<compile_context>
chip_gen: v5e
topology: v5e:2x2
jax: 0.10.0
libtpu: 0.0.40
codegen_flags: <defaults>
</compile_context>

<pallas_src>
import functools
import math

import jax
import jax.numpy as jnp
from jax.experimental import pallas as pl
from jax.experimental.pallas import tpu as pltpu


def _round_up(x, m):
    return (x + m - 1) // m * m


# ----------------------------- Pallas kernels --------------------------------
def _gemm_bias_act_kernel(a_ref, w_ref, b_ref, o_ref, *, apply_relu):
    acc = jnp.dot(a_ref[...], w_ref[...], preferred_element_type=jnp.float32)
    y = acc + b_ref[...]
    if apply_relu:
        y = jnp.maximum(y, 0.0)
    o_ref[...] = y.astype(o_ref.dtype)


def _head_kernel(cnn_ref, sp_ref, wsp_ref, bsp_ref,
                 w1c_ref, w1s_ref, b1_ref, w2_ref, b2_ref, o_ref):
    # speed_fc: Linear(1, 32) + ReLU.  K == 1, so the GEMM is a broadcast
    # multiply on the VPU -- no MXU pass, no separate XLA op, no concat.
    sp_feat = jnp.maximum(sp_ref[...] * wsp_ref[...] + bsp_ref[...], 0.0)   # (M,32) f32
    # fc1 over the (implicitly concatenated) features:
    #   h = cnn_feat @ W1_cnn + speed_feat @ W1_speed + b1
    h = jnp.dot(cnn_ref[...], w1c_ref[...], preferred_element_type=jnp.float32)
    h += jnp.dot(sp_feat.astype(jnp.bfloat16), w1s_ref[...],
                 preferred_element_type=jnp.float32)
    h = jnp.maximum(h + b1_ref[...], 0.0)
    # Dropout(0.3): identity in inference mode.
    out = jnp.dot(h.astype(jnp.bfloat16), w2_ref[...],
                  preferred_element_type=jnp.float32)
    o_ref[...] = out + b2_ref[...]


# ----------------------------- kernel wrappers --------------------------------
def _pick_tm(mp, k, np_, budget_bytes=12 << 20):
    """Largest M tile whose double-buffered working set fits the VMEM budget."""
    def est(tm):
        return (2 * tm * k * 2      # A block (bf16), double buffered
                + 2 * tm * np_ * 2  # out block (bf16), double buffered
                + 2 * k * np_ * 2   # W (bf16), double buffered by default
                + 2 * np_ * 4)      # bias (f32)
    if est(mp) <= budget_bytes:
        return mp
    tm = 2048
    while tm > 64 and est(tm) > budget_bytes:
        tm //= 2
    return tm


def gemm_bias_act(a, w_packed, b_packed, n_out, apply_relu=True,
                  out_dtype=jnp.bfloat16):
    """act(a @ w_packed + b_packed).

    a:        (M, K) float  (cast to bf16; rows padded to a multiple of the M tile)
    w_packed: (K, Np) bf16  (N padded to 128; BN scale / 1-255 norm pre-folded)
    b_packed: (1, Np) f32   (conv bias + BN shift pre-folded)
    """
    M, K = a.shape
    Kw, Np = w_packed.shape
    assert K == Kw, (K, Kw)

    Mp = _round_up(M, 16)                         # bf16 packs 16 rows per vreg group
    TM = _pick_tm(Mp, K, Np)
    Mp = _round_up(Mp, TM)

    a_p = a.astype(jnp.bfloat16)
    if Mp != M:
        a_p = jnp.pad(a_p, ((0, Mp - M), (0, 0)))

    cost = pl.CostEstimate(
        flops=2 * Mp * K * Np,
        transcendentals=0,
        bytes_accessed=Mp * K * 2 + K * Np * 2 + Mp * Np * 2 + Np * 4)

    out = pl.pallas_call(
        functools.partial(_gemm_bias_act_kernel, apply_relu=apply_relu),
        out_shape=jax.ShapeDtypeStruct((Mp, Np), out_dtype),
        grid=(Mp // TM,),
        in_specs=[
            pl.BlockSpec((TM, K), lambda i: (i, 0)),    # full-K block (no 128 pad)
            pl.BlockSpec((K, Np), lambda i: (0, 0)),    # full weight, lane-dense N
            pl.BlockSpec((1, Np), lambda i: (0, 0)),
        ],
        out_specs=pl.BlockSpec((TM, Np), lambda i: (i, 0)),
        compiler_params=pltpu.CompilerParams(
            dimension_semantics=("parallel",),
            vmem_limit_bytes=32 * 1024 * 1024),
        cost_estimate=cost,
    )(a_p, w_packed, b_packed)

    if Mp != M or Np != n_out:
        out = out[:M, :n_out]
    return out


def fused_head(cnn_feat, speed, head):
    """logits = relu(cnn@W1c + relu(speed*wsp+bsp)@W1s + b1) @ W2 + b2 — one kernel."""
    M, Kc = cnn_feat.shape
    Mp = _round_up(M, 16)
    Ks = head["w1_speed"].shape[0]                # 32
    Np1 = head["w1_cnn"].shape[1]                 # 512
    Np2 = head["w2"].shape[1]                     # padded actor dim

    x_p = cnn_feat.astype(jnp.bfloat16)
    sp_p = speed.astype(jnp.float32)
    if Mp != M:
        x_p = jnp.pad(x_p, ((0, Mp - M), (0, 0)))
        sp_p = jnp.pad(sp_p, ((0, Mp - M), (0, 0)))

    cost = pl.CostEstimate(
        flops=2 * Mp * (Kc + Ks) * Np1 + 2 * Mp * Np1 * Np2 + 4 * Mp * Ks,
        transcendentals=0,
        bytes_accessed=(Mp * Kc * 2 + Kc * Np1 * 2 + Ks * Np1 * 2
                        + Np1 * Np2 * 2 + Mp * Np2 * 4))

    single = pl.Buffered(1)   # grid=(1,): nothing to overlap; don't double-buffer weights
    out = pl.pallas_call(
        _head_kernel,
        out_shape=jax.ShapeDtypeStruct((Mp, Np2), jnp.float32),
        grid=(1,),
        in_specs=[
            pl.BlockSpec((Mp, Kc), lambda i: (0, 0)),
            pl.BlockSpec((Mp, 1), lambda i: (0, 0)),
            pl.BlockSpec((1, Ks), lambda i: (0, 0)),
            pl.BlockSpec((1, Ks), lambda i: (0, 0)),
            pl.BlockSpec((Kc, Np1), lambda i: (0, 0), pipeline_mode=single),
            pl.BlockSpec((Ks, Np1), lambda i: (0, 0), pipeline_mode=single),
            pl.BlockSpec((1, Np1), lambda i: (0, 0)),
            pl.BlockSpec((Np1, Np2), lambda i: (0, 0), pipeline_mode=single),
            pl.BlockSpec((1, Np2), lambda i: (0, 0)),
        ],
        out_specs=pl.BlockSpec((Mp, Np2), lambda i: (0, 0)),
        compiler_params=pltpu.CompilerParams(
            dimension_semantics=("arbitrary",),
            vmem_limit_bytes=32 * 1024 * 1024),
        cost_estimate=cost,
    )(x_p, sp_p, head["w_sp"], head["b_sp"],
      head["w1_cnn"], head["w1_speed"], head["b1"], head["w2"], head["b2"])
    return out[:M, :head["actor_shape"]]


# ------------------------------- JAX glue ------------------------------------
def _im2col_nhwc(x, stride):
    """3x3 patches, padding=1; returns (N*Ho*Wo, 9*C) with (kh,kw,C) ordering."""
    N, H, W, C = x.shape
    Ho = (H - 1) // stride + 1
    Wo = (W - 1) // stride + 1
    xp = jnp.pad(x, ((0, 0), (1, 1), (1, 1), (0, 0)))
    cols = []
    for kh in range(3):
        for kw in range(3):
            sl = xp[:, kh: kh + stride * (Ho - 1) + 1: stride,
                       kw: kw + stride * (Wo - 1) + 1: stride, :]
            cols.append(sl)
    patches = jnp.stack(cols, axis=3)          # (N, Ho, Wo, 9, C)
    return patches.reshape(N * Ho * Wo, 9 * C), Ho, Wo


def adaptive_avg_pool_nhwc(x, out_h=4, out_w=4):
    """PyTorch AdaptiveAvgPool2d bin semantics, NHWC layout."""
    N, H, W, C = x.shape
    if H == out_h and W == out_w:
        return x                                            # identity fast path
    if H % out_h == 0 and W % out_w == 0:                   # equal-bin fast path
        y = x.astype(jnp.float32).reshape(N, out_h, H // out_h, out_w, W // out_w, C)
        return y.mean(axis=(2, 4)).astype(x.dtype)
    rows = []                                               # general PyTorch bins
    xf = x.astype(jnp.float32)
    for i in range(out_h):
        hs, he = (i * H) // out_h, math.ceil((i + 1) * H / out_h)
        cols = []
        for j in range(out_w):
            ws, we = (j * W) // out_w, math.ceil((j + 1) * W / out_w)
            cols.append(jnp.mean(xf[:, hs:he, ws:we, :], axis=(1, 2)))
        rows.append(jnp.stack(cols, axis=1))
    return jnp.stack(rows, axis=1).astype(x.dtype)


# ------------------------------ parameters -----------------------------------
def init_params(key, in_ch, actor_shape):
    """Raw parameters in PyTorch layout (synthetic, deterministic)."""
    keys = iter(jax.random.split(key, 40))

    def nrm(shape, scale=0.05):
        return scale * jax.random.normal(next(keys), shape, dtype=jnp.float32)

    convs = []
    for cin, cout, stride in [(in_ch, 32, 1), (32, 64, 2), (64, 128, 2), (128, 256, 2)]:
        convs.append(dict(
            w=nrm((cout, cin, 3, 3)),
            b=nrm((cout,)),
            gamma=1.0 + nrm((cout,)),
            beta=nrm((cout,)),
            mean=nrm((cout,)),
            var=0.5 + jnp.abs(nrm((cout,))),
            stride=stride,
        ))
    return dict(
        convs=convs,
        speed_w=nrm((32, 1)),
        speed_b=nrm((32,)),
        fc1_w=nrm((512, 256 * 4 * 4 + 32)),
        fc1_b=nrm((512,)),
        fc2_w=nrm((actor_shape, 512)),
        fc2_b=nrm((actor_shape,)),
    )


def prepare_params(raw, eps=1e-5):
    """One-time host-side packing: transpose, fold BN scale/bias (+ 1/255 into
    conv1), permute fc1 columns to NHWC feature order, split off the speed
    columns, pad N to 128, cast MXU operands to bf16."""
    packed = {"convs": []}
    for li, layer in enumerate(raw["convs"]):
        w, b = layer["w"], layer["b"]
        cout, cin = w.shape[0], w.shape[1]
        s = layer["gamma"] / jnp.sqrt(layer["var"] + eps)
        t = layer["beta"] - layer["mean"] * s + b * s        # conv bias folded into BN shift
        # (Cout,Cin,kh,kw) -> (kh,kw,Cin,Cout) -> (9*Cin,Cout); fold BN scale into W
        w_mat = jnp.transpose(w, (2, 3, 1, 0)).reshape(9 * cin, cout) * s[None, :]
        if li == 0:
            w_mat = w_mat * (1.0 / 255.0)                    # fold input normalization
        Np = _round_up(cout, 128)
        w_p = jnp.pad(w_mat, ((0, 0), (0, Np - cout))).astype(jnp.bfloat16)  # K unpadded
        t_p = jnp.pad(t.reshape(1, cout), ((0, 0), (0, Np - cout))).astype(jnp.float32)
        packed["convs"].append(dict(w=w_p, b=t_p, cout=cout, stride=layer["stride"]))

    # --- fused head: speed_fc + concat + fc1(+ReLU) + fc2 in one kernel -------
    n_cnn = 256 * 4 * 4
    fc1_w, fc1_b = raw["fc1_w"], raw["fc1_b"]                # (512, 4128), (512,)
    N1 = fc1_w.shape[0]
    # PyTorch flatten order of the pooled features is NCHW (c*16 + h*4 + w);
    # permute fc1's cnn columns to the NHWC order (h*1024 + w*256 + c) that the
    # wrapper's plain reshape produces, so no transpose is needed per forward.
    w1_cnn = fc1_w[:, :n_cnn].reshape(N1, 256, 4, 4)
    w1_cnn = jnp.transpose(w1_cnn, (0, 2, 3, 1)).reshape(N1, n_cnn)
    w1_cnn = w1_cnn.T.astype(jnp.bfloat16)                   # (4096, 512), no pad needed
    w1_speed = fc1_w[:, n_cnn:].T.astype(jnp.bfloat16)       # (32, 512)
    b1 = fc1_b.reshape(1, N1).astype(jnp.float32)

    N2 = raw["fc2_w"].shape[0]                               # actor_shape
    Np2 = _round_up(N2, 128)
    w2 = jnp.pad(raw["fc2_w"].T, ((0, 0), (0, Np2 - N2))).astype(jnp.bfloat16)
    b2 = jnp.pad(raw["fc2_b"].reshape(1, N2), ((0, 0), (0, Np2 - N2))).astype(jnp.float32)

    packed["head"] = dict(
        w_sp=raw["speed_w"].T.astype(jnp.float32),           # (1, 32)
        b_sp=raw["speed_b"].reshape(1, 32).astype(jnp.float32),
        w1_cnn=w1_cnn, w1_speed=w1_speed, b1=b1, w2=w2, b2=b2, actor_shape=N2)
    return packed


# ------------------------------ forward pass ----------------------------------
def discrete_actor_forward(packed, x_nchw, speed=None):
    # 1/255 normalization is folded into conv1's packed weights (host side).
    x = jnp.transpose(x_nchw.astype(jnp.float32), (0, 2, 3, 1)).astype(jnp.bfloat16)
    n = x.shape[0]

    for layer in packed["convs"]:
        patches, ho, wo = _im2col_nhwc(x, layer["stride"])
        out = gemm_bias_act(patches, layer["w"], layer["b"], n_out=layer["cout"],
                            apply_relu=True, out_dtype=jnp.bfloat16)
        x = out.reshape(n, ho, wo, layer["cout"])

    x = adaptive_avg_pool_nhwc(x, 4, 4)              # (N, 4, 4, 256); identity here
    cnn_feat = x.reshape(n, -1)                      # NHWC flatten; fc1 permuted to match

    if speed is None:
        speed = jnp.zeros((n, 1), jnp.float32)
    else:
        speed = speed.astype(jnp.float32)
        if speed.ndim == 1:
            speed = speed[:, None]

    # TODO(synk): conv4's GEMM could also be merged into the head kernel (its
    # output is only (N*16, 256) bf16), but that needs an in-kernel
    # (N*16,256)->(N,4096) relayout; kept as two pallas_calls for robustness.
    return fused_head(cnn_feat, speed, packed["head"])


if __name__ == "__main__":
    key = jax.random.PRNGKey(0)
    k_param, k_x, k_speed = jax.random.split(key, 3)

    # module's input_shape = (H, W, C); 32x32 spatial makes conv4's 4x4 output
    # match AdaptiveAvgPool2d((4,4)) exactly (identity fast path).
    B, C, H, W = 2, 4, 32, 32
    actor_shape = 8

    raw_params = init_params(k_param, C, actor_shape)
    params = prepare_params(raw_params)              # one-time host-side packing

    x = jax.random.uniform(k_x, (B, C, H, W), jnp.float32, 0.0, 255.0)
    speed = jax.random.uniform(k_speed, (B,), jnp.float32, 0.0, 10.0)

    fwd = jax.jit(lambda xi, si: discrete_actor_forward(params, xi, si))
    logits = fwd(x, speed)
    jax.block_until_ready(logits)

    assert logits.shape == (B, actor_shape), logits.shape
    assert bool(jnp.all(jnp.isfinite(logits)))
    print("KERNEL_OK")
</pallas_src>

<mosaic_0001>
module attributes {stable_mosaic.version = 11 : i64} {
  func.func @_gemm_bias_act_kernel(%arg0: i32, %arg1: memref<2048x36xbf16, #tpu.memory_space<vmem>>, %arg2: memref<36x128xbf16, #tpu.memory_space<vmem>>, %arg3: memref<1x128xf32, #tpu.memory_space<vmem>>, %arg4: memref<2048x128xbf16, #tpu.memory_space<vmem>>) attributes {dimension_semantics = [#tpu.dimension_semantics<parallel>], iteration_bounds = array<i64: 1>, scalar_prefetch = 0 : i64, scratch_operands = 0 : i64, tpu.core_type = #tpu.core_type<tc>, window_params = [{transform_indices = @transform_0, window_bounds = array<i64: 2048, 36>}, {pipeline_mode = #tpu.pipeline_mode<synchronous>, transform_indices = @transform_1, window_bounds = array<i64: 36, 128>}, {pipeline_mode = #tpu.pipeline_mode<synchronous>, transform_indices = @transform_2, window_bounds = array<i64: 1, 128>}, {transform_indices = @transform_3, window_bounds = array<i64: 2048, 128>}]} {
    %c0 = arith.constant 0 : index
    %c0_0 = arith.constant 0 : index
    %0 = vector.load %arg1[%c0, %c0_0] : memref<2048x36xbf16, #tpu.memory_space<vmem>>, vector<2048x36xbf16>
    %c0_1 = arith.constant 0 : index
    %c0_2 = arith.constant 0 : index
    %1 = vector.load %arg2[%c0_1, %c0_2] : memref<36x128xbf16, #tpu.memory_space<vmem>>, vector<36x128xbf16>
    %cst = arith.constant dense<0.000000e+00> : vector<2048x128xf32>
    %2 = tpu.matmul %0, %1, %cst {dimension_numbers = #tpu.dot_dimension_numbers<[1], [0], [0], [1], [0, 0, 1, 1], [], []>} : vector<2048x36xbf16>, vector<36x128xbf16>, vector<2048x128xf32> -> vector<2048x128xf32>
    %c0_3 = arith.constant 0 : index
    %c0_4 = arith.constant 0 : index
    %3 = vector.load %arg3[%c0_3, %c0_4] : memref<1x128xf32, #tpu.memory_space<vmem>>, vector<1x128xf32>
    %4 = vector.broadcast %3 : vector<1x128xf32> to vector<2048x128xf32>
    %5 = arith.addf %2, %4 : vector<2048x128xf32>
    %cst_5 = arith.constant 0.000000e+00 : f32
    %6 = vector.broadcast %cst_5 : f32 to vector<2048x128xf32>
    %7 = arith.maximumf %5, %6 : vector<2048x128xf32>
    %8 = arith.truncf %7 : vector<2048x128xf32> to vector<2048x128xbf16>
    %c0_6 = arith.constant 0 : index
    %c0_7 = arith.constant 0 : index
    %9 = vector.load %arg4[%c0_6, %c0_7] : memref<2048x128xbf16, #tpu.memory_space<vmem>>, vector<2048x128xbf16>
    tpu.vector_store %arg4[%c0_6, %c0_7], %8 {strides = array<i32>} : memref<2048x128xbf16, #tpu.memory_space<vmem>>, vector<2048x128xbf16>,
    return
  }
  func.func @transform_0(%arg0: i32) -> (i32, i32) {
    %c0_i32 = arith.constant 0 : i32
    %c0_i32_0 = arith.constant 0 : i32
    return %arg0, %c0_i32 : i32, i32
  }
  func.func @transform_1(%arg0: i32) -> (i32, i32) {
    %c0_i32 = arith.constant 0 : i32
    %c0_i32_0 = arith.constant 0 : i32
    %c0_i32_1 = arith.constant 0 : i32
    return %c0_i32, %c0_i32_0 : i32, i32
  }
  func.func @transform_2(%arg0: i32) -> (i32, i32) {
    %c0_i32 = arith.constant 0 : i32
    %c0_i32_0 = arith.constant 0 : i32
    %c0_i32_1 = arith.constant 0 : i32
    return %c0_i32, %c0_i32_0 : i32, i32
  }
  func.func @transform_3(%arg0: i32) -> (i32, i32) {
    %c0_i32 = arith.constant 0 : i32
    %c0_i32_0 = arith.constant 0 : i32
    return %arg0, %c0_i32 : i32, i32
  }
}

module attributes {stable_mosaic.version = 11 : i64} {
  func.func @_gemm_bias_act_kernel(%arg0: i32, %arg1: memref<512x288xbf16, #tpu.memory_space<vmem>>, %arg2: memref<288x128xbf16, #tpu.memory_space<vmem>>, %arg3: memref<1x128xf32, #tpu.memory_space<vmem>>, %arg4: memref<512x128xbf16, #tpu.memory_space<vmem>>) attributes {dimension_semantics = [#tpu.dimension_semantics<parallel>], iteration_bounds = array<i64: 1>, scalar_prefetch = 0 : i64, scratch_operands = 0 : i64, tpu.core_type = #tpu.core_type<tc>, window_params = [{transform_indices = @transform_0, window_bounds = array<i64: 512, 288>}, {pipeline_mode = #tpu.pipeline_mode<synchronous>, transform_indices = @transform_1, window_bounds = array<i64: 288, 128>}, {pipeline_mode = #tpu.pipeline_mode<synchronous>, transform_indices = @transform_2, window_bounds = array<i64: 1, 128>}, {transform_indices = @transform_3, window_bounds = array<i64: 512, 128>}]} {
    %c0 = arith.constant 0 : index
    %c0_0 = arith.constant 0 : index
    %0 = vector.load %arg1[%c0, %c0_0] : memref<512x288xbf16, #tpu.memory_space<vmem>>, vector<512x288xbf16>
    %c0_1 = arith.constant 0 : index
    %c0_2 = arith.constant 0 : index
    %1 = vector.load %arg2[%c0_1, %c0_2] : memref<288x128xbf16, #tpu.memory_space<vmem>>, vector<288x128xbf16>
    %cst = arith.constant dense<0.000000e+00> : vector<512x128xf32>
    %2 = tpu.matmul %0, %1, %cst {dimension_numbers = #tpu.dot_dimension_numbers<[1], [0], [0], [1], [0, 0, 1, 1], [], []>} : vector<512x288xbf16>, vector<288x128xbf16>, vector<512x128xf32> -> vector<512x128xf32>
    %c0_3 = arith.constant 0 : index
    %c0_4 = arith.constant 0 : index
    %3 = vector.load %arg3[%c0_3, %c0_4] : memref<1x128xf32, #tpu.memory_space<vmem>>, vector<1x128xf32>
    %4 = vector.broadcast %3 : vector<1x128xf32> to vector<512x128xf32>
    %5 = arith.addf %2, %4 : vector<512x128xf32>
    %cst_5 = arith.constant 0.000000e+00 : f32
    %6 = vector.broadcast %cst_5 : f32 to vector<512x128xf32>
    %7 = arith.maximumf %5, %6 : vector<512x128xf32>
    %8 = arith.truncf %7 : vector<512x128xf32> to vector<512x128xbf16>
    %c0_6 = arith.constant 0 : index
    %c0_7 = arith.constant 0 : index
    %9 = vector.load %arg4[%c0_6, %c0_7] : memref<512x128xbf16, #tpu.memory_space<vmem>>, vector<512x128xbf16>
    tpu.vector_store %arg4[%c0_6, %c0_7], %8 {strides = array<i32>} : memref<512x128xbf16, #tpu.memory_space<vmem>>, vector<512x128xbf16>,
    return
  }
  func.func @transform_0(%arg0: i32) -> (i32, i32) {
    %c0_i32 = arith.constant 0 : i32
    %c0_i32_0 = arith.constant 0 : i32
    return %arg0, %c0_i32 : i32, i32
  }
  func.func @transform_1(%arg0: i32) -> (i32, i32) {
    %c0_i32 = arith.constant 0 : i32
    %c0_i32_0 = arith.constant 0 : i32
    %c0_i32_1 = arith.constant 0 : i32
    return %c0_i32, %c0_i32_0 : i32, i32
  }
  func.func @transform_2(%arg0: i32) -> (i32, i32) {
    %c0_i32 = arith.constant 0 : i32
    %c0_i32_0 = arith.constant 0 : i32
    %c0_i32_1 = arith.constant 0 : i32
    return %c0_i32, %c0_i32_0 : i32, i32
  }
  func.func @transform_3(%arg0: i32) -> (i32, i32) {
    %c0_i32 = arith.constant 0 : i32
    %c0_i32_0 = arith.constant 0 : i32
    return %arg0, %c0_i32 : i32, i32
  }
}

module attributes {stable_mosaic.version = 11 : i64} {
  func.func @_gemm_bias_act_kernel(%arg0: i32, %arg1: memref<128x576xbf16, #tpu.memory_space<vmem>>, %arg2: memref<576x128xbf16, #tpu.memory_space<vmem>>, %arg3: memref<1x128xf32, #tpu.memory_space<vmem>>, %arg4: memref<128x128xbf16, #tpu.memory_space<vmem>>) attributes {dimension_semantics = [#tpu.dimension_semantics<parallel>], iteration_bounds = array<i64: 1>, scalar_prefetch = 0 : i64, scratch_operands = 0 : i64, tpu.core_type = #tpu.core_type<tc>, window_params = [{transform_indices = @transform_0, window_bounds = array<i64: 128, 576>}, {pipeline_mode = #tpu.pipeline_mode<synchronous>, transform_indices = @transform_1, window_bounds = array<i64: 576, 128>}, {pipeline_mode = #tpu.pipeline_mode<synchronous>, transform_indices = @transform_2, window_bounds = array<i64: 1, 128>}, {transform_indices = @transform_3, window_bounds = array<i64: 128, 128>}]} {
    %c0 = arith.constant 0 : index
    %c0_0 = arith.constant 0 : index
    %0 = vector.load %arg1[%c0, %c0_0] : memref<128x576xbf16, #tpu.memory_space<vmem>>, vector<128x576xbf16>
    %c0_1 = arith.constant 0 : index
    %c0_2 = arith.constant 0 : index
    %1 = vector.load %arg2[%c0_1, %c0_2] : memref<576x128xbf16, #tpu.memory_space<vmem>>, vector<576x128xbf16>
    %cst = arith.constant dense<0.000000e+00> : vector<128x128xf32>
    %2 = tpu.matmul %0, %1, %cst {dimension_numbers = #tpu.dot_dimension_numbers<[1], [0], [0], [1], [0, 0, 1, 1], [], []>} : vector<128x576xbf16>, vector<576x128xbf16>, vector<128x128xf32> -> vector<128x128xf32>
    %c0_3 = arith.constant 0 : index
    %c0_4 = arith.constant 0 : index
    %3 = vector.load %arg3[%c0_3, %c0_4] : memref<1x128xf32, #tpu.memory_space<vmem>>, vector<1x128xf32>
    %4 = vector.broadcast %3 : vector<1x128xf32> to vector<128x128xf32>
    %5 = arith.addf %2, %4 : vector<128x128xf32>
    %cst_5 = arith.constant 0.000000e+00 : f32
    %6 = vector.broadcast %cst_5 : f32 to vector<128x128xf32>
    %7 = arith.maximumf %5, %6 : vector<128x128xf32>
    %8 = arith.truncf %7 : vector<128x128xf32> to vector<128x128xbf16>
    %c0_6 = arith.constant 0 : index
    %c0_7 = arith.constant 0 : index
    %9 = vector.load %arg4[%c0_6, %c0_7] : memref<128x128xbf16, #tpu.memory_space<vmem>>, vector<128x128xbf16>
    tpu.vector_store %arg4[%c0_6, %c0_7], %8 {strides = array<i32>} : memref<128x128xbf16, #tpu.memory_space<vmem>>, vector<128x128xbf16>,
    return
  }
  func.func @transform_0(%arg0: i32) -> (i32, i32) {
    %c0_i32 = arith.constant 0 : i32
    %c0_i32_0 = arith.constant 0 : i32
    return %arg0, %c0_i32 : i32, i32
  }
  func.func @transform_1(%arg0: i32) -> (i32, i32) {
    %c0_i32 = arith.constant 0 : i32
    %c0_i32_0 = arith.constant 0 : i32
    %c0_i32_1 = arith.constant 0 : i32
    return %c0_i32, %c0_i32_0 : i32, i32
  }
  func.func @transform_2(%arg0: i32) -> (i32, i32) {
    %c0_i32 = arith.constant 0 : i32
    %c0_i32_0 = arith.constant 0 : i32
    %c0_i32_1 = arith.constant 0 : i32
    return %c0_i32, %c0_i32_0 : i32, i32
  }
  func.func @transform_3(%arg0: i32) -> (i32, i32) {
    %c0_i32 = arith.constant 0 : i32
    %c0_i32_0 = arith.constant 0 : i32
    return %arg0, %c0_i32 : i32, i32
  }
}

module attributes {stable_mosaic.version = 11 : i64} {
  func.func @_gemm_bias_act_kernel(%arg0: i32, %arg1: memref<32x1152xbf16, #tpu.memory_space<vmem>>, %arg2: memref<1152x256xbf16, #tpu.memory_space<vmem>>, %arg3: memref<1x256xf32, #tpu.memory_space<vmem>>, %arg4: memref<32x256xbf16, #tpu.memory_space<vmem>>) attributes {dimension_semantics = [#tpu.dimension_semantics<parallel>], iteration_bounds = array<i64: 1>, scalar_prefetch = 0 : i64, scratch_operands = 0 : i64, tpu.core_type = #tpu.core_type<tc>, window_params = [{transform_indices = @transform_0, window_bounds = array<i64: 32, 1152>}, {pipeline_mode = #tpu.pipeline_mode<synchronous>, transform_indices = @transform_1, window_bounds = array<i64: 1152, 256>}, {pipeline_mode = #tpu.pipeline_mode<synchronous>, transform_indices = @transform_2, window_bounds = array<i64: 1, 256>}, {transform_indices = @transform_3, window_bounds = array<i64: 32, 256>}]} {
    %c0 = arith.constant 0 : index
    %c0_0 = arith.constant 0 : index
    %0 = vector.load %arg1[%c0, %c0_0] : memref<32x1152xbf16, #tpu.memory_space<vmem>>, vector<32x1152xbf16>
    %c0_1 = arith.constant 0 : index
    %c0_2 = arith.constant 0 : index
    %1 = vector.load %arg2[%c0_1, %c0_2] : memref<1152x256xbf16, #tpu.memory_space<vmem>>, vector<1152x256xbf16>
    %cst = arith.constant dense<0.000000e+00> : vector<32x256xf32>
    %2 = tpu.matmul %0, %1, %cst {dimension_numbers = #tpu.dot_dimension_numbers<[1], [0], [0], [1], [0, 0, 1, 1], [], []>} : vector<32x1152xbf16>, vector<1152x256xbf16>, vector<32x256xf32> -> vector<32x256xf32>
    %c0_3 = arith.constant 0 : index
    %c0_4 = arith.constant 0 : index
    %3 = vector.load %arg3[%c0_3, %c0_4] : memref<1x256xf32, #tpu.memory_space<vmem>>, vector<1x256xf32>
    %4 = vector.broadcast %3 : vector<1x256xf32> to vector<32x256xf32>
    %5 = arith.addf %2, %4 : vector<32x256xf32>
    %cst_5 = arith.constant 0.000000e+00 : f32
    %6 = vector.broadcast %cst_5 : f32 to vector<32x256xf32>
    %7 = arith.maximumf %5, %6 : vector<32x256xf32>
    %8 = arith.truncf %7 : vector<32x256xf32> to vector<32x256xbf16>
    %c0_6 = arith.constant 0 : index
    %c0_7 = arith.constant 0 : index
    %9 = vector.load %arg4[%c0_6, %c0_7] : memref<32x256xbf16, #tpu.memory_space<vmem>>, vector<32x256xbf16>
    tpu.vector_store %arg4[%c0_6, %c0_7], %8 {strides = array<i32>} : memref<32x256xbf16, #tpu.memory_space<vmem>>, vector<32x256xbf16>,
    return
  }
  func.func @transform_0(%arg0: i32) -> (i32, i32) {
    %c0_i32 = arith.constant 0 : i32
    %c0_i32_0 = arith.constant 0 : i32
    return %arg0, %c0_i32 : i32, i32
  }
  func.func @transform_1(%arg0: i32) -> (i32, i32) {
    %c0_i32 = arith.constant 0 : i32
    %c0_i32_0 = arith.constant 0 : i32
    %c0_i32_1 = arith.constant 0 : i32
    return %c0_i32, %c0_i32_0 : i32, i32
  }
  func.func @transform_2(%arg0: i32) -> (i32, i32) {
    %c0_i32 = arith.constant 0 : i32
    %c0_i32_0 = arith.constant 0 : i32
    %c0_i32_1 = arith.constant 0 : i32
    return %c0_i32, %c0_i32_0 : i32, i32
  }
  func.func @transform_3(%arg0: i32) -> (i32, i32) {
    %c0_i32 = arith.constant 0 : i32
    %c0_i32_0 = arith.constant 0 : i32
    return %arg0, %c0_i32 : i32, i32
  }
}

module attributes {stable_mosaic.version = 11 : i64} {
  func.func @_head_kernel(%arg0: i32, %arg1: memref<16x4096xbf16, #tpu.memory_space<vmem>>, %arg2: memref<16x1xf32, #tpu.memory_space<vmem>>, %arg3: memref<1x32xf32, #tpu.memory_space<vmem>>, %arg4: memref<1x32xf32, #tpu.memory_space<vmem>>, %arg5: memref<4096x512xbf16, #tpu.memory_space<vmem>>, %arg6: memref<32x512xbf16, #tpu.memory_space<vmem>>, %arg7: memref<1x512xf32, #tpu.memory_space<vmem>>, %arg8: memref<512x128xbf16, #tpu.memory_space<vmem>>, %arg9: memref<1x128xf32, #tpu.memory_space<vmem>>, %arg10: memref<16x128xf32, #tpu.memory_space<vmem>>) attributes {dimension_semantics = [#tpu.dimension_semantics<arbitrary>], iteration_bounds = array<i64: 1>, scalar_prefetch = 0 : i64, scratch_operands = 0 : i64, tpu.core_type = #tpu.core_type<tc>, window_params = [{pipeline_mode = #tpu.pipeline_mode<synchronous>, transform_indices = @transform_0, window_bounds = array<i64: 16, 4096>}, {pipeline_mode = #tpu.pipeline_mode<synchronous>, transform_indices = @transform_1, window_bounds = array<i64: 16, 1>}, {pipeline_mode = #tpu.pipeline_mode<synchronous>, transform_indices = @transform_2, window_bounds = array<i64: 1, 32>}, {pipeline_mode = #tpu.pipeline_mode<synchronous>, transform_indices = @transform_3, window_bounds = array<i64: 1, 32>}, {pipeline_mode = #tpu.pipeline_mode<synchronous>, transform_indices = @transform_4, window_bounds = array<i64: 4096, 512>}, {pipeline_mode = #tpu.pipeline_mode<synchronous>, transform_indices = @transform_5, window_bounds = array<i64: 32, 512>}, {pipeline_mode = #tpu.pipeline_mode<synchronous>, transform_indices = @transform_6, window_bounds = array<i64: 1, 512>}, {pipeline_mode = #tpu.pipeline_mode<synchronous>, transform_indices = @transform_7, window_bounds = array<i64: 512, 128>}, {pipeline_mode = #tpu.pipeline_mode<synchronous>, transform_indices = @transform_8, window_bounds = array<i64: 1, 128>}, {pipeline_mode = #tpu.pipeline_mode<synchronous>, transform_indices = @transform_9, window_bounds = array<i64: 16, 128>}]} {
    %c0 = arith.constant 0 : index
    %c0_0 = arith.constant 0 : index
    %0 = vector.load %arg2[%c0, %c0_0] : memref<16x1xf32, #tpu.memory_space<vmem>>, vector<16x1xf32>
    %c0_1 = arith.constant 0 : index
    %c0_2 = arith.constant 0 : index
    %1 = vector.load %arg3[%c0_1, %c0_2] : memref<1x32xf32, #tpu.memory_space<vmem>>, vector<1x32xf32>
    %2 = vector.broadcast %0 : vector<16x1xf32> to vector<16x32xf32>
    %3 = vector.broadcast %1 : vector<1x32xf32> to vector<16x32xf32>
    %4 = arith.mulf %2, %3 : vector<16x32xf32>
    %c0_3 = arith.constant 0 : index
    %c0_4 = arith.constant 0 : index
    %5 = vector.load %arg4[%c0_3, %c0_4] : memref<1x32xf32, #tpu.memory_space<vmem>>, vector<1x32xf32>
    %6 = vector.broadcast %5 : vector<1x32xf32> to vector<16x32xf32>
    %7 = arith.addf %4, %6 : vector<16x32xf32>
    %cst = arith.constant 0.000000e+00 : f32
    %8 = vector.broadcast %cst : f32 to vector<16x32xf32>
    %9 = arith.maximumf %7, %8 : vector<16x32xf32>
    %c0_5 = arith.constant 0 : index
    %c0_6 = arith.constant 0 : index
    %10 = vector.load %arg1[%c0_5, %c0_6] : memref<16x4096xbf16, #tpu.memory_space<vmem>>, vector<16x4096xbf16>
    %c0_7 = arith.constant 0 : index
    %c0_8 = arith.constant 0 : index
    %11 = vector.load %arg5[%c0_7, %c0_8] : memref<4096x512xbf16, #tpu.memory_space<vmem>>, vector<4096x512xbf16>
    %cst_9 = arith.constant dense<0.000000e+00> : vector<16x512xf32>
    %12 = tpu.matmul %10, %11, %cst_9 {dimension_numbers = #tpu.dot_dimension_numbers<[1], [0], [0], [1], [0, 0, 1, 1], [], []>} : vector<16x4096xbf16>, vector<4096x512xbf16>, vector<16x512xf32> -> vector<16x512xf32>
    %13 = arith.truncf %9 : vector<16x32xf32> to vector<16x32xbf16>
    %c0_10 = arith.constant 0 : index
    %c0_11 = arith.constant 0 : index
    %14 = vector.load %arg6[%c0_10, %c0_11] : memref<32x512xbf16, #tpu.memory_space<vmem>>, vector<32x512xbf16>
    %cst_12 = arith.constant dense<0.000000e+00> : vector<16x512xf32>
    %15 = tpu.matmul %13, %14, %cst_12 {dimension_numbers = #tpu.dot_dimension_numbers<[1], [0], [0], [1], [0, 0, 1, 1], [], []>} : vector<16x32xbf16>, vector<32x512xbf16>, vector<16x512xf32> -> vector<16x512xf32>
    %16 = arith.addf %12, %15 : vector<16x512xf32>
    %c0_13 = arith.constant 0 : index
    %c0_14 = arith.constant 0 : index
    %17 = vector.load %arg7[%c0_13, %c0_14] : memref<1x512xf32, #tpu.memory_space<vmem>>, vector<1x512xf32>
    %18 = vector.broadcast %17 : vector<1x512xf32> to vector<16x512xf32>
    %19 = arith.addf %16, %18 : vector<16x512xf32>
    %cst_15 = arith.constant 0.000000e+00 : f32
    %20 = vector.broadcast %cst_15 : f32 to vector<16x512xf32>
    %21 = arith.maximumf %19, %20 : vector<16x512xf32>
    %22 = arith.truncf %21 : vector<16x512xf32> to vector<16x512xbf16>
    %c0_16 = arith.constant 0 : index
    %c0_17 = arith.constant 0 : index
    %23 = vector.load %arg8[%c0_16, %c0_17] : memref<512x128xbf16, #tpu.memory_space<vmem>>, vector<512x128xbf16>
    %cst_18 = arith.constant dense<0.000000e+00> : vector<16x128xf32>
    %24 = tpu.matmul %22, %23, %cst_18 {dimension_numbers = #tpu.dot_dimension_numbers<[1], [0], [0], [1], [0, 0, 1, 1], [], []>} : vector<16x512xbf16>, vector<512x128xbf16>, vector<16x128xf32> -> vector<16x128xf32>
    %c0_19 = arith.constant 0 : index
    %c0_20 = arith.constant 0 : index
    %25 = vector.load %arg9[%c0_19, %c0_20] : memref<1x128xf32, #tpu.memory_space<vmem>>, vector<1x128xf32>
    %26 = vector.broadcast %25 : vector<1x128xf32> to vector<16x128xf32>
    %27 = arith.addf %24, %26 : vector<16x128xf32>
    %c0_21 = arith.constant 0 : index
    %c0_22 = arith.constant 0 : index
    %28 = vector.load %arg10[%c0_21, %c0_22] : memref<16x128xf32, #tpu.memory_space<vmem>>, vector<16x128xf32>
    tpu.vector_store %arg10[%c0_21, %c0_22], %27 {strides = array<i32>} : memref<16x128xf32, #tpu.memory_space<vmem>>, vector<16x128xf32>,
    return
  }
  func.func @transform_0(%arg0: i32) -> (i32, i32) {
    %c0_i32 = arith.constant 0 : i32
    %c0_i32_0 = arith.constant 0 : i32
    %c0_i32_1 = arith.constant 0 : i32
    return %c0_i32, %c0_i32_0 : i32, i32
  }
  func.func @transform_1(%arg0: i32) -> (i32, i32) {
    %c0_i32 = arith.constant 0 : i32
    %c0_i32_0 = arith.constant 0 : i32
    %c0_i32_1 = arith.constant 0 : i32
    return %c0_i32, %c0_i32_0 : i32, i32
  }
  func.func @transform_2(%arg0: i32) -> (i32, i32) {
    %c0_i32 = arith.constant 0 : i32
    %c0_i32_0 = arith.constant 0 : i32
    %c0_i32_1 = arith.constant 0 : i32
    return %c0_i32, %c0_i32_0 : i32, i32
  }
  func.func @transform_3(%arg0: i32) -> (i32, i32) {
    %c0_i32 = arith.constant 0 : i32
    %c0_i32_0 = arith.constant 0 : i32
    %c0_i32_1 = arith.constant 0 : i32
    return %c0_i32, %c0_i32_0 : i32, i32
  }
  func.func @transform_4(%arg0: i32) -> (i32, i32) {
    %c0_i32 = arith.constant 0 : i32
    %c0_i32_0 = arith.constant 0 : i32
    %c0_i32_1 = arith.constant 0 : i32
    return %c0_i32, %c0_i32_0 : i32, i32
  }
  func.func @transform_5(%arg0: i32) -> (i32, i32) {
    %c0_i32 = arith.constant 0 : i32
    %c0_i32_0 = arith.constant 0 : i32
    %c0_i32_1 = arith.constant 0 : i32
    return %c0_i32, %c0_i32_0 : i32, i32
  }
  func.func @transform_6(%arg0: i32) -> (i32, i32) {
    %c0_i32 = arith.constant 0 : i32
    %c0_i32_0 = arith.constant 0 : i32
    %c0_i32_1 = arith.constant 0 : i32
    return %c0_i32, %c0_i32_0 : i32, i32
  }
  func.func @transform_7(%arg0: i32) -> (i32, i32) {
    %c0_i32 = arith.constant 0 : i32
    %c0_i32_0 = arith.constant 0 : i32
    %c0_i32_1 = arith.constant 0 : i32
    return %c0_i32, %c0_i32_0 : i32, i32
  }
  func.func @transform_8(%arg0: i32) -> (i32, i32) {
    %c0_i32 = arith.constant 0 : i32
    %c0_i32_0 = arith.constant 0 : i32
    %c0_i32_1 = arith.constant 0 : i32
    return %c0_i32, %c0_i32_0 : i32, i32
  }
  func.func @transform_9(%arg0: i32) -> (i32, i32) {
    %c0_i32 = arith.constant 0 : i32
    %c0_i32_0 = arith.constant 0 : i32
    %c0_i32_1 = arith.constant 0 : i32
    return %c0_i32, %c0_i32_0 : i32, i32
  }
}

</mosaic_0001>

<llo_original>
// kernel: _lambda_.5
$region0: #{_lambda_.5}
  #allocation0 [shape = 'u32[]', space=smem, size = 0x4, offset = 0x4, fixed_abs, tag = 'smem constant byte address 0x4 - core index']
  #allocation1 [shape = 'u32[72,128]{1,0:T(1,128)}', space=vmem, size = 0x9000, scoped, tag = 'internal scratch']
  %s0 = inlined_call_operand.vmem [shape: bf16[2048,36], index: 0, kind: input, shape index: {}]
  %s1 = inlined_call_operand.vmem [shape: bf16[36,128], index: 1, kind: input, shape index: {}]
  %s2 = inlined_call_operand.vmem [shape: f32[1,128], index: 2, kind: input, shape index: {}]
  %s3 = inlined_call_operand.vmem [shape: bf16[2048,128], index: 3, kind: output, shape index: {}]
  %s4 = sld [smem:[#allocation0]]
  $region22: #{_lambda_.5} parent=0
    _
  %s6 = ssub.s32 1, %s4
  %s7 = scalar_select 0, %s6, %s4
  // Predicated region
  $region2: #{_lambda_.5} parent=0 // pred_check
    _
  $region3: #{_lambda_.5} parent=0 // pred_check_branch
    %9 = sbr.rel (0) target = $region5
  $region4: #{_lambda_.5} parent=0 // pred_region
    _
  $region5: #{_lambda_.5} parent=0 // pred_fallthru
    _
  // Predicated region
  $region6: #{_lambda_.5} parent=0 // pred_check
    _
  $region7: #{_lambda_.5} parent=0 // pred_check_branch
    %11 = sbr.rel (0) target = $region9
  $region8: #{_lambda_.5} parent=0 // pred_region
    _
  $region9: #{_lambda_.5} parent=0 // pred_fallthru
    _
  // Predicated region
  $region10: #{_lambda_.5} parent=0 // pred_check
    _
  $region11: #{_lambda_.5} parent=0 // pred_check_branch
    %13 = sbr.rel (0) target = $region13
  $region12: #{_lambda_.5} parent=0 // pred_region
    _
  $region13: #{_lambda_.5} parent=0 // pred_fallthru
    _
  %v15 = vld [vmem:[%s0] sm:$0xf]
  %v16 = vld [vmem:[%s0 + $0x4] sm:$0xf]
  %v17 = vld [vmem:[%s0 + $0x8] sm:$0xf]
  %v18 = vld [vmem:[%s0 + $0xc] sm:$0xf]
  %v19 = vld [vmem:[%s0 + $0x10] sm:$0xf]
  %v20 = vld [vmem:[%s0 + $0x14] sm:$0xf]
  %v21 = vld [vmem:[%s0 + $0x18] sm:$0xf]
  %v22 = vld [vmem:[%s0 + $0x1c] sm:$0xf]
  %v23 = vld [vmem:[%s0 + $0x20] sm:$0xf]
  %v24 = vld [vmem:[%s0 + $0x24] sm:$0xf]
  %v25 = vld [vmem:[%s0 + $0x28] sm:$0xf]
  %v26 = vld [vmem:[%s0 + $0x2c] sm:$0xf]
  %v27 = vld [vmem:[%s0 + $0x30] sm:$0xf]
  %v28 = vld [vmem:[%s0 + $0x34] sm:$0xf]
  %v29 = vld [vmem:[%s0 + $0x38] sm:$0xf]
  %v30 = vld [vmem:[%s0 + $0x3c] sm:$0xf]
  %v31 = vld [vmem:[%s0 + $0x40] sm:$0xf]
  %v32 = vld [vmem:[%s0 + $0x44] sm:$0xf]
  %v33 = vld [vmem:[%s0 + $0x48] sm:$0xf]
  %v34 = vld [vmem:[%s0 + $0x4c] sm:$0xf]
  %v35 = vld [vmem:[%s0 + $0x50] sm:$0xf]
  %v36 = vld [vmem:[%s0 + $0x54] sm:$0xf]
  %v37 = vld [vmem:[%s0 + $0x58] sm:$0xf]
  %v38 = vld [vmem:[%s0 + $0x5c] sm:$0xf]
  %v39 = vld [vmem:[%s0 + $0x60] sm:$0xf]
  %v40 = vld [vmem:[%s0 + $0x64] sm:$0xf]
  %v41 = vld [vmem:[%s0 + $0x68] sm:$0xf]
  %v42 = vld [vmem:[%s0 + $0x6c] sm:$0xf]
  %v43 = vld [vmem:[%s0 + $0x70] sm:$0xf]
  %v44 = vld [vmem:[%s0 + $0x74] sm:$0xf]
  %v45 = vld [vmem:[%s0 + $0x78] sm:$0xf]
  %v46 = vld [vmem:[%s0 + $0x7c] sm:$0xf]
  %v47 = vld [vmem:[%s0 + $0x80] sm:$0xf]
  %v48 = vld [vmem:[%s0 + $0x84] sm:$0xf]
  %v49 = vld [vmem:[%s0 + $0x88] sm:$0xf]
  %v50 = vld [vmem:[%s0 + $0x8c] sm:$0xf]
  %v51 = vld [vmem:[%s0 + $0x90] sm:$0xf]
  %v52 = vld [vmem:[%s0 + $0x94] sm:$0xf]
  %v53 = vld [vmem:[%s0 + $0x98] sm:$0xf]
  %v54 = vld [vmem:[%s0 + $0x9c] sm:$0xf]
  %v55 = vld [vmem:[%s0 + $0xa0] sm:$0xf]
  %v56 = vld [vmem:[%s0 + $0xa4] sm:$0xf]
  %v57 = vld [vmem:[%s0 + $0xa8] sm:$0xf]
  %v58 = vld [vmem:[%s0 + $0xac] sm:$0xf]
  %v59 = vld [vmem:[%s0 + $0xb0] sm:$0xf]
  %v60 = vld [vmem:[%s0 + $0xb4] sm:$0xf]
  %v61 = vld [vmem:[%s0 + $0xb8] sm:$0xf]
  %v62 = vld [vmem:[%s0 + $0xbc] sm:$0xf]
  %v63 = vld [vmem:[%s0 + $0xc0] sm:$0xf]
  %v64 = vld [vmem:[%s0 + $0xc4] sm:$0xf]
  %v65 = vld [vmem:[%s0 + $0xc8] sm:$0xf]
  %v66 = vld [vmem:[%s0 + $0xcc] sm:$0xf]
  %v67 = vld [vmem:[%s0 + $0xd0] sm:$0xf]
  %v68 = vld [vmem:[%s0 + $0xd4] sm:$0xf]
  %v69 = vld [vmem:[%s0 + $0xd8] sm:$0xf]
  %v70 = vld [vmem:[%s0 + $0xdc] sm:$0xf]
  %v71 = vld [vmem:[%s0 + $0xe0] sm:$0xf]
  %v72 = vld [vmem:[%s0 + $0xe4] sm:$0xf]
  %v73 = vld [vmem:[%s0 + $0xe8] sm:$0xf]
  %v74 = vld [vmem:[%s0 + $0xec] sm:$0xf]
  %v75 = vld [vmem:[%s0 + $0xf0] sm:$0xf]
  %v76 = vld [vmem:[%s0 + $0xf4] sm:$0xf]
  %v77 = vld [vmem:[%s0 + $0xf8] sm:$0xf]
  %v78 = vld [vmem:[%s0 + $0xfc] sm:$0xf]
  %v79 = vld [vmem:[%s0 + $0x100] sm:$0xf]
  %v80 = vld [vmem:[%s0 + $0x104] sm:$0xf]
  %v81 = vld [vmem:[%s0 + $0x108] sm:$0xf]
  %v82 = vld [vmem:[%s0 + $0x10c] sm:$0xf]
  %v83 = vld [vmem:[%s0 + $0x110] sm:$0xf]
  %v84 = vld [vmem:[%s0 + $0x114] sm:$0xf]
  %v85 = vld [vmem:[%s0 + $0x118] sm:$0xf]
  %v86 = vld [vmem:[%s0 + $0x11c] sm:$0xf]
  %v87 = vld [vmem:[%s0 + $0x120] sm:$0xf]
  %v88 = vld [vmem:[%s0 + $0x124] sm:$0xf]
  %v89 = vld [vmem:[%s0 + $0x128] sm:$0xf]
  %v90 = vld [vmem:[%s0 + $0x12c] sm:$0xf]
  %v91 = vld [vmem:[%s0 + $0x130] sm:$0xf]
  %v92 = vld [vmem:[%s0 + $0x134] sm:$0xf]
  %v93 = vld [vmem:[%s0 + $0x138] sm:$0xf]
  %v94 = vld [vmem:[%s0 + $0x13c] sm:$0xf]
  %v95 = vld [vmem:[%s0 + $0x140] sm:$0xf]
  %v96 = vld [vmem:[%s0 + $0x144] sm:$0xf]
  %v97 = vld [vmem:[%s0 + $0x148] sm:$0xf]
  %v98 = vld [vmem:[%s0 + $0x14c] sm:$0xf]
  %v99 = vld [vmem:[%s0 + $0x150] sm:$0xf]
  %v100 = vld [vmem:[%s0 + $0x154] sm:$0xf]
  %v101 = vld [vmem:[%s0 + $0x158] sm:$0xf]
  %v102 = vld [vmem:[%s0 + $0x15c] sm:$0xf]
  %v103 = vld [vmem:[%s0 + $0x160] sm:$0xf]
  %v104 = vld [vmem:[%s0 + $0x164] sm:$0xf]
  %v105 = vld [vmem:[%s0 + $0x168] sm:$0xf]
  %v106 = vld [vmem:[%s0 + $0x16c] sm:$0xf]
  %v107 = vld [vmem:[%s0 + $0x170] sm:$0xf]
  %v108 = vld [vmem:[%s0 + $0x174] sm:$0xf]
  %v109 = vld [vmem:[%s0 + $0x178] sm:$0xf]
  %v110 = vld [vmem:[%s0 + $0x17c] sm:$0xf]
  %v111 = vld [vmem:[%s0 + $0x180] sm:$0xf]
  %v112 = vld [vmem:[%s0 + $0x184] sm:$0xf]
  %v113 = vld [vmem:[%s0 + $0x188] sm:$0xf]
  %v114 = vld [vmem:[%s0 + $0x18c] sm:$0xf]
  %v115 = vld [vmem:[%s0 + $0x190] sm:$0xf]
  %v116 = vld [vmem:[%s0 + $0x194] sm:$0xf]
  %v117 = vld [vmem:[%s0 + $0x198] sm:$0xf]
  %v118 = vld [vmem:[%s0 + $0x19c] sm:$0xf]
  %v119 = vld [vmem:[%s0 + $0x1a0] sm:$0xf]
  %v120 = vld [vmem:[%s0 + $0x1a4] sm:$0xf]
  %v121 = vld [vmem:[%s0 + $0x1a8] sm:$0xf]
  %v122 = vld [vmem:[%s0 + $0x1ac] sm:$0xf]
  %v123 = vld [vmem:[%s0 + $0x1b0] sm:$0xf]
  %v124 = vld [vmem:[%s0 + $0x1b4] sm:$0xf]
  %v125 = vld [vmem:[%s0 + $0x1b8] sm:$0xf]
  %v126 = vld [vmem:[%s0 + $0x1bc] sm:$0xf]
  %v127 = vld [vmem:[%s0 + $0x1c0] sm:$0xf]
  %v128 = vld [vmem:[%s0 + $0x1c4] sm:$0xf]
  %v129 = vld [vmem:[%s0 + $0x1c8] sm:$0xf]
  %v130 = vld [vmem:[%s0 + $0x1cc] sm:$0xf]
  %v131 = vld [vmem:[%s0 + $0x1d0] sm:$0xf]
  %v132 = vld [vmem:[%s0 + $0x1d4] sm:$0xf]
  %v133 = vld [vmem:[%s0 + $0x1d8] sm:$0xf]
  %v134 = vld [vmem:[%s0 + $0x1dc] sm:$0xf]
  %v135 = vld [vmem:[%s0 + $0x1e0] sm:$0xf]
  %v136 = vld [vmem:[%s0 + $0x1e4] sm:$0xf]
  %v137 = vld [vmem:[%s0 + $0x1e8] sm:$0xf]
  %v138 = vld [vmem:[%s0 + $0x1ec] sm:$0xf]
  %v139 = vld [vmem:[%s0 + $0x1f0] sm:$0xf]
  %v140 = vld [vmem:[%s0 + $0x1f4] sm:$0xf]
  %v141 = vld [vmem:[%s0 + $0x1f8] sm:$0xf]
  %v142 = vld [vmem:[%s0 + $0x1fc] sm:$0xf]
  %v143 = vld [vmem:[%s0 + $0x200] sm:$0xf]
  %v144 = vld [vmem:[%s0 + $0x204] sm:$0xf]
  %v145 = vld [vmem:[%s0 + $0x208] sm:$0xf]
  %v146 = vld [vmem:[%s0 + $0x20c] sm:$0xf]
  %v147 = vld [vmem:[%s0 + $0x210] sm:$0xf]
  %v148 = vld [vmem:[%s0 + $0x214] sm:$0xf]
  %v149 = vld [vmem:[%s0 + $0x218] sm:$0xf]
  %v150 = vld [vmem:[%s0 + $0x21c] sm:$0xf]
  %v151 = vld [vmem:[%s0 + $0x220] sm:$0xf]
  %v152 = vld [vmem:[%s0 + $0x224] sm:$0xf]
  %v153 = vld [vmem:[%s0 + $0x228] sm:$0xf]
  %v154 = vld [vmem:[%s0 + $0x22c] sm:$0xf]
  %v155 = vld [vmem:[%s0 + $0x230] sm:$0xf]
  %v156 = vld [vmem:[%s0 + $0x234] sm:$0xf]
  %v157 = vld [vmem:[%s0 + $0x238] sm:$0xf]
  %v158 = vld [vmem:[%s0 + $0x23c] sm:$0xf]
  %v159 = vld [vmem:[%s0 + $0x240] sm:$0xf]
  %v160 = vld [vmem:[%s0 + $0x244] sm:$0xf]
  %v161 = vld [vmem:[%s0 + $0x248] sm:$0xf]
  %v162 = vld [vmem:[%s0 + $0x24c] sm:$0xf]
  %v163 = vld [vmem:[%s0 + $0x250] sm:$0xf]
  %v164 = vld [vmem:[%s0 + $0x254] sm:$0xf]
  %v165 = vld [vmem:[%s0 + $0x258] sm:$0xf]
  %v166 = vld [vmem:[%s0 + $0x25c] sm:$0xf]
  %v167 = vld [vmem:[%s0 + $0x260] sm:$0xf]
  %v168 = vld [vmem:[%s0 + $0x264] sm:$0xf]
  %v169 = vld [vmem:[%s0 + $0x268] sm:$0xf]
  %v170 = vld [vmem:[%s0 + $0x26c] sm:$0xf]
  %v171 = vld [vmem:[%s0 + $0x270] sm:$0xf]
  %v172 = vld [vmem:[%s0 + $0x274] sm:$0xf]
  %v173 = vld [vmem:[%s0 + $0x278] sm:$0xf]
  %v174 = vld [vmem:[%s0 + $0x27c] sm:$0xf]
  %v175 = vld [vmem:[%s0 + $0x280] sm:$0xf]
  %v176 = vld [vmem:[%s0 + $0x284] sm:$0xf]
  %v177 = vld [vmem:[%s0 + $0x288] sm:$0xf]
  %v178 = vld [vmem:[%s0 + $0x28c] sm:$0xf]
  %v179 = vld [vmem:[%s0 + $0x290] sm:$0xf]
  %v180 = vld [vmem:[%s0 + $0x294] sm:$0xf]
  %v181 = vld [vmem:[%s0 + $0x298] sm:$0xf]
  %v182 = vld [vmem:[%s0 + $0x29c] sm:$0xf]
  %v183 = vld [vmem:[%s0 + $0x2a0] sm:$0xf]
  %v184 = vld [vmem:[%s0 + $0x2a4] sm:$0xf]
  %v185 = vld [vmem:[%s0 + $0x2a8] sm:$0xf]
  %v186 = vld [vmem:[%s0 + $0x2ac] sm:$0xf]
  %v187 = vld [vmem:[%s0 + $0x2b0] sm:$0xf]
  %v188 = vld [vmem:[%s0 + $0x2b4] sm:$0xf]
  %v189 = vld [vmem:[%s0 + $0x2b8] sm:$0xf]
  %v190 = vld [vmem:[%s0 + $0x2bc] sm:$0xf]
  %v191 = vld [vmem:[%s0 + $0x2c0] sm:$0xf]
  %v192 = vld [vmem:[%s0 + $0x2c4] sm:$0xf]
  %v193 = vld [vmem:[%s0 + $0x2c8] sm:$0xf]
  %v194 = vld [vmem:[%s0 + $0x2cc] sm:$0xf]
  %v195 = vld [vmem:[%s0 + $0x2d0] sm:$0xf]
  %v196 = vld [vmem:[%s0 + $0x2d4] sm:$0xf]
  %v197 = vld [vmem:[%s0 + $0x2d8] sm:$0xf]
  %v198 = vld [vmem:[%s0 + $0x2dc] sm:$0xf]
  %v199 = vld [vmem:[%s0 + $0x2e0] sm:$0xf]
  %v200 = vld [vmem:[%s0 + $0x2e4] sm:$0xf]
  %v201 = vld [vmem:[%s0 + $0x2e8] sm:$0xf]
  %v202 = vld [vmem:[%s0 + $0x2ec] sm:$0xf]
  %v203 = vld [vmem:[%s0 + $0x2f0] sm:$0xf]
  %v204 = vld [vmem:[%s0 + $0x2f4] sm:$0xf]
  %v205 = vld [vmem:[%s0 + $0x2f8] sm:$0xf]
  %v206 = vld [vmem:[%s0 + $0x2fc] sm:$0xf]
  %v207 = vld [vmem:[%s0 + $0x300] sm:$0xf]
  %v208 = vld [vmem:[%s0 + $0x304] sm:$0xf]
  %v209 = vld [vmem:[%s0 + $0x308] sm:$0xf]
  %v210 = vld [vmem:[%s0 + $0x30c] sm:$0xf]
  %v211 = vld [vmem:[%s0 + $0x310] sm:$0xf]
  %v212 = vld [vmem:[%s0 + $0x314] sm:$0xf]
  %v213 = vld [vmem:[%s0 + $0x318] sm:$0xf]
  %v214 = vld [vmem:[%s0 + $0x31c] sm:$0xf]
  %v215 = vld [vmem:[%s0 + $0x320] sm:$0xf]
  %v216 = vld [vmem:[%s0 + $0x324] sm:$0xf]
  %v217 = vld [vmem:[%s0 + $0x328] sm:$0xf]
  %v218 = vld [vmem:[%s0 + $0x32c] sm:$0xf]
  %v219 = vld [vmem:[%s0 + $0x330] sm:$0xf]
  %v220 = vld [vmem:[%s0 + $0x334] sm:$0xf]
  %v221 = vld [vmem:[%s0 + $0x338] sm:$0xf]
  %v222 = vld [vmem:[%s0 + $0x33c] sm:$0xf]
  %v223 = vld [vmem:[%s0 + $0x340] sm:$0xf]
  %v224 = vld [vmem:[%s0 + $0x344] sm:$0xf]
  %v225 = vld [vmem:[%s0 + $0x348] sm:$0xf]
  %v226 = vld [vmem:[%s0 + $0x34c] sm:$0xf]
  %v227 = vld [vmem:[%s0 + $0x350] sm:$0xf]
  %v228 = vld [vmem:[%s0 + $0x354] sm:$0xf]
  %v229 = vld [vmem:[%s0 + $0x358] sm:$0xf]
  %v230 = vld [vmem:[%s0 + $0x35c] sm:$0xf]
  %v231 = vld [vmem:[%s0 + $0x360] sm:$0xf]
  %v232 = vld [vmem:[%s0 + $0x364] sm:$0xf]
  %v233 = vld [vmem:[%s0 + $0x368] sm:$0xf]
  %v234 = vld [vmem:[%s0 + $0x36c] sm:$0xf]
  %v235 = vld [vmem:[%s0 + $0x370] sm:$0xf]
  %v236 = vld [vmem:[%s0 + $0x374] sm:$0xf]
  %v237 = vld [vmem:[%s0 + $0x378] sm:$0xf]
  %v238 = vld [vmem:[%s0 + $0x37c] sm:$0xf]
  %v239 = vld [vmem:[%s0 + $0x380] sm:$0xf]
  %v240 = vld [vmem:[%s0 + $0x384] sm:$0xf]
  %v241 = vld [vmem:[%s0 + $0x388] sm:$0xf]
  %v242 = vld [vmem:[%s0 + $0x38c] sm:$0xf]
  %v243 = vld [vmem:[%s0 + $0x390] sm:$0xf]
  %v244 = vld [vmem:[%s0 + $0x394] sm:$0xf]
  %v245 = vld [vmem:[%s0 + $0x398] sm:$0xf]
  %v246 = vld [vmem:[%s0 + $0x39c] sm:$0xf]
  %v247 = vld [vmem:[%s0 + $0x3a0] sm:$0xf]
  %v248 = vld [vmem:[%s0 + $0x3a4] sm:$0xf]
  %v249 = vld [vmem:[%s0 + $0x3a8] sm:$0xf]
  %v250 = vld [vmem:[%s0 + $0x3ac] sm:$0xf]
  %v251 = vld [vmem:[%s0 + $0x3b0] sm:$0xf]
  %v252 = vld [vmem:[%s0 + $0x3b4] sm:$0xf]
  %v253 = vld [vmem:[%s0 + $0x3b8] sm:$0xf]
  %v254 = vld [vmem:[%s0 + $0x3bc] sm:$0xf]
  %v255 = vld [vmem:[%s0 + $0x3c0] sm:$0xf]
  %v256 = vld [vmem:[%s0 + $0x3c4] sm:$0xf]
  %v257 = vld [vmem:[%s0 + $0x3c8] sm:$0xf]
  %v258 = vld [vmem:[%s0 + $0x3cc] sm:$0xf]
  %v259 = vld [vmem:[%s0 + $0x3d0] sm:$0xf]
  %v260 = vld [vmem:[%s0 + $0x3d4] sm:$0xf]
  %v261 = vld [vmem:[%s0 + $0x3d8] sm:$0xf]
  %v262 = vld [vmem:[%s0 + $0x3dc] sm:$0xf]
  %v263 = vld [vmem:[%s0 + $0x3e0] sm:$0xf]
  %v264 = vld [vmem:[%s0 + $0x3e4] sm:$0xf]
  %v265 = vld [vmem:[%s0 + $0x3e8] sm:$0xf]
  %v266 = vld [vmem:[%s0 + $0x3ec] sm:$0xf]
  %v267 = vld [vmem:[%s0 + $0x3f0] sm:$0xf]
  %v268 = vld [vmem:[%s0 + $0x3f4] sm:$0xf]
  %v269 = vld [vmem:[%s0 + $0x3f8] sm:$0xf]
  %v270 = vld [vmem:[%s0 + $0x3fc] sm:$0xf]
  %v271 = vld [vmem:[%s1] sm:$0xf]
  %v272 = vld [vmem:[%s1 + $0x4] sm:$0xf]
  %v273 = vld [vmem:[%s1 + $0x8] sm:$0xf]
  %v274 = vld [vmem:[%s1 + $0xc] sm:$0xf]
  %v275 = vld [vmem:[%s1 + $0x10] sm:$0x3]
  %v276 = vld [vmem:[%s2] sm:$0x1]
  %v278 = vperm.slane %v276, 0
  %v536 = vunpack.c.l.b16 %v15
  %v537 = vunpack.c.l.b16 %v16
  %v538 = vunpack.c.l.b16 %v17
  %v539 = vunpack.c.l.b16 %v18
  %v540 = vunpack.c.l.b16 %v19
  %v541 = vunpack.c.l.b16 %v20
  %v542 = vunpack.c.l.b16 %v21
  %v543 = vunpack.c.l.b16 %v22
  %v544 = vunpack.c.l.b16 %v23
  %v545 = vunpack.c.l.b16 %v24
  %v546 = vunpack.c.l.b16 %v25
  %v547 = vunpack.c.l.b16 %v26
  %v548 = vunpack.c.l.b16 %v27
  %v549 = vunpack.c.l.b16 %v28
  %v550 = vunpack.c.l.b16 %v29
  %v551 = vunpack.c.l.b16 %v30
  %v552 = vunpack.c.l.b16 %v31
  %v553 = vunpack.c.l.b16 %v32
  %v554 = vunpack.c.l.b16 %v33
  %v555 = vunpack.c.l.b16 %v34
  %v556 = vunpack.c.l.b16 %v35
  %v557 = vunpack.c.l.b16 %v36
  %v558 = vunpack.c.l.b16 %v37
  %v559 = vunpack.c.l.b16 %v38
  %v560 = vunpack.c.l.b16 %v39
  %v561 = vunpack.c.l.b16 %v40
  %v562 = vunpack.c.l.b16 %v41
  %v563 = vunpack.c.l.b16 %v42
  %v564 = vunpack.c.l.b16 %v43
  %v565 = vunpack.c.l.b16 %v44
  %v566 = vunpack.c.l.b16 %v45
  %v567 = vunpack.c.l.b16 %v46
  %v568 = vunpack.c.l.b16 %v47
  %v569 = vunpack.c.l.b16 %v48
  %v570 = vunpack.c.l.b16 %v49
  %v571 = vunpack.c.l.b16 %v50
  %v572 = vunpack.c.l.b16 %v51
  %v573 = vunpack.c.l.b16 %v52
  %v574 = vunpack.c.l.b16 %v53
  %v575 = vunpack.c.l.b16 %v54
  %v576 = vunpack.c.l.b16 %v55
  %v577 = vunpack.c.l.b16 %v56
  %v578 = vunpack.c.l.b16 %v57
  %v579 = vunpack.c.l.b16 %v58
  %v580 = vunpack.c.l.b16 %v59
  %v581 = vunpack.c.l.b16 %v60
  %v582 = vunpack.c.l.b16 %v61
  %v583 = vunpack.c.l.b16 %v62
  %v584 = vunpack.c.l.b16 %v63
  %v585 = vunpack.c.l.b16 %v64
  %v586 = vunpack.c.l.b16 %v65
  %v587 = vunpack.c.l.b16 %v66
  %v588 = vunpack.c.l.b16 %v67
  %v589 = vunpack.c.l.b16 %v68
  %v590 = vunpack.c.l.b16 %v69
  %v591 = vunpack.c.l.b16 %v70
  %v592 = vunpack.c.l.b16 %v71
  %v593 = vunpack.c.l.b16 %v72
  %v594 = vunpack.c.l.b16 %v73
  %v595 = vunpack.c.l.b16 %v74
  %v596 = vunpack.c.l.b16 %v75
  %v597 = vunpack.c.l.b16 %v76
  %v598 = vunpack.c.l.b16 %v77
  %v599 = vunpack.c.l.b16 %v78
  %v600 = vunpack.c.l.b16 %v79
  %v601 = vunpack.c.l.b16 %v80
  %v602 = vunpack.c.l.b16 %v81
  %v603 = vunpack.c.l.b16 %v82
  %v604 = vunpack.c.l.b16 %v83
  %v605 = vunpack.c.l.b16 %v84
  %v606 = vunpack.c.l.b16 %v85
  %v607 = vunpack.c.l.b16 %v86
  %v608 = vunpack.c.l.b16 %v87
  %v609 = vunpack.c.l.b16 %v88
  %v610 = vunpack.c.l.b16 %v89
  %v611 = vunpack.c.l.b16 %v90
  %v612 = vunpack.c.l.b16 %v91
  %v613 = vunpack.c.l.b16 %v92
  %v614 = vunpack.c.l.b16 %v93
  %v615 = vunpack.c.l.b16 %v94
  %v616 = vunpack.c.l.b16 %v95
  %v617 = vunpack.c.l.b16 %v96
  %v618 = vunpack.c.l.b16 %v97
  %v619 = vunpack.c.l.b16 %v98
  %v620 = vunpack.c.l.b16 %v99
  %v621 = vunpack.c.l.b16 %v100
  %v622 = vunpack.c.l.b16 %v101
  %v623 = vunpack.c.l.b16 %v102
  %v624 = vunpack.c.l.b16 %v103
  %v625 = vunpack.c.l.b16 %v104
  %v626 = vunpack.c.l.b16 %v105
  %v627 = vunpack.c.l.b16 %v106
  %v628 = vunpack.c.l.b16 %v107
  %v629 = vunpack.c.l.b16 %v108
  %v630 = vunpack.c.l.b16 %v109
  %v631 = vunpack.c.l.b16 %v110
  %v632 = vunpack.c.l.b16 %v111
  %v633 = vunpack.c.l.b16 %v112
  %v634 = vunpack.c.l.b16 %v113
  %v635 = vunpack.c.l.b16 %v114
  %v636 = vunpack.c.l.b16 %v115
  %v637 = vunpack.c.l.b16 %v116
  %v638 = vunpack.c.l.b16 %v117
  %v639 = vunpack.c.l.b16 %v118
  %v640 = vunpack.c.l.b16 %v119
  %v641 = vunpack.c.l.b16 %v120
  %v642 = vunpack.c.l.b16 %v121
  %v643 = vunpack.c.l.b16 %v122
  %v644 = vunpack.c.l.b16 %v123
  %v645 = vunpack.c.l.b16 %v124
  %v646 = vunpack.c.l.b16 %v125
  %v647 = vunpack.c.l.b16 %v126
  %v648 = vunpack.c.l.b16 %v127
  %v649 = vunpack.c.l.b16 %v128
  %v650 = vunpack.c.l.b16 %v129
  %v651 = vunpack.c.l.b16 %v130
  %v652 = vunpack.c.l.b16 %v131
  %v653 = vunpack.c.l.b16 %v132
  %v654 = vunpack.c.l.b16 %v133
  %v655 = vunpack.c.l.b16 %v134
  %v656 = vunpack.c.l.b16 %v135
  %v657 = vunpack.c.l.b16 %v136
  %v658 = vunpack.c.l.b16 %v137
  %v659 = vunpack.c.l.b16 %v138
  %v660 = vunpack.c.l.b16 %v139
  %v661 = vunpack.c.l.b16 %v140
  %v662 = vunpack.c.l.b16 %v141
  %v663 = vunpack.c.l.b16 %v142
  %v664 = vunpack.c.l.b16 %v143
  %v665 = vunpack.c.l.b16 %v144
  %v666 = vunpack.c.l.b16 %v145
  %v667 = vunpack.c.l.b16 %v146
  %v668 = vunpack.c.l.b16 %v147
  %v669 = vunpack.c.l.b16 %v148
  %v670 = vunpack.c.l.b16 %v149
  %v671 = vunpack.c.l.b16 %v150
  %v672 = vunpack.c.l.b16 %v151
  %v673 = vunpack.c.l.b16 %v152
  %v674 = vunpack.c.l.b16 %v153
  %v675 = vunpack.c.l.b16 %v154
  %v676 = vunpack.c.l.b16 %v155
  %v677 = vunpack.c.l.b16 %v156
  %v678 = vunpack.c.l.b16 %v157
  %v679 = vunpack.c.l.b16 %v158
  %v680 = vunpack.c.l.b16 %v159
  %v681 = vunpack.c.l.b16 %v160
  %v682 = vunpack.c.l.b16 %v161
  %v683 = vunpack.c.l.b16 %v162
  %v684 = vunpack.c.l.b16 %v163
  %v685 = vunpack.c.l.b16 %v164
  %v686 = vunpack.c.l.b16 %v165
  %v687 = vunpack.c.l.b16 %v166
  %v688 = vunpack.c.l.b16 %v167
  %v689 = vunpack.c.l.b16 %v168
  %v690 = vunpack.c.l.b16 %v169
  %v691 = vunpack.c.l.b16 %v170
  %v692 = vunpack.c.l.b16 %v171
  %v693 = vunpack.c.l.b16 %v172
  %v694 = vunpack.c.l.b16 %v173
  %v695 = vunpack.c.l.b16 %v174
  %v696 = vunpack.c.l.b16 %v175
  %v697 = vunpack.c.l.b16 %v176
  %v698 = vunpack.c.l.b16 %v177
  %v699 = vunpack.c.l.b16 %v178
  %v700 = vunpack.c.l.b16 %v179
  %v701 = vunpack.c.l.b16 %v180
  %v702 = vunpack.c.l.b16 %v181
  %v703 = vunpack.c.l.b16 %v182
  %v704 = vunpack.c.l.b16 %v183
  %v705 = vunpack.c.l.b16 %v184
  %v706 = vunpack.c.l.b16 %v185
  %v707 = vunpack.c.l.b16 %v186
  %v708 = vunpack.c.l.b16 %v187
  %v709 = vunpack.c.l.b16 %v188
  %v710 = vunpack.c.l.b16 %v189
  %v711 = vunpack.c.l.b16 %v190
  %v712 = vunpack.c.l.b16 %v191
  %v713 = vunpack.c.l.b16 %v192
  %v714 = vunpack.c.l.b16 %v193
  %v715 = vunpack.c.l.b16 %v194
  %v716 = vunpack.c.l.b16 %v195
  %v717 = vunpack.c.l.b16 %v196
  %v718 = vunpack.c.l.b16 %v197
  %v719 = vunpack.c.l.b16 %v198
  %v720 = vunpack.c.l.b16 %v199
  %v721 = vunpack.c.l.b16 %v200
  %v722 = vunpack.c.l.b16 %v201
  %v723 = vunpack.c.l.b16 %v202
  %v724 = vunpack.c.l.b16 %v203
  %v725 = vunpack.c.l.b16 %v204
  %v726 = vunpack.c.l.b16 %v205
  %v727 = vunpack.c.l.b16 %v206
  %v728 = vunpack.c.l.b16 %v207
  %v729 = vunpack.c.l.b16 %v208
  %v730 = vunpack.c.l.b16 %v209
  %v731 = vunpack.c.l.b16 %v210
  %v732 = vunpack.c.l.b16 %v211
  %v733 = vunpack.c.l.b16 %v212
  %v734 = vunpack.c.l.b16 %v213
  %v735 = vunpack.c.l.b16 %v214
  %v736 = vunpack.c.l.b16 %v215
  %v737 = vunpack.c.l.b16 %v216
  %v738 = vunpack.c.l.b16 %v217
  %v739 = vunpack.c.l.b16 %v218
  %v740 = vunpack.c.l.b16 %v219
  %v741 = vunpack.c.l.b16 %v220
  %v742 = vunpack.c.l.b16 %v221
  %v743 = vunpack.c.l.b16 %v222
  %v744 = vunpack.c.l.b16 %v223
  %v745 = vunpack.c.l.b16 %v224
  %v746 = vunpack.c.l.b16 %v225
  %v747 = vunpack.c.l.b16 %v226
  %v748 = vunpack.c.l.b16 %v227
  %v749 = vunpack.c.l.b16 %v228
  %v750 = vunpack.c.l.b16 %v229
  %v751 = vunpack.c.l.b16 %v230
  %v752 = vunpack.c.l.b16 %v231
  %v753 = vunpack.c.l.b16 %v232
  %v754 = vunpack.c.l.b16 %v233
  %v755 = vunpack.c.l.b16 %v234
  %v756 = vunpack.c.l.b16 %v235
  %v757 = vunpack.c.l.b16 %v236
  %v758 = vunpack.c.l.b16 %v237
  %v759 = vunpack.c.l.b16 %v238
  %v760 = vunpack.c.l.b16 %v239
  %v761 = vunpack.c.l.b16 %v240
  %v762 = vunpack.c.l.b16 %v241
  %v763 = vunpack.c.l.b16 %v242
  %v764 = vunpack.c.l.b16 %v243
  %v765 = vunpack.c.l.b16 %v244
  %v766 = vunpack.c.l.b16 %v245
  %v767 = vunpack.c.l.b16 %v246
  %v768 = vunpack.c.l.b16 %v247
  %v769 = vunpack.c.l.b16 %v248
  %v770 = vunpack.c.l.b16 %v249
  %v771 = vunpack.c.l.b16 %v250
  %v772 = vunpack.c.l.b16 %v251
  %v773 = vunpack.c.l.b16 %v252
  %v774 = vunpack.c.l.b16 %v253
  %v775 = vunpack.c.l.b16 %v254
  %v776 = vunpack.c.l.b16 %v255
  %v777 = vunpack.c.l.b16 %v256
  %v778 = vunpack.c.l.b16 %v257
  %v779 = vunpack.c.l.b16 %v258
  %v780 = vunpack.c.l.b16 %v259
  %v781 = vunpack.c.l.b16 %v260
  %v782 = vunpack.c.l.b16 %v261
  %v783 = vunpack.c.l.b16 %v262
  %v784 = vunpack.c.l.b16 %v263
  %v785 = vunpack.c.l.b16 %v264
  %v786 = vunpack.c.l.b16 %v265
  %v787 = vunpack.c.l.b16 %v266
  %v788 = vunpack.c.l.b16 %v267
  %v789 = vunpack.c.l.b16 %v268
  %v790 = vunpack.c.l.b16 %v269
  %v791 = vunpack.c.l.b16 %v270
  %v792 = vpack.c.b16 %v537, %v536
  %v793 = vpack.c.b16 %v539, %v538
  %v794 = vpack.c.b16 %v541, %v540
  %v795 = vpack.c.b16 %v543, %v542
  %v796 = vpack.c.b16 %v545, %v544
  %v797 = vpack.c.b16 %v547, %v546
  %v798 = vpack.c.b16 %v549, %v548
  %v799 = vpack.c.b16 %v551, %v550
  %v800 = vpack.c.b16 %v553, %v552
  %v801 = vpack.c.b16 %v555, %v554
  %v802 = vpack.c.b16 %v557, %v556
  %v803 = vpack.c.b16 %v559, %v558
  %v804 = vpack.c.b16 %v561, %v560
  %v805 = vpack.c.b16 %v563, %v562
  %v806 = vpack.c.b16 %v565, %v564
  %v807 = vpack.c.b16 %v567, %v566
  %v808 = vpack.c.b16 %v569, %v568
  %v809 = vpack.c.b16 %v571, %v570
  %v810 = vpack.c.b16 %v573, %v572
  %v811 = vpack.c.b16 %v575, %v574
  %v812 = vpack.c.b16 %v577, %v576
  %v813 = vpack.c.b16 %v579, %v578
  %v814 = vpack.c.b16 %v581, %v580
  %v815 = vpack.c.b16 %v583, %v582
  %v816 = vpack.c.b16 %v585, %v584
  %v817 = vpack.c.b16 %v587, %v586
  %v818 = vpack.c.b16 %v589, %v588
  %v819 = vpack.c.b16 %v591, %v590
  %v820 = vpack.c.b16 %v593, %v592
  %v821 = vpack.c.b16 %v595, %v594
  %v822 = vpack.c.b16 %v597, %v596
  %v823 = vpack.c.b16 %v599, %v598
  %v824 = vpack.c.b16 %v601, %v600
  %v825 = vpack.c.b16 %v603, %v602
  %v826 = vpack.c.b16 %v605, %v604
  %v827 = vpack.c.b16 %v607, %v606
  %v828 = vpack.c.b16 %v609, %v608
  %v829 = vpack.c.b16 %v611, %v610
  %v830 = vpack.c.b16 %v613, %v612
  %v831 = vpack.c.b16 %v615, %v614
  %v832 = vpack.c.b16 %v617, %v616
  %v833 = vpack.c.b16 %v619, %v618
  %v834 = vpack.c.b16 %v621, %v620
  %v835 = vpack.c.b16 %v623, %v622
  %v836 = vpack.c.b16 %v625, %v624
  %v837 = vpack.c.b16 %v627, %v626
  %v838 = vpack.c.b16 %v629, %v628
  %v839 = vpack.c.b16 %v631, %v630
  %v840 = vpack.c.b16 %v633, %v632
  %v841 = vpack.c.b16 %v635, %v634
  %v842 = vpack.c.b16 %v637, %v636
  %v843 = vpack.c.b16 %v639, %v638
  %v844 = vpack.c.b16 %v641, %v640
  %v845 = vpack.c.b16 %v643, %v642
  %v846 = vpack.c.b16 %v645, %v644
  %v847 = vpack.c.b16 %v647, %v646
  %v848 = vpack.c.b16 %v649, %v648
  %v849 = vpack.c.b16 %v651, %v650
  %v850 = vpack.c.b16 %v653, %v652
  %v851 = vpack.c.b16 %v655, %v654
  %v852 = vpack.c.b16 %v657, %v656
  %v853 = vpack.c.b16 %v659, %v658
  %v854 = vpack.c.b16 %v661, %v660
  %v855 = vpack.c.b16 %v663, %v662
  %v856 = vpack.c.b16 %v665, %v664
  %v857 = vpack.c.b16 %v667, %v666
  %v858 = vpack.c.b16 %v669, %v668
  %v859 = vpack.c.b16 %v671, %v670
  %v860 = vpack.c.b16 %v673, %v672
  %v861 = vpack.c.b16 %v675, %v674
  %v862 = vpack.c.b16 %v677, %v676
  %v863 = vpack.c.b16 %v679, %v678
  %v864 = vpack.c.b16 %v681, %v680
  %v865 = vpack.c.b16 %v683, %v682
  %v866 = vpack.c.b16 %v685, %v684
  %v867 = vpack.c.b16 %v687, %v686
  %v868 = vpack.c.b16 %v689, %v688
  %v869 = vpack.c.b16 %v691, %v690
  %v870 = vpack.c.b16 %v693, %v692
  %v871 = vpack.c.b16 %v695, %v694
  %v872 = vpack.c.b16 %v697, %v696
  %v873 = vpack.c.b16 %v699, %v698
  %v874 = vpack.c.b16 %v701, %v700
  %v875 = vpack.c.b16 %v703, %v702
  %v876 = vpack.c.b16 %v705, %v704
  %v877 = vpack.c.b16 %v707, %v706
  %v878 = vpack.c.b16 %v709, %v708
  %v879 = vpack.c.b16 %v711, %v710
  %v880 = vpack.c.b16 %v713, %v712
  %v881 = vpack.c.b16 %v715, %v714
  %v882 = vpack.c.b16 %v717, %v716
  %v883 = vpack.c.b16 %v719, %v718
  %v884 = vpack.c.b16 %v721, %v720
  %v885 = vpack.c.b16 %v723, %v722
  %v886 = vpack.c.b16 %v725, %v724
  %v887 = vpack.c.b16 %v727, %v726
  %v888 = vpack.c.b16 %v729, %v728
  %v889 = vpack.c.b16 %v731, %v730
  %v890 = vpack.c.b16 %v733, %v732
  %v891 = vpack.c.b16 %v735, %v734
  %v892 = vpack.c.b16 %v737, %v736
  %v893 = vpack.c.b16 %v739, %v738
  %v894 = vpack.c.b16 %v741, %v740
  %v895 = vpack.c.b16 %v743, %v742
  %v896 = vpack.c.b16 %v745, %v744
  %v897 = vpack.c.b16 %v747, %v746
  %v898 = vpack.c.b16 %v749, %v748
  %v899 = vpack.c.b16 %v751, %v750
  %v900 = vpack.c.b16 %v753, %v752
  %v901 = vpack.c.b16 %v755, %v754
  %v902 = vpack.c.b16 %v757, %v756
  %v903 = vpack.c.b16 %v759, %v758
  %v904 = vpack.c.b16 %v761, %v760
  %v905 = vpack.c.b16 %v763, %v762
  %v906 = vpack.c.b16 %v765, %v764
  %v907 = vpack.c.b16 %v767, %v766
  %v908 = vpack.c.b16 %v769, %v768
  %v909 = vpack.c.b16 %v771, %v770
  %v910 = vpack.c.b16 %v773, %v772
  %v911 = vpack.c.b16 %v775, %v774
  %v912 = vpack.c.b16 %v777, %v776
  %v913 = vpack.c.b16 %v779, %v778
  %v914 = vpack.c.b16 %v781, %v780
  %v915 = vpack.c.b16 %v783, %v782
  %v916 = vpack.c.b16 %v785, %v784
  %v917 = vpack.c.b16 %v787, %v786
  %v918 = vpack.c.b16 %v789, %v788
  %v919 = vpack.c.b16 %v791, %v790
  %v925 = vunpack.c.l.b16 %v271
  %v926 = vunpack.c.l.b16 %v272
  %v927 = vunpack.c.l.b16 %v273
  %v928 = vunpack.c.l.b16 %v274
  %v929 = vunpack.c.l.b16 %v275
  %v930 = vpack.c.b16 %v926, %v925
  %v931 = vpack.c.b16 %v928, %v927
  %v932 = vpack.c.b16 %v929, %v929
  %vm935 = vcmask 293888
  %v937 = vsel %vm935, %v792, 0
  %v940 = vsel %vm935, %v793, 0
  %v943 = vsel %vm935, %v794, 0
  %v946 = vsel %vm935, %v795, 0
  %v949 = vsel %vm935, %v796, 0
  %v952 = vsel %vm935, %v797, 0
  %v955 = vsel %vm935, %v798, 0
  %v958 = vsel %vm935, %v799, 0
  %v961 = vsel %vm935, %v800, 0
  %v964 = vsel %vm935, %v801, 0
  %v967 = vsel %vm935, %v802, 0
  %v970 = vsel %vm935, %v803, 0
  %v973 = vsel %vm935, %v804, 0
  %v976 = vsel %vm935, %v805, 0
  %v979 = vsel %vm935, %v806, 0
  %v982 = vsel %vm935, %v807, 0
  %v985 = vsel %vm935, %v808, 0
  %v988 = vsel %vm935, %v809, 0
  %v991 = vsel %vm935, %v810, 0
  %v994 = vsel %vm935, %v811, 0
  %v997 = vsel %vm935, %v812, 0
  %v1000 = vsel %vm935, %v813, 0
  %v1003 = vsel %vm935, %v814, 0
  %v1006 = vsel %vm935, %v815, 0
  %v1009 = vsel %vm935, %v816, 0
  %v1012 = vsel %vm935, %v817, 0
  %v1015 = vsel %vm935, %v818, 0
  %v1018 = vsel %vm935, %v819, 0
  %v1021 = vsel %vm935, %v820, 0
  %v1024 = vsel %vm935, %v821, 0
  %v1027 = vsel %vm935, %v822, 0
  %v1030 = vsel %vm935, %v823, 0
  %v1033 = vsel %vm935, %v824, 0
  %v1036 = vsel %vm935, %v825, 0
  %v1039 = vsel %vm935, %v826, 0
  %v1042 = vsel %vm935, %v827, 0
  %v1045 = vsel %vm935, %v828, 0
  %v1048 = vsel %vm935, %v829, 0
  %v1051 = vsel %vm935, %v830, 0
  %v1054 = vsel %vm935, %v831, 0
  %v1057 = vsel %vm935, %v832, 0
  %v1060 = vsel %vm935, %v833, 0
  %v1063 = vsel %vm935, %v834, 0
  %v1066 = vsel %vm935, %v835, 0
  %v1069 = vsel %vm935, %v836, 0
  %v1072 = vsel %vm935, %v837, 0
  %v1075 = vsel %vm935, %v838, 0
  %v1078 = vsel %vm935, %v839, 0
  %v1081 = vsel %vm935, %v840, 0
  %v1084 = vsel %vm935, %v841, 0
  %v1087 = vsel %vm935, %v842, 0
  %v1090 = vsel %vm935, %v843, 0
  %v1093 = vsel %vm935, %v844, 0
  %v1096 = vsel %vm935, %v845, 0
  %v1099 = vsel %vm935, %v846, 0
  %v1102 = vsel %vm935, %v847, 0
  %v1105 = vsel %vm935, %v848, 0
  %v1108 = vsel %vm935, %v849, 0
  %v1111 = vsel %vm935, %v850, 0
  %v1114 = vsel %vm935, %v851, 0
  %v1117 = vsel %vm935, %v852, 0
  %v1120 = vsel %vm935, %v853, 0
  %v1123 = vsel %vm935, %v854, 0
  %v1126 = vsel %vm935, %v855, 0
  %v1129 = vsel %vm935, %v856, 0
  %v1132 = vsel %vm935, %v857, 0
  %v1135 = vsel %vm935, %v858, 0
  %v1138 = vsel %vm935, %v859, 0
  %v1141 = vsel %vm935, %v860, 0
  %v1144 = vsel %vm935, %v861, 0
  %v1147 = vsel %vm935, %v862, 0
  %v1150 = vsel %vm935, %v863, 0
  %v1153 = vsel %vm935, %v864, 0
  %v1156 = vsel %vm935, %v865, 0
  %v1159 = vsel %vm935, %v866, 0
  %v1162 = vsel %vm935, %v867, 0
  %v1165 = vsel %vm935, %v868, 0
  %v1168 = vsel %vm935, %v869, 0
  %v1171 = vsel %vm935, %v870, 0
  %v1174 = vsel %vm935, %v871, 0
  %v1177 = vsel %vm935, %v872, 0
  %v1180 = vsel %vm935, %v873, 0
  %v1183 = vsel %vm935, %v874, 0
  %v1186 = vsel %vm935, %v875, 0
  %v1189 = vsel %vm935, %v876, 0
  %v1192 = vsel %vm935, %v877, 0
  %v1195 = vsel %vm935, %v878, 0
  %v1198 = vsel %vm935, %v879, 0
  %v1201 = vsel %vm935, %v880, 0
  %v1204 = vsel %vm935, %v881, 0
  %v1207 = vsel %vm935, %v882, 0
  %v1210 = vsel %vm935, %v883, 0
  %v1213 = vsel %vm935, %v884, 0
  %v1216 = vsel %vm935, %v885, 0
  %v1219 = vsel %vm935, %v886, 0
  %v1222 = vsel %vm935, %v887, 0
  %v1225 = vsel %vm935, %v888, 0
  %v1228 = vsel %vm935, %v889, 0
  %v1231 = vsel %vm935, %v890, 0
  %v1234 = vsel %vm935, %v891, 0
  %v1237 = vsel %vm935, %v892, 0
  %v1240 = vsel %vm935, %v893, 0
  %v1243 = vsel %vm935, %v894, 0
  %v1246 = vsel %vm935, %v895, 0
  %v1249 = vsel %vm935, %v896, 0
  %v1252 = vsel %vm935, %v897, 0
  %v1255 = vsel %vm935, %v898, 0
  %v1258 = vsel %vm935, %v899, 0
  %v1261 = vsel %vm935, %v900, 0
  %v1264 = vsel %vm935, %v901, 0
  %v1267 = vsel %vm935, %v902, 0
  %v1270 = vsel %vm935, %v903, 0
  %v1273 = vsel %vm935, %v904, 0
  %v1276 = vsel %vm935, %v905, 0
  %v1279 = vsel %vm935, %v906, 0
  %v1282 = vsel %vm935, %v907, 0
  %v1285 = vsel %vm935, %v908, 0
  %v1288 = vsel %vm935, %v909, 0
  %v1291 = vsel %vm935, %v910, 0
  %v1294 = vsel %vm935, %v911, 0
  %v1297 = vsel %vm935, %v912, 0
  %v1300 = vsel %vm935, %v913, 0
  %v1303 = vsel %vm935, %v914, 0
  %v1306 = vsel %vm935, %v915, 0
  %v1309 = vsel %vm935, %v916, 0
  %v1312 = vsel %vm935, %v917, 0
  %v1315 = vsel %vm935, %v918, 0
  %v1318 = vsel %vm935, %v919, 0
  %vm1320 = vcmask 1041408
  %v1322 = vsel %vm1320, %v932, 0
  %1324 = vmatpush.bf16.msra.mxu0 0
  %1325 = vmatpush.bf16.msra.mxu0 0
  %1326 = vmatpush.bf16.msra.mxu0 0
  %1327 = vmatpush.bf16.msra.mxu0 0
  %1328 = vmatpush.bf16.msra.mxu0 0
  %1329 = vmatpush.bf16.msra.mxu0 %v1322
  %1330 = vmatpush.bf16.msra.mxu0 %v931
  %1331 = vmatpush.bf16.msra.mxu0 %v930
  %1332 = vmatmul.bf16.gmra.mxu0 %v937
  %v1333 = vpop.f32.mrf.mxu0
  %v1334 = vadd.f32 %v278, %v1333
  %v1335 = vpop.f32.mrf.mxu0
  %v1336 = vadd.f32 %v278, %v1335
  %1337 = vmatmul.bf16.gmra.mxu0 %v940
  %v1338 = vpop.f32.mrf.mxu0
  %v1339 = vadd.f32 %v278, %v1338
  %v1340 = vpop.f32.mrf.mxu0
  %v1341 = vadd.f32 %v278, %v1340
  %1342 = vmatmul.bf16.gmra.mxu0 %v943
  %v1343 = vpop.f32.mrf.mxu0
  %v1344 = vadd.f32 %v278, %v1343
  %v1345 = vpop.f32.mrf.mxu0
  %v1346 = vadd.f32 %v278, %v1345
  %1347 = vmatmul.bf16.gmra.mxu0 %v946
  %v1348 = vpop.f32.mrf.mxu0
  %v1349 = vadd.f32 %v278, %v1348
  %v1350 = vpop.f32.mrf.mxu0
  %v1351 = vadd.f32 %v278, %v1350
  %1352 = vmatmul.bf16.gmra.mxu0 %v949
  %v1353 = vpop.f32.mrf.mxu0
  %v1354 = vadd.f32 %v278, %v1353
  %v1355 = vpop.f32.mrf.mxu0
  %v1356 = vadd.f32 %v278, %v1355
  %1357 = vmatmul.bf16.gmra.mxu0 %v952
  %v1358 = vpop.f32.mrf.mxu0
  %v1359 = vadd.f32 %v278, %v1358
  %v1360 = vpop.f32.mrf.mxu0
  %v1361 = vadd.f32 %v278, %v1360
  %1362 = vmatmul.bf16.gmra.mxu0 %v955
  %v1363 = vpop.f32.mrf.mxu0
  %v1364 = vadd.f32 %v278, %v1363
  %v1365 = vpop.f32.mrf.mxu0
  %v1366 = vadd.f32 %v278, %v1365
  %1367 = vmatmul.bf16.gmra.mxu0 %v958
  %v1368 = vpop.f32.mrf.mxu0
  %v1369 = vadd.f32 %v278, %v1368
  %v1370 = vpop.f32.mrf.mxu0
  %v1371 = vadd.f32 %v278, %v1370
  %1372 = vmatmul.bf16.gmra.mxu0 %v961
  %v1373 = vpop.f32.mrf.mxu0
  %v1374 = vadd.f32 %v278, %v1373
  %v1375 = vpop.f32.mrf.mxu0
  %v1376 = vadd.f32 %v278, %v1375
  %1377 = vmatmul.bf16.gmra.mxu0 %v964
  %v1378 = vpop.f32.mrf.mxu0
  %v1379 = vadd.f32 %v278, %v1378
  %v1380 = vpop.f32.mrf.mxu0
  %v1381 = vadd.f32 %v278, %v1380
  %1382 = vmatmul.bf16.gmra.mxu0 %v967
  %v1383 = vpop.f32.mrf.mxu0
  %v1384 = vadd.f32 %v278, %v1383
  %v1385 = vpop.f32.mrf.mxu0
  %v1386 = vadd.f32 %v278, %v1385
  %1387 = vmatmul.bf16.gmra.mxu0 %v970
  %v1388 = vpop.f32.mrf.mxu0
  %v1389 = vadd.f32 %v278, %v1388
  %v1390 = vpop.f32.mrf.mxu0
  %v1391 = vadd.f32 %v278, %v1390
  %1392 = vmatmul.bf16.gmra.mxu0 %v973
  %v1393 = vpop.f32.mrf.mxu0
  %v1394 = vadd.f32 %v278, %v1393
  %v1395 = vpop.f32.mrf.mxu0
  %v1396 = vadd.f32 %v278, %v1395
  %1397 = vmatmul.bf16.gmra.mxu0 %v976
  %v1398 = vpop.f32.mrf.mxu0
  %v1399 = vadd.f32 %v278, %v1398
  %v1400 = vpop.f32.mrf.mxu0
  %v1401 = vadd.f32 %v278, %v1400
  %1402 = vmatmul.bf16.gmra.mxu0 %v979
  %v1403 = vpop.f32.mrf.mxu0
  %v1404 = vadd.f32 %v278, %v1403
  %v1405 = vpop.f32.mrf.mxu0
  %v1406 = vadd.f32 %v278, %v1405
  %1407 = vmatmul.bf16.gmra.mxu0 %v982
  %v1408 = vpop.f32.mrf.mxu0
  %v1409 = vadd.f32 %v278, %v1408
  %v1410 = vpop.f32.mrf.mxu0
  %v1411 = vadd.f32 %v278, %v1410
  %1412 = vmatmul.bf16.gmra.mxu0 %v985
  %v1413 = vpop.f32.mrf.mxu0
  %v1414 = vadd.f32 %v278, %v1413
  %v1415 = vpop.f32.mrf.mxu0
  %v1416 = vadd.f32 %v278, %v1415
  %1417 = vmatmul.bf16.gmra.mxu0 %v988
  %v1418 = vpop.f32.mrf.mxu0
  %v1419 = vadd.f32 %v278, %v1418
  %v1420 = vpop.f32.mrf.mxu0
  %v1421 = vadd.f32 %v278, %v1420
  %1422 = vmatmul.bf16.gmra.mxu0 %v991
  %v1423 = vpop.f32.mrf.mxu0
  %v1424 = vadd.f32 %v278, %v1423
  %v1425 = vpop.f32.mrf.mxu0
  %v1426 = vadd.f32 %v278, %v1425
  %1427 = vmatmul.bf16.gmra.mxu0 %v994
  %v1428 = vpop.f32.mrf.mxu0
  %v1429 = vadd.f32 %v278, %v1428
  %v1430 = vpop.f32.mrf.mxu0
  %v1431 = vadd.f32 %v278, %v1430
  %1432 = vmatmul.bf16.gmra.mxu0 %v997
  %v1433 = vpop.f32.mrf.mxu0
  %v1434 = vadd.f32 %v278, %v1433
  %v1435 = vpop.f32.mrf.mxu0
  %v1436 = vadd.f32 %v278, %v1435
  %1437 = vmatmul.bf16.gmra.mxu0 %v1000
  %v1438 = vpop.f32.mrf.mxu0
  %v1439 = vadd.f32 %v278, %v1438
  %v1440 = vpop.f32.mrf.mxu0
  %v1441 = vadd.f32 %v278, %v1440
  %1442 = vmatmul.bf16.gmra.mxu0 %v1003
  %v1443 = vpop.f32.mrf.mxu0
  %v1444 = vadd.f32 %v278, %v1443
  %v1445 = vpop.f32.mrf.mxu0
  %v1446 = vadd.f32 %v278, %v1445
  %1447 = vmatmul.bf16.gmra.mxu0 %v1006
  %v1448 = vpop.f32.mrf.mxu0
  %v1449 = vadd.f32 %v278, %v1448
  %v1450 = vpop.f32.mrf.mxu0
  %v1451 = vadd.f32 %v278, %v1450
  %1452 = vmatmul.bf16.gmra.mxu0 %v1009
  %v1453 = vpop.f32.mrf.mxu0
  %v1454 = vadd.f32 %v278, %v1453
  %v1455 = vpop.f32.mrf.mxu0
  %v1456 = vadd.f32 %v278, %v1455
  %1457 = vmatmul.bf16.gmra.mxu0 %v1012
  %v1458 = vpop.f32.mrf.mxu0
  %v1459 = vadd.f32 %v278, %v1458
  %v1460 = vpop.f32.mrf.mxu0
  %v1461 = vadd.f32 %v278, %v1460
  %1462 = vmatmul.bf16.gmra.mxu0 %v1015
  %v1463 = vpop.f32.mrf.mxu0
  %v1464 = vadd.f32 %v278, %v1463
  %v1465 = vpop.f32.mrf.mxu0
  %v1466 = vadd.f32 %v278, %v1465
  %1467 = vmatmul.bf16.gmra.mxu0 %v1018
  %v1468 = vpop.f32.mrf.mxu0
  %v1469 = vadd.f32 %v278, %v1468
  %v1470 = vpop.f32.mrf.mxu0
  %v1471 = vadd.f32 %v278, %v1470
  %1472 = vmatmul.bf16.gmra.mxu0 %v1021
  %v1473 = vpop.f32.mrf.mxu0
  %v1474 = vadd.f32 %v278, %v1473
  %v1475 = vpop.f32.mrf.mxu0
  %v1476 = vadd.f32 %v278, %v1475
  %1477 = vmatmul.bf16.gmra.mxu0 %v1024
  %v1478 = vpop.f32.mrf.mxu0
  %v1479 = vadd.f32 %v278, %v1478
  %v1480 = vpop.f32.mrf.mxu0
  %v1481 = vadd.f32 %v278, %v1480
  %1482 = vmatmul.bf16.gmra.mxu0 %v1027
  %v1483 = vpop.f32.mrf.mxu0
  %v1484 = vadd.f32 %v278, %v1483
  %v1485 = vpop.f32.mrf.mxu0
  %v1486 = vadd.f32 %v278, %v1485
  %1487 = vmatmul.bf16.gmra.mxu0 %v1030
  %v1488 = vpop.f32.mrf.mxu0
  %v1489 = vadd.f32 %v278, %v1488
  %v1490 = vpop.f32.mrf.mxu0
  %v1491 = vadd.f32 %v278, %v1490
  %1492 = vmatmul.bf16.gmra.mxu0 %v1033
  %v1493 = vpop.f32.mrf.mxu0
  %v1494 = vadd.f32 %v278, %v1493
  %v1495 = vpop.f32.mrf.mxu0
  %v1496 = vadd.f32 %v278, %v1495
  %1497 = vmatmul.bf16.gmra.mxu0 %v1036
  %v1498 = vpop.f32.mrf.mxu0
  %v1499 = vadd.f32 %v278, %v1498
  %v1500 = vpop.f32.mrf.mxu0
  %v1501 = vadd.f32 %v278, %v1500
  %1502 = vmatmul.bf16.gmra.mxu0 %v1039
  %v1503 = vpop.f32.mrf.mxu0
  %v1504 = vadd.f32 %v278, %v1503
  %v1505 = vpop.f32.mrf.mxu0
  %v1506 = vadd.f32 %v278, %v1505
  %1507 = vmatmul.bf16.gmra.mxu0 %v1042
  %v1508 = vpop.f32.mrf.mxu0
  %v1509 = vadd.f32 %v278, %v1508
  %v1510 = vpop.f32.mrf.mxu0
  %v1511 = vadd.f32 %v278, %v1510
  %1512 = vmatmul.bf16.gmra.mxu0 %v1045
  %v1513 = vpop.f32.mrf.mxu0
  %v1514 = vadd.f32 %v278, %v1513
  %v1515 = vpop.f32.mrf.mxu0
  %v1516 = vadd.f32 %v278, %v1515
  %1517 = vmatmul.bf16.gmra.mxu0 %v1048
  %v1518 = vpop.f32.mrf.mxu0
  %v1519 = vadd.f32 %v278, %v1518
  %v1520 = vpop.f32.mrf.mxu0
  %v1521 = vadd.f32 %v278, %v1520
  %1522 = vmatmul.bf16.gmra.mxu0 %v1051
  %v1523 = vpop.f32.mrf.mxu0
  %v1524 = vadd.f32 %v278, %v1523
  %v1525 = vpop.f32.mrf.mxu0
  %v1526 = vadd.f32 %v278, %v1525
  %1527 = vmatmul.bf16.gmra.mxu0 %v1054
  %v1528 = vpop.f32.mrf.mxu0
  %v1529 = vadd.f32 %v278, %v1528
  %v1530 = vpop.f32.mrf.mxu0
  %v1531 = vadd.f32 %v278, %v1530
  %1532 = vmatmul.bf16.gmra.mxu0 %v1057
  %v1533 = vpop.f32.mrf.mxu0
  %v1534 = vadd.f32 %v278, %v1533
  %v1535 = vpop.f32.mrf.mxu0
  %v1536 = vadd.f32 %v278, %v1535
  %1537 = vmatmul.bf16.gmra.mxu0 %v1060
  %v1538 = vpop.f32.mrf.mxu0
  %v1539 = vadd.f32 %v278, %v1538
  %v1540 = vpop.f32.mrf.mxu0
  %v1541 = vadd.f32 %v278, %v1540
  %1542 = vmatmul.bf16.gmra.mxu0 %v1063
  %v1543 = vpop.f32.mrf.mxu0
  %v1544 = vadd.f32 %v278, %v1543
  %v1545 = vpop.f32.mrf.mxu0
  %v1546 = vadd.f32 %v278, %v1545
  %1547 = vmatmul.bf16.gmra.mxu0 %v1066
  %v1548 = vpop.f32.mrf.mxu0
  %v1549 = vadd.f32 %v278, %v1548
  %v1550 = vpop.f32.mrf.mxu0
  %v1551 = vadd.f32 %v278, %v1550
  %1552 = vmatmul.bf16.gmra.mxu0 %v1069
  %v1553 = vpop.f32.mrf.mxu0
  %v1554 = vadd.f32 %v278, %v1553
  %v1555 = vpop.f32.mrf.mxu0
  %v1556 = vadd.f32 %v278, %v1555
  %1557 = vmatmul.bf16.gmra.mxu0 %v1072
  %v1558 = vpop.f32.mrf.mxu0
  %v1559 = vadd.f32 %v278, %v1558
  %v1560 = vpop.f32.mrf.mxu0
  %v1561 = vadd.f32 %v278, %v1560
  %1562 = vmatmul.bf16.gmra.mxu0 %v1075
  %v1563 = vpop.f32.mrf.mxu0
  %v1564 = vadd.f32 %v278, %v1563
  %v1565 = vpop.f32.mrf.mxu0
  %v1566 = vadd.f32 %v278, %v1565
  %1567 = vmatmul.bf16.gmra.mxu0 %v1078
  %v1568 = vpop.f32.mrf.mxu0
  %v1569 = vadd.f32 %v278, %v1568
  %v1570 = vpop.f32.mrf.mxu0
  %v1571 = vadd.f32 %v278, %v1570
  %1572 = vmatmul.bf16.gmra.mxu0 %v1081
  %v1573 = vpop.f32.mrf.mxu0
  %v1574 = vadd.f32 %v278, %v1573
  %v1575 = vpop.f32.mrf.mxu0
  %v1576 = vadd.f32 %v278, %v1575
  %1577 = vmatmul.bf16.gmra.mxu0 %v1084
  %v1578 = vpop.f32.mrf.mxu0
  %v1579 = vadd.f32 %v278, %v1578
  %v1580 = vpop.f32.mrf.mxu0
  %v1581 = vadd.f32 %v278, %v1580
  %1582 = vmatmul.bf16.gmra.mxu0 %v1087
  %v1583 = vpop.f32.mrf.mxu0
  %v1584 = vadd.f32 %v278, %v1583
  %v1585 = vpop.f32.mrf.mxu0
  %v1586 = vadd.f32 %v278, %v1585
  %1587 = vmatmul.bf16.gmra.mxu0 %v1090
  %v1588 = vpop.f32.mrf.mxu0
  %v1589 = vadd.f32 %v278, %v1588
  %v1590 = vpop.f32.mrf.mxu0
  %v1591 = vadd.f32 %v278, %v1590
  %1592 = vmatmul.bf16.gmra.mxu0 %v1093
  %v1593 = vpop.f32.mrf.mxu0
  %v1594 = vadd.f32 %v278, %v1593
  %v1595 = vpop.f32.mrf.mxu0
  %v1596 = vadd.f32 %v278, %v1595
  %1597 = vmatmul.bf16.gmra.mxu0 %v1096
  %v1598 = vpop.f32.mrf.mxu0
  %v1599 = vadd.f32 %v278, %v1598
  %v1600 = vpop.f32.mrf.mxu0
  %v1601 = vadd.f32 %v278, %v1600
  %1602 = vmatmul.bf16.gmra.mxu0 %v1099
  %v1603 = vpop.f32.mrf.mxu0
  %v1604 = vadd.f32 %v278, %v1603
  %v1605 = vpop.f32.mrf.mxu0
  %v1606 = vadd.f32 %v278, %v1605
  %1607 = vmatmul.bf16.gmra.mxu0 %v1102
  %v1608 = vpop.f32.mrf.mxu0
  %v1609 = vadd.f32 %v278, %v1608
  %v1610 = vpop.f32.mrf.mxu0
  %v1611 = vadd.f32 %v278, %v1610
  %1612 = vmatmul.bf16.gmra.mxu0 %v1105
  %v1613 = vpop.f32.mrf.mxu0
  %v1614 = vadd.f32 %v278, %v1613
  %v1615 = vpop.f32.mrf.mxu0
  %v1616 = vadd.f32 %v278, %v1615
  %1617 = vmatmul.bf16.gmra.mxu0 %v1108
  %v1618 = vpop.f32.mrf.mxu0
  %v1619 = vadd.f32 %v278, %v1618
  %v1620 = vpop.f32.mrf.mxu0
  %v1621 = vadd.f32 %v278, %v1620
  %1622 = vmatmul.bf16.gmra.mxu0 %v1111
  %v1623 = vpop.f32.mrf.mxu0
  %v1624 = vadd.f32 %v278, %v1623
  %v1625 = vpop.f32.mrf.mxu0
  %v1626 = vadd.f32 %v278, %v1625
  %1627 = vmatmul.bf16.gmra.mxu0 %v1114
  %v1628 = vpop.f32.mrf.mxu0
  %v1629 = vadd.f32 %v278, %v1628
  %v1630 = vpop.f32.mrf.mxu0
  %v1631 = vadd.f32 %v278, %v1630
  %1632 = vmatmul.bf16.gmra.mxu0 %v1117
  %v1633 = vpop.f32.mrf.mxu0
  %v1634 = vadd.f32 %v278, %v1633
  %v1635 = vpop.f32.mrf.mxu0
  %v1636 = vadd.f32 %v278, %v1635
  %1637 = vmatmul.bf16.gmra.mxu0 %v1120
  %v1638 = vpop.f32.mrf.mxu0
  %v1639 = vadd.f32 %v278, %v1638
  %v1640 = vpop.f32.mrf.mxu0
  %v1641 = vadd.f32 %v278, %v1640
  %1642 = vmatmul.bf16.gmra.mxu0 %v1123
  %v1643 = vpop.f32.mrf.mxu0
  %v1644 = vadd.f32 %v278, %v1643
  %v1645 = vpop.f32.mrf.mxu0
  %v1646 = vadd.f32 %v278, %v1645
  %1647 = vmatmul.bf16.gmra.mxu0 %v1126
  %v1648 = vpop.f32.mrf.mxu0
  %v1649 = vadd.f32 %v278, %v1648
  %v1650 = vpop.f32.mrf.mxu0
  %v1651 = vadd.f32 %v278, %v1650
  %1652 = vmatmul.bf16.gmra.mxu0 %v1129
  %v1653 = vpop.f32.mrf.mxu0
  %v1654 = vadd.f32 %v278, %v1653
  %v1655 = vpop.f32.mrf.mxu0
  %v1656 = vadd.f32 %v278, %v1655
  %1657 = vmatmul.bf16.gmra.mxu0 %v1132
  %v1658 = vpop.f32.mrf.mxu0
  %v1659 = vadd.f32 %v278, %v1658
  %v1660 = vpop.f32.mrf.mxu0
  %v1661 = vadd.f32 %v278, %v1660
  %1662 = vmatmul.bf16.gmra.mxu0 %v1135
  %v1663 = vpop.f32.mrf.mxu0
  %v1664 = vadd.f32 %v278, %v1663
  %v1665 = vpop.f32.mrf.mxu0
  %v1666 = vadd.f32 %v278, %v1665
  %1667 = vmatmul.bf16.gmra.mxu0 %v1138
  %v1668 = vpop.f32.mrf.mxu0
  %v1669 = vadd.f32 %v278, %v1668
  %v1670 = vpop.f32.mrf.mxu0
  %v1671 = vadd.f32 %v278, %v1670
  %1672 = vmatmul.bf16.gmra.mxu0 %v1141
  %v1673 = vpop.f32.mrf.mxu0
  %v1674 = vadd.f32 %v278, %v1673
  %v1675 = vpop.f32.mrf.mxu0
  %v1676 = vadd.f32 %v278, %v1675
  %1677 = vmatmul.bf16.gmra.mxu0 %v1144
  %v1678 = vpop.f32.mrf.mxu0
  %v1679 = vadd.f32 %v278, %v1678
  %v1680 = vpop.f32.mrf.mxu0
  %v1681 = vadd.f32 %v278, %v1680
  %1682 = vmatmul.bf16.gmra.mxu0 %v1147
  %v1683 = vpop.f32.mrf.mxu0
  %v1684 = vadd.f32 %v278, %v1683
  %v1685 = vpop.f32.mrf.mxu0
  %v1686 = vadd.f32 %v278, %v1685
  %1687 = vmatmul.bf16.gmra.mxu0 %v1150
  %v1688 = vpop.f32.mrf.mxu0
  %v1689 = vadd.f32 %v278, %v1688
  %v1690 = vpop.f32.mrf.mxu0
  %v1691 = vadd.f32 %v278, %v1690
  %1692 = vmatmul.bf16.gmra.mxu0 %v1153
  %v1693 = vpop.f32.mrf.mxu0
  %v1694 = vadd.f32 %v278, %v1693
  %v1695 = vpop.f32.mrf.mxu0
  %v1696 = vadd.f32 %v278, %v1695
  %1697 = vmatmul.bf16.gmra.mxu0 %v1156
  %v1698 = vpop.f32.mrf.mxu0
  %v1699 = vadd.f32 %v278, %v1698
  %v1700 = vpop.f32.mrf.mxu0
  %v1701 = vadd.f32 %v278, %v1700
  %1702 = vmatmul.bf16.gmra.mxu0 %v1159
  %v1703 = vpop.f32.mrf.mxu0
  %v1704 = vadd.f32 %v278, %v1703
  %v1705 = vpop.f32.mrf.mxu0
  %v1706 = vadd.f32 %v278, %v1705
  %1707 = vmatmul.bf16.gmra.mxu0 %v1162
  %v1708 = vpop.f32.mrf.mxu0
  %v1709 = vadd.f32 %v278, %v1708
  %v1710 = vpop.f32.mrf.mxu0
  %v1711 = vadd.f32 %v278, %v1710
  %1712 = vmatmul.bf16.gmra.mxu0 %v1165
  %v1713 = vpop.f32.mrf.mxu0
  %v1714 = vadd.f32 %v278, %v1713
  %v1715 = vpop.f32.mrf.mxu0
  %v1716 = vadd.f32 %v278, %v1715
  %1717 = vmatmul.bf16.gmra.mxu0 %v1168
  %v1718 = vpop.f32.mrf.mxu0
  %v1719 = vadd.f32 %v278, %v1718
  %v1720 = vpop.f32.mrf.mxu0
  %v1721 = vadd.f32 %v278, %v1720
  %1722 = vmatmul.bf16.gmra.mxu0 %v1171
  %v1723 = vpop.f32.mrf.mxu0
  %v1724 = vadd.f32 %v278, %v1723
  %v1725 = vpop.f32.mrf.mxu0
  %v1726 = vadd.f32 %v278, %v1725
  %1727 = vmatmul.bf16.gmra.mxu0 %v1174
  %v1728 = vpop.f32.mrf.mxu0
  %v1729 = vadd.f32 %v278, %v1728
  %v1730 = vpop.f32.mrf.mxu0
  %v1731 = vadd.f32 %v278, %v1730
  %1732 = vmatmul.bf16.gmra.mxu0 %v1177
  %v1733 = vpop.f32.mrf.mxu0
  %v1734 = vadd.f32 %v278, %v1733
  %v1735 = vpop.f32.mrf.mxu0
  %v1736 = vadd.f32 %v278, %v1735
  %1737 = vmatmul.bf16.gmra.mxu0 %v1180
  %v1738 = vpop.f32.mrf.mxu0
  %v1739 = vadd.f32 %v278, %v1738
  %v1740 = vpop.f32.mrf.mxu0
  %v1741 = vadd.f32 %v278, %v1740
  %1742 = vmatmul.bf16.gmra.mxu0 %v1183
  %v1743 = vpop.f32.mrf.mxu0
  %v1744 = vadd.f32 %v278, %v1743
  %v1745 = vpop.f32.mrf.mxu0
  %v1746 = vadd.f32 %v278, %v1745
  %1747 = vmatmul.bf16.gmra.mxu0 %v1186
  %v1748 = vpop.f32.mrf.mxu0
  %v1749 = vadd.f32 %v278, %v1748
  %v1750 = vpop.f32.mrf.mxu0
  %v1751 = vadd.f32 %v278, %v1750
  %1752 = vmatmul.bf16.gmra.mxu0 %v1189
  %v1753 = vpop.f32.mrf.mxu0
  %v1754 = vadd.f32 %v278, %v1753
  %v1755 = vpop.f32.mrf.mxu0
  %v1756 = vadd.f32 %v278, %v1755
  %1757 = vmatmul.bf16.gmra.mxu0 %v1192
  %v1758 = vpop.f32.mrf.mxu0
  %v1759 = vadd.f32 %v278, %v1758
  %v1760 = vpop.f32.mrf.mxu0
  %v1761 = vadd.f32 %v278, %v1760
  %1762 = vmatmul.bf16.gmra.mxu0 %v1195
  %v1763 = vpop.f32.mrf.mxu0
  %v1764 = vadd.f32 %v278, %v1763
  %v1765 = vpop.f32.mrf.mxu0
  %v1766 = vadd.f32 %v278, %v1765
  %1767 = vmatmul.bf16.gmra.mxu0 %v1198
  %v1768 = vpop.f32.mrf.mxu0
  %v1769 = vadd.f32 %v278, %v1768
  %v1770 = vpop.f32.mrf.mxu0
  %v1771 = vadd.f32 %v278, %v1770
  %1772 = vmatmul.bf16.gmra.mxu0 %v1201
  %v1773 = vpop.f32.mrf.mxu0
  %v1774 = vadd.f32 %v278, %v1773
  %v1775 = vpop.f32.mrf.mxu0
  %v1776 = vadd.f32 %v278, %v1775
  %1777 = vmatmul.bf16.gmra.mxu0 %v1204
  %v1778 = vpop.f32.mrf.mxu0
  %v1779 = vadd.f32 %v278, %v1778
  %v1780 = vpop.f32.mrf.mxu0
  %v1781 = vadd.f32 %v278, %v1780
  %1782 = vmatmul.bf16.gmra.mxu0 %v1207
  %v1783 = vpop.f32.mrf.mxu0
  %v1784 = vadd.f32 %v278, %v1783
  %v1785 = vpop.f32.mrf.mxu0
  %v1786 = vadd.f32 %v278, %v1785
  %1787 = vmatmul.bf16.gmra.mxu0 %v1210
  %v1788 = vpop.f32.mrf.mxu0
  %v1789 = vadd.f32 %v278, %v1788
  %v1790 = vpop.f32.mrf.mxu0
  %v1791 = vadd.f32 %v278, %v1790
  %1792 = vmatmul.bf16.gmra.mxu0 %v1213
  %v1793 = vpop.f32.mrf.mxu0
  %v1794 = vadd.f32 %v278, %v1793
  %v1795 = vpop.f32.mrf.mxu0
  %v1796 = vadd.f32 %v278, %v1795
  %1797 = vmatmul.bf16.gmra.mxu0 %v1216
  %v1798 = vpop.f32.mrf.mxu0
  %v1799 = vadd.f32 %v278, %v1798
  %v1800 = vpop.f32.mrf.mxu0
  %v1801 = vadd.f32 %v278, %v1800
  %1802 = vmatmul.bf16.gmra.mxu0 %v1219
  %v1803 = vpop.f32.mrf.mxu0
  %v1804 = vadd.f32 %v278, %v1803
  %v1805 = vpop.f32.mrf.mxu0
  %v1806 = vadd.f32 %v278, %v1805
  %1807 = vmatmul.bf16.gmra.mxu0 %v1222
  %v1808 = vpop.f32.mrf.mxu0
  %v1809 = vadd.f32 %v278, %v1808
  %v1810 = vpop.f32.mrf.mxu0
  %v1811 = vadd.f32 %v278, %v1810
  %1812 = vmatmul.bf16.gmra.mxu0 %v1225
  %v1813 = vpop.f32.mrf.mxu0
  %v1814 = vadd.f32 %v278, %v1813
  %v1815 = vpop.f32.mrf.mxu0
  %v1816 = vadd.f32 %v278, %v1815
  %1817 = vmatmul.bf16.gmra.mxu0 %v1228
  %v1818 = vpop.f32.mrf.mxu0
  %v1819 = vadd.f32 %v278, %v1818
  %v1820 = vpop.f32.mrf.mxu0
  %v1821 = vadd.f32 %v278, %v1820
  %1822 = vmatmul.bf16.gmra.mxu0 %v1231
  %v1823 = vpop.f32.mrf.mxu0
  %v1824 = vadd.f32 %v278, %v1823
  %v1825 = vpop.f32.mrf.mxu0
  %v1826 = vadd.f32 %v278, %v1825
  %1827 = vmatmul.bf16.gmra.mxu0 %v1234
  %v1828 = vpop.f32.mrf.mxu0
  %v1829 = vadd.f32 %v278, %v1828
  %v1830 = vpop.f32.mrf.mxu0
  %v1831 = vadd.f32 %v278, %v1830
  %1832 = vmatmul.bf16.gmra.mxu0 %v1237
  %v1833 = vpop.f32.mrf.mxu0
  %v1834 = vadd.f32 %v278, %v1833
  %v1835 = vpop.f32.mrf.mxu0
  %v1836 = vadd.f32 %v278, %v1835
  %1837 = vmatmul.bf16.gmra.mxu0 %v1240
  %v1838 = vpop.f32.mrf.mxu0
  %v1839 = vadd.f32 %v278, %v1838
  %v1840 = vpop.f32.mrf.mxu0
  %v1841 = vadd.f32 %v278, %v1840
  %1842 = vmatmul.bf16.gmra.mxu0 %v1243
  %v1843 = vpop.f32.mrf.mxu0
  %v1844 = vadd.f32 %v278, %v1843
  %v1845 = vpop.f32.mrf.mxu0
  %v1846 = vadd.f32 %v278, %v1845
  %1847 = vmatmul.bf16.gmra.mxu0 %v1246
  %v1848 = vpop.f32.mrf.mxu0
  %v1849 = vadd.f32 %v278, %v1848
  %v1850 = vpop.f32.mrf.mxu0
  %v1851 = vadd.f32 %v278, %v1850
  %1852 = vmatmul.bf16.gmra.mxu0 %v1249
  %v1853 = vpop.f32.mrf.mxu0
  %v1854 = vadd.f32 %v278, %v1853
  %v1855 = vpop.f32.mrf.mxu0
  %v1856 = vadd.f32 %v278, %v1855
  %1857 = vmatmul.bf16.gmra.mxu0 %v1252
  %v1858 = vpop.f32.mrf.mxu0
  %v1859 = vadd.f32 %v278, %v1858
  %v1860 = vpop.f32.mrf.mxu0
  %v1861 = vadd.f32 %v278, %v1860
  %1862 = vmatmul.bf16.gmra.mxu0 %v1255
  %v1863 = vpop.f32.mrf.mxu0
  %v1864 = vadd.f32 %v278, %v1863
  %v1865 = vpop.f32.mrf.mxu0
  %v1866 = vadd.f32 %v278, %v1865
  %1867 = vmatmul.bf16.gmra.mxu0 %v1258
  %v1868 = vpop.f32.mrf.mxu0
  %v1869 = vadd.f32 %v278, %v1868
  %v1870 = vpop.f32.mrf.mxu0
  %v1871 = vadd.f32 %v278, %v1870
  %1872 = vmatmul.bf16.gmra.mxu0 %v1261
  %v1873 = vpop.f32.mrf.mxu0
  %v1874 = vadd.f32 %v278, %v1873
  %v1875 = vpop.f32.mrf.mxu0
  %v1876 = vadd.f32 %v278, %v1875
  %1877 = vmatmul.bf16.gmra.mxu0 %v1264
  %v1878 = vpop.f32.mrf.mxu0
  %v1879 = vadd.f32 %v278, %v1878
  %v1880 = vpop.f32.mrf.mxu0
  %v1881 = vadd.f32 %v278, %v1880
  %1882 = vmatmul.bf16.gmra.mxu0 %v1267
  %v1883 = vpop.f32.mrf.mxu0
  %v1884 = vadd.f32 %v278, %v1883
  %v1885 = vpop.f32.mrf.mxu0
  %v1886 = vadd.f32 %v278, %v1885
  %1887 = vmatmul.bf16.gmra.mxu0 %v1270
  %v1888 = vpop.f32.mrf.mxu0
  %v1889 = vadd.f32 %v278, %v1888
  %v1890 = vpop.f32.mrf.mxu0
  %v1891 = vadd.f32 %v278, %v1890
  %1892 = vmatmul.bf16.gmra.mxu0 %v1273
  %v1893 = vpop.f32.mrf.mxu0
  %v1894 = vadd.f32 %v278, %v1893
  %v1895 = vpop.f32.mrf.mxu0
  %v1896 = vadd.f32 %v278, %v1895
  %1897 = vmatmul.bf16.gmra.mxu0 %v1276
  %v1898 = vpop.f32.mrf.mxu0
  %v1899 = vadd.f32 %v278, %v1898
  %v1900 = vpop.f32.mrf.mxu0
  %v1901 = vadd.f32 %v278, %v1900
  %1902 = vmatmul.bf16.gmra.mxu0 %v1279
  %v1903 = vpop.f32.mrf.mxu0
  %v1904 = vadd.f32 %v278, %v1903
  %v1905 = vpop.f32.mrf.mxu0
  %v1906 = vadd.f32 %v278, %v1905
  %1907 = vmatmul.bf16.gmra.mxu0 %v1282
  %v1908 = vpop.f32.mrf.mxu0
  %v1909 = vadd.f32 %v278, %v1908
  %v1910 = vpop.f32.mrf.mxu0
  %v1911 = vadd.f32 %v278, %v1910
  %1912 = vmatmul.bf16.gmra.mxu0 %v1285
  %v1913 = vpop.f32.mrf.mxu0
  %v1914 = vadd.f32 %v278, %v1913
  %v1915 = vpop.f32.mrf.mxu0
  %v1916 = vadd.f32 %v278, %v1915
  %1917 = vmatmul.bf16.gmra.mxu0 %v1288
  %v1918 = vpop.f32.mrf.mxu0
  %v1919 = vadd.f32 %v278, %v1918
  %v1920 = vpop.f32.mrf.mxu0
  %v1921 = vadd.f32 %v278, %v1920
  %1922 = vmatmul.bf16.gmra.mxu0 %v1291
  %v1923 = vpop.f32.mrf.mxu0
  %v1924 = vadd.f32 %v278, %v1923
  %v1925 = vpop.f32.mrf.mxu0
  %v1926 = vadd.f32 %v278, %v1925
  %1927 = vmatmul.bf16.gmra.mxu0 %v1294
  %v1928 = vpop.f32.mrf.mxu0
  %v1929 = vadd.f32 %v278, %v1928
  %v1930 = vpop.f32.mrf.mxu0
  %v1931 = vadd.f32 %v278, %v1930
  %1932 = vmatmul.bf16.gmra.mxu0 %v1297
  %v1933 = vpop.f32.mrf.mxu0
  %v1934 = vadd.f32 %v278, %v1933
  %v1935 = vpop.f32.mrf.mxu0
  %v1936 = vadd.f32 %v278, %v1935
  %1937 = vmatmul.bf16.gmra.mxu0 %v1300
  %v1938 = vpop.f32.mrf.mxu0
  %v1939 = vadd.f32 %v278, %v1938
  %v1940 = vpop.f32.mrf.mxu0
  %v1941 = vadd.f32 %v278, %v1940
  %1942 = vmatmul.bf16.gmra.mxu0 %v1303
  %v1943 = vpop.f32.mrf.mxu0
  %v1944 = vadd.f32 %v278, %v1943
  %v1945 = vpop.f32.mrf.mxu0
  %v1946 = vadd.f32 %v278, %v1945
  %1947 = vmatmul.bf16.gmra.mxu0 %v1306
  %v1948 = vpop.f32.mrf.mxu0
  %v1949 = vadd.f32 %v278, %v1948
  %v1950 = vpop.f32.mrf.mxu0
  %v1951 = vadd.f32 %v278, %v1950
  %1952 = vmatmul.bf16.gmra.mxu0 %v1309
  %v1953 = vpop.f32.mrf.mxu0
  %v1954 = vadd.f32 %v278, %v1953
  %v1955 = vpop.f32.mrf.mxu0
  %v1956 = vadd.f32 %v278, %v1955
  %1957 = vmatmul.bf16.gmra.mxu0 %v1312
  %v1958 = vpop.f32.mrf.mxu0
  %v1959 = vadd.f32 %v278, %v1958
  %v1960 = vpop.f32.mrf.mxu0
  %v1961 = vadd.f32 %v278, %v1960
  %1962 = vmatmul.bf16.gmra.mxu0 %v1315
  %v1963 = vpop.f32.mrf.mxu0
  %v1964 = vadd.f32 %v278, %v1963
  %v1965 = vpop.f32.mrf.mxu0
  %v1966 = vadd.f32 %v278, %v1965
  %1967 = vmatmul.bf16.gmra.mxu0 %v1318
  %v1968 = vpop.f32.mrf.mxu0
  %v1969 = vadd.f32 %v278, %v1968
  %v1970 = vpop.f32.mrf.mxu0
  %v1971 = vadd.f32 %v278, %v1970
  %1972 = vdwg.mxu0
  %v1973 = vmax.f32 %v1334, 0.0
  %v1974 = vmax.f32 %v1336, 0.0
  %v1975 = vmax.f32 %v1339, 0.0
  %v1976 = vmax.f32 %v1341, 0.0
  %v1977 = vmax.f32 %v1344, 0.0
  %v1978 = vmax.f32 %v1346, 0.0
  %v1979 = vmax.f32 %v1349, 0.0
  %v1980 = vmax.f32 %v1351, 0.0
  %v1981 = vmax.f32 %v1354, 0.0
  %v1982 = vmax.f32 %v1356, 0.0
  %v1983 = vmax.f32 %v1359, 0.0
  %v1984 = vmax.f32 %v1361, 0.0
  %v1985 = vmax.f32 %v1364, 0.0
  %v1986 = vmax.f32 %v1366, 0.0
  %v1987 = vmax.f32 %v1369, 0.0
  %v1988 = vmax.f32 %v1371, 0.0
  %v1989 = vmax.f32 %v1374, 0.0
  %v1990 = vmax.f32 %v1376, 0.0
  %v1991 = vmax.f32 %v1379, 0.0
  %v1992 = vmax.f32 %v1381, 0.0
  %v1993 = vmax.f32 %v1384, 0.0
  %v1994 = vmax.f32 %v1386, 0.0
  %v1995 = vmax.f32 %v1389, 0.0
  %v1996 = vmax.f32 %v1391, 0.0
  %v1997 = vmax.f32 %v1394, 0.0
  %v1998 = vmax.f32 %v1396, 0.0
  %v1999 = vmax.f32 %v1399, 0.0
  %v2000 = vmax.f32 %v1401, 0.0
  %v2001 = vmax.f32 %v1404, 0.0
  %v2002 = vmax.f32 %v1406, 0.0
  %v2003 = vmax.f32 %v1409, 0.0
  %v2004 = vmax.f32 %v1411, 0.0
  %v2005 = vmax.f32 %v1414, 0.0
  %v2006 = vmax.f32 %v1416, 0.0
  %v2007 = vmax.f32 %v1419, 0.0
  %v2008 = vmax.f32 %v1421, 0.0
  %v2009 = vmax.f32 %v1424, 0.0
  %v2010 = vmax.f32 %v1426, 0.0
  %v2011 = vmax.f32 %v1429, 0.0
  %v2012 = vmax.f32 %v1431, 0.0
  %v2013 = vmax.f32 %v1434, 0.0
  %v2014 = vmax.f32 %v1436, 0.0
  %v2015 = vmax.f32 %v1439, 0.0
  %v2016 = vmax.f32 %v1441, 0.0
  %v2017 = vmax.f32 %v1444, 0.0
  %v2018 = vmax.f32 %v1446, 0.0
  %v2019 = vmax.f32 %v1449, 0.0
  %v2020 = vmax.f32 %v1451, 0.0
  %v2021 = vmax.f32 %v1454, 0.0
  %v2022 = vmax.f32 %v1456, 0.0
  %v2023 = vmax.f32 %v1459, 0.0
  %v2024 = vmax.f32 %v1461, 0.0
  %v2025 = vmax.f32 %v1464, 0.0
  %v2026 = vmax.f32 %v1466, 0.0
  %v2027 = vmax.f32 %v1469, 0.0
  %v2028 = vmax.f32 %v1471, 0.0
  %v2029 = vmax.f32 %v1474, 0.0
  %v2030 = vmax.f32 %v1476, 0.0
  %v2031 = vmax.f32 %v1479, 0.0
  %v2032 = vmax.f32 %v1481, 0.0
  %v2033 = vmax.f32 %v1484, 0.0
  %v2034 = vmax.f32 %v1486, 0.0
  %v2035 = vmax.f32 %v1489, 0.0
  %v2036 = vmax.f32 %v1491, 0.0
  %v2037 = vmax.f32 %v1494, 0.0
  %v2038 = vmax.f32 %v1496, 0.0
  %v2039 = vmax.f32 %v1499, 0.0
  %v2040 = vmax.f32 %v1501, 0.0
  %v2041 = vmax.f32 %v1504, 0.0
  %v2042 = vmax.f32 %v1506, 0.0
  %v2043 = vmax.f32 %v1509, 0.0
  %v2044 = vmax.f32 %v1511, 0.0
  %v2045 = vmax.f32 %v1514, 0.0
  %v2046 = vmax.f32 %v1516, 0.0
  %v2047 = vmax.f32 %v1519, 0.0
  %v2048 = vmax.f32 %v1521, 0.0
  %v2049 = vmax.f32 %v1524, 0.0
  %v2050 = vmax.f32 %v1526, 0.0
  %v2051 = vmax.f32 %v1529, 0.0
  %v2052 = vmax.f32 %v1531, 0.0
  %v2053 = vmax.f32 %v1534, 0.0
  %v2054 = vmax.f32 %v1536, 0.0
  %v2055 = vmax.f32 %v1539, 0.0
  %v2056 = vmax.f32 %v1541, 0.0
  %v2057 = vmax.f32 %v1544, 0.0
  %v2058 = vmax.f32 %v1546, 0.0
  %v2059 = vmax.f32 %v1549, 0.0
  %v2060 = vmax.f32 %v1551, 0.0
  %v2061 = vmax.f32 %v1554, 0.0
  %v2062 = vmax.f32 %v1556, 0.0
  %v2063 = vmax.f32 %v1559, 0.0
  %v2064 = vmax.f32 %v1561, 0.0
  %v2065 = vmax.f32 %v1564, 0.0
  %v2066 = vmax.f32 %v1566, 0.0
  %v2067 = vmax.f32 %v1569, 0.0
  %v2068 = vmax.f32 %v1571, 0.0
  %v2069 = vmax.f32 %v1574, 0.0
  %v2070 = vmax.f32 %v1576, 0.0
  %v2071 = vmax.f32 %v1579, 0.0
  %v2072 = vmax.f32 %v1581, 0.0
  %v2073 = vmax.f32 %v1584, 0.0
  %v2074 = vmax.f32 %v1586, 0.0
  %v2075 = vmax.f32 %v1589, 0.0
  %v2076 = vmax.f32 %v1591, 0.0
  %v2077 = vmax.f32 %v1594, 0.0
  %v2078 = vmax.f32 %v1596, 0.0
  %v2079 = vmax.f32 %v1599, 0.0
  %v2080 = vmax.f32 %v1601, 0.0
  %v2081 = vmax.f32 %v1604, 0.0
  %v2082 = vmax.f32 %v1606, 0.0
  %v2083 = vmax.f32 %v1609, 0.0
  %v2084 = vmax.f32 %v1611, 0.0
  %v2085 = vmax.f32 %v1614, 0.0
  %v2086 = vmax.f32 %v1616, 0.0
  %v2087 = vmax.f32 %v1619, 0.0
  %v2088 = vmax.f32 %v1621, 0.0
  %v2089 = vmax.f32 %v1624, 0.0
  %v2090 = vmax.f32 %v1626, 0.0
  %v2091 = vmax.f32 %v1629, 0.0
  %v2092 = vmax.f32 %v1631, 0.0
  %v2093 = vmax.f32 %v1634, 0.0
  %v2094 = vmax.f32 %v1636, 0.0
  %v2095 = vmax.f32 %v1639, 0.0
  %v2096 = vmax.f32 %v1641, 0.0
  %v2097 = vmax.f32 %v1644, 0.0
  %v2098 = vmax.f32 %v1646, 0.0
  %v2099 = vmax.f32 %v1649, 0.0
  %v2100 = vmax.f32 %v1651, 0.0
  %v2101 = vmax.f32 %v1654, 0.0
  %v2102 = vmax.f32 %v1656, 0.0
  %v2103 = vmax.f32 %v1659, 0.0
  %v2104 = vmax.f32 %v1661, 0.0
  %v2105 = vmax.f32 %v1664, 0.0
  %v2106 = vmax.f32 %v1666, 0.0
  %v2107 = vmax.f32 %v1669, 0.0
  %v2108 = vmax.f32 %v1671, 0.0
  %v2109 = vmax.f32 %v1674, 0.0
  %v2110 = vmax.f32 %v1676, 0.0
  %v2111 = vmax.f32 %v1679, 0.0
  %v2112 = vmax.f32 %v1681, 0.0
  %v2113 = vmax.f32 %v1684, 0.0
  %v2114 = vmax.f32 %v1686, 0.0
  %v2115 = vmax.f32 %v1689, 0.0
  %v2116 = vmax.f32 %v1691, 0.0
  %v2117 = vmax.f32 %v1694, 0.0
  %v2118 = vmax.f32 %v1696, 0.0
  %v2119 = vmax.f32 %v1699, 0.0
  %v2120 = vmax.f32 %v1701, 0.0
  %v2121 = vmax.f32 %v1704, 0.0
  %v2122 = vmax.f32 %v1706, 0.0
  %v2123 = vmax.f32 %v1709, 0.0
  %v2124 = vmax.f32 %v1711, 0.0
  %v2125 = vmax.f32 %v1714, 0.0
  %v2126 = vmax.f32 %v1716, 0.0
  %v2127 = vmax.f32 %v1719, 0.0
  %v2128 = vmax.f32 %v1721, 0.0
  %v2129 = vmax.f32 %v1724, 0.0
  %v2130 = vmax.f32 %v1726, 0.0
  %v2131 = vmax.f32 %v1729, 0.0
  %v2132 = vmax.f32 %v1731, 0.0
  %v2133 = vmax.f32 %v1734, 0.0
  %v2134 = vmax.f32 %v1736, 0.0
  %v2135 = vmax.f32 %v1739, 0.0
  %v2136 = vmax.f32 %v1741, 0.0
  %v2137 = vmax.f32 %v1744, 0.0
  %v2138 = vmax.f32 %v1746, 0.0
  %v2139 = vmax.f32 %v1749, 0.0
  %v2140 = vmax.f32 %v1751, 0.0
  %v2141 = vmax.f32 %v1754, 0.0
  %v2142 = vmax.f32 %v1756, 0.0
  %v2143 = vmax.f32 %v1759, 0.0
  %v2144 = vmax.f32 %v1761, 0.0
  %v2145 = vmax.f32 %v1764, 0.0
  %v2146 = vmax.f32 %v1766, 0.0
  %v2147 = vmax.f32 %v1769, 0.0
  %v2148 = vmax.f32 %v1771, 0.0
  %v2149 = vmax.f32 %v1774, 0.0
  %v2150 = vmax.f32 %v1776, 0.0
  %v2151 = vmax.f32 %v1779, 0.0
  %v2152 = vmax.f32 %v1781, 0.0
  %v2153 = vmax.f32 %v1784, 0.0
  %v2154 = vmax.f32 %v1786, 0.0
  %v2155 = vmax.f32 %v1789, 0.0
  %v2156 = vmax.f32 %v1791, 0.0
  %v2157 = vmax.f32 %v1794, 0.0
  %v2158 = vmax.f32 %v1796, 0.0
  %v2159 = vmax.f32 %v1799, 0.0
  %v2160 = vmax.f32 %v1801, 0.0
  %v2161 = vmax.f32 %v1804, 0.0
  %v2162 = vmax.f32 %v1806, 0.0
  %v2163 = vmax.f32 %v1809, 0.0
  %v2164 = vmax.f32 %v1811, 0.0
  %v2165 = vmax.f32 %v1814, 0.0
  %v2166 = vmax.f32 %v1816, 0.0
  %v2167 = vmax.f32 %v1819, 0.0
  %v2168 = vmax.f32 %v1821, 0.0
  %v2169 = vmax.f32 %v1824, 0.0
  %v2170 = vmax.f32 %v1826, 0.0
  %v2171 = vmax.f32 %v1829, 0.0
  %v2172 = vmax.f32 %v1831, 0.0
  %v2173 = vmax.f32 %v1834, 0.0
  %v2174 = vmax.f32 %v1836, 0.0
  %v2175 = vmax.f32 %v1839, 0.0
  %v2176 = vmax.f32 %v1841, 0.0
  %v2177 = vmax.f32 %v1844, 0.0
  %v2178 = vmax.f32 %v1846, 0.0
  %v2179 = vmax.f32 %v1849, 0.0
  %v2180 = vmax.f32 %v1851, 0.0
  %v2181 = vmax.f32 %v1854, 0.0
  %v2182 = vmax.f32 %v1856, 0.0
  %v2183 = vmax.f32 %v1859, 0.0
  %v2184 = vmax.f32 %v1861, 0.0
  %v2185 = vmax.f32 %v1864, 0.0
  %v2186 = vmax.f32 %v1866, 0.0
  %v2187 = vmax.f32 %v1869, 0.0
  %v2188 = vmax.f32 %v1871, 0.0
  %v2189 = vmax.f32 %v1874, 0.0
  %v2190 = vmax.f32 %v1876, 0.0
  %v2191 = vmax.f32 %v1879, 0.0
  %v2192 = vmax.f32 %v1881, 0.0
  %v2193 = vmax.f32 %v1884, 0.0
  %v2194 = vmax.f32 %v1886, 0.0
  %v2195 = vmax.f32 %v1889, 0.0
  %v2196 = vmax.f32 %v1891, 0.0
  %v2197 = vmax.f32 %v1894, 0.0
  %v2198 = vmax.f32 %v1896, 0.0
  %v2199 = vmax.f32 %v1899, 0.0
  %v2200 = vmax.f32 %v1901, 0.0
  %v2201 = vmax.f32 %v1904, 0.0
  %v2202 = vmax.f32 %v1906, 0.0
  %v2203 = vmax.f32 %v1909, 0.0
  %v2204 = vmax.f32 %v1911, 0.0
  %v2205 = vmax.f32 %v1914, 0.0
  %v2206 = vmax.f32 %v1916, 0.0
  %v2207 = vmax.f32 %v1919, 0.0
  %v2208 = vmax.f32 %v1921, 0.0
  %v2209 = vmax.f32 %v1924, 0.0
  %v2210 = vmax.f32 %v1926, 0.0
  %v2211 = vmax.f32 %v1929, 0.0
  %v2212 = vmax.f32 %v1931, 0.0
  %v2213 = vmax.f32 %v1934, 0.0
  %v2214 = vmax.f32 %v1936, 0.0
  %v2215 = vmax.f32 %v1939, 0.0
  %v2216 = vmax.f32 %v1941, 0.0
  %v2217 = vmax.f32 %v1944, 0.0
  %v2218 = vmax.f32 %v1946, 0.0
  %v2219 = vmax.f32 %v1949, 0.0
  %v2220 = vmax.f32 %v1951, 0.0
  %v2221 = vmax.f32 %v1954, 0.0
  %v2222 = vmax.f32 %v1956, 0.0
  %v2223 = vmax.f32 %v1959, 0.0
  %v2224 = vmax.f32 %v1961, 0.0
  %v2225 = vmax.f32 %v1964, 0.0
  %v2226 = vmax.f32 %v1966, 0.0
  %v2227 = vmax.f32 %v1969, 0.0
  %v2228 = vmax.f32 %v1971, 0.0
  %v2229 = vpack.c.bf16 %v1973, %v1973
  %v2230 = vpack.c.bf16 %v1974, %v1974
  %v2231 = vpack.c.bf16 %v1975, %v1975
  %v2232 = vpack.c.bf16 %v1976, %v1976
  %v2233 = vpack.c.bf16 %v1977, %v1977
  %v2234 = vpack.c.bf16 %v1978, %v1978
  %v2235 = vpack.c.bf16 %v1979, %v1979
  %v2236 = vpack.c.bf16 %v1980, %v1980
  %v2237 = vpack.c.bf16 %v1981, %v1981
  %v2238 = vpack.c.bf16 %v1982, %v1982
  %v2239 = vpack.c.bf16 %v1983, %v1983
  %v2240 = vpack.c.bf16 %v1984, %v1984
  %v2241 = vpack.c.bf16 %v1985, %v1985
  %v2242 = vpack.c.bf16 %v1986, %v1986
  %v2243 = vpack.c.bf16 %v1987, %v1987
  %v2244 = vpack.c.bf16 %v1988, %v1988
  %v2245 = vpack.c.bf16 %v1989, %v1989
  %v2246 = vpack.c.bf16 %v1990, %v1990
  %v2247 = vpack.c.bf16 %v1991, %v1991
  %v2248 = vpack.c.bf16 %v1992, %v1992
  %v2249 = vpack.c.bf16 %v1993, %v1993
  %v2250 = vpack.c.bf16 %v1994, %v1994
  %v2251 = vpack.c.bf16 %v1995, %v1995
  %v2252 = vpack.c.bf16 %v1996, %v1996
  %v2253 = vpack.c.bf16 %v1997, %v1997
  %v2254 = vpack.c.bf16 %v1998, %v1998
  %v2255 = vpack.c.bf16 %v1999, %v1999
  %v2256 = vpack.c.bf16 %v2000, %v2000
  %v2257 = vpack.c.bf16 %v2001, %v2001
  %v2258 = vpack.c.bf16 %v2002, %v2002
  %v2259 = vpack.c.bf16 %v2003, %v2003
  %v2260 = vpack.c.bf16 %v2004, %v2004
  %v2261 = vpack.c.bf16 %v2005, %v2005
  %v2262 = vpack.c.bf16 %v2006, %v2006
  %v2263 = vpack.c.bf16 %v2007, %v2007
  %v2264 = vpack.c.bf16 %v2008, %v2008
  %v2265 = vpack.c.bf16 %v2009, %v2009
  %v2266 = vpack.c.bf16 %v2010, %v2010
  %v2267 = vpack.c.bf16 %v2011, %v2011
  %v2268 = vpack.c.bf16 %v2012, %v2012
  %v2269 = vpack.c.bf16 %v2013, %v2013
  %v2270 = vpack.c.bf16 %v2014, %v2014
  %v2271 = vpack.c.bf16 %v2015, %v2015
  %v2272 = vpack.c.bf16 %v2016, %v2016
  %v2273 = vpack.c.bf16 %v2017, %v2017
  %v2274 = vpack.c.bf16 %v2018, %v2018
  %v2275 = vpack.c.bf16 %v2019, %v2019
  %v2276 = vpack.c.bf16 %v2020, %v2020
  %v2277 = vpack.c.bf16 %v2021, %v2021
  %v2278 = vpack.c.bf16 %v2022, %v2022
  %v2279 = vpack.c.bf16 %v2023, %v2023
  %v2280 = vpack.c.bf16 %v2024, %v2024
  %v2281 = vpack.c.bf16 %v2025, %v2025
  %v2282 = vpack.c.bf16 %v2026, %v2026
  %v2283 = vpack.c.bf16 %v2027, %v2027
  %v2284 = vpack.c.bf16 %v2028, %v2028
  %v2285 = vpack.c.bf16 %v2029, %v2029
  %v2286 = vpack.c.bf16 %v2030, %v2030
  %v2287 = vpack.c.bf16 %v2031, %v2031
  %v2288 = vpack.c.bf16 %v2032, %v2032
  %v2289 = vpack.c.bf16 %v2033, %v2033
  %v2290 = vpack.c.bf16 %v2034, %v2034
  %v2291 = vpack.c.bf16 %v2035, %v2035
  %v2292 = vpack.c.bf16 %v2036, %v2036
  %v2293 = vpack.c.bf16 %v2037, %v2037
  %v2294 = vpack.c.bf16 %v2038, %v2038
  %v2295 = vpack.c.bf16 %v2039, %v2039
  %v2296 = vpack.c.bf16 %v2040, %v2040
  %v2297 = vpack.c.bf16 %v2041, %v2041
  %v2298 = vpack.c.bf16 %v2042, %v2042
  %v2299 = vpack.c.bf16 %v2043, %v2043
  %v2300 = vpack.c.bf16 %v2044, %v2044
  %v2301 = vpack.c.bf16 %v2045, %v2045
  %v2302 = vpack.c.bf16 %v2046, %v2046
  %v2303 = vpack.c.bf16 %v2047, %v2047
  %v2304 = vpack.c.bf16 %v2048, %v2048
  %v2305 = vpack.c.bf16 %v2049, %v2049
  %v2306 = vpack.c.bf16 %v2050, %v2050
  %v2307 = vpack.c.bf16 %v2051, %v2051
  %v2308 = vpack.c.bf16 %v2052, %v2052
  %v2309 = vpack.c.bf16 %v2053, %v2053
  %v2310 = vpack.c.bf16 %v2054, %v2054
  %v2311 = vpack.c.bf16 %v2055, %v2055
  %v2312 = vpack.c.bf16 %v2056, %v2056
  %v2313 = vpack.c.bf16 %v2057, %v2057
  %v2314 = vpack.c.bf16 %v2058, %v2058
  %v2315 = vpack.c.bf16 %v2059, %v2059
  %v2316 = vpack.c.bf16 %v2060, %v2060
  %v2317 = vpack.c.bf16 %v2061, %v2061
  %v2318 = vpack.c.bf16 %v2062, %v2062
  %v2319 = vpack.c.bf16 %v2063, %v2063
  %v2320 = vpack.c.bf16 %v2064, %v2064
  %v2321 = vpack.c.bf16 %v2065, %v2065
  %v2322 = vpack.c.bf16 %v2066, %v2066
  %v2323 = vpack.c.bf16 %v2067, %v2067
  %v2324 = vpack.c.bf16 %v2068, %v2068
  %v2325 = vpack.c.bf16 %v2069, %v2069
  %v2326 = vpack.c.bf16 %v2070, %v2070
  %v2327 = vpack.c.bf16 %v2071, %v2071
  %v2328 = vpack.c.bf16 %v2072, %v2072
  %v2329 = vpack.c.bf16 %v2073, %v2073
  %v2330 = vpack.c.bf16 %v2074, %v2074
  %v2331 = vpack.c.bf16 %v2075, %v2075
  %v2332 = vpack.c.bf16 %v2076, %v2076
  %v2333 = vpack.c.bf16 %v2077, %v2077
  %v2334 = vpack.c.bf16 %v2078, %v2078
  %v2335 = vpack.c.bf16 %v2079, %v2079
  %v2336 = vpack.c.bf16 %v2080, %v2080
  %v2337 = vpack.c.bf16 %v2081, %v2081
  %v2338 = vpack.c.bf16 %v2082, %v2082
  %v2339 = vpack.c.bf16 %v2083, %v2083
  %v2340 = vpack.c.bf16 %v2084, %v2084
  %v2341 = vpack.c.bf16 %v2085, %v2085
  %v2342 = vpack.c.bf16 %v2086, %v2086
  %v2343 = vpack.c.bf16 %v2087, %v2087
  %v2344 = vpack.c.bf16 %v2088, %v2088
  %v2345 = vpack.c.bf16 %v2089, %v2089
  %v2346 = vpack.c.bf16 %v2090, %v2090
  %v2347 = vpack.c.bf16 %v2091, %v2091
  %v2348 = vpack.c.bf16 %v2092, %v2092
  %v2349 = vpack.c.bf16 %v2093, %v2093
  %v2350 = vpack.c.bf16 %v2094, %v2094
  %v2351 = vpack.c.bf16 %v2095, %v2095
  %v2352 = vpack.c.bf16 %v2096, %v2096
  %v2353 = vpack.c.bf16 %v2097, %v2097
  %v2354 = vpack.c.bf16 %v2098, %v2098
  %v2355 = vpack.c.bf16 %v2099, %v2099
  %v2356 = vpack.c.bf16 %v2100, %v2100
  %v2357 = vpack.c.bf16 %v2101, %v2101
  %v2358 = vpack.c.bf16 %v2102, %v2102
  %v2359 = vpack.c.bf16 %v2103, %v2103
  %v2360 = vpack.c.bf16 %v2104, %v2104
  %v2361 = vpack.c.bf16 %v2105, %v2105
  %v2362 = vpack.c.bf16 %v2106, %v2106
  %v2363 = vpack.c.bf16 %v2107, %v2107
  %v2364 = vpack.c.bf16 %v2108, %v2108
  %v2365 = vpack.c.bf16 %v2109, %v2109
  %v2366 = vpack.c.bf16 %v2110, %v2110
  %v2367 = vpack.c.bf16 %v2111, %v2111
  %v2368 = vpack.c.bf16 %v2112, %v2112
  %v2369 = vpack.c.bf16 %v2113, %v2113
  %v2370 = vpack.c.bf16 %v2114, %v2114
  %v2371 = vpack.c.bf16 %v2115, %v2115
  %v2372 = vpack.c.bf16 %v2116, %v2116
  %v2373 = vpack.c.bf16 %v2117, %v2117
  %v2374 = vpack.c.bf16 %v2118, %v2118
  %v2375 = vpack.c.bf16 %v2119, %v2119
  %v2376 = vpack.c.bf16 %v2120, %v2120
  %v2377 = vpack.c.bf16 %v2121, %v2121
  %v2378 = vpack.c.bf16 %v2122, %v2122
  %v2379 = vpack.c.bf16 %v2123, %v2123
  %v2380 = vpack.c.bf16 %v2124, %v2124
  %v2381 = vpack.c.bf16 %v2125, %v2125
  %v2382 = vpack.c.bf16 %v2126, %v2126
  %v2383 = vpack.c.bf16 %v2127, %v2127
  %v2384 = vpack.c.bf16 %v2128, %v2128
  %v2385 = vpack.c.bf16 %v2129, %v2129
  %v2386 = vpack.c.bf16 %v2130, %v2130
  %v2387 = vpack.c.bf16 %v2131, %v2131
  %v2388 = vpack.c.bf16 %v2132, %v2132
  %v2389 = vpack.c.bf16 %v2133, %v2133
  %v2390 = vpack.c.bf16 %v2134, %v2134
  %v2391 = vpack.c.bf16 %v2135, %v2135
  %v2392 = vpack.c.bf16 %v2136, %v2136
  %v2393 = vpack.c.bf16 %v2137, %v2137
  %v2394 = vpack.c.bf16 %v2138, %v2138
  %v2395 = vpack.c.bf16 %v2139, %v2139
  %v2396 = vpack.c.bf16 %v2140, %v2140
  %v2397 = vpack.c.bf16 %v2141, %v2141
  %v2398 = vpack.c.bf16 %v2142, %v2142
  %v2399 = vpack.c.bf16 %v2143, %v2143
  %v2400 = vpack.c.bf16 %v2144, %v2144
  %v2401 = vpack.c.bf16 %v2145, %v2145
  %v2402 = vpack.c.bf16 %v2146, %v2146
  %v2403 = vpack.c.bf16 %v2147, %v2147
  %v2404 = vpack.c.bf16 %v2148, %v2148
  %v2405 = vpack.c.bf16 %v2149, %v2149
  %v2406 = vpack.c.bf16 %v2150, %v2150
  %v2407 = vpack.c.bf16 %v2151, %v2151
  %v2408 = vpack.c.bf16 %v2152, %v2152
  %v2409 = vpack.c.bf16 %v2153, %v2153
  %v2410 = vpack.c.bf16 %v2154, %v2154
  %v2411 = vpack.c.bf16 %v2155, %v2155
  %v2412 = vpack.c.bf16 %v2156, %v2156
  %v2413 = vpack.c.bf16 %v2157, %v2157
  %v2414 = vpack.c.bf16 %v2158, %v2158
  %v2415 = vpack.c.bf16 %v2159, %v2159
  %v2416 = vpack.c.bf16 %v2160, %v2160
  %v2417 = vpack.c.bf16 %v2161, %v2161
  %v2418 = vpack.c.bf16 %v2162, %v2162
  %v2419 = vpack.c.bf16 %v2163, %v2163
  %v2420 = vpack.c.bf16 %v2164, %v2164
  %v2421 = vpack.c.bf16 %v2165, %v2165
  %v2422 = vpack.c.bf16 %v2166, %v2166
  %v2423 = vpack.c.bf16 %v2167, %v2167
  %v2424 = vpack.c.bf16 %v2168, %v2168
  %v2425 = vpack.c.bf16 %v2169, %v2169
  %v2426 = vpack.c.bf16 %v2170, %v2170
  %v2427 = vpack.c.bf16 %v2171, %v2171
  %v2428 = vpack.c.bf16 %v2172, %v2172
  %v2429 = vpack.c.bf16 %v2173, %v2173
  %v2430 = vpack.c.bf16 %v2174, %v2174
  %v2431 = vpack.c.bf16 %v2175, %v2175
  %v2432 = vpack.c.bf16 %v2176, %v2176
  %v2433 = vpack.c.bf16 %v2177, %v2177
  %v2434 = vpack.c.bf16 %v2178, %v2178
  %v2435 = vpack.c.bf16 %v2179, %v2179
  %v2436 = vpack.c.bf16 %v2180, %v2180
  %v2437 = vpack.c.bf16 %v2181, %v2181
  %v2438 = vpack.c.bf16 %v2182, %v2182
  %v2439 = vpack.c.bf16 %v2183, %v2183
  %v2440 = vpack.c.bf16 %v2184, %v2184
  %v2441 = vpack.c.bf16 %v2185, %v2185
  %v2442 = vpack.c.bf16 %v2186, %v2186
  %v2443 = vpack.c.bf16 %v2187, %v2187
  %v2444 = vpack.c.bf16 %v2188, %v2188
  %v2445 = vpack.c.bf16 %v2189, %v2189
  %v2446 = vpack.c.bf16 %v2190, %v2190
  %v2447 = vpack.c.bf16 %v2191, %v2191
  %v2448 = vpack.c.bf16 %v2192, %v2192
  %v2449 = vpack.c.bf16 %v2193, %v2193
  %v2450 = vpack.c.bf16 %v2194, %v2194
  %v2451 = vpack.c.bf16 %v2195, %v2195
  %v2452 = vpack.c.bf16 %v2196, %v2196
  %v2453 = vpack.c.bf16 %v2197, %v2197
  %v2454 = vpack.c.bf16 %v2198, %v2198
  %v2455 = vpack.c.bf16 %v2199, %v2199
  %v2456 = vpack.c.bf16 %v2200, %v2200
  %v2457 = vpack.c.bf16 %v2201, %v2201
  %v2458 = vpack.c.bf16 %v2202, %v2202
  %v2459 = vpack.c.bf16 %v2203, %v2203
  %v2460 = vpack.c.bf16 %v2204, %v2204
  %v2461 = vpack.c.bf16 %v2205, %v2205
  %v2462 = vpack.c.bf16 %v2206, %v2206
  %v2463 = vpack.c.bf16 %v2207, %v2207
  %v2464 = vpack.c.bf16 %v2208, %v2208
  %v2465 = vpack.c.bf16 %v2209, %v2209
  %v2466 = vpack.c.bf16 %v2210, %v2210
  %v2467 = vpack.c.bf16 %v2211, %v2211
  %v2468 = vpack.c.bf16 %v2212, %v2212
  %v2469 = vpack.c.bf16 %v2213, %v2213
  %v2470 = vpack.c.bf16 %v2214, %v2214
  %v2471 = vpack.c.bf16 %v2215, %v2215
  %v2472 = vpack.c.bf16 %v2216, %v2216
  %v2473 = vpack.c.bf16 %v2217, %v2217
  %v2474 = vpack.c.bf16 %v2218, %v2218
  %v2475 = vpack.c.bf16 %v2219, %v2219
  %v2476 = vpack.c.bf16 %v2220, %v2220
  %v2477 = vpack.c.bf16 %v2221, %v2221
  %v2478 = vpack.c.bf16 %v2222, %v2222
  %v2479 = vpack.c.bf16 %v2223, %v2223
  %v2480 = vpack.c.bf16 %v2224, %v2224
  %v2481 = vpack.c.bf16 %v2225, %v2225
  %v2482 = vpack.c.bf16 %v2226, %v2226
  %v2483 = vpack.c.bf16 %v2227, %v2227
  %v2484 = vpack.c.bf16 %v2228, %v2228
  %2485 = vst [vmem:[%s3] sm:$0xf] %v2229
  %2486 = vst [vmem:[%s3 + $0x4] sm:$0xf] %v2230
  %2487 = vst [vmem:[%s3 + $0x8] sm:$0xf] %v2231
  %2488 = vst [vmem:[%s3 + $0xc] sm:$0xf] %v2232
  %2489 = vst [vmem:[%s3 + $0x10] sm:$0xf] %v2233
  %2490 = vst [vmem:[%s3 + $0x14] sm:$0xf] %v2234
  %2491 = vst [vmem:[%s3 + $0x18] sm:$0xf] %v2235
  %2492 = vst [vmem:[%s3 + $0x1c] sm:$0xf] %v2236
  %2493 = vst [vmem:[%s3 + $0x20] sm:$0xf] %v2237
  %2494 = vst [vmem:[%s3 + $0x24] sm:$0xf] %v2238
  %2495 = vst [vmem:[%s3 + $0x28] sm:$0xf] %v2239
  %2496 = vst [vmem:[%s3 + $0x2c] sm:$0xf] %v2240
  %2497 = vst [vmem:[%s3 + $0x30] sm:$0xf] %v2241
  %2498 = vst [vmem:[%s3 + $0x34] sm:$0xf] %v2242
  %2499 = vst [vmem:[%s3 + $0x38] sm:$0xf] %v2243
  %2500 = vst [vmem:[%s3 + $0x3c] sm:$0xf] %v2244
  %2501 = vst [vmem:[%s3 + $0x40] sm:$0xf] %v2245
  %2502 = vst [vmem:[%s3 + $0x44] sm:$0xf] %v2246
  %2503 = vst [vmem:[%s3 + $0x48] sm:$0xf] %v2247
  %2504 = vst [vmem:[%s3 + $0x4c] sm:$0xf] %v2248
  %2505 = vst [vmem:[%s3 + $0x50] sm:$0xf] %v2249
  %2506 = vst [vmem:[%s3 + $0x54] sm:$0xf] %v2250
  %2507 = vst [vmem:[%s3 + $0x58] sm:$0xf] %v2251
  %2508 = vst [vmem:[%s3 + $0x5c] sm:$0xf] %v2252
  %2509 = vst [vmem:[%s3 + $0x60] sm:$0xf] %v2253
  %2510 = vst [vmem:[%s3 + $0x64] sm:$0xf] %v2254
  %2511 = vst [vmem:[%s3 + $0x68] sm:$0xf] %v2255
  %2512 = vst [vmem:[%s3 + $0x6c] sm:$0xf] %v2256
  %2513 = vst [vmem:[%s3 + $0x70] sm:$0xf] %v2257
  %2514 = vst [vmem:[%s3 + $0x74] sm:$0xf] %v2258
  %2515 = vst [vmem:[%s3 + $0x78] sm:$0xf] %v2259
  %2516 = vst [vmem:[%s3 + $0x7c] sm:$0xf] %v2260
  %2517 = vst [vmem:[%s3 + $0x80] sm:$0xf] %v2261
  %2518 = vst [vmem:[%s3 + $0x84] sm:$0xf] %v2262
  %2519 = vst [vmem:[%s3 + $0x88] sm:$0xf] %v2263
  %2520 = vst [vmem:[%s3 + $0x8c] sm:$0xf] %v2264
  %2521 = vst [vmem:[%s3 + $0x90] sm:$0xf] %v2265
  %2522 = vst [vmem:[%s3 + $0x94] sm:$0xf] %v2266
  %2523 = vst [vmem:[%s3 + $0x98] sm:$0xf] %v2267
  %2524 = vst [vmem:[%s3 + $0x9c] sm:$0xf] %v2268
  %2525 = vst [vmem:[%s3 + $0xa0] sm:$0xf] %v2269
  %2526 = vst [vmem:[%s3 + $0xa4] sm:$0xf] %v2270
  %2527 = vst [vmem:[%s3 + $0xa8] sm:$0xf] %v2271
  %2528 = vst [vmem:[%s3 + $0xac] sm:$0xf] %v2272
  %2529 = vst [vmem:[%s3 + $0xb0] sm:$0xf] %v2273
  %2530 = vst [vmem:[%s3 + $0xb4] sm:$0xf] %v2274
  %2531 = vst [vmem:[%s3 + $0xb8] sm:$0xf] %v2275
  %2532 = vst [vmem:[%s3 + $0xbc] sm:$0xf] %v2276
  %2533 = vst [vmem:[%s3 + $0xc0] sm:$0xf] %v2277
  %2534 = vst [vmem:[%s3 + $0xc4] sm:$0xf] %v2278
  %2535 = vst [vmem:[%s3 + $0xc8] sm:$0xf] %v2279
  %2536 = vst [vmem:[%s3 + $0xcc] sm:$0xf] %v2280
  %2537 = vst [vmem:[%s3 + $0xd0] sm:$0xf] %v2281
  %2538 = vst [vmem:[%s3 + $0xd4] sm:$0xf] %v2282
  %2539 = vst [vmem:[%s3 + $0xd8] sm:$0xf] %v2283
  %2540 = vst [vmem:[%s3 + $0xdc] sm:$0xf] %v2284
  %2541 = vst [vmem:[%s3 + $0xe0] sm:$0xf] %v2285
  %2542 = vst [vmem:[%s3 + $0xe4] sm:$0xf] %v2286
  %2543 = vst [vmem:[%s3 + $0xe8] sm:$0xf] %v2287
  %2544 = vst [vmem:[%s3 + $0xec] sm:$0xf] %v2288
  %2545 = vst [vmem:[%s3 + $0xf0] sm:$0xf] %v2289
  %2546 = vst [vmem:[%s3 + $0xf4] sm:$0xf] %v2290
  %2547 = vst [vmem:[%s3 + $0xf8] sm:$0xf] %v2291
  %2548 = vst [vmem:[%s3 + $0xfc] sm:$0xf] %v2292
  %2549 = vst [vmem:[%s3 + $0x100] sm:$0xf] %v2293
  %2550 = vst [vmem:[%s3 + $0x104] sm:$0xf] %v2294
  %2551 = vst [vmem:[%s3 + $0x108] sm:$0xf] %v2295
  %2552 = vst [vmem:[%s3 + $0x10c] sm:$0xf] %v2296
  %2553 = vst [vmem:[%s3 + $0x110] sm:$0xf] %v2297
  %2554 = vst [vmem:[%s3 + $0x114] sm:$0xf] %v2298
  %2555 = vst [vmem:[%s3 + $0x118] sm:$0xf] %v2299
  %2556 = vst [vmem:[%s3 + $0x11c] sm:$0xf] %v2300
  %2557 = vst [vmem:[%s3 + $0x120] sm:$0xf] %v2301
  %2558 = vst [vmem:[%s3 + $0x124] sm:$0xf] %v2302
  %2559 = vst [vmem:[%s3 + $0x128] sm:$0xf] %v2303
  %2560 = vst [vmem:[%s3 + $0x12c] sm:$0xf] %v2304
  %2561 = vst [vmem:[%s3 + $0x130] sm:$0xf] %v2305
  %2562 = vst [vmem:[%s3 + $0x134] sm:$0xf] %v2306
  %2563 = vst [vmem:[%s3 + $0x138] sm:$0xf] %v2307
  %2564 = vst [vmem:[%s3 + $0x13c] sm:$0xf] %v2308
  %2565 = vst [vmem:[%s3 + $0x140] sm:$0xf] %v2309
  %2566 = vst [vmem:[%s3 + $0x144] sm:$0xf] %v2310
  %2567 = vst [vmem:[%s3 + $0x148] sm:$0xf] %v2311
  %2568 = vst [vmem:[%s3 + $0x14c] sm:$0xf] %v2312
  %2569 = vst [vmem:[%s3 + $0x150] sm:$0xf] %v2313
  %2570 = vst [vmem:[%s3 + $0x154] sm:$0xf] %v2314
  %2571 = vst [vmem:[%s3 + $0x158] sm:$0xf] %v2315
  %2572 = vst [vmem:[%s3 + $0x15c] sm:$0xf] %v2316
  %2573 = vst [vmem:[%s3 + $0x160] sm:$0xf] %v2317
  %2574 = vst [vmem:[%s3 + $0x164] sm:$0xf] %v2318
  %2575 = vst [vmem:[%s3 + $0x168] sm:$0xf] %v2319
  %2576 = vst [vmem:[%s3 + $0x16c] sm:$0xf] %v2320
  %2577 = vst [vmem:[%s3 + $0x170] sm:$0xf] %v2321
  %2578 = vst [vmem:[%s3 + $0x174] sm:$0xf] %v2322
  %2579 = vst [vmem:[%s3 + $0x178] sm:$0xf] %v2323
  %2580 = vst [vmem:[%s3 + $0x17c] sm:$0xf] %v2324
  %2581 = vst [vmem:[%s3 + $0x180] sm:$0xf] %v2325
  %2582 = vst [vmem:[%s3 + $0x184] sm:$0xf] %v2326
  %2583 = vst [vmem:[%s3 + $0x188] sm:$0xf] %v2327
  %2584 = vst [vmem:[%s3 + $0x18c] sm:$0xf] %v2328
  %2585 = vst [vmem:[%s3 + $0x190] sm:$0xf] %v2329
  %2586 = vst [vmem:[%s3 + $0x194] sm:$0xf] %v2330
  %2587 = vst [vmem:[%s3 + $0x198] sm:$0xf] %v2331
  %2588 = vst [vmem:[%s3 + $0x19c] sm:$0xf] %v2332
  %2589 = vst [vmem:[%s3 + $0x1a0] sm:$0xf] %v2333
  %2590 = vst [vmem:[%s3 + $0x1a4] sm:$0xf] %v2334
  %2591 = vst [vmem:[%s3 + $0x1a8] sm:$0xf] %v2335
  %2592 = vst [vmem:[%s3 + $0x1ac] sm:$0xf] %v2336
  %2593 = vst [vmem:[%s3 + $0x1b0] sm:$0xf] %v2337
  %2594 = vst [vmem:[%s3 + $0x1b4] sm:$0xf] %v2338
  %2595 = vst [vmem:[%s3 + $0x1b8] sm:$0xf] %v2339
  %2596 = vst [vmem:[%s3 + $0x1bc] sm:$0xf] %v2340
  %2597 = vst [vmem:[%s3 + $0x1c0] sm:$0xf] %v2341
  %2598 = vst [vmem:[%s3 + $0x1c4] sm:$0xf] %v2342
  %2599 = vst [vmem:[%s3 + $0x1c8] sm:$0xf] %v2343
  %2600 = vst [vmem:[%s3 + $0x1cc] sm:$0xf] %v2344
  %2601 = vst [vmem:[%s3 + $0x1d0] sm:$0xf] %v2345
  %2602 = vst [vmem:[%s3 + $0x1d4] sm:$0xf] %v2346
  %2603 = vst [vmem:[%s3 + $0x1d8] sm:$0xf] %v2347
  %2604 = vst [vmem:[%s3 + $0x1dc] sm:$0xf] %v2348
  %2605 = vst [vmem:[%s3 + $0x1e0] sm:$0xf] %v2349
  %2606 = vst [vmem:[%s3 + $0x1e4] sm:$0xf] %v2350
  %2607 = vst [vmem:[%s3 + $0x1e8] sm:$0xf] %v2351
  %2608 = vst [vmem:[%s3 + $0x1ec] sm:$0xf] %v2352
  %2609 = vst [vmem:[%s3 + $0x1f0] sm:$0xf] %v2353
  %2610 = vst [vmem:[%s3 + $0x1f4] sm:$0xf] %v2354
  %2611 = vst [vmem:[%s3 + $0x1f8] sm:$0xf] %v2355
  %2612 = vst [vmem:[%s3 + $0x1fc] sm:$0xf] %v2356
  %2613 = vst [vmem:[%s3 + $0x200] sm:$0xf] %v2357
  %2614 = vst [vmem:[%s3 + $0x204] sm:$0xf] %v2358
  %2615 = vst [vmem:[%s3 + $0x208] sm:$0xf] %v2359
  %2616 = vst [vmem:[%s3 + $0x20c] sm:$0xf] %v2360
  %2617 = vst [vmem:[%s3 + $0x210] sm:$0xf] %v2361
  %2618 = vst [vmem:[%s3 + $0x214] sm:$0xf] %v2362
  %2619 = vst [vmem:[%s3 + $0x218] sm:$0xf] %v2363
  %2620 = vst [vmem:[%s3 + $0x21c] sm:$0xf] %v2364
  %2621 = vst [vmem:[%s3 + $0x220] sm:$0xf] %v2365
  %2622 = vst [vmem:[%s3 + $0x224] sm:$0xf] %v2366
  %2623 = vst [vmem:[%s3 + $0x228] sm:$0xf] %v2367
  %2624 = vst [vmem:[%s3 + $0x22c] sm:$0xf] %v2368
  %2625 = vst [vmem:[%s3 + $0x230] sm:$0xf] %v2369
  %2626 = vst [vmem:[%s3 + $0x234] sm:$0xf] %v2370
  %2627 = vst [vmem:[%s3 + $0x238] sm:$0xf] %v2371
  %2628 = vst [vmem:[%s3 + $0x23c] sm:$0xf] %v2372
  %2629 = vst [vmem:[%s3 + $0x240] sm:$0xf] %v2373
  %2630 = vst [vmem:[%s3 + $0x244] sm:$0xf] %v2374
  %2631 = vst [vmem:[%s3 + $0x248] sm:$0xf] %v2375
  %2632 = vst [vmem:[%s3 + $0x24c] sm:$0xf] %v2376
  %2633 = vst [vmem:[%s3 + $0x250] sm:$0xf] %v2377
  %2634 = vst [vmem:[%s3 + $0x254] sm:$0xf] %v2378
  %2635 = vst [vmem:[%s3 + $0x258] sm:$0xf] %v2379
  %2636 = vst [vmem:[%s3 + $0x25c] sm:$0xf] %v2380
  %2637 = vst [vmem:[%s3 + $0x260] sm:$0xf] %v2381
  %2638 = vst [vmem:[%s3 + $0x264] sm:$0xf] %v2382
  %2639 = vst [vmem:[%s3 + $0x268] sm:$0xf] %v2383
  %2640 = vst [vmem:[%s3 + $0x26c] sm:$0xf] %v2384
  %2641 = vst [vmem:[%s3 + $0x270] sm:$0xf] %v2385
  %2642 = vst [vmem:[%s3 + $0x274] sm:$0xf] %v2386
  %2643 = vst [vmem:[%s3 + $0x278] sm:$0xf] %v2387
  %2644 = vst [vmem:[%s3 + $0x27c] sm:$0xf] %v2388
  %2645 = vst [vmem:[%s3 + $0x280] sm:$0xf] %v2389
  %2646 = vst [vmem:[%s3 + $0x284] sm:$0xf] %v2390
  %2647 = vst [vmem:[%s3 + $0x288] sm:$0xf] %v2391
  %2648 = vst [vmem:[%s3 + $0x28c] sm:$0xf] %v2392
  %2649 = vst [vmem:[%s3 + $0x290] sm:$0xf] %v2393
  %2650 = vst [vmem:[%s3 + $0x294] sm:$0xf] %v2394
  %2651 = vst [vmem:[%s3 + $0x298] sm:$0xf] %v2395
  %2652 = vst [vmem:[%s3 + $0x29c] sm:$0xf] %v2396
  %2653 = vst [vmem:[%s3 + $0x2a0] sm:$0xf] %v2397
  %2654 = vst [vmem:[%s3 + $0x2a4] sm:$0xf] %v2398
  %2655 = vst [vmem:[%s3 + $0x2a8] sm:$0xf] %v2399
  %2656 = vst [vmem:[%s3 + $0x2ac] sm:$0xf] %v2400
  %2657 = vst [vmem:[%s3 + $0x2b0] sm:$0xf] %v2401
  %2658 = vst [vmem:[%s3 + $0x2b4] sm:$0xf] %v2402
  %2659 = vst [vmem:[%s3 + $0x2b8] sm:$0xf] %v2403
  %2660 = vst [vmem:[%s3 + $0x2bc] sm:$0xf] %v2404
  %2661 = vst [vmem:[%s3 + $0x2c0] sm:$0xf] %v2405
  %2662 = vst [vmem:[%s3 + $0x2c4] sm:$0xf] %v2406
  %2663 = vst [vmem:[%s3 + $0x2c8] sm:$0xf] %v2407
  %2664 = vst [vmem:[%s3 + $0x2cc] sm:$0xf] %v2408
  %2665 = vst [vmem:[%s3 + $0x2d0] sm:$0xf] %v2409
  %2666 = vst [vmem:[%s3 + $0x2d4] sm:$0xf] %v2410
  %2667 = vst [vmem:[%s3 + $0x2d8] sm:$0xf] %v2411
  %2668 = vst [vmem:[%s3 + $0x2dc] sm:$0xf] %v2412
  %2669 = vst [vmem:[%s3 + $0x2e0] sm:$0xf] %v2413
  %2670 = vst [vmem:[%s3 + $0x2e4] sm:$0xf] %v2414
  %2671 = vst [vmem:[%s3 + $0x2e8] sm:$0xf] %v2415
  %2672 = vst [vmem:[%s3 + $0x2ec] sm:$0xf] %v2416
  %2673 = vst [vmem:[%s3 + $0x2f0] sm:$0xf] %v2417
  %2674 = vst [vmem:[%s3 + $0x2f4] sm:$0xf] %v2418
  %2675 = vst [vmem:[%s3 + $0x2f8] sm:$0xf] %v2419
  %2676 = vst [vmem:[%s3 + $0x2fc] sm:$0xf] %v2420
  %2677 = vst [vmem:[%s3 + $0x300] sm:$0xf] %v2421
  %2678 = vst [vmem:[%s3 + $0x304] sm:$0xf] %v2422
  %2679 = vst [vmem:[%s3 + $0x308] sm:$0xf] %v2423
  %2680 = vst [vmem:[%s3 + $0x30c] sm:$0xf] %v2424
  %2681 = vst [vmem:[%s3 + $0x310] sm:$0xf] %v2425
  %2682 = vst [vmem:[%s3 + $0x314] sm:$0xf] %v2426
  %2683 = vst [vmem:[%s3 + $0x318] sm:$0xf] %v2427
  %2684 = vst [vmem:[%s3 + $0x31c] sm:$0xf] %v2428
  %2685 = vst [vmem:[%s3 + $0x320] sm:$0xf] %v2429
  %2686 = vst [vmem:[%s3 + $0x324] sm:$0xf] %v2430
  %2687 = vst [vmem:[%s3 + $0x328] sm:$0xf] %v2431
  %2688 = vst [vmem:[%s3 + $0x32c] sm:$0xf] %v2432
  %2689 = vst [vmem:[%s3 + $0x330] sm:$0xf] %v2433
  %2690 = vst [vmem:[%s3 + $0x334] sm:$0xf] %v2434
  %2691 = vst [vmem:[%s3 + $0x338] sm:$0xf] %v2435
  %2692 = vst [vmem:[%s3 + $0x33c] sm:$0xf] %v2436
  %2693 = vst [vmem:[%s3 + $0x340] sm:$0xf] %v2437
  %2694 = vst [vmem:[%s3 + $0x344] sm:$0xf] %v2438
  %2695 = vst [vmem:[%s3 + $0x348] sm:$0xf] %v2439
  %2696 = vst [vmem:[%s3 + $0x34c] sm:$0xf] %v2440
  %2697 = vst [vmem:[%s3 + $0x350] sm:$0xf] %v2441
  %2698 = vst [vmem:[%s3 + $0x354] sm:$0xf] %v2442
  %2699 = vst [vmem:[%s3 + $0x358] sm:$0xf] %v2443
  %2700 = vst [vmem:[%s3 + $0x35c] sm:$0xf] %v2444
  %2701 = vst [vmem:[%s3 + $0x360] sm:$0xf] %v2445
  %2702 = vst [vmem:[%s3 + $0x364] sm:$0xf] %v2446
  %2703 = vst [vmem:[%s3 + $0x368] sm:$0xf] %v2447
  %2704 = vst [vmem:[%s3 + $0x36c] sm:$0xf] %v2448
  %2705 = vst [vmem:[%s3 + $0x370] sm:$0xf] %v2449
  %2706 = vst [vmem:[%s3 + $0x374] sm:$0xf] %v2450
  %2707 = vst [vmem:[%s3 + $0x378] sm:$0xf] %v2451
  %2708 = vst [vmem:[%s3 + $0x37c] sm:$0xf] %v2452
  %2709 = vst [vmem:[%s3 + $0x380] sm:$0xf] %v2453
  %2710 = vst [vmem:[%s3 + $0x384] sm:$0xf] %v2454
  %2711 = vst [vmem:[%s3 + $0x388] sm:$0xf] %v2455
  %2712 = vst [vmem:[%s3 + $0x38c] sm:$0xf] %v2456
  %2713 = vst [vmem:[%s3 + $0x390] sm:$0xf] %v2457
  %2714 = vst [vmem:[%s3 + $0x394] sm:$0xf] %v2458
  %2715 = vst [vmem:[%s3 + $0x398] sm:$0xf] %v2459
  %2716 = vst [vmem:[%s3 + $0x39c] sm:$0xf] %v2460
  %2717 = vst [vmem:[%s3 + $0x3a0] sm:$0xf] %v2461
  %2718 = vst [vmem:[%s3 + $0x3a4] sm:$0xf] %v2462
  %2719 = vst [vmem:[%s3 + $0x3a8] sm:$0xf] %v2463
  %2720 = vst [vmem:[%s3 + $0x3ac] sm:$0xf] %v2464
  %2721 = vst [vmem:[%s3 + $0x3b0] sm:$0xf] %v2465
  %2722 = vst [vmem:[%s3 + $0x3b4] sm:$0xf] %v2466
  %2723 = vst [vmem:[%s3 + $0x3b8] sm:$0xf] %v2467
  %2724 = vst [vmem:[%s3 + $0x3bc] sm:$0xf] %v2468
  %2725 = vst [vmem:[%s3 + $0x3c0] sm:$0xf] %v2469
  %2726 = vst [vmem:[%s3 + $0x3c4] sm:$0xf] %v2470
  %2727 = vst [vmem:[%s3 + $0x3c8] sm:$0xf] %v2471
  %2728 = vst [vmem:[%s3 + $0x3cc] sm:$0xf] %v2472
  %2729 = vst [vmem:[%s3 + $0x3d0] sm:$0xf] %v2473
  %2730 = vst [vmem:[%s3 + $0x3d4] sm:$0xf] %v2474
  %2731 = vst [vmem:[%s3 + $0x3d8] sm:$0xf] %v2475
  %2732 = vst [vmem:[%s3 + $0x3dc] sm:$0xf] %v2476
  %2733 = vst [vmem:[%s3 + $0x3e0] sm:$0xf] %v2477
  %2734 = vst [vmem:[%s3 + $0x3e4] sm:$0xf] %v2478
  %2735 = vst [vmem:[%s3 + $0x3e8] sm:$0xf] %v2479
  %2736 = vst [vmem:[%s3 + $0x3ec] sm:$0xf] %v2480
  %2737 = vst [vmem:[%s3 + $0x3f0] sm:$0xf] %v2481
  %2738 = vst [vmem:[%s3 + $0x3f4] sm:$0xf] %v2482
  %2739 = vst [vmem:[%s3 + $0x3f8] sm:$0xf] %v2483
  %2740 = vst [vmem:[%s3 + $0x3fc] sm:$0xf] %v2484
  // Predicated region
  $region14: #{_lambda_.5} parent=0 // pred_check
    _
  $region15: #{_lambda_.5} parent=0 // pred_check_branch
    %2742 = sbr.rel (0) target = $region17
  $region16: #{_lambda_.5} parent=0 // pred_region
    _
  $region17: #{_lambda_.5} parent=0 // pred_fallthru
    _
  // Predicated region
  $region18: #{_lambda_.5} parent=0 // pred_check
    _
  $region19: #{_lambda_.5} parent=0 // pred_check_branch
    %2744 = sbr.rel (0) target = $region21
  $region20: #{_lambda_.5} parent=0 // pred_region
    _
  $region21: #{_lambda_.5} parent=0 // pred_fallthru
    _

// kernel: _lambda_.6
$region0: #{_lambda_.6}
  #allocation0 [shape = 'u32[]', space=smem, size = 0x4, offset = 0x4, fixed_abs, tag = 'smem constant byte address 0x4 - core index']
  #allocation1 [shape = 'u32[72,128]{1,0:T(1,128)}', space=vmem, size = 0x9000, scoped, tag = 'internal scratch']
  %s0 = inlined_call_operand.vmem [shape: bf16[512,288], index: 0, kind: input, shape index: {}]
  %s1 = inlined_call_operand.vmem [shape: bf16[288,128], index: 1, kind: input, shape index: {}]
  %s2 = inlined_call_operand.vmem [shape: f32[1,128], index: 2, kind: input, shape index: {}]
  %s3 = inlined_call_operand.vmem [shape: bf16[512,128], index: 3, kind: output, shape index: {}]
  %s4 = sld [smem:[#allocation0]]
  $region22: #{_lambda_.6} parent=0
    _
  %s6 = ssub.s32 1, %s4
  %s7 = scalar_select 0, %s6, %s4
  // Predicated region
  $region2: #{_lambda_.6} parent=0 // pred_check
    _
  $region3: #{_lambda_.6} parent=0 // pred_check_branch
    %9 = sbr.rel (0) target = $region5
  $region4: #{_lambda_.6} parent=0 // pred_region
    _
  $region5: #{_lambda_.6} parent=0 // pred_fallthru
    _
  // Predicated region
  $region6: #{_lambda_.6} parent=0 // pred_check
    _
  $region7: #{_lambda_.6} parent=0 // pred_check_branch
    %11 = sbr.rel (0) target = $region9
  $region8: #{_lambda_.6} parent=0 // pred_region
    _
  $region9: #{_lambda_.6} parent=0 // pred_fallthru
    _
  // Predicated region
  $region10: #{_lambda_.6} parent=0 // pred_check
    _
  $region11: #{_lambda_.6} parent=0 // pred_check_branch
    %13 = sbr.rel (0) target = $region13
  $region12: #{_lambda_.6} parent=0 // pred_region
    _
  $region13: #{_lambda_.6} parent=0 // pred_fallthru
    _
  %v15 = vld [vmem:[%s0] sm:$0xff]
  %v16 = vld [vmem:[%s0 + $0x8] sm:$0xf]
  %v17 = vld [vmem:[%s0 + $0xc] sm:$0xff]
  %v18 = vld [vmem:[%s0 + $0x14] sm:$0xf]
  %v19 = vld [vmem:[%s0 + $0x18] sm:$0xff]
  %v20 = vld [vmem:[%s0 + $0x20] sm:$0xf]
  %v21 = vld [vmem:[%s0 + $0x24] sm:$0xff]
  %v22 = vld [vmem:[%s0 + $0x2c] sm:$0xf]
  %v23 = vld [vmem:[%s0 + $0x30] sm:$0xff]
  %v24 = vld [vmem:[%s0 + $0x38] sm:$0xf]
  %v25 = vld [vmem:[%s0 + $0x3c] sm:$0xff]
  %v26 = vld [vmem:[%s0 + $0x44] sm:$0xf]
  %v27 = vld [vmem:[%s0 + $0x48] sm:$0xff]
  %v28 = vld [vmem:[%s0 + $0x50] sm:$0xf]
  %v29 = vld [vmem:[%s0 + $0x54] sm:$0xff]
  %v30 = vld [vmem:[%s0 + $0x5c] sm:$0xf]
  %v31 = vld [vmem:[%s0 + $0x60] sm:$0xff]
  %v32 = vld [vmem:[%s0 + $0x68] sm:$0xf]
  %v33 = vld [vmem:[%s0 + $0x6c] sm:$0xff]
  %v34 = vld [vmem:[%s0 + $0x74] sm:$0xf]
  %v35 = vld [vmem:[%s0 + $0x78] sm:$0xff]
  %v36 = vld [vmem:[%s0 + $0x80] sm:$0xf]
  %v37 = vld [vmem:[%s0 + $0x84] sm:$0xff]
  %v38 = vld [vmem:[%s0 + $0x8c] sm:$0xf]
  %v39 = vld [vmem:[%s0 + $0x90] sm:$0xff]
  %v40 = vld [vmem:[%s0 + $0x98] sm:$0xf]
  %v41 = vld [vmem:[%s0 + $0x9c] sm:$0xff]
  %v42 = vld [vmem:[%s0 + $0xa4] sm:$0xf]
  %v43 = vld [vmem:[%s0 + $0xa8] sm:$0xff]
  %v44 = vld [vmem:[%s0 + $0xb0] sm:$0xf]
  %v45 = vld [vmem:[%s0 + $0xb4] sm:$0xff]
  %v46 = vld [vmem:[%s0 + $0xbc] sm:$0xf]
  %v47 = vld [vmem:[%s0 + $0xc0] sm:$0xff]
  %v48 = vld [vmem:[%s0 + $0xc8] sm:$0xf]
  %v49 = vld [vmem:[%s0 + $0xcc] sm:$0xff]
  %v50 = vld [vmem:[%s0 + $0xd4] sm:$0xf]
  %v51 = vld [vmem:[%s0 + $0xd8] sm:$0xff]
  %v52 = vld [vmem:[%s0 + $0xe0] sm:$0xf]
  %v53 = vld [vmem:[%s0 + $0xe4] sm:$0xff]
  %v54 = vld [vmem:[%s0 + $0xec] sm:$0xf]
  %v55 = vld [vmem:[%s0 + $0xf0] sm:$0xff]
  %v56 = vld [vmem:[%s0 + $0xf8] sm:$0xf]
  %v57 = vld [vmem:[%s0 + $0xfc] sm:$0xff]
  %v58 = vld [vmem:[%s0 + $0x104] sm:$0xf]
  %v59 = vld [vmem:[%s0 + $0x108] sm:$0xff]
  %v60 = vld [vmem:[%s0 + $0x110] sm:$0xf]
  %v61 = vld [vmem:[%s0 + $0x114] sm:$0xff]
  %v62 = vld [vmem:[%s0 + $0x11c] sm:$0xf]
  %v63 = vld [vmem:[%s0 + $0x120] sm:$0xff]
  %v64 = vld [vmem:[%s0 + $0x128] sm:$0xf]
  %v65 = vld [vmem:[%s0 + $0x12c] sm:$0xff]
  %v66 = vld [vmem:[%s0 + $0x134] sm:$0xf]
  %v67 = vld [vmem:[%s0 + $0x138] sm:$0xff]
  %v68 = vld [vmem:[%s0 + $0x140] sm:$0xf]
  %v69 = vld [vmem:[%s0 + $0x144] sm:$0xff]
  %v70 = vld [vmem:[%s0 + $0x14c] sm:$0xf]
  %v71 = vld [vmem:[%s0 + $0x150] sm:$0xff]
  %v72 = vld [vmem:[%s0 + $0x158] sm:$0xf]
  %v73 = vld [vmem:[%s0 + $0x15c] sm:$0xff]
  %v74 = vld [vmem:[%s0 + $0x164] sm:$0xf]
  %v75 = vld [vmem:[%s0 + $0x168] sm:$0xff]
  %v76 = vld [vmem:[%s0 + $0x170] sm:$0xf]
  %v77 = vld [vmem:[%s0 + $0x174] sm:$0xff]
  %v78 = vld [vmem:[%s0 + $0x17c] sm:$0xf]
  %v79 = vld [vmem:[%s0 + $0x180] sm:$0xff]
  %v80 = vld [vmem:[%s0 + $0x188] sm:$0xf]
  %v81 = vld [vmem:[%s0 + $0x18c] sm:$0xff]
  %v82 = vld [vmem:[%s0 + $0x194] sm:$0xf]
  %v83 = vld [vmem:[%s0 + $0x198] sm:$0xff]
  %v84 = vld [vmem:[%s0 + $0x1a0] sm:$0xf]
  %v85 = vld [vmem:[%s0 + $0x1a4] sm:$0xff]
  %v86 = vld [vmem:[%s0 + $0x1ac] sm:$0xf]
  %v87 = vld [vmem:[%s0 + $0x1b0] sm:$0xff]
  %v88 = vld [vmem:[%s0 + $0x1b8] sm:$0xf]
  %v89 = vld [vmem:[%s0 + $0x1bc] sm:$0xff]
  %v90 = vld [vmem:[%s0 + $0x1c4] sm:$0xf]
  %v91 = vld [vmem:[%s0 + $0x1c8] sm:$0xff]
  %v92 = vld [vmem:[%s0 + $0x1d0] sm:$0xf]
  %v93 = vld [vmem:[%s0 + $0x1d4] sm:$0xff]
  %v94 = vld [vmem:[%s0 + $0x1dc] sm:$0xf]
  %v95 = vld [vmem:[%s0 + $0x1e0] sm:$0xff]
  %v96 = vld [vmem:[%s0 + $0x1e8] sm:$0xf]
  %v97 = vld [vmem:[%s0 + $0x1ec] sm:$0xff]
  %v98 = vld [vmem:[%s0 + $0x1f4] sm:$0xf]
  %v99 = vld [vmem:[%s0 + $0x1f8] sm:$0xff]
  %v100 = vld [vmem:[%s0 + $0x200] sm:$0xf]
  %v101 = vld [vmem:[%s0 + $0x204] sm:$0xff]
  %v102 = vld [vmem:[%s0 + $0x20c] sm:$0xf]
  %v103 = vld [vmem:[%s0 + $0x210] sm:$0xff]
  %v104 = vld [vmem:[%s0 + $0x218] sm:$0xf]
  %v105 = vld [vmem:[%s0 + $0x21c] sm:$0xff]
  %v106 = vld [vmem:[%s0 + $0x224] sm:$0xf]
  %v107 = vld [vmem:[%s0 + $0x228] sm:$0xff]
  %v108 = vld [vmem:[%s0 + $0x230] sm:$0xf]
  %v109 = vld [vmem:[%s0 + $0x234] sm:$0xff]
  %v110 = vld [vmem:[%s0 + $0x23c] sm:$0xf]
  %v111 = vld [vmem:[%s0 + $0x240] sm:$0xff]
  %v112 = vld [vmem:[%s0 + $0x248] sm:$0xf]
  %v113 = vld [vmem:[%s0 + $0x24c] sm:$0xff]
  %v114 = vld [vmem:[%s0 + $0x254] sm:$0xf]
  %v115 = vld [vmem:[%s0 + $0x258] sm:$0xff]
  %v116 = vld [vmem:[%s0 + $0x260] sm:$0xf]
  %v117 = vld [vmem:[%s0 + $0x264] sm:$0xff]
  %v118 = vld [vmem:[%s0 + $0x26c] sm:$0xf]
  %v119 = vld [vmem:[%s0 + $0x270] sm:$0xff]
  %v120 = vld [vmem:[%s0 + $0x278] sm:$0xf]
  %v121 = vld [vmem:[%s0 + $0x27c] sm:$0xff]
  %v122 = vld [vmem:[%s0 + $0x284] sm:$0xf]
  %v123 = vld [vmem:[%s0 + $0x288] sm:$0xff]
  %v124 = vld [vmem:[%s0 + $0x290] sm:$0xf]
  %v125 = vld [vmem:[%s0 + $0x294] sm:$0xff]
  %v126 = vld [vmem:[%s0 + $0x29c] sm:$0xf]
  %v127 = vld [vmem:[%s0 + $0x2a0] sm:$0xff]
  %v128 = vld [vmem:[%s0 + $0x2a8] sm:$0xf]
  %v129 = vld [vmem:[%s0 + $0x2ac] sm:$0xff]
  %v130 = vld [vmem:[%s0 + $0x2b4] sm:$0xf]
  %v131 = vld [vmem:[%s0 + $0x2b8] sm:$0xff]
  %v132 = vld [vmem:[%s0 + $0x2c0] sm:$0xf]
  %v133 = vld [vmem:[%s0 + $0x2c4] sm:$0xff]
  %v134 = vld [vmem:[%s0 + $0x2cc] sm:$0xf]
  %v135 = vld [vmem:[%s0 + $0x2d0] sm:$0xff]
  %v136 = vld [vmem:[%s0 + $0x2d8] sm:$0xf]
  %v137 = vld [vmem:[%s0 + $0x2dc] sm:$0xff]
  %v138 = vld [vmem:[%s0 + $0x2e4] sm:$0xf]
  %v139 = vld [vmem:[%s0 + $0x2e8] sm:$0xff]
  %v140 = vld [vmem:[%s0 + $0x2f0] sm:$0xf]
  %v141 = vld [vmem:[%s0 + $0x2f4] sm:$0xff]
  %v142 = vld [vmem:[%s0 + $0x2fc] sm:$0xf]
  %v143 = vld [vmem:[%s1] sm:$0xf]
  %v144 = vld [vmem:[%s1 + $0x4] sm:$0xf]
  %v145 = vld [vmem:[%s1 + $0x8] sm:$0xf]
  %v146 = vld [vmem:[%s1 + $0xc] sm:$0xf]
  %v147 = vld [vmem:[%s1 + $0x10] sm:$0xf]
  %v148 = vld [vmem:[%s1 + $0x14] sm:$0xf]
  %v149 = vld [vmem:[%s1 + $0x18] sm:$0xf]
  %v150 = vld [vmem:[%s1 + $0x1c] sm:$0xf]
  %v151 = vld [vmem:[%s1 + $0x20] sm:$0xf]
  %v152 = vld [vmem:[%s1 + $0x24] sm:$0xf]
  %v153 = vld [vmem:[%s1 + $0x28] sm:$0xf]
  %v154 = vld [vmem:[%s1 + $0x2c] sm:$0xf]
  %v155 = vld [vmem:[%s1 + $0x30] sm:$0xf]
  %v156 = vld [vmem:[%s1 + $0x34] sm:$0xf]
  %v157 = vld [vmem:[%s1 + $0x38] sm:$0xf]
  %v158 = vld [vmem:[%s1 + $0x3c] sm:$0xf]
  %v159 = vld [vmem:[%s1 + $0x40] sm:$0xf]
  %v160 = vld [vmem:[%s1 + $0x44] sm:$0xf]
  %v161 = vld [vmem:[%s1 + $0x48] sm:$0xf]
  %v162 = vld [vmem:[%s1 + $0x4c] sm:$0xf]
  %v163 = vld [vmem:[%s1 + $0x50] sm:$0xf]
  %v164 = vld [vmem:[%s1 + $0x54] sm:$0xf]
  %v165 = vld [vmem:[%s1 + $0x58] sm:$0xf]
  %v166 = vld [vmem:[%s1 + $0x5c] sm:$0xf]
  %v167 = vld [vmem:[%s1 + $0x60] sm:$0xf]
  %v168 = vld [vmem:[%s1 + $0x64] sm:$0xf]
  %v169 = vld [vmem:[%s1 + $0x68] sm:$0xf]
  %v170 = vld [vmem:[%s1 + $0x6c] sm:$0xf]
  %v171 = vld [vmem:[%s1 + $0x70] sm:$0xf]
  %v172 = vld [vmem:[%s1 + $0x74] sm:$0xf]
  %v173 = vld [vmem:[%s1 + $0x78] sm:$0xf]
  %v174 = vld [vmem:[%s1 + $0x7c] sm:$0xf]
  %v175 = vld [vmem:[%s1 + $0x80] sm:$0xf]
  %v176 = vld [vmem:[%s1 + $0x84] sm:$0xf]
  %v177 = vld [vmem:[%s1 + $0x88] sm:$0xf]
  %v178 = vld [vmem:[%s1 + $0x8c] sm:$0xf]
  %v179 = vld [vmem:[%s2] sm:$0x1]
  %v181 = vperm.slane %v179, 0
  %v311 = vunpack.c.l.b16 %v15
  %v312 = vunpack.c.h.b16 %v15
  %v313 = vunpack.c.l.b16 %v16
  %v314 = vunpack.c.l.b16 %v17
  %v315 = vunpack.c.h.b16 %v17
  %v316 = vunpack.c.l.b16 %v18
  %v317 = vunpack.c.l.b16 %v19
  %v318 = vunpack.c.h.b16 %v19
  %v319 = vunpack.c.l.b16 %v20
  %v320 = vunpack.c.l.b16 %v21
  %v321 = vunpack.c.h.b16 %v21
  %v322 = vunpack.c.l.b16 %v22
  %v323 = vunpack.c.l.b16 %v23
  %v324 = vunpack.c.h.b16 %v23
  %v325 = vunpack.c.l.b16 %v24
  %v326 = vunpack.c.l.b16 %v25
  %v327 = vunpack.c.h.b16 %v25
  %v328 = vunpack.c.l.b16 %v26
  %v329 = vunpack.c.l.b16 %v27
  %v330 = vunpack.c.h.b16 %v27
  %v331 = vunpack.c.l.b16 %v28
  %v332 = vunpack.c.l.b16 %v29
  %v333 = vunpack.c.h.b16 %v29
  %v334 = vunpack.c.l.b16 %v30
  %v335 = vunpack.c.l.b16 %v31
  %v336 = vunpack.c.h.b16 %v31
  %v337 = vunpack.c.l.b16 %v32
  %v338 = vunpack.c.l.b16 %v33
  %v339 = vunpack.c.h.b16 %v33
  %v340 = vunpack.c.l.b16 %v34
  %v341 = vunpack.c.l.b16 %v35
  %v342 = vunpack.c.h.b16 %v35
  %v343 = vunpack.c.l.b16 %v36
  %v344 = vunpack.c.l.b16 %v37
  %v345 = vunpack.c.h.b16 %v37
  %v346 = vunpack.c.l.b16 %v38
  %v347 = vunpack.c.l.b16 %v39
  %v348 = vunpack.c.h.b16 %v39
  %v349 = vunpack.c.l.b16 %v40
  %v350 = vunpack.c.l.b16 %v41
  %v351 = vunpack.c.h.b16 %v41
  %v352 = vunpack.c.l.b16 %v42
  %v353 = vunpack.c.l.b16 %v43
  %v354 = vunpack.c.h.b16 %v43
  %v355 = vunpack.c.l.b16 %v44
  %v356 = vunpack.c.l.b16 %v45
  %v357 = vunpack.c.h.b16 %v45
  %v358 = vunpack.c.l.b16 %v46
  %v359 = vunpack.c.l.b16 %v47
  %v360 = vunpack.c.h.b16 %v47
  %v361 = vunpack.c.l.b16 %v48
  %v362 = vunpack.c.l.b16 %v49
  %v363 = vunpack.c.h.b16 %v49
  %v364 = vunpack.c.l.b16 %v50
  %v365 = vunpack.c.l.b16 %v51
  %v366 = vunpack.c.h.b16 %v51
  %v367 = vunpack.c.l.b16 %v52
  %v368 = vunpack.c.l.b16 %v53
  %v369 = vunpack.c.h.b16 %v53
  %v370 = vunpack.c.l.b16 %v54
  %v371 = vunpack.c.l.b16 %v55
  %v372 = vunpack.c.h.b16 %v55
  %v373 = vunpack.c.l.b16 %v56
  %v374 = vunpack.c.l.b16 %v57
  %v375 = vunpack.c.h.b16 %v57
  %v376 = vunpack.c.l.b16 %v58
  %v377 = vunpack.c.l.b16 %v59
  %v378 = vunpack.c.h.b16 %v59
  %v379 = vunpack.c.l.b16 %v60
  %v380 = vunpack.c.l.b16 %v61
  %v381 = vunpack.c.h.b16 %v61
  %v382 = vunpack.c.l.b16 %v62
  %v383 = vunpack.c.l.b16 %v63
  %v384 = vunpack.c.h.b16 %v63
  %v385 = vunpack.c.l.b16 %v64
  %v386 = vunpack.c.l.b16 %v65
  %v387 = vunpack.c.h.b16 %v65
  %v388 = vunpack.c.l.b16 %v66
  %v389 = vunpack.c.l.b16 %v67
  %v390 = vunpack.c.h.b16 %v67
  %v391 = vunpack.c.l.b16 %v68
  %v392 = vunpack.c.l.b16 %v69
  %v393 = vunpack.c.h.b16 %v69
  %v394 = vunpack.c.l.b16 %v70
  %v395 = vunpack.c.l.b16 %v71
  %v396 = vunpack.c.h.b16 %v71
  %v397 = vunpack.c.l.b16 %v72
  %v398 = vunpack.c.l.b16 %v73
  %v399 = vunpack.c.h.b16 %v73
  %v400 = vunpack.c.l.b16 %v74
  %v401 = vunpack.c.l.b16 %v75
  %v402 = vunpack.c.h.b16 %v75
  %v403 = vunpack.c.l.b16 %v76
  %v404 = vunpack.c.l.b16 %v77
  %v405 = vunpack.c.h.b16 %v77
  %v406 = vunpack.c.l.b16 %v78
  %v407 = vunpack.c.l.b16 %v79
  %v408 = vunpack.c.h.b16 %v79
  %v409 = vunpack.c.l.b16 %v80
  %v410 = vunpack.c.l.b16 %v81
  %v411 = vunpack.c.h.b16 %v81
  %v412 = vunpack.c.l.b16 %v82
  %v413 = vunpack.c.l.b16 %v83
  %v414 = vunpack.c.h.b16 %v83
  %v415 = vunpack.c.l.b16 %v84
  %v416 = vunpack.c.l.b16 %v85
  %v417 = vunpack.c.h.b16 %v85
  %v418 = vunpack.c.l.b16 %v86
  %v419 = vunpack.c.l.b16 %v87
  %v420 = vunpack.c.h.b16 %v87
  %v421 = vunpack.c.l.b16 %v88
  %v422 = vunpack.c.l.b16 %v89
  %v423 = vunpack.c.h.b16 %v89
  %v424 = vunpack.c.l.b16 %v90
  %v425 = vunpack.c.l.b16 %v91
  %v426 = vunpack.c.h.b16 %v91
  %v427 = vunpack.c.l.b16 %v92
  %v428 = vunpack.c.l.b16 %v93
  %v429 = vunpack.c.h.b16 %v93
  %v430 = vunpack.c.l.b16 %v94
  %v431 = vunpack.c.l.b16 %v95
  %v432 = vunpack.c.h.b16 %v95
  %v433 = vunpack.c.l.b16 %v96
  %v434 = vunpack.c.l.b16 %v97
  %v435 = vunpack.c.h.b16 %v97
  %v436 = vunpack.c.l.b16 %v98
  %v437 = vunpack.c.l.b16 %v99
  %v438 = vunpack.c.h.b16 %v99
  %v439 = vunpack.c.l.b16 %v100
  %v440 = vunpack.c.l.b16 %v101
  %v441 = vunpack.c.h.b16 %v101
  %v442 = vunpack.c.l.b16 %v102
  %v443 = vunpack.c.l.b16 %v103
  %v444 = vunpack.c.h.b16 %v103
  %v445 = vunpack.c.l.b16 %v104
  %v446 = vunpack.c.l.b16 %v105
  %v447 = vunpack.c.h.b16 %v105
  %v448 = vunpack.c.l.b16 %v106
  %v449 = vunpack.c.l.b16 %v107
  %v450 = vunpack.c.h.b16 %v107
  %v451 = vunpack.c.l.b16 %v108
  %v452 = vunpack.c.l.b16 %v109
  %v453 = vunpack.c.h.b16 %v109
  %v454 = vunpack.c.l.b16 %v110
  %v455 = vunpack.c.l.b16 %v111
  %v456 = vunpack.c.h.b16 %v111
  %v457 = vunpack.c.l.b16 %v112
  %v458 = vunpack.c.l.b16 %v113
  %v459 = vunpack.c.h.b16 %v113
  %v460 = vunpack.c.l.b16 %v114
  %v461 = vunpack.c.l.b16 %v115
  %v462 = vunpack.c.h.b16 %v115
  %v463 = vunpack.c.l.b16 %v116
  %v464 = vunpack.c.l.b16 %v117
  %v465 = vunpack.c.h.b16 %v117
  %v466 = vunpack.c.l.b16 %v118
  %v467 = vunpack.c.l.b16 %v119
  %v468 = vunpack.c.h.b16 %v119
  %v469 = vunpack.c.l.b16 %v120
  %v470 = vunpack.c.l.b16 %v121
  %v471 = vunpack.c.h.b16 %v121
  %v472 = vunpack.c.l.b16 %v122
  %v473 = vunpack.c.l.b16 %v123
  %v474 = vunpack.c.h.b16 %v123
  %v475 = vunpack.c.l.b16 %v124
  %v476 = vunpack.c.l.b16 %v125
  %v477 = vunpack.c.h.b16 %v125
  %v478 = vunpack.c.l.b16 %v126
  %v479 = vunpack.c.l.b16 %v127
  %v480 = vunpack.c.h.b16 %v127
  %v481 = vunpack.c.l.b16 %v128
  %v482 = vunpack.c.l.b16 %v129
  %v483 = vunpack.c.h.b16 %v129
  %v484 = vunpack.c.l.b16 %v130
  %v485 = vunpack.c.l.b16 %v131
  %v486 = vunpack.c.h.b16 %v131
  %v487 = vunpack.c.l.b16 %v132
  %v488 = vunpack.c.l.b16 %v133
  %v489 = vunpack.c.h.b16 %v133
  %v490 = vunpack.c.l.b16 %v134
  %v491 = vunpack.c.l.b16 %v135
  %v492 = vunpack.c.h.b16 %v135
  %v493 = vunpack.c.l.b16 %v136
  %v494 = vunpack.c.l.b16 %v137
  %v495 = vunpack.c.h.b16 %v137
  %v496 = vunpack.c.l.b16 %v138
  %v497 = vunpack.c.l.b16 %v139
  %v498 = vunpack.c.h.b16 %v139
  %v499 = vunpack.c.l.b16 %v140
  %v500 = vunpack.c.l.b16 %v141
  %v501 = vunpack.c.h.b16 %v141
  %v502 = vunpack.c.l.b16 %v142
  %v503 = vpack.c.b16 %v314, %v311
  %v504 = vpack.c.b16 %v315, %v312
  %v505 = vpack.c.b16 %v316, %v313
  %v506 = vpack.c.b16 %v320, %v317
  %v507 = vpack.c.b16 %v321, %v318
  %v508 = vpack.c.b16 %v322, %v319
  %v509 = vpack.c.b16 %v326, %v323
  %v510 = vpack.c.b16 %v327, %v324
  %v511 = vpack.c.b16 %v328, %v325
  %v512 = vpack.c.b16 %v332, %v329
  %v513 = vpack.c.b16 %v333, %v330
  %v514 = vpack.c.b16 %v334, %v331
  %v515 = vpack.c.b16 %v338, %v335
  %v516 = vpack.c.b16 %v339, %v336
  %v517 = vpack.c.b16 %v340, %v337
  %v518 = vpack.c.b16 %v344, %v341
  %v519 = vpack.c.b16 %v345, %v342
  %v520 = vpack.c.b16 %v346, %v343
  %v521 = vpack.c.b16 %v350, %v347
  %v522 = vpack.c.b16 %v351, %v348
  %v523 = vpack.c.b16 %v352, %v349
  %v524 = vpack.c.b16 %v356, %v353
  %v525 = vpack.c.b16 %v357, %v354
  %v526 = vpack.c.b16 %v358, %v355
  %v527 = vpack.c.b16 %v362, %v359
  %v528 = vpack.c.b16 %v363, %v360
  %v529 = vpack.c.b16 %v364, %v361
  %v530 = vpack.c.b16 %v368, %v365
  %v531 = vpack.c.b16 %v369, %v366
  %v532 = vpack.c.b16 %v370, %v367
  %v533 = vpack.c.b16 %v374, %v371
  %v534 = vpack.c.b16 %v375, %v372
  %v535 = vpack.c.b16 %v376, %v373
  %v536 = vpack.c.b16 %v380, %v377
  %v537 = vpack.c.b16 %v381, %v378
  %v538 = vpack.c.b16 %v382, %v379
  %v539 = vpack.c.b16 %v386, %v383
  %v540 = vpack.c.b16 %v387, %v384
  %v541 = vpack.c.b16 %v388, %v385
  %v542 = vpack.c.b16 %v392, %v389
  %v543 = vpack.c.b16 %v393, %v390
  %v544 = vpack.c.b16 %v394, %v391
  %v545 = vpack.c.b16 %v398, %v395
  %v546 = vpack.c.b16 %v399, %v396
  %v547 = vpack.c.b16 %v400, %v397
  %v548 = vpack.c.b16 %v404, %v401
  %v549 = vpack.c.b16 %v405, %v402
  %v550 = vpack.c.b16 %v406, %v403
  %v551 = vpack.c.b16 %v410, %v407
  %v552 = vpack.c.b16 %v411, %v408
  %v553 = vpack.c.b16 %v412, %v409
  %v554 = vpack.c.b16 %v416, %v413
  %v555 = vpack.c.b16 %v417, %v414
  %v556 = vpack.c.b16 %v418, %v415
  %v557 = vpack.c.b16 %v422, %v419
  %v558 = vpack.c.b16 %v423, %v420
  %v559 = vpack.c.b16 %v424, %v421
  %v560 = vpack.c.b16 %v428, %v425
  %v561 = vpack.c.b16 %v429, %v426
  %v562 = vpack.c.b16 %v430, %v427
  %v563 = vpack.c.b16 %v434, %v431
  %v564 = vpack.c.b16 %v435, %v432
  %v565 = vpack.c.b16 %v436, %v433
  %v566 = vpack.c.b16 %v440, %v437
  %v567 = vpack.c.b16 %v441, %v438
  %v568 = vpack.c.b16 %v442, %v439
  %v569 = vpack.c.b16 %v446, %v443
  %v570 = vpack.c.b16 %v447, %v444
  %v571 = vpack.c.b16 %v448, %v445
  %v572 = vpack.c.b16 %v452, %v449
  %v573 = vpack.c.b16 %v453, %v450
  %v574 = vpack.c.b16 %v454, %v451
  %v575 = vpack.c.b16 %v458, %v455
  %v576 = vpack.c.b16 %v459, %v456
  %v577 = vpack.c.b16 %v460, %v457
  %v578 = vpack.c.b16 %v464, %v461
  %v579 = vpack.c.b16 %v465, %v462
  %v580 = vpack.c.b16 %v466, %v463
  %v581 = vpack.c.b16 %v470, %v467
  %v582 = vpack.c.b16 %v471, %v468
  %v583 = vpack.c.b16 %v472, %v469
  %v584 = vpack.c.b16 %v476, %v473
  %v585 = vpack.c.b16 %v477, %v474
  %v586 = vpack.c.b16 %v478, %v475
  %v587 = vpack.c.b16 %v482, %v479
  %v588 = vpack.c.b16 %v483, %v480
  %v589 = vpack.c.b16 %v484, %v481
  %v590 = vpack.c.b16 %v488, %v485
  %v591 = vpack.c.b16 %v489, %v486
  %v592 = vpack.c.b16 %v490, %v487
  %v593 = vpack.c.b16 %v494, %v491
  %v594 = vpack.c.b16 %v495, %v492
  %v595 = vpack.c.b16 %v496, %v493
  %v596 = vpack.c.b16 %v500, %v497
  %v597 = vpack.c.b16 %v501, %v498
  %v598 = vpack.c.b16 %v502, %v499
  %v699 = vunpack.c.l.b16 %v143
  %v700 = vunpack.c.l.b16 %v144
  %v701 = vunpack.c.l.b16 %v145
  %v702 = vunpack.c.l.b16 %v146
  %v703 = vunpack.c.l.b16 %v147
  %v704 = vunpack.c.l.b16 %v148
  %v705 = vunpack.c.l.b16 %v149
  %v706 = vunpack.c.l.b16 %v150
  %v707 = vunpack.c.l.b16 %v151
  %v708 = vunpack.c.l.b16 %v152
  %v709 = vunpack.c.l.b16 %v153
  %v710 = vunpack.c.l.b16 %v154
  %v711 = vunpack.c.l.b16 %v155
  %v712 = vunpack.c.l.b16 %v156
  %v713 = vunpack.c.l.b16 %v157
  %v714 = vunpack.c.l.b16 %v158
  %v715 = vunpack.c.l.b16 %v159
  %v716 = vunpack.c.l.b16 %v160
  %v717 = vunpack.c.l.b16 %v161
  %v718 = vunpack.c.l.b16 %v162
  %v719 = vunpack.c.l.b16 %v163
  %v720 = vunpack.c.l.b16 %v164
  %v721 = vunpack.c.l.b16 %v165
  %v722 = vunpack.c.l.b16 %v166
  %v723 = vunpack.c.l.b16 %v167
  %v724 = vunpack.c.l.b16 %v168
  %v725 = vunpack.c.l.b16 %v169
  %v726 = vunpack.c.l.b16 %v170
  %v727 = vunpack.c.l.b16 %v171
  %v728 = vunpack.c.l.b16 %v172
  %v729 = vunpack.c.l.b16 %v173
  %v730 = vunpack.c.l.b16 %v174
  %v731 = vunpack.c.l.b16 %v175
  %v732 = vunpack.c.l.b16 %v176
  %v733 = vunpack.c.l.b16 %v177
  %v734 = vunpack.c.l.b16 %v178
  %v735 = vpack.c.b16 %v700, %v699
  %v736 = vpack.c.b16 %v702, %v701
  %v737 = vpack.c.b16 %v704, %v703
  %v738 = vpack.c.b16 %v706, %v705
  %v739 = vpack.c.b16 %v708, %v707
  %v740 = vpack.c.b16 %v710, %v709
  %v741 = vpack.c.b16 %v712, %v711
  %v742 = vpack.c.b16 %v714, %v713
  %v743 = vpack.c.b16 %v716, %v715
  %v744 = vpack.c.b16 %v718, %v717
  %v745 = vpack.c.b16 %v720, %v719
  %v746 = vpack.c.b16 %v722, %v721
  %v747 = vpack.c.b16 %v724, %v723
  %v748 = vpack.c.b16 %v726, %v725
  %v749 = vpack.c.b16 %v728, %v727
  %v750 = vpack.c.b16 %v730, %v729
  %v751 = vpack.c.b16 %v732, %v731
  %v752 = vpack.c.b16 %v734, %v733
  %vm771 = vcmask 261120
  %v773 = vsel %vm771, %v505, 0
  %v776 = vsel %vm771, %v508, 0
  %v779 = vsel %vm771, %v511, 0
  %v782 = vsel %vm771, %v514, 0
  %v785 = vsel %vm771, %v517, 0
  %v788 = vsel %vm771, %v520, 0
  %v791 = vsel %vm771, %v523, 0
  %v794 = vsel %vm771, %v526, 0
  %v797 = vsel %vm771, %v529, 0
  %v800 = vsel %vm771, %v532, 0
  %v803 = vsel %vm771, %v535, 0
  %v806 = vsel %vm771, %v538, 0
  %v809 = vsel %vm771, %v541, 0
  %v812 = vsel %vm771, %v544, 0
  %v815 = vsel %vm771, %v547, 0
  %v818 = vsel %vm771, %v550, 0
  %v821 = vsel %vm771, %v553, 0
  %v824 = vsel %vm771, %v556, 0
  %v827 = vsel %vm771, %v559, 0
  %v830 = vsel %vm771, %v562, 0
  %v833 = vsel %vm771, %v565, 0
  %v836 = vsel %vm771, %v568, 0
  %v839 = vsel %vm771, %v571, 0
  %v842 = vsel %vm771, %v574, 0
  %v845 = vsel %vm771, %v577, 0
  %v848 = vsel %vm771, %v580, 0
  %v851 = vsel %vm771, %v583, 0
  %v854 = vsel %vm771, %v586, 0
  %v857 = vsel %vm771, %v589, 0
  %v860 = vsel %vm771, %v592, 0
  %v863 = vsel %vm771, %v595, 0
  %v866 = vsel %vm771, %v598, 0
  %868 = vmatpush.bf16.msra.mxu0 %v742
  %869 = vmatpush.bf16.msra.mxu0 %v741
  %870 = vmatpush.bf16.msra.mxu0 %v740
  %871 = vmatpush.bf16.msra.mxu0 %v739
  %872 = vmatpush.bf16.msra.mxu0 %v738
  %873 = vmatpush.bf16.msra.mxu0 %v737
  %874 = vmatpush.bf16.msra.mxu0 %v736
  %875 = vmatpush.bf16.msra.mxu0 %v735
  %876 = vmatmul.bf16.gmra.mxu0 %v503
  %v877 = vpop.f32.mrf.mxu0
  %v878 = vadd.f32 %v181, %v877
  %v879 = vpop.f32.mrf.mxu0
  %v880 = vadd.f32 %v181, %v879
  %881 = vmatmul.bf16.gmra.mxu0 %v506
  %v882 = vpop.f32.mrf.mxu0
  %v883 = vadd.f32 %v181, %v882
  %v884 = vpop.f32.mrf.mxu0
  %v885 = vadd.f32 %v181, %v884
  %886 = vmatmul.bf16.gmra.mxu0 %v509
  %v887 = vpop.f32.mrf.mxu0
  %v888 = vadd.f32 %v181, %v887
  %v889 = vpop.f32.mrf.mxu0
  %v890 = vadd.f32 %v181, %v889
  %891 = vmatmul.bf16.gmra.mxu0 %v512
  %v892 = vpop.f32.mrf.mxu0
  %v893 = vadd.f32 %v181, %v892
  %v894 = vpop.f32.mrf.mxu0
  %v895 = vadd.f32 %v181, %v894
  %896 = vmatmul.bf16.gmra.mxu0 %v515
  %v897 = vpop.f32.mrf.mxu0
  %v898 = vadd.f32 %v181, %v897
  %v899 = vpop.f32.mrf.mxu0
  %v900 = vadd.f32 %v181, %v899
  %901 = vmatmul.bf16.gmra.mxu0 %v518
  %v902 = vpop.f32.mrf.mxu0
  %v903 = vadd.f32 %v181, %v902
  %v904 = vpop.f32.mrf.mxu0
  %v905 = vadd.f32 %v181, %v904
  %906 = vmatmul.bf16.gmra.mxu0 %v521
  %v907 = vpop.f32.mrf.mxu0
  %v908 = vadd.f32 %v181, %v907
  %v909 = vpop.f32.mrf.mxu0
  %v910 = vadd.f32 %v181, %v909
  %911 = vmatmul.bf16.gmra.mxu0 %v524
  %v912 = vpop.f32.mrf.mxu0
  %v913 = vadd.f32 %v181, %v912
  %v914 = vpop.f32.mrf.mxu0
  %v915 = vadd.f32 %v181, %v914
  %916 = vmatmul.bf16.gmra.mxu0 %v527
  %v917 = vpop.f32.mrf.mxu0
  %v918 = vadd.f32 %v181, %v917
  %v919 = vpop.f32.mrf.mxu0
  %v920 = vadd.f32 %v181, %v919
  %921 = vmatmul.bf16.gmra.mxu0 %v530
  %v922 = vpop.f32.mrf.mxu0
  %v923 = vadd.f32 %v181, %v922
  %v924 = vpop.f32.mrf.mxu0
  %v925 = vadd.f32 %v181, %v924
  %926 = vmatmul.bf16.gmra.mxu0 %v533
  %v927 = vpop.f32.mrf.mxu0
  %v928 = vadd.f32 %v181, %v927
  %v929 = vpop.f32.mrf.mxu0
  %v930 = vadd.f32 %v181, %v929
  %931 = vmatmul.bf16.gmra.mxu0 %v536
  %v932 = vpop.f32.mrf.mxu0
  %v933 = vadd.f32 %v181, %v932
  %v934 = vpop.f32.mrf.mxu0
  %v935 = vadd.f32 %v181, %v934
  %936 = vmatmul.bf16.gmra.mxu0 %v539
  %v937 = vpop.f32.mrf.mxu0
  %v938 = vadd.f32 %v181, %v937
  %v939 = vpop.f32.mrf.mxu0
  %v940 = vadd.f32 %v181, %v939
  %941 = vmatmul.bf16.gmra.mxu0 %v542
  %v942 = vpop.f32.mrf.mxu0
  %v943 = vadd.f32 %v181, %v942
  %v944 = vpop.f32.mrf.mxu0
  %v945 = vadd.f32 %v181, %v944
  %946 = vmatmul.bf16.gmra.mxu0 %v545
  %v947 = vpop.f32.mrf.mxu0
  %v948 = vadd.f32 %v181, %v947
  %v949 = vpop.f32.mrf.mxu0
  %v950 = vadd.f32 %v181, %v949
  %951 = vmatmul.bf16.gmra.mxu0 %v548
  %v952 = vpop.f32.mrf.mxu0
  %v953 = vadd.f32 %v181, %v952
  %v954 = vpop.f32.mrf.mxu0
  %v955 = vadd.f32 %v181, %v954
  %956 = vmatmul.bf16.gmra.mxu0 %v551
  %v957 = vpop.f32.mrf.mxu0
  %v958 = vadd.f32 %v181, %v957
  %v959 = vpop.f32.mrf.mxu0
  %v960 = vadd.f32 %v181, %v959
  %961 = vmatmul.bf16.gmra.mxu0 %v554
  %v962 = vpop.f32.mrf.mxu0
  %v963 = vadd.f32 %v181, %v962
  %v964 = vpop.f32.mrf.mxu0
  %v965 = vadd.f32 %v181, %v964
  %966 = vmatmul.bf16.gmra.mxu0 %v557
  %v967 = vpop.f32.mrf.mxu0
  %v968 = vadd.f32 %v181, %v967
  %v969 = vpop.f32.mrf.mxu0
  %v970 = vadd.f32 %v181, %v969
  %971 = vmatmul.bf16.gmra.mxu0 %v560
  %v972 = vpop.f32.mrf.mxu0
  %v973 = vadd.f32 %v181, %v972
  %v974 = vpop.f32.mrf.mxu0
  %v975 = vadd.f32 %v181, %v974
  %976 = vmatmul.bf16.gmra.mxu0 %v563
  %v977 = vpop.f32.mrf.mxu0
  %v978 = vadd.f32 %v181, %v977
  %v979 = vpop.f32.mrf.mxu0
  %v980 = vadd.f32 %v181, %v979
  %981 = vmatmul.bf16.gmra.mxu0 %v566
  %v982 = vpop.f32.mrf.mxu0
  %v983 = vadd.f32 %v181, %v982
  %v984 = vpop.f32.mrf.mxu0
  %v985 = vadd.f32 %v181, %v984
  %986 = vmatmul.bf16.gmra.mxu0 %v569
  %v987 = vpop.f32.mrf.mxu0
  %v988 = vadd.f32 %v181, %v987
  %v989 = vpop.f32.mrf.mxu0
  %v990 = vadd.f32 %v181, %v989
  %991 = vmatmul.bf16.gmra.mxu0 %v572
  %v992 = vpop.f32.mrf.mxu0
  %v993 = vadd.f32 %v181, %v992
  %v994 = vpop.f32.mrf.mxu0
  %v995 = vadd.f32 %v181, %v994
  %996 = vmatmul.bf16.gmra.mxu0 %v575
  %v997 = vpop.f32.mrf.mxu0
  %v998 = vadd.f32 %v181, %v997
  %v999 = vpop.f32.mrf.mxu0
  %v1000 = vadd.f32 %v181, %v999
  %1001 = vmatmul.bf16.gmra.mxu0 %v578
  %v1002 = vpop.f32.mrf.mxu0
  %v1003 = vadd.f32 %v181, %v1002
  %v1004 = vpop.f32.mrf.mxu0
  %v1005 = vadd.f32 %v181, %v1004
  %1006 = vmatmul.bf16.gmra.mxu0 %v581
  %v1007 = vpop.f32.mrf.mxu0
  %v1008 = vadd.f32 %v181, %v1007
  %v1009 = vpop.f32.mrf.mxu0
  %v1010 = vadd.f32 %v181, %v1009
  %1011 = vmatmul.bf16.gmra.mxu0 %v584
  %v1012 = vpop.f32.mrf.mxu0
  %v1013 = vadd.f32 %v181, %v1012
  %v1014 = vpop.f32.mrf.mxu0
  %v1015 = vadd.f32 %v181, %v1014
  %1016 = vmatmul.bf16.gmra.mxu0 %v587
  %v1017 = vpop.f32.mrf.mxu0
  %v1018 = vadd.f32 %v181, %v1017
  %v1019 = vpop.f32.mrf.mxu0
  %v1020 = vadd.f32 %v181, %v1019
  %1021 = vmatmul.bf16.gmra.mxu0 %v590
  %v1022 = vpop.f32.mrf.mxu0
  %v1023 = vadd.f32 %v181, %v1022
  %v1024 = vpop.f32.mrf.mxu0
  %v1025 = vadd.f32 %v181, %v1024
  %1026 = vmatmul.bf16.gmra.mxu0 %v593
  %v1027 = vpop.f32.mrf.mxu0
  %v1028 = vadd.f32 %v181, %v1027
  %v1029 = vpop.f32.mrf.mxu0
  %v1030 = vadd.f32 %v181, %v1029
  %1031 = vmatmul.bf16.gmra.mxu0 %v596
  %v1032 = vpop.f32.mrf.mxu0
  %v1033 = vadd.f32 %v181, %v1032
  %v1034 = vpop.f32.mrf.mxu0
  %v1035 = vadd.f32 %v181, %v1034
  %1036 = vdwg.mxu0
  %1037 = vmatpush.bf16.msra.mxu0 %v750
  %1038 = vmatpush.bf16.msra.mxu0 %v749
  %1039 = vmatpush.bf16.msra.mxu0 %v748
  %1040 = vmatpush.bf16.msra.mxu0 %v747
  %1041 = vmatpush.bf16.msra.mxu0 %v746
  %1042 = vmatpush.bf16.msra.mxu0 %v745
  %1043 = vmatpush.bf16.msra.mxu0 %v744
  %1044 = vmatpush.bf16.msra.mxu0 %v743
  %1045 = vmatmul.bf16.gmra.mxu0 %v504
  %v1046 = vpop.f32.mrf.mxu0
  %v1047 = vadd.f32 %v878, %v1046
  %v1048 = vpop.f32.mrf.mxu0
  %v1049 = vadd.f32 %v880, %v1048
  %1050 = vmatmul.bf16.gmra.mxu0 %v507
  %v1051 = vpop.f32.mrf.mxu0
  %v1052 = vadd.f32 %v883, %v1051
  %v1053 = vpop.f32.mrf.mxu0
  %v1054 = vadd.f32 %v885, %v1053
  %1055 = vmatmul.bf16.gmra.mxu0 %v510
  %v1056 = vpop.f32.mrf.mxu0
  %v1057 = vadd.f32 %v888, %v1056
  %v1058 = vpop.f32.mrf.mxu0
  %v1059 = vadd.f32 %v890, %v1058
  %1060 = vmatmul.bf16.gmra.mxu0 %v513
  %v1061 = vpop.f32.mrf.mxu0
  %v1062 = vadd.f32 %v893, %v1061
  %v1063 = vpop.f32.mrf.mxu0
  %v1064 = vadd.f32 %v895, %v1063
  %1065 = vmatmul.bf16.gmra.mxu0 %v516
  %v1066 = vpop.f32.mrf.mxu0
  %v1067 = vadd.f32 %v898, %v1066
  %v1068 = vpop.f32.mrf.mxu0
  %v1069 = vadd.f32 %v900, %v1068
  %1070 = vmatmul.bf16.gmra.mxu0 %v519
  %v1071 = vpop.f32.mrf.mxu0
  %v1072 = vadd.f32 %v903, %v1071
  %v1073 = vpop.f32.mrf.mxu0
  %v1074 = vadd.f32 %v905, %v1073
  %1075 = vmatmul.bf16.gmra.mxu0 %v522
  %v1076 = vpop.f32.mrf.mxu0
  %v1077 = vadd.f32 %v908, %v1076
  %v1078 = vpop.f32.mrf.mxu0
  %v1079 = vadd.f32 %v910, %v1078
  %1080 = vmatmul.bf16.gmra.mxu0 %v525
  %v1081 = vpop.f32.mrf.mxu0
  %v1082 = vadd.f32 %v913, %v1081
  %v1083 = vpop.f32.mrf.mxu0
  %v1084 = vadd.f32 %v915, %v1083
  %1085 = vmatmul.bf16.gmra.mxu0 %v528
  %v1086 = vpop.f32.mrf.mxu0
  %v1087 = vadd.f32 %v918, %v1086
  %v1088 = vpop.f32.mrf.mxu0
  %v1089 = vadd.f32 %v920, %v1088
  %1090 = vmatmul.bf16.gmra.mxu0 %v531
  %v1091 = vpop.f32.mrf.mxu0
  %v1092 = vadd.f32 %v923, %v1091
  %v1093 = vpop.f32.mrf.mxu0
  %v1094 = vadd.f32 %v925, %v1093
  %1095 = vmatmul.bf16.gmra.mxu0 %v534
  %v1096 = vpop.f32.mrf.mxu0
  %v1097 = vadd.f32 %v928, %v1096
  %v1098 = vpop.f32.mrf.mxu0
  %v1099 = vadd.f32 %v930, %v1098
  %1100 = vmatmul.bf16.gmra.mxu0 %v537
  %v1101 = vpop.f32.mrf.mxu0
  %v1102 = vadd.f32 %v933, %v1101
  %v1103 = vpop.f32.mrf.mxu0
  %v1104 = vadd.f32 %v935, %v1103
  %1105 = vmatmul.bf16.gmra.mxu0 %v540
  %v1106 = vpop.f32.mrf.mxu0
  %v1107 = vadd.f32 %v938, %v1106
  %v1108 = vpop.f32.mrf.mxu0
  %v1109 = vadd.f32 %v940, %v1108
  %1110 = vmatmul.bf16.gmra.mxu0 %v543
  %v1111 = vpop.f32.mrf.mxu0
  %v1112 = vadd.f32 %v943, %v1111
  %v1113 = vpop.f32.mrf.mxu0
  %v1114 = vadd.f32 %v945, %v1113
  %1115 = vmatmul.bf16.gmra.mxu0 %v546
  %v1116 = vpop.f32.mrf.mxu0
  %v1117 = vadd.f32 %v948, %v1116
  %v1118 = vpop.f32.mrf.mxu0
  %v1119 = vadd.f32 %v950, %v1118
  %1120 = vmatmul.bf16.gmra.mxu0 %v549
  %v1121 = vpop.f32.mrf.mxu0
  %v1122 = vadd.f32 %v953, %v1121
  %v1123 = vpop.f32.mrf.mxu0
  %v1124 = vadd.f32 %v955, %v1123
  %1125 = vmatmul.bf16.gmra.mxu0 %v552
  %v1126 = vpop.f32.mrf.mxu0
  %v1127 = vadd.f32 %v958, %v1126
  %v1128 = vpop.f32.mrf.mxu0
  %v1129 = vadd.f32 %v960, %v1128
  %1130 = vmatmul.bf16.gmra.mxu0 %v555
  %v1131 = vpop.f32.mrf.mxu0
  %v1132 = vadd.f32 %v963, %v1131
  %v1133 = vpop.f32.mrf.mxu0
  %v1134 = vadd.f32 %v965, %v1133
  %1135 = vmatmul.bf16.gmra.mxu0 %v558
  %v1136 = vpop.f32.mrf.mxu0
  %v1137 = vadd.f32 %v968, %v1136
  %v1138 = vpop.f32.mrf.mxu0
  %v1139 = vadd.f32 %v970, %v1138
  %1140 = vmatmul.bf16.gmra.mxu0 %v561
  %v1141 = vpop.f32.mrf.mxu0
  %v1142 = vadd.f32 %v973, %v1141
  %v1143 = vpop.f32.mrf.mxu0
  %v1144 = vadd.f32 %v975, %v1143
  %1145 = vmatmul.bf16.gmra.mxu0 %v564
  %v1146 = vpop.f32.mrf.mxu0
  %v1147 = vadd.f32 %v978, %v1146
  %v1148 = vpop.f32.mrf.mxu0
  %v1149 = vadd.f32 %v980, %v1148
  %1150 = vmatmul.bf16.gmra.mxu0 %v567
  %v1151 = vpop.f32.mrf.mxu0
  %v1152 = vadd.f32 %v983, %v1151
  %v1153 = vpop.f32.mrf.mxu0
  %v1154 = vadd.f32 %v985, %v1153
  %1155 = vmatmul.bf16.gmra.mxu0 %v570
  %v1156 = vpop.f32.mrf.mxu0
  %v1157 = vadd.f32 %v988, %v1156
  %v1158 = vpop.f32.mrf.mxu0
  %v1159 = vadd.f32 %v990, %v1158
  %1160 = vmatmul.bf16.gmra.mxu0 %v573
  %v1161 = vpop.f32.mrf.mxu0
  %v1162 = vadd.f32 %v993, %v1161
  %v1163 = vpop.f32.mrf.mxu0
  %v1164 = vadd.f32 %v995, %v1163
  %1165 = vmatmul.bf16.gmra.mxu0 %v576
  %v1166 = vpop.f32.mrf.mxu0
  %v1167 = vadd.f32 %v998, %v1166
  %v1168 = vpop.f32.mrf.mxu0
  %v1169 = vadd.f32 %v1000, %v1168
  %1170 = vmatmul.bf16.gmra.mxu0 %v579
  %v1171 = vpop.f32.mrf.mxu0
  %v1172 = vadd.f32 %v1003, %v1171
  %v1173 = vpop.f32.mrf.mxu0
  %v1174 = vadd.f32 %v1005, %v1173
  %1175 = vmatmul.bf16.gmra.mxu0 %v582
  %v1176 = vpop.f32.mrf.mxu0
  %v1177 = vadd.f32 %v1008, %v1176
  %v1178 = vpop.f32.mrf.mxu0
  %v1179 = vadd.f32 %v1010, %v1178
  %1180 = vmatmul.bf16.gmra.mxu0 %v585
  %v1181 = vpop.f32.mrf.mxu0
  %v1182 = vadd.f32 %v1013, %v1181
  %v1183 = vpop.f32.mrf.mxu0
  %v1184 = vadd.f32 %v1015, %v1183
  %1185 = vmatmul.bf16.gmra.mxu0 %v588
  %v1186 = vpop.f32.mrf.mxu0
  %v1187 = vadd.f32 %v1018, %v1186
  %v1188 = vpop.f32.mrf.mxu0
  %v1189 = vadd.f32 %v1020, %v1188
  %1190 = vmatmul.bf16.gmra.mxu0 %v591
  %v1191 = vpop.f32.mrf.mxu0
  %v1192 = vadd.f32 %v1023, %v1191
  %v1193 = vpop.f32.mrf.mxu0
  %v1194 = vadd.f32 %v1025, %v1193
  %1195 = vmatmul.bf16.gmra.mxu0 %v594
  %v1196 = vpop.f32.mrf.mxu0
  %v1197 = vadd.f32 %v1028, %v1196
  %v1198 = vpop.f32.mrf.mxu0
  %v1199 = vadd.f32 %v1030, %v1198
  %1200 = vmatmul.bf16.gmra.mxu0 %v597
  %v1201 = vpop.f32.mrf.mxu0
  %v1202 = vadd.f32 %v1033, %v1201
  %v1203 = vpop.f32.mrf.mxu0
  %v1204 = vadd.f32 %v1035, %v1203
  %1205 = vdwg.mxu0
  %1206 = vmatpush.bf16.msra.mxu0 0
  %1207 = vmatpush.bf16.msra.mxu0 0
  %1208 = vmatpush.bf16.msra.mxu0 0
  %1209 = vmatpush.bf16.msra.mxu0 0
  %1210 = vmatpush.bf16.msra.mxu0 0
  %1211 = vmatpush.bf16.msra.mxu0 0
  %1212 = vmatpush.bf16.msra.mxu0 %v752
  %1213 = vmatpush.bf16.msra.mxu0 %v751
  %1214 = vmatmul.bf16.gmra.mxu0 %v773
  %v1215 = vpop.f32.mrf.mxu0
  %v1216 = vadd.f32 %v1047, %v1215
  %v1217 = vpop.f32.mrf.mxu0
  %v1218 = vadd.f32 %v1049, %v1217
  %1219 = vmatmul.bf16.gmra.mxu0 %v776
  %v1220 = vpop.f32.mrf.mxu0
  %v1221 = vadd.f32 %v1052, %v1220
  %v1222 = vpop.f32.mrf.mxu0
  %v1223 = vadd.f32 %v1054, %v1222
  %1224 = vmatmul.bf16.gmra.mxu0 %v779
  %v1225 = vpop.f32.mrf.mxu0
  %v1226 = vadd.f32 %v1057, %v1225
  %v1227 = vpop.f32.mrf.mxu0
  %v1228 = vadd.f32 %v1059, %v1227
  %1229 = vmatmul.bf16.gmra.mxu0 %v782
  %v1230 = vpop.f32.mrf.mxu0
  %v1231 = vadd.f32 %v1062, %v1230
  %v1232 = vpop.f32.mrf.mxu0
  %v1233 = vadd.f32 %v1064, %v1232
  %1234 = vmatmul.bf16.gmra.mxu0 %v785
  %v1235 = vpop.f32.mrf.mxu0
  %v1236 = vadd.f32 %v1067, %v1235
  %v1237 = vpop.f32.mrf.mxu0
  %v1238 = vadd.f32 %v1069, %v1237
  %1239 = vmatmul.bf16.gmra.mxu0 %v788
  %v1240 = vpop.f32.mrf.mxu0
  %v1241 = vadd.f32 %v1072, %v1240
  %v1242 = vpop.f32.mrf.mxu0
  %v1243 = vadd.f32 %v1074, %v1242
  %1244 = vmatmul.bf16.gmra.mxu0 %v791
  %v1245 = vpop.f32.mrf.mxu0
  %v1246 = vadd.f32 %v1077, %v1245
  %v1247 = vpop.f32.mrf.mxu0
  %v1248 = vadd.f32 %v1079, %v1247
  %1249 = vmatmul.bf16.gmra.mxu0 %v794
  %v1250 = vpop.f32.mrf.mxu0
  %v1251 = vadd.f32 %v1082, %v1250
  %v1252 = vpop.f32.mrf.mxu0
  %v1253 = vadd.f32 %v1084, %v1252
  %1254 = vmatmul.bf16.gmra.mxu0 %v797
  %v1255 = vpop.f32.mrf.mxu0
  %v1256 = vadd.f32 %v1087, %v1255
  %v1257 = vpop.f32.mrf.mxu0
  %v1258 = vadd.f32 %v1089, %v1257
  %1259 = vmatmul.bf16.gmra.mxu0 %v800
  %v1260 = vpop.f32.mrf.mxu0
  %v1261 = vadd.f32 %v1092, %v1260
  %v1262 = vpop.f32.mrf.mxu0
  %v1263 = vadd.f32 %v1094, %v1262
  %1264 = vmatmul.bf16.gmra.mxu0 %v803
  %v1265 = vpop.f32.mrf.mxu0
  %v1266 = vadd.f32 %v1097, %v1265
  %v1267 = vpop.f32.mrf.mxu0
  %v1268 = vadd.f32 %v1099, %v1267
  %1269 = vmatmul.bf16.gmra.mxu0 %v806
  %v1270 = vpop.f32.mrf.mxu0
  %v1271 = vadd.f32 %v1102, %v1270
  %v1272 = vpop.f32.mrf.mxu0
  %v1273 = vadd.f32 %v1104, %v1272
  %1274 = vmatmul.bf16.gmra.mxu0 %v809
  %v1275 = vpop.f32.mrf.mxu0
  %v1276 = vadd.f32 %v1107, %v1275
  %v1277 = vpop.f32.mrf.mxu0
  %v1278 = vadd.f32 %v1109, %v1277
  %1279 = vmatmul.bf16.gmra.mxu0 %v812
  %v1280 = vpop.f32.mrf.mxu0
  %v1281 = vadd.f32 %v1112, %v1280
  %v1282 = vpop.f32.mrf.mxu0
  %v1283 = vadd.f32 %v1114, %v1282
  %1284 = vmatmul.bf16.gmra.mxu0 %v815
  %v1285 = vpop.f32.mrf.mxu0
  %v1286 = vadd.f32 %v1117, %v1285
  %v1287 = vpop.f32.mrf.mxu0
  %v1288 = vadd.f32 %v1119, %v1287
  %1289 = vmatmul.bf16.gmra.mxu0 %v818
  %v1290 = vpop.f32.mrf.mxu0
  %v1291 = vadd.f32 %v1122, %v1290
  %v1292 = vpop.f32.mrf.mxu0
  %v1293 = vadd.f32 %v1124, %v1292
  %1294 = vmatmul.bf16.gmra.mxu0 %v821
  %v1295 = vpop.f32.mrf.mxu0
  %v1296 = vadd.f32 %v1127, %v1295
  %v1297 = vpop.f32.mrf.mxu0
  %v1298 = vadd.f32 %v1129, %v1297
  %1299 = vmatmul.bf16.gmra.mxu0 %v824
  %v1300 = vpop.f32.mrf.mxu0
  %v1301 = vadd.f32 %v1132, %v1300
  %v1302 = vpop.f32.mrf.mxu0
  %v1303 = vadd.f32 %v1134, %v1302
  %1304 = vmatmul.bf16.gmra.mxu0 %v827
  %v1305 = vpop.f32.mrf.mxu0
  %v1306 = vadd.f32 %v1137, %v1305
  %v1307 = vpop.f32.mrf.mxu0
  %v1308 = vadd.f32 %v1139, %v1307
  %1309 = vmatmul.bf16.gmra.mxu0 %v830
  %v1310 = vpop.f32.mrf.mxu0
  %v1311 = vadd.f32 %v1142, %v1310
  %v1312 = vpop.f32.mrf.mxu0
  %v1313 = vadd.f32 %v1144, %v1312
  %1314 = vmatmul.bf16.gmra.mxu0 %v833
  %v1315 = vpop.f32.mrf.mxu0
  %v1316 = vadd.f32 %v1147, %v1315
  %v1317 = vpop.f32.mrf.mxu0
  %v1318 = vadd.f32 %v1149, %v1317
  %1319 = vmatmul.bf16.gmra.mxu0 %v836
  %v1320 = vpop.f32.mrf.mxu0
  %v1321 = vadd.f32 %v1152, %v1320
  %v1322 = vpop.f32.mrf.mxu0
  %v1323 = vadd.f32 %v1154, %v1322
  %1324 = vmatmul.bf16.gmra.mxu0 %v839
  %v1325 = vpop.f32.mrf.mxu0
  %v1326 = vadd.f32 %v1157, %v1325
  %v1327 = vpop.f32.mrf.mxu0
  %v1328 = vadd.f32 %v1159, %v1327
  %1329 = vmatmul.bf16.gmra.mxu0 %v842
  %v1330 = vpop.f32.mrf.mxu0
  %v1331 = vadd.f32 %v1162, %v1330
  %v1332 = vpop.f32.mrf.mxu0
  %v1333 = vadd.f32 %v1164, %v1332
  %1334 = vmatmul.bf16.gmra.mxu0 %v845
  %v1335 = vpop.f32.mrf.mxu0
  %v1336 = vadd.f32 %v1167, %v1335
  %v1337 = vpop.f32.mrf.mxu0
  %v1338 = vadd.f32 %v1169, %v1337
  %1339 = vmatmul.bf16.gmra.mxu0 %v848
  %v1340 = vpop.f32.mrf.mxu0
  %v1341 = vadd.f32 %v1172, %v1340
  %v1342 = vpop.f32.mrf.mxu0
  %v1343 = vadd.f32 %v1174, %v1342
  %1344 = vmatmul.bf16.gmra.mxu0 %v851
  %v1345 = vpop.f32.mrf.mxu0
  %v1346 = vadd.f32 %v1177, %v1345
  %v1347 = vpop.f32.mrf.mxu0
  %v1348 = vadd.f32 %v1179, %v1347
  %1349 = vmatmul.bf16.gmra.mxu0 %v854
  %v1350 = vpop.f32.mrf.mxu0
  %v1351 = vadd.f32 %v1182, %v1350
  %v1352 = vpop.f32.mrf.mxu0
  %v1353 = vadd.f32 %v1184, %v1352
  %1354 = vmatmul.bf16.gmra.mxu0 %v857
  %v1355 = vpop.f32.mrf.mxu0
  %v1356 = vadd.f32 %v1187, %v1355
  %v1357 = vpop.f32.mrf.mxu0
  %v1358 = vadd.f32 %v1189, %v1357
  %1359 = vmatmul.bf16.gmra.mxu0 %v860
  %v1360 = vpop.f32.mrf.mxu0
  %v1361 = vadd.f32 %v1192, %v1360
  %v1362 = vpop.f32.mrf.mxu0
  %v1363 = vadd.f32 %v1194, %v1362
  %1364 = vmatmul.bf16.gmra.mxu0 %v863
  %v1365 = vpop.f32.mrf.mxu0
  %v1366 = vadd.f32 %v1197, %v1365
  %v1367 = vpop.f32.mrf.mxu0
  %v1368 = vadd.f32 %v1199, %v1367
  %1369 = vmatmul.bf16.gmra.mxu0 %v866
  %v1370 = vpop.f32.mrf.mxu0
  %v1371 = vadd.f32 %v1202, %v1370
  %v1372 = vpop.f32.mrf.mxu0
  %v1373 = vadd.f32 %v1204, %v1372
  %1374 = vdwg.mxu0
  %v1375 = vmax.f32 %v1216, 0.0
  %v1376 = vmax.f32 %v1218, 0.0
  %v1377 = vmax.f32 %v1221, 0.0
  %v1378 = vmax.f32 %v1223, 0.0
  %v1379 = vmax.f32 %v1226, 0.0
  %v1380 = vmax.f32 %v1228, 0.0
  %v1381 = vmax.f32 %v1231, 0.0
  %v1382 = vmax.f32 %v1233, 0.0
  %v1383 = vmax.f32 %v1236, 0.0
  %v1384 = vmax.f32 %v1238, 0.0
  %v1385 = vmax.f32 %v1241, 0.0
  %v1386 = vmax.f32 %v1243, 0.0
  %v1387 = vmax.f32 %v1246, 0.0
  %v1388 = vmax.f32 %v1248, 0.0
  %v1389 = vmax.f32 %v1251, 0.0
  %v1390 = vmax.f32 %v1253, 0.0
  %v1391 = vmax.f32 %v1256, 0.0
  %v1392 = vmax.f32 %v1258, 0.0
  %v1393 = vmax.f32 %v1261, 0.0
  %v1394 = vmax.f32 %v1263, 0.0
  %v1395 = vmax.f32 %v1266, 0.0
  %v1396 = vmax.f32 %v1268, 0.0
  %v1397 = vmax.f32 %v1271, 0.0
  %v1398 = vmax.f32 %v1273, 0.0
  %v1399 = vmax.f32 %v1276, 0.0
  %v1400 = vmax.f32 %v1278, 0.0
  %v1401 = vmax.f32 %v1281, 0.0
  %v1402 = vmax.f32 %v1283, 0.0
  %v1403 = vmax.f32 %v1286, 0.0
  %v1404 = vmax.f32 %v1288, 0.0
  %v1405 = vmax.f32 %v1291, 0.0
  %v1406 = vmax.f32 %v1293, 0.0
  %v1407 = vmax.f32 %v1296, 0.0
  %v1408 = vmax.f32 %v1298, 0.0
  %v1409 = vmax.f32 %v1301, 0.0
  %v1410 = vmax.f32 %v1303, 0.0
  %v1411 = vmax.f32 %v1306, 0.0
  %v1412 = vmax.f32 %v1308, 0.0
  %v1413 = vmax.f32 %v1311, 0.0
  %v1414 = vmax.f32 %v1313, 0.0
  %v1415 = vmax.f32 %v1316, 0.0
  %v1416 = vmax.f32 %v1318, 0.0
  %v1417 = vmax.f32 %v1321, 0.0
  %v1418 = vmax.f32 %v1323, 0.0
  %v1419 = vmax.f32 %v1326, 0.0
  %v1420 = vmax.f32 %v1328, 0.0
  %v1421 = vmax.f32 %v1331, 0.0
  %v1422 = vmax.f32 %v1333, 0.0
  %v1423 = vmax.f32 %v1336, 0.0
  %v1424 = vmax.f32 %v1338, 0.0
  %v1425 = vmax.f32 %v1341, 0.0
  %v1426 = vmax.f32 %v1343, 0.0
  %v1427 = vmax.f32 %v1346, 0.0
  %v1428 = vmax.f32 %v1348, 0.0
  %v1429 = vmax.f32 %v1351, 0.0
  %v1430 = vmax.f32 %v1353, 0.0
  %v1431 = vmax.f32 %v1356, 0.0
  %v1432 = vmax.f32 %v1358, 0.0
  %v1433 = vmax.f32 %v1361, 0.0
  %v1434 = vmax.f32 %v1363, 0.0
  %v1435 = vmax.f32 %v1366, 0.0
  %v1436 = vmax.f32 %v1368, 0.0
  %v1437 = vmax.f32 %v1371, 0.0
  %v1438 = vmax.f32 %v1373, 0.0
  %v1439 = vpack.c.bf16 %v1375, %v1375
  %v1440 = vpack.c.bf16 %v1376, %v1376
  %v1441 = vpack.c.bf16 %v1377, %v1377
  %v1442 = vpack.c.bf16 %v1378, %v1378
  %v1443 = vpack.c.bf16 %v1379, %v1379
  %v1444 = vpack.c.bf16 %v1380, %v1380
  %v1445 = vpack.c.bf16 %v1381, %v1381
  %v1446 = vpack.c.bf16 %v1382, %v1382
  %v1447 = vpack.c.bf16 %v1383, %v1383
  %v1448 = vpack.c.bf16 %v1384, %v1384
  %v1449 = vpack.c.bf16 %v1385, %v1385
  %v1450 = vpack.c.bf16 %v1386, %v1386
  %v1451 = vpack.c.bf16 %v1387, %v1387
  %v1452 = vpack.c.bf16 %v1388, %v1388
  %v1453 = vpack.c.bf16 %v1389, %v1389
  %v1454 = vpack.c.bf16 %v1390, %v1390
  %v1455 = vpack.c.bf16 %v1391, %v1391
  %v1456 = vpack.c.bf16 %v1392, %v1392
  %v1457 = vpack.c.bf16 %v1393, %v1393
  %v1458 = vpack.c.bf16 %v1394, %v1394
  %v1459 = vpack.c.bf16 %v1395, %v1395
  %v1460 = vpack.c.bf16 %v1396, %v1396
  %v1461 = vpack.c.bf16 %v1397, %v1397
  %v1462 = vpack.c.bf16 %v1398, %v1398
  %v1463 = vpack.c.bf16 %v1399, %v1399
  %v1464 = vpack.c.bf16 %v1400, %v1400
  %v1465 = vpack.c.bf16 %v1401, %v1401
  %v1466 = vpack.c.bf16 %v1402, %v1402
  %v1467 = vpack.c.bf16 %v1403, %v1403
  %v1468 = vpack.c.bf16 %v1404, %v1404
  %v1469 = vpack.c.bf16 %v1405, %v1405
  %v1470 = vpack.c.bf16 %v1406, %v1406
  %v1471 = vpack.c.bf16 %v1407, %v1407
  %v1472 = vpack.c.bf16 %v1408, %v1408
  %v1473 = vpack.c.bf16 %v1409, %v1409
  %v1474 = vpack.c.bf16 %v1410, %v1410
  %v1475 = vpack.c.bf16 %v1411, %v1411
  %v1476 = vpack.c.bf16 %v1412, %v1412
  %v1477 = vpack.c.bf16 %v1413, %v1413
  %v1478 = vpack.c.bf16 %v1414, %v1414
  %v1479 = vpack.c.bf16 %v1415, %v1415
  %v1480 = vpack.c.bf16 %v1416, %v1416
  %v1481 = vpack.c.bf16 %v1417, %v1417
  %v1482 = vpack.c.bf16 %v1418, %v1418
  %v1483 = vpack.c.bf16 %v1419, %v1419
  %v1484 = vpack.c.bf16 %v1420, %v1420
  %v1485 = vpack.c.bf16 %v1421, %v1421
  %v1486 = vpack.c.bf16 %v1422, %v1422
  %v1487 = vpack.c.bf16 %v1423, %v1423
  %v1488 = vpack.c.bf16 %v1424, %v1424
  %v1489 = vpack.c.bf16 %v1425, %v1425
  %v1490 = vpack.c.bf16 %v1426, %v1426
  %v1491 = vpack.c.bf16 %v1427, %v1427
  %v1492 = vpack.c.bf16 %v1428, %v1428
  %v1493 = vpack.c.bf16 %v1429, %v1429
  %v1494 = vpack.c.bf16 %v1430, %v1430
  %v1495 = vpack.c.bf16 %v1431, %v1431
  %v1496 = vpack.c.bf16 %v1432, %v1432
  %v1497 = vpack.c.bf16 %v1433, %v1433
  %v1498 = vpack.c.bf16 %v1434, %v1434
  %v1499 = vpack.c.bf16 %v1435, %v1435
  %v1500 = vpack.c.bf16 %v1436, %v1436
  %v1501 = vpack.c.bf16 %v1437, %v1437
  %v1502 = vpack.c.bf16 %v1438, %v1438
  %1503 = vst [vmem:[%s3] sm:$0xf] %v1439
  %1504 = vst [vmem:[%s3 + $0x4] sm:$0xf] %v1440
  %1505 = vst [vmem:[%s3 + $0x8] sm:$0xf] %v1441
  %1506 = vst [vmem:[%s3 + $0xc] sm:$0xf] %v1442
  %1507 = vst [vmem:[%s3 + $0x10] sm:$0xf] %v1443
  %1508 = vst [vmem:[%s3 + $0x14] sm:$0xf] %v1444
  %1509 = vst [vmem:[%s3 + $0x18] sm:$0xf] %v1445
  %1510 = vst [vmem:[%s3 + $0x1c] sm:$0xf] %v1446
  %1511 = vst [vmem:[%s3 + $0x20] sm:$0xf] %v1447
  %1512 = vst [vmem:[%s3 + $0x24] sm:$0xf] %v1448
  %1513 = vst [vmem:[%s3 + $0x28] sm:$0xf] %v1449
  %1514 = vst [vmem:[%s3 + $0x2c] sm:$0xf] %v1450
  %1515 = vst [vmem:[%s3 + $0x30] sm:$0xf] %v1451
  %1516 = vst [vmem:[%s3 + $0x34] sm:$0xf] %v1452
  %1517 = vst [vmem:[%s3 + $0x38] sm:$0xf] %v1453
  %1518 = vst [vmem:[%s3 + $0x3c] sm:$0xf] %v1454
  %1519 = vst [vmem:[%s3 + $0x40] sm:$0xf] %v1455
  %1520 = vst [vmem:[%s3 + $0x44] sm:$0xf] %v1456
  %1521 = vst [vmem:[%s3 + $0x48] sm:$0xf] %v1457
  %1522 = vst [vmem:[%s3 + $0x4c] sm:$0xf] %v1458
  %1523 = vst [vmem:[%s3 + $0x50] sm:$0xf] %v1459
  %1524 = vst [vmem:[%s3 + $0x54] sm:$0xf] %v1460
  %1525 = vst [vmem:[%s3 + $0x58] sm:$0xf] %v1461
  %1526 = vst [vmem:[%s3 + $0x5c] sm:$0xf] %v1462
  %1527 = vst [vmem:[%s3 + $0x60] sm:$0xf] %v1463
  %1528 = vst [vmem:[%s3 + $0x64] sm:$0xf] %v1464
  %1529 = vst [vmem:[%s3 + $0x68] sm:$0xf] %v1465
  %1530 = vst [vmem:[%s3 + $0x6c] sm:$0xf] %v1466
  %1531 = vst [vmem:[%s3 + $0x70] sm:$0xf] %v1467
  %1532 = vst [vmem:[%s3 + $0x74] sm:$0xf] %v1468
  %1533 = vst [vmem:[%s3 + $0x78] sm:$0xf] %v1469
  %1534 = vst [vmem:[%s3 + $0x7c] sm:$0xf] %v1470
  %1535 = vst [vmem:[%s3 + $0x80] sm:$0xf] %v1471
  %1536 = vst [vmem:[%s3 + $0x84] sm:$0xf] %v1472
  %1537 = vst [vmem:[%s3 + $0x88] sm:$0xf] %v1473
  %1538 = vst [vmem:[%s3 + $0x8c] sm:$0xf] %v1474
  %1539 = vst [vmem:[%s3 + $0x90] sm:$0xf] %v1475
  %1540 = vst [vmem:[%s3 + $0x94] sm:$0xf] %v1476
  %1541 = vst [vmem:[%s3 + $0x98] sm:$0xf] %v1477
  %1542 = vst [vmem:[%s3 + $0x9c] sm:$0xf] %v1478
  %1543 = vst [vmem:[%s3 + $0xa0] sm:$0xf] %v1479
  %1544 = vst [vmem:[%s3 + $0xa4] sm:$0xf] %v1480
  %1545 = vst [vmem:[%s3 + $0xa8] sm:$0xf] %v1481
  %1546 = vst [vmem:[%s3 + $0xac] sm:$0xf] %v1482
  %1547 = vst [vmem:[%s3 + $0xb0] sm:$0xf] %v1483
  %1548 = vst [vmem:[%s3 + $0xb4] sm:$0xf] %v1484
  %1549 = vst [vmem:[%s3 + $0xb8] sm:$0xf] %v1485
  %1550 = vst [vmem:[%s3 + $0xbc] sm:$0xf] %v1486
  %1551 = vst [vmem:[%s3 + $0xc0] sm:$0xf] %v1487
  %1552 = vst [vmem:[%s3 + $0xc4] sm:$0xf] %v1488
  %1553 = vst [vmem:[%s3 + $0xc8] sm:$0xf] %v1489
  %1554 = vst [vmem:[%s3 + $0xcc] sm:$0xf] %v1490
  %1555 = vst [vmem:[%s3 + $0xd0] sm:$0xf] %v1491
  %1556 = vst [vmem:[%s3 + $0xd4] sm:$0xf] %v1492
  %1557 = vst [vmem:[%s3 + $0xd8] sm:$0xf] %v1493
  %1558 = vst [vmem:[%s3 + $0xdc] sm:$0xf] %v1494
  %1559 = vst [vmem:[%s3 + $0xe0] sm:$0xf] %v1495
  %1560 = vst [vmem:[%s3 + $0xe4] sm:$0xf] %v1496
  %1561 = vst [vmem:[%s3 + $0xe8] sm:$0xf] %v1497
  %1562 = vst [vmem:[%s3 + $0xec] sm:$0xf] %v1498
  %1563 = vst [vmem:[%s3 + $0xf0] sm:$0xf] %v1499
  %1564 = vst [vmem:[%s3 + $0xf4] sm:$0xf] %v1500
  %1565 = vst [vmem:[%s3 + $0xf8] sm:$0xf] %v1501
  %1566 = vst [vmem:[%s3 + $0xfc] sm:$0xf] %v1502
  // Predicated region
  $region14: #{_lambda_.6} parent=0 // pred_check
    _
  $region15: #{_lambda_.6} parent=0 // pred_check_branch
    %1568 = sbr.rel (0) target = $region17
  $region16: #{_lambda_.6} parent=0 // pred_region
    _
  $region17: #{_lambda_.6} parent=0 // pred_fallthru
    _
  // Predicated region
  $region18: #{_lambda_.6} parent=0 // pred_check
    _
  $region19: #{_lambda_.6} parent=0 // pred_check_branch
    %1570 = sbr.rel (0) target = $region21
  $region20: #{_lambda_.6} parent=0 // pred_region
    _
  $region21: #{_lambda_.6} parent=0 // pred_fallthru
    _

// kernel: _lambda_.7
$region0: #{_lambda_.7}
  #allocation0 [shape = 'u32[]', space=smem, size = 0x4, offset = 0x4, fixed_abs, tag = 'smem constant byte address 0x4 - core index']
  #allocation1 [shape = 'u32[72,128]{1,0:T(1,128)}', space=vmem, size = 0x9000, scoped, tag = 'internal scratch']
  %s0 = inlined_call_operand.vmem [shape: bf16[128,576], index: 0, kind: input, shape index: {}]
  %s1 = inlined_call_operand.vmem [shape: bf16[576,128], index: 1, kind: input, shape index: {}]
  %s2 = inlined_call_operand.vmem [shape: f32[1,128], index: 2, kind: input, shape index: {}]
  %s3 = inlined_call_operand.vmem [shape: bf16[128,128], index: 3, kind: output, shape index: {}]
  %s4 = sld [smem:[#allocation0]]
  $region22: #{_lambda_.7} parent=0
    _
  %s6 = ssub.s32 1, %s4
  %s7 = scalar_select 0, %s6, %s4
  // Predicated region
  $region2: #{_lambda_.7} parent=0 // pred_check
    _
  $region3: #{_lambda_.7} parent=0 // pred_check_branch
    %9 = sbr.rel (0) target = $region5
  $region4: #{_lambda_.7} parent=0 // pred_region
    _
  $region5: #{_lambda_.7} parent=0 // pred_fallthru
    _
  // Predicated region
  $region6: #{_lambda_.7} parent=0 // pred_check
    _
  $region7: #{_lambda_.7} parent=0 // pred_check_branch
    %11 = sbr.rel (0) target = $region9
  $region8: #{_lambda_.7} parent=0 // pred_region
    _
  $region9: #{_lambda_.7} parent=0 // pred_fallthru
    _
  // Predicated region
  $region10: #{_lambda_.7} parent=0 // pred_check
    _
  $region11: #{_lambda_.7} parent=0 // pred_check_branch
    %13 = sbr.rel (0) target = $region13
  $region12: #{_lambda_.7} parent=0 // pred_region
    _
  $region13: #{_lambda_.7} parent=0 // pred_fallthru
    _
  %v15 = vld [vmem:[%s0] sm:$0xff]
  %v16 = vld [vmem:[%s0 + $0x8] sm:$0xff]
  %v17 = vld [vmem:[%s0 + $0x10] sm:$0xf]
  %v18 = vld [vmem:[%s0 + $0x14] sm:$0xff]
  %v19 = vld [vmem:[%s0 + $0x1c] sm:$0xff]
  %v20 = vld [vmem:[%s0 + $0x24] sm:$0xf]
  %v21 = vld [vmem:[%s0 + $0x28] sm:$0xff]
  %v22 = vld [vmem:[%s0 + $0x30] sm:$0xff]
  %v23 = vld [vmem:[%s0 + $0x38] sm:$0xf]
  %v24 = vld [vmem:[%s0 + $0x3c] sm:$0xff]
  %v25 = vld [vmem:[%s0 + $0x44] sm:$0xff]
  %v26 = vld [vmem:[%s0 + $0x4c] sm:$0xf]
  %v27 = vld [vmem:[%s0 + $0x50] sm:$0xff]
  %v28 = vld [vmem:[%s0 + $0x58] sm:$0xff]
  %v29 = vld [vmem:[%s0 + $0x60] sm:$0xf]
  %v30 = vld [vmem:[%s0 + $0x64] sm:$0xff]
  %v31 = vld [vmem:[%s0 + $0x6c] sm:$0xff]
  %v32 = vld [vmem:[%s0 + $0x74] sm:$0xf]
  %v33 = vld [vmem:[%s0 + $0x78] sm:$0xff]
  %v34 = vld [vmem:[%s0 + $0x80] sm:$0xff]
  %v35 = vld [vmem:[%s0 + $0x88] sm:$0xf]
  %v36 = vld [vmem:[%s0 + $0x8c] sm:$0xff]
  %v37 = vld [vmem:[%s0 + $0x94] sm:$0xff]
  %v38 = vld [vmem:[%s0 + $0x9c] sm:$0xf]
  %v39 = vld [vmem:[%s0 + $0xa0] sm:$0xff]
  %v40 = vld [vmem:[%s0 + $0xa8] sm:$0xff]
  %v41 = vld [vmem:[%s0 + $0xb0] sm:$0xf]
  %v42 = vld [vmem:[%s0 + $0xb4] sm:$0xff]
  %v43 = vld [vmem:[%s0 + $0xbc] sm:$0xff]
  %v44 = vld [vmem:[%s0 + $0xc4] sm:$0xf]
  %v45 = vld [vmem:[%s0 + $0xc8] sm:$0xff]
  %v46 = vld [vmem:[%s0 + $0xd0] sm:$0xff]
  %v47 = vld [vmem:[%s0 + $0xd8] sm:$0xf]
  %v48 = vld [vmem:[%s0 + $0xdc] sm:$0xff]
  %v49 = vld [vmem:[%s0 + $0xe4] sm:$0xff]
  %v50 = vld [vmem:[%s0 + $0xec] sm:$0xf]
  %v51 = vld [vmem:[%s0 + $0xf0] sm:$0xff]
  %v52 = vld [vmem:[%s0 + $0xf8] sm:$0xff]
  %v53 = vld [vmem:[%s0 + $0x100] sm:$0xf]
  %v54 = vld [vmem:[%s0 + $0x104] sm:$0xff]
  %v55 = vld [vmem:[%s0 + $0x10c] sm:$0xff]
  %v56 = vld [vmem:[%s0 + $0x114] sm:$0xf]
  %v57 = vld [vmem:[%s0 + $0x118] sm:$0xff]
  %v58 = vld [vmem:[%s0 + $0x120] sm:$0xff]
  %v59 = vld [vmem:[%s0 + $0x128] sm:$0xf]
  %v60 = vld [vmem:[%s0 + $0x12c] sm:$0xff]
  %v61 = vld [vmem:[%s0 + $0x134] sm:$0xff]
  %v62 = vld [vmem:[%s0 + $0x13c] sm:$0xf]
  %v63 = vld [vmem:[%s1] sm:$0xf]
  %v64 = vld [vmem:[%s1 + $0x4] sm:$0xf]
  %v65 = vld [vmem:[%s1 + $0x8] sm:$0xf]
  %v66 = vld [vmem:[%s1 + $0xc] sm:$0xf]
  %v67 = vld [vmem:[%s1 + $0x10] sm:$0xf]
  %v68 = vld [vmem:[%s1 + $0x14] sm:$0xf]
  %v69 = vld [vmem:[%s1 + $0x18] sm:$0xf]
  %v70 = vld [vmem:[%s1 + $0x1c] sm:$0xf]
  %v71 = vld [vmem:[%s1 + $0x20] sm:$0xf]
  %v72 = vld [vmem:[%s1 + $0x24] sm:$0xf]
  %v73 = vld [vmem:[%s1 + $0x28] sm:$0xf]
  %v74 = vld [vmem:[%s1 + $0x2c] sm:$0xf]
  %v75 = vld [vmem:[%s1 + $0x30] sm:$0xf]
  %v76 = vld [vmem:[%s1 + $0x34] sm:$0xf]
  %v77 = vld [vmem:[%s1 + $0x38] sm:$0xf]
  %v78 = vld [vmem:[%s1 + $0x3c] sm:$0xf]
  %v79 = vld [vmem:[%s1 + $0x40] sm:$0xf]
  %v80 = vld [vmem:[%s1 + $0x44] sm:$0xf]
  %v81 = vld [vmem:[%s1 + $0x48] sm:$0xf]
  %v82 = vld [vmem:[%s1 + $0x4c] sm:$0xf]
  %v83 = vld [vmem:[%s1 + $0x50] sm:$0xf]
  %v84 = vld [vmem:[%s1 + $0x54] sm:$0xf]
  %v85 = vld [vmem:[%s1 + $0x58] sm:$0xf]
  %v86 = vld [vmem:[%s1 + $0x5c] sm:$0xf]
  %v87 = vld [vmem:[%s1 + $0x60] sm:$0xf]
  %v88 = vld [vmem:[%s1 + $0x64] sm:$0xf]
  %v89 = vld [vmem:[%s1 + $0x68] sm:$0xf]
  %v90 = vld [vmem:[%s1 + $0x6c] sm:$0xf]
  %v91 = vld [vmem:[%s1 + $0x70] sm:$0xf]
  %v92 = vld [vmem:[%s1 + $0x74] sm:$0xf]
  %v93 = vld [vmem:[%s1 + $0x78] sm:$0xf]
  %v94 = vld [vmem:[%s1 + $0x7c] sm:$0xf]
  %v95 = vld [vmem:[%s1 + $0x80] sm:$0xf]
  %v96 = vld [vmem:[%s1 + $0x84] sm:$0xf]
  %v97 = vld [vmem:[%s1 + $0x88] sm:$0xf]
  %v98 = vld [vmem:[%s1 + $0x8c] sm:$0xf]
  %v99 = vld [vmem:[%s1 + $0x90] sm:$0xf]
  %v100 = vld [vmem:[%s1 + $0x94] sm:$0xf]
  %v101 = vld [vmem:[%s1 + $0x98] sm:$0xf]
  %v102 = vld [vmem:[%s1 + $0x9c] sm:$0xf]
  %v103 = vld [vmem:[%s1 + $0xa0] sm:$0xf]
  %v104 = vld [vmem:[%s1 + $0xa4] sm:$0xf]
  %v105 = vld [vmem:[%s1 + $0xa8] sm:$0xf]
  %v106 = vld [vmem:[%s1 + $0xac] sm:$0xf]
  %v107 = vld [vmem:[%s1 + $0xb0] sm:$0xf]
  %v108 = vld [vmem:[%s1 + $0xb4] sm:$0xf]
  %v109 = vld [vmem:[%s1 + $0xb8] sm:$0xf]
  %v110 = vld [vmem:[%s1 + $0xbc] sm:$0xf]
  %v111 = vld [vmem:[%s1 + $0xc0] sm:$0xf]
  %v112 = vld [vmem:[%s1 + $0xc4] sm:$0xf]
  %v113 = vld [vmem:[%s1 + $0xc8] sm:$0xf]
  %v114 = vld [vmem:[%s1 + $0xcc] sm:$0xf]
  %v115 = vld [vmem:[%s1 + $0xd0] sm:$0xf]
  %v116 = vld [vmem:[%s1 + $0xd4] sm:$0xf]
  %v117 = vld [vmem:[%s1 + $0xd8] sm:$0xf]
  %v118 = vld [vmem:[%s1 + $0xdc] sm:$0xf]
  %v119 = vld [vmem:[%s1 + $0xe0] sm:$0xf]
  %v120 = vld [vmem:[%s1 + $0xe4] sm:$0xf]
  %v121 = vld [vmem:[%s1 + $0xe8] sm:$0xf]
  %v122 = vld [vmem:[%s1 + $0xec] sm:$0xf]
  %v123 = vld [vmem:[%s1 + $0xf0] sm:$0xf]
  %v124 = vld [vmem:[%s1 + $0xf4] sm:$0xf]
  %v125 = vld [vmem:[%s1 + $0xf8] sm:$0xf]
  %v126 = vld [vmem:[%s1 + $0xfc] sm:$0xf]
  %v127 = vld [vmem:[%s1 + $0x100] sm:$0xf]
  %v128 = vld [vmem:[%s1 + $0x104] sm:$0xf]
  %v129 = vld [vmem:[%s1 + $0x108] sm:$0xf]
  %v130 = vld [vmem:[%s1 + $0x10c] sm:$0xf]
  %v131 = vld [vmem:[%s1 + $0x110] sm:$0xf]
  %v132 = vld [vmem:[%s1 + $0x114] sm:$0xf]
  %v133 = vld [vmem:[%s1 + $0x118] sm:$0xf]
  %v134 = vld [vmem:[%s1 + $0x11c] sm:$0xf]
  %v135 = vld [vmem:[%s2] sm:$0x1]
  %v137 = vperm.slane %v135, 0
  %v187 = vunpack.c.l.b16 %v15
  %v188 = vunpack.c.h.b16 %v15
  %v189 = vunpack.c.l.b16 %v16
  %v190 = vunpack.c.h.b16 %v16
  %v191 = vunpack.c.l.b16 %v17
  %v192 = vunpack.c.l.b16 %v18
  %v193 = vunpack.c.h.b16 %v18
  %v194 = vunpack.c.l.b16 %v19
  %v195 = vunpack.c.h.b16 %v19
  %v196 = vunpack.c.l.b16 %v20
  %v197 = vunpack.c.l.b16 %v21
  %v198 = vunpack.c.h.b16 %v21
  %v199 = vunpack.c.l.b16 %v22
  %v200 = vunpack.c.h.b16 %v22
  %v201 = vunpack.c.l.b16 %v23
  %v202 = vunpack.c.l.b16 %v24
  %v203 = vunpack.c.h.b16 %v24
  %v204 = vunpack.c.l.b16 %v25
  %v205 = vunpack.c.h.b16 %v25
  %v206 = vunpack.c.l.b16 %v26
  %v207 = vunpack.c.l.b16 %v27
  %v208 = vunpack.c.h.b16 %v27
  %v209 = vunpack.c.l.b16 %v28
  %v210 = vunpack.c.h.b16 %v28
  %v211 = vunpack.c.l.b16 %v29
  %v212 = vunpack.c.l.b16 %v30
  %v213 = vunpack.c.h.b16 %v30
  %v214 = vunpack.c.l.b16 %v31
  %v215 = vunpack.c.h.b16 %v31
  %v216 = vunpack.c.l.b16 %v32
  %v217 = vunpack.c.l.b16 %v33
  %v218 = vunpack.c.h.b16 %v33
  %v219 = vunpack.c.l.b16 %v34
  %v220 = vunpack.c.h.b16 %v34
  %v221 = vunpack.c.l.b16 %v35
  %v222 = vunpack.c.l.b16 %v36
  %v223 = vunpack.c.h.b16 %v36
  %v224 = vunpack.c.l.b16 %v37
  %v225 = vunpack.c.h.b16 %v37
  %v226 = vunpack.c.l.b16 %v38
  %v227 = vunpack.c.l.b16 %v39
  %v228 = vunpack.c.h.b16 %v39
  %v229 = vunpack.c.l.b16 %v40
  %v230 = vunpack.c.h.b16 %v40
  %v231 = vunpack.c.l.b16 %v41
  %v232 = vunpack.c.l.b16 %v42
  %v233 = vunpack.c.h.b16 %v42
  %v234 = vunpack.c.l.b16 %v43
  %v235 = vunpack.c.h.b16 %v43
  %v236 = vunpack.c.l.b16 %v44
  %v237 = vunpack.c.l.b16 %v45
  %v238 = vunpack.c.h.b16 %v45
  %v239 = vunpack.c.l.b16 %v46
  %v240 = vunpack.c.h.b16 %v46
  %v241 = vunpack.c.l.b16 %v47
  %v242 = vunpack.c.l.b16 %v48
  %v243 = vunpack.c.h.b16 %v48
  %v244 = vunpack.c.l.b16 %v49
  %v245 = vunpack.c.h.b16 %v49
  %v246 = vunpack.c.l.b16 %v50
  %v247 = vunpack.c.l.b16 %v51
  %v248 = vunpack.c.h.b16 %v51
  %v249 = vunpack.c.l.b16 %v52
  %v250 = vunpack.c.h.b16 %v52
  %v251 = vunpack.c.l.b16 %v53
  %v252 = vunpack.c.l.b16 %v54
  %v253 = vunpack.c.h.b16 %v54
  %v254 = vunpack.c.l.b16 %v55
  %v255 = vunpack.c.h.b16 %v55
  %v256 = vunpack.c.l.b16 %v56
  %v257 = vunpack.c.l.b16 %v57
  %v258 = vunpack.c.h.b16 %v57
  %v259 = vunpack.c.l.b16 %v58
  %v260 = vunpack.c.h.b16 %v58
  %v261 = vunpack.c.l.b16 %v59
  %v262 = vunpack.c.l.b16 %v60
  %v263 = vunpack.c.h.b16 %v60
  %v264 = vunpack.c.l.b16 %v61
  %v265 = vunpack.c.h.b16 %v61
  %v266 = vunpack.c.l.b16 %v62
  %v267 = vpack.c.b16 %v192, %v187
  %v268 = vpack.c.b16 %v193, %v188
  %v269 = vpack.c.b16 %v194, %v189
  %v270 = vpack.c.b16 %v195, %v190
  %v271 = vpack.c.b16 %v196, %v191
  %v272 = vpack.c.b16 %v202, %v197
  %v273 = vpack.c.b16 %v203, %v198
  %v274 = vpack.c.b16 %v204, %v199
  %v275 = vpack.c.b16 %v205, %v200
  %v276 = vpack.c.b16 %v206, %v201
  %v277 = vpack.c.b16 %v212, %v207
  %v278 = vpack.c.b16 %v213, %v208
  %v279 = vpack.c.b16 %v214, %v209
  %v280 = vpack.c.b16 %v215, %v210
  %v281 = vpack.c.b16 %v216, %v211
  %v282 = vpack.c.b16 %v222, %v217
  %v283 = vpack.c.b16 %v223, %v218
  %v284 = vpack.c.b16 %v224, %v219
  %v285 = vpack.c.b16 %v225, %v220
  %v286 = vpack.c.b16 %v226, %v221
  %v287 = vpack.c.b16 %v232, %v227
  %v288 = vpack.c.b16 %v233, %v228
  %v289 = vpack.c.b16 %v234, %v229
  %v290 = vpack.c.b16 %v235, %v230
  %v291 = vpack.c.b16 %v236, %v231
  %v292 = vpack.c.b16 %v242, %v237
  %v293 = vpack.c.b16 %v243, %v238
  %v294 = vpack.c.b16 %v244, %v239
  %v295 = vpack.c.b16 %v245, %v240
  %v296 = vpack.c.b16 %v246, %v241
  %v297 = vpack.c.b16 %v252, %v247
  %v298 = vpack.c.b16 %v253, %v248
  %v299 = vpack.c.b16 %v254, %v249
  %v300 = vpack.c.b16 %v255, %v250
  %v301 = vpack.c.b16 %v256, %v251
  %v302 = vpack.c.b16 %v262, %v257
  %v303 = vpack.c.b16 %v263, %v258
  %v304 = vpack.c.b16 %v264, %v259
  %v305 = vpack.c.b16 %v265, %v260
  %v306 = vpack.c.b16 %v266, %v261
  %v411 = vunpack.c.l.b16 %v63
  %v412 = vunpack.c.l.b16 %v64
  %v413 = vunpack.c.l.b16 %v65
  %v414 = vunpack.c.l.b16 %v66
  %v415 = vunpack.c.l.b16 %v67
  %v416 = vunpack.c.l.b16 %v68
  %v417 = vunpack.c.l.b16 %v69
  %v418 = vunpack.c.l.b16 %v70
  %v419 = vunpack.c.l.b16 %v71
  %v420 = vunpack.c.l.b16 %v72
  %v421 = vunpack.c.l.b16 %v73
  %v422 = vunpack.c.l.b16 %v74
  %v423 = vunpack.c.l.b16 %v75
  %v424 = vunpack.c.l.b16 %v76
  %v425 = vunpack.c.l.b16 %v77
  %v426 = vunpack.c.l.b16 %v78
  %v427 = vunpack.c.l.b16 %v79
  %v428 = vunpack.c.l.b16 %v80
  %v429 = vunpack.c.l.b16 %v81
  %v430 = vunpack.c.l.b16 %v82
  %v431 = vunpack.c.l.b16 %v83
  %v432 = vunpack.c.l.b16 %v84
  %v433 = vunpack.c.l.b16 %v85
  %v434 = vunpack.c.l.b16 %v86
  %v435 = vunpack.c.l.b16 %v87
  %v436 = vunpack.c.l.b16 %v88
  %v437 = vunpack.c.l.b16 %v89
  %v438 = vunpack.c.l.b16 %v90
  %v439 = vunpack.c.l.b16 %v91
  %v440 = vunpack.c.l.b16 %v92
  %v441 = vunpack.c.l.b16 %v93
  %v442 = vunpack.c.l.b16 %v94
  %v443 = vunpack.c.l.b16 %v95
  %v444 = vunpack.c.l.b16 %v96
  %v445 = vunpack.c.l.b16 %v97
  %v446 = vunpack.c.l.b16 %v98
  %v447 = vunpack.c.l.b16 %v99
  %v448 = vunpack.c.l.b16 %v100
  %v449 = vunpack.c.l.b16 %v101
  %v450 = vunpack.c.l.b16 %v102
  %v451 = vunpack.c.l.b16 %v103
  %v452 = vunpack.c.l.b16 %v104
  %v453 = vunpack.c.l.b16 %v105
  %v454 = vunpack.c.l.b16 %v106
  %v455 = vunpack.c.l.b16 %v107
  %v456 = vunpack.c.l.b16 %v108
  %v457 = vunpack.c.l.b16 %v109
  %v458 = vunpack.c.l.b16 %v110
  %v459 = vunpack.c.l.b16 %v111
  %v460 = vunpack.c.l.b16 %v112
  %v461 = vunpack.c.l.b16 %v113
  %v462 = vunpack.c.l.b16 %v114
  %v463 = vunpack.c.l.b16 %v115
  %v464 = vunpack.c.l.b16 %v116
  %v465 = vunpack.c.l.b16 %v117
  %v466 = vunpack.c.l.b16 %v118
  %v467 = vunpack.c.l.b16 %v119
  %v468 = vunpack.c.l.b16 %v120
  %v469 = vunpack.c.l.b16 %v121
  %v470 = vunpack.c.l.b16 %v122
  %v471 = vunpack.c.l.b16 %v123
  %v472 = vunpack.c.l.b16 %v124
  %v473 = vunpack.c.l.b16 %v125
  %v474 = vunpack.c.l.b16 %v126
  %v475 = vunpack.c.l.b16 %v127
  %v476 = vunpack.c.l.b16 %v128
  %v477 = vunpack.c.l.b16 %v129
  %v478 = vunpack.c.l.b16 %v130
  %v479 = vunpack.c.l.b16 %v131
  %v480 = vunpack.c.l.b16 %v132
  %v481 = vunpack.c.l.b16 %v133
  %v482 = vunpack.c.l.b16 %v134
  %v483 = vpack.c.b16 %v412, %v411
  %v484 = vpack.c.b16 %v414, %v413
  %v485 = vpack.c.b16 %v416, %v415
  %v486 = vpack.c.b16 %v418, %v417
  %v487 = vpack.c.b16 %v420, %v419
  %v488 = vpack.c.b16 %v422, %v421
  %v489 = vpack.c.b16 %v424, %v423
  %v490 = vpack.c.b16 %v426, %v425
  %v491 = vpack.c.b16 %v428, %v427
  %v492 = vpack.c.b16 %v430, %v429
  %v493 = vpack.c.b16 %v432, %v431
  %v494 = vpack.c.b16 %v434, %v433
  %v495 = vpack.c.b16 %v436, %v435
  %v496 = vpack.c.b16 %v438, %v437
  %v497 = vpack.c.b16 %v440, %v439
  %v498 = vpack.c.b16 %v442, %v441
  %v499 = vpack.c.b16 %v444, %v443
  %v500 = vpack.c.b16 %v446, %v445
  %v501 = vpack.c.b16 %v448, %v447
  %v502 = vpack.c.b16 %v450, %v449
  %v503 = vpack.c.b16 %v452, %v451
  %v504 = vpack.c.b16 %v454, %v453
  %v505 = vpack.c.b16 %v456, %v455
  %v506 = vpack.c.b16 %v458, %v457
  %v507 = vpack.c.b16 %v460, %v459
  %v508 = vpack.c.b16 %v462, %v461
  %v509 = vpack.c.b16 %v464, %v463
  %v510 = vpack.c.b16 %v466, %v465
  %v511 = vpack.c.b16 %v468, %v467
  %v512 = vpack.c.b16 %v470, %v469
  %v513 = vpack.c.b16 %v472, %v471
  %v514 = vpack.c.b16 %v474, %v473
  %v515 = vpack.c.b16 %v476, %v475
  %v516 = vpack.c.b16 %v478, %v477
  %v517 = vpack.c.b16 %v480, %v479
  %v518 = vpack.c.b16 %v482, %v481
  %vm555 = vcmask 523264
  %v557 = vsel %vm555, %v271, 0
  %v560 = vsel %vm555, %v276, 0
  %v563 = vsel %vm555, %v281, 0
  %v566 = vsel %vm555, %v286, 0
  %v569 = vsel %vm555, %v291, 0
  %v572 = vsel %vm555, %v296, 0
  %v575 = vsel %vm555, %v301, 0
  %v578 = vsel %vm555, %v306, 0
  %580 = vmatpush.bf16.msra.mxu0 %v490
  %581 = vmatpush.bf16.msra.mxu0 %v489
  %582 = vmatpush.bf16.msra.mxu0 %v488
  %583 = vmatpush.bf16.msra.mxu0 %v487
  %584 = vmatpush.bf16.msra.mxu0 %v486
  %585 = vmatpush.bf16.msra.mxu0 %v485
  %586 = vmatpush.bf16.msra.mxu0 %v484
  %587 = vmatpush.bf16.msra.mxu0 %v483
  %588 = vmatmul.bf16.gmra.mxu0 %v267
  %v589 = vpop.f32.mrf.mxu0
  %v590 = vadd.f32 %v137, %v589
  %v591 = vpop.f32.mrf.mxu0
  %v592 = vadd.f32 %v137, %v591
  %593 = vmatmul.bf16.gmra.mxu0 %v272
  %v594 = vpop.f32.mrf.mxu0
  %v595 = vadd.f32 %v137, %v594
  %v596 = vpop.f32.mrf.mxu0
  %v597 = vadd.f32 %v137, %v596
  %598 = vmatmul.bf16.gmra.mxu0 %v277
  %v599 = vpop.f32.mrf.mxu0
  %v600 = vadd.f32 %v137, %v599
  %v601 = vpop.f32.mrf.mxu0
  %v602 = vadd.f32 %v137, %v601
  %603 = vmatmul.bf16.gmra.mxu0 %v282
  %v604 = vpop.f32.mrf.mxu0
  %v605 = vadd.f32 %v137, %v604
  %v606 = vpop.f32.mrf.mxu0
  %v607 = vadd.f32 %v137, %v606
  %608 = vmatmul.bf16.gmra.mxu0 %v287
  %v609 = vpop.f32.mrf.mxu0
  %v610 = vadd.f32 %v137, %v609
  %v611 = vpop.f32.mrf.mxu0
  %v612 = vadd.f32 %v137, %v611
  %613 = vmatmul.bf16.gmra.mxu0 %v292
  %v614 = vpop.f32.mrf.mxu0
  %v615 = vadd.f32 %v137, %v614
  %v616 = vpop.f32.mrf.mxu0
  %v617 = vadd.f32 %v137, %v616
  %618 = vmatmul.bf16.gmra.mxu0 %v297
  %v619 = vpop.f32.mrf.mxu0
  %v620 = vadd.f32 %v137, %v619
  %v621 = vpop.f32.mrf.mxu0
  %v622 = vadd.f32 %v137, %v621
  %623 = vmatmul.bf16.gmra.mxu0 %v302
  %v624 = vpop.f32.mrf.mxu0
  %v625 = vadd.f32 %v137, %v624
  %v626 = vpop.f32.mrf.mxu0
  %v627 = vadd.f32 %v137, %v626
  %628 = vdwg.mxu0
  %629 = vmatpush.bf16.msra.mxu0 %v498
  %630 = vmatpush.bf16.msra.mxu0 %v497
  %631 = vmatpush.bf16.msra.mxu0 %v496
  %632 = vmatpush.bf16.msra.mxu0 %v495
  %633 = vmatpush.bf16.msra.mxu0 %v494
  %634 = vmatpush.bf16.msra.mxu0 %v493
  %635 = vmatpush.bf16.msra.mxu0 %v492
  %636 = vmatpush.bf16.msra.mxu0 %v491
  %637 = vmatmul.bf16.gmra.mxu0 %v268
  %v638 = vpop.f32.mrf.mxu0
  %v639 = vadd.f32 %v590, %v638
  %v640 = vpop.f32.mrf.mxu0
  %v641 = vadd.f32 %v592, %v640
  %642 = vmatmul.bf16.gmra.mxu0 %v273
  %v643 = vpop.f32.mrf.mxu0
  %v644 = vadd.f32 %v595, %v643
  %v645 = vpop.f32.mrf.mxu0
  %v646 = vadd.f32 %v597, %v645
  %647 = vmatmul.bf16.gmra.mxu0 %v278
  %v648 = vpop.f32.mrf.mxu0
  %v649 = vadd.f32 %v600, %v648
  %v650 = vpop.f32.mrf.mxu0
  %v651 = vadd.f32 %v602, %v650
  %652 = vmatmul.bf16.gmra.mxu0 %v283
  %v653 = vpop.f32.mrf.mxu0
  %v654 = vadd.f32 %v605, %v653
  %v655 = vpop.f32.mrf.mxu0
  %v656 = vadd.f32 %v607, %v655
  %657 = vmatmul.bf16.gmra.mxu0 %v288
  %v658 = vpop.f32.mrf.mxu0
  %v659 = vadd.f32 %v610, %v658
  %v660 = vpop.f32.mrf.mxu0
  %v661 = vadd.f32 %v612, %v660
  %662 = vmatmul.bf16.gmra.mxu0 %v293
  %v663 = vpop.f32.mrf.mxu0
  %v664 = vadd.f32 %v615, %v663
  %v665 = vpop.f32.mrf.mxu0
  %v666 = vadd.f32 %v617, %v665
  %667 = vmatmul.bf16.gmra.mxu0 %v298
  %v668 = vpop.f32.mrf.mxu0
  %v669 = vadd.f32 %v620, %v668
  %v670 = vpop.f32.mrf.mxu0
  %v671 = vadd.f32 %v622, %v670
  %672 = vmatmul.bf16.gmra.mxu0 %v303
  %v673 = vpop.f32.mrf.mxu0
  %v674 = vadd.f32 %v625, %v673
  %v675 = vpop.f32.mrf.mxu0
  %v676 = vadd.f32 %v627, %v675
  %677 = vdwg.mxu0
  %678 = vmatpush.bf16.msra.mxu0 %v506
  %679 = vmatpush.bf16.msra.mxu0 %v505
  %680 = vmatpush.bf16.msra.mxu0 %v504
  %681 = vmatpush.bf16.msra.mxu0 %v503
  %682 = vmatpush.bf16.msra.mxu0 %v502
  %683 = vmatpush.bf16.msra.mxu0 %v501
  %684 = vmatpush.bf16.msra.mxu0 %v500
  %685 = vmatpush.bf16.msra.mxu0 %v499
  %686 = vmatmul.bf16.gmra.mxu0 %v269
  %v687 = vpop.f32.mrf.mxu0
  %v688 = vadd.f32 %v639, %v687
  %v689 = vpop.f32.mrf.mxu0
  %v690 = vadd.f32 %v641, %v689
  %691 = vmatmul.bf16.gmra.mxu0 %v274
  %v692 = vpop.f32.mrf.mxu0
  %v693 = vadd.f32 %v644, %v692
  %v694 = vpop.f32.mrf.mxu0
  %v695 = vadd.f32 %v646, %v694
  %696 = vmatmul.bf16.gmra.mxu0 %v279
  %v697 = vpop.f32.mrf.mxu0
  %v698 = vadd.f32 %v649, %v697
  %v699 = vpop.f32.mrf.mxu0
  %v700 = vadd.f32 %v651, %v699
  %701 = vmatmul.bf16.gmra.mxu0 %v284
  %v702 = vpop.f32.mrf.mxu0
  %v703 = vadd.f32 %v654, %v702
  %v704 = vpop.f32.mrf.mxu0
  %v705 = vadd.f32 %v656, %v704
  %706 = vmatmul.bf16.gmra.mxu0 %v289
  %v707 = vpop.f32.mrf.mxu0
  %v708 = vadd.f32 %v659, %v707
  %v709 = vpop.f32.mrf.mxu0
  %v710 = vadd.f32 %v661, %v709
  %711 = vmatmul.bf16.gmra.mxu0 %v294
  %v712 = vpop.f32.mrf.mxu0
  %v713 = vadd.f32 %v664, %v712
  %v714 = vpop.f32.mrf.mxu0
  %v715 = vadd.f32 %v666, %v714
  %716 = vmatmul.bf16.gmra.mxu0 %v299
  %v717 = vpop.f32.mrf.mxu0
  %v718 = vadd.f32 %v669, %v717
  %v719 = vpop.f32.mrf.mxu0
  %v720 = vadd.f32 %v671, %v719
  %721 = vmatmul.bf16.gmra.mxu0 %v304
  %v722 = vpop.f32.mrf.mxu0
  %v723 = vadd.f32 %v674, %v722
  %v724 = vpop.f32.mrf.mxu0
  %v725 = vadd.f32 %v676, %v724
  %726 = vdwg.mxu0
  %727 = vmatpush.bf16.msra.mxu0 %v514
  %728 = vmatpush.bf16.msra.mxu0 %v513
  %729 = vmatpush.bf16.msra.mxu0 %v512
  %730 = vmatpush.bf16.msra.mxu0 %v511
  %731 = vmatpush.bf16.msra.mxu0 %v510
  %732 = vmatpush.bf16.msra.mxu0 %v509
  %733 = vmatpush.bf16.msra.mxu0 %v508
  %734 = vmatpush.bf16.msra.mxu0 %v507
  %735 = vmatmul.bf16.gmra.mxu0 %v270
  %v736 = vpop.f32.mrf.mxu0
  %v737 = vadd.f32 %v688, %v736
  %v738 = vpop.f32.mrf.mxu0
  %v739 = vadd.f32 %v690, %v738
  %740 = vmatmul.bf16.gmra.mxu0 %v275
  %v741 = vpop.f32.mrf.mxu0
  %v742 = vadd.f32 %v693, %v741
  %v743 = vpop.f32.mrf.mxu0
  %v744 = vadd.f32 %v695, %v743
  %745 = vmatmul.bf16.gmra.mxu0 %v280
  %v746 = vpop.f32.mrf.mxu0
  %v747 = vadd.f32 %v698, %v746
  %v748 = vpop.f32.mrf.mxu0
  %v749 = vadd.f32 %v700, %v748
  %750 = vmatmul.bf16.gmra.mxu0 %v285
  %v751 = vpop.f32.mrf.mxu0
  %v752 = vadd.f32 %v703, %v751
  %v753 = vpop.f32.mrf.mxu0
  %v754 = vadd.f32 %v705, %v753
  %755 = vmatmul.bf16.gmra.mxu0 %v290
  %v756 = vpop.f32.mrf.mxu0
  %v757 = vadd.f32 %v708, %v756
  %v758 = vpop.f32.mrf.mxu0
  %v759 = vadd.f32 %v710, %v758
  %760 = vmatmul.bf16.gmra.mxu0 %v295
  %v761 = vpop.f32.mrf.mxu0
  %v762 = vadd.f32 %v713, %v761
  %v763 = vpop.f32.mrf.mxu0
  %v764 = vadd.f32 %v715, %v763
  %765 = vmatmul.bf16.gmra.mxu0 %v300
  %v766 = vpop.f32.mrf.mxu0
  %v767 = vadd.f32 %v718, %v766
  %v768 = vpop.f32.mrf.mxu0
  %v769 = vadd.f32 %v720, %v768
  %770 = vmatmul.bf16.gmra.mxu0 %v305
  %v771 = vpop.f32.mrf.mxu0
  %v772 = vadd.f32 %v723, %v771
  %v773 = vpop.f32.mrf.mxu0
  %v774 = vadd.f32 %v725, %v773
  %775 = vdwg.mxu0
  %776 = vmatpush.bf16.msra.mxu0 0
  %777 = vmatpush.bf16.msra.mxu0 0
  %778 = vmatpush.bf16.msra.mxu0 0
  %779 = vmatpush.bf16.msra.mxu0 0
  %780 = vmatpush.bf16.msra.mxu0 %v518
  %781 = vmatpush.bf16.msra.mxu0 %v517
  %782 = vmatpush.bf16.msra.mxu0 %v516
  %783 = vmatpush.bf16.msra.mxu0 %v515
  %784 = vmatmul.bf16.gmra.mxu0 %v557
  %v785 = vpop.f32.mrf.mxu0
  %v786 = vadd.f32 %v737, %v785
  %v787 = vpop.f32.mrf.mxu0
  %v788 = vadd.f32 %v739, %v787
  %789 = vmatmul.bf16.gmra.mxu0 %v560
  %v790 = vpop.f32.mrf.mxu0
  %v791 = vadd.f32 %v742, %v790
  %v792 = vpop.f32.mrf.mxu0
  %v793 = vadd.f32 %v744, %v792
  %794 = vmatmul.bf16.gmra.mxu0 %v563
  %v795 = vpop.f32.mrf.mxu0
  %v796 = vadd.f32 %v747, %v795
  %v797 = vpop.f32.mrf.mxu0
  %v798 = vadd.f32 %v749, %v797
  %799 = vmatmul.bf16.gmra.mxu0 %v566
  %v800 = vpop.f32.mrf.mxu0
  %v801 = vadd.f32 %v752, %v800
  %v802 = vpop.f32.mrf.mxu0
  %v803 = vadd.f32 %v754, %v802
  %804 = vmatmul.bf16.gmra.mxu0 %v569
  %v805 = vpop.f32.mrf.mxu0
  %v806 = vadd.f32 %v757, %v805
  %v807 = vpop.f32.mrf.mxu0
  %v808 = vadd.f32 %v759, %v807
  %809 = vmatmul.bf16.gmra.mxu0 %v572
  %v810 = vpop.f32.mrf.mxu0
  %v811 = vadd.f32 %v762, %v810
  %v812 = vpop.f32.mrf.mxu0
  %v813 = vadd.f32 %v764, %v812
  %814 = vmatmul.bf16.gmra.mxu0 %v575
  %v815 = vpop.f32.mrf.mxu0
  %v816 = vadd.f32 %v767, %v815
  %v817 = vpop.f32.mrf.mxu0
  %v818 = vadd.f32 %v769, %v817
  %819 = vmatmul.bf16.gmra.mxu0 %v578
  %v820 = vpop.f32.mrf.mxu0
  %v821 = vadd.f32 %v772, %v820
  %v822 = vpop.f32.mrf.mxu0
  %v823 = vadd.f32 %v774, %v822
  %824 = vdwg.mxu0
  %v825 = vmax.f32 %v786, 0.0
  %v826 = vmax.f32 %v788, 0.0
  %v827 = vmax.f32 %v791, 0.0
  %v828 = vmax.f32 %v793, 0.0
  %v829 = vmax.f32 %v796, 0.0
  %v830 = vmax.f32 %v798, 0.0
  %v831 = vmax.f32 %v801, 0.0
  %v832 = vmax.f32 %v803, 0.0
  %v833 = vmax.f32 %v806, 0.0
  %v834 = vmax.f32 %v808, 0.0
  %v835 = vmax.f32 %v811, 0.0
  %v836 = vmax.f32 %v813, 0.0
  %v837 = vmax.f32 %v816, 0.0
  %v838 = vmax.f32 %v818, 0.0
  %v839 = vmax.f32 %v821, 0.0
  %v840 = vmax.f32 %v823, 0.0
  %v841 = vpack.c.bf16 %v825, %v825
  %v842 = vpack.c.bf16 %v826, %v826
  %v843 = vpack.c.bf16 %v827, %v827
  %v844 = vpack.c.bf16 %v828, %v828
  %v845 = vpack.c.bf16 %v829, %v829
  %v846 = vpack.c.bf16 %v830, %v830
  %v847 = vpack.c.bf16 %v831, %v831
  %v848 = vpack.c.bf16 %v832, %v832
  %v849 = vpack.c.bf16 %v833, %v833
  %v850 = vpack.c.bf16 %v834, %v834
  %v851 = vpack.c.bf16 %v835, %v835
  %v852 = vpack.c.bf16 %v836, %v836
  %v853 = vpack.c.bf16 %v837, %v837
  %v854 = vpack.c.bf16 %v838, %v838
  %v855 = vpack.c.bf16 %v839, %v839
  %v856 = vpack.c.bf16 %v840, %v840
  %857 = vst [vmem:[%s3] sm:$0xf] %v841
  %858 = vst [vmem:[%s3 + $0x4] sm:$0xf] %v842
  %859 = vst [vmem:[%s3 + $0x8] sm:$0xf] %v843
  %860 = vst [vmem:[%s3 + $0xc] sm:$0xf] %v844
  %861 = vst [vmem:[%s3 + $0x10] sm:$0xf] %v845
  %862 = vst [vmem:[%s3 + $0x14] sm:$0xf] %v846
  %863 = vst [vmem:[%s3 + $0x18] sm:$0xf] %v847
  %864 = vst [vmem:[%s3 + $0x1c] sm:$0xf] %v848
  %865 = vst [vmem:[%s3 + $0x20] sm:$0xf] %v849
  %866 = vst [vmem:[%s3 + $0x24] sm:$0xf] %v850
  %867 = vst [vmem:[%s3 + $0x28] sm:$0xf] %v851
  %868 = vst [vmem:[%s3 + $0x2c] sm:$0xf] %v852
  %869 = vst [vmem:[%s3 + $0x30] sm:$0xf] %v853
  %870 = vst [vmem:[%s3 + $0x34] sm:$0xf] %v854
  %871 = vst [vmem:[%s3 + $0x38] sm:$0xf] %v855
  %872 = vst [vmem:[%s3 + $0x3c] sm:$0xf] %v856
  // Predicated region
  $region14: #{_lambda_.7} parent=0 // pred_check
    _
  $region15: #{_lambda_.7} parent=0 // pred_check_branch
    %874 = sbr.rel (0) target = $region17
  $region16: #{_lambda_.7} parent=0 // pred_region
    _
  $region17: #{_lambda_.7} parent=0 // pred_fallthru
    _
  // Predicated region
  $region18: #{_lambda_.7} parent=0 // pred_check
    _
  $region19: #{_lambda_.7} parent=0 // pred_check_branch
    %876 = sbr.rel (0) target = $region21
  $region20: #{_lambda_.7} parent=0 // pred_region
    _
  $region21: #{_lambda_.7} parent=0 // pred_fallthru
    _

// kernel: _lambda_.8
$region0: #{_lambda_.8}
  #allocation0 [shape = 'u32[]', space=smem, size = 0x4, offset = 0x4, fixed_abs, tag = 'smem constant byte address 0x4 - core index']
  #allocation1 [shape = 'u32[72,128]{1,0:T(1,128)}', space=vmem, size = 0x9000, scoped, tag = 'internal scratch']
  %s0 = inlined_call_operand.vmem [shape: bf16[32,1152], index: 0, kind: input, shape index: {}]
  %s1 = inlined_call_operand.vmem [shape: bf16[1152,256], index: 1, kind: input, shape index: {}]
  %s2 = inlined_call_operand.vmem [shape: f32[1,256], index: 2, kind: input, shape index: {}]
  %s3 = inlined_call_operand.vmem [shape: bf16[32,256], index: 3, kind: output, shape index: {}]
  %s4 = sld [smem:[#allocation0]]
  $region22: #{_lambda_.8} parent=0
    _
  %s6 = ssub.s32 1, %s4
  %s7 = scalar_select 0, %s6, %s4
  // Predicated region
  $region2: #{_lambda_.8} parent=0 // pred_check
    _
  $region3: #{_lambda_.8} parent=0 // pred_check_branch
    %9 = sbr.rel (0) target = $region5
  $region4: #{_lambda_.8} parent=0 // pred_region
    _
  $region5: #{_lambda_.8} parent=0 // pred_fallthru
    _
  // Predicated region
  $region6: #{_lambda_.8} parent=0 // pred_check
    _
  $region7: #{_lambda_.8} parent=0 // pred_check_branch
    %11 = sbr.rel (0) target = $region9
  $region8: #{_lambda_.8} parent=0 // pred_region
    _
  $region9: #{_lambda_.8} parent=0 // pred_fallthru
    _
  // Predicated region
  $region10: #{_lambda_.8} parent=0 // pred_check
    _
  $region11: #{_lambda_.8} parent=0 // pred_check_branch
    %13 = sbr.rel (0) target = $region13
  $region12: #{_lambda_.8} parent=0 // pred_region
    _
  $region13: #{_lambda_.8} parent=0 // pred_fallthru
    _
  %v14 = vld [vmem:[%s0] sm:$0xff]
  %v15 = vld [vmem:[%s0 + $0x8] sm:$0xff]
  %v16 = vld [vmem:[%s0 + $0x10] sm:$0xff]
  %v17 = vld [vmem:[%s0 + $0x18] sm:$0xff]
  %v18 = vld [vmem:[%s0 + $0x20] sm:$0xf]
  %v19 = vld [vmem:[%s0 + $0x24] sm:$0xff]
  %v20 = vld [vmem:[%s0 + $0x2c] sm:$0xff]
  %v21 = vld [vmem:[%s0 + $0x34] sm:$0xff]
  %v22 = vld [vmem:[%s0 + $0x3c] sm:$0xff]
  %v23 = vld [vmem:[%s0 + $0x44] sm:$0xf]
  %v24 = vld [vmem:[%s0 + $0x48] sm:$0xff]
  %v25 = vld [vmem:[%s0 + $0x50] sm:$0xff]
  %v26 = vld [vmem:[%s0 + $0x58] sm:$0xff]
  %v27 = vld [vmem:[%s0 + $0x60] sm:$0xff]
  %v28 = vld [vmem:[%s0 + $0x68] sm:$0xf]
  %v29 = vld [vmem:[%s0 + $0x6c] sm:$0xff]
  %v30 = vld [vmem:[%s0 + $0x74] sm:$0xff]
  %v31 = vld [vmem:[%s0 + $0x7c] sm:$0xff]
  %v32 = vld [vmem:[%s0 + $0x84] sm:$0xff]
  %v33 = vld [vmem:[%s0 + $0x8c] sm:$0xf]
  %v34 = vld [vmem:[%s1] sm:$0xff]
  %v35 = vld [vmem:[%s1 + $0x8] sm:$0xff]
  %v36 = vld [vmem:[%s1 + $0x10] sm:$0xff]
  %v37 = vld [vmem:[%s1 + $0x18] sm:$0xff]
  %v38 = vld [vmem:[%s1 + $0x20] sm:$0xff]
  %v39 = vld [vmem:[%s1 + $0x28] sm:$0xff]
  %v40 = vld [vmem:[%s1 + $0x30] sm:$0xff]
  %v41 = vld [vmem:[%s1 + $0x38] sm:$0xff]
  %v42 = vld [vmem:[%s1 + $0x40] sm:$0xff]
  %v43 = vld [vmem:[%s1 + $0x48] sm:$0xff]
  %v44 = vld [vmem:[%s1 + $0x50] sm:$0xff]
  %v45 = vld [vmem:[%s1 + $0x58] sm:$0xff]
  %v46 = vld [vmem:[%s1 + $0x60] sm:$0xff]
  %v47 = vld [vmem:[%s1 + $0x68] sm:$0xff]
  %v48 = vld [vmem:[%s1 + $0x70] sm:$0xff]
  %v49 = vld [vmem:[%s1 + $0x78] sm:$0xff]
  %v50 = vld [vmem:[%s1 + $0x80] sm:$0xff]
  %v51 = vld [vmem:[%s1 + $0x88] sm:$0xff]
  %v52 = vld [vmem:[%s1 + $0x90] sm:$0xff]
  %v53 = vld [vmem:[%s1 + $0x98] sm:$0xff]
  %v54 = vld [vmem:[%s1 + $0xa0] sm:$0xff]
  %v55 = vld [vmem:[%s1 + $0xa8] sm:$0xff]
  %v56 = vld [vmem:[%s1 + $0xb0] sm:$0xff]
  %v57 = vld [vmem:[%s1 + $0xb8] sm:$0xff]
  %v58 = vld [vmem:[%s1 + $0xc0] sm:$0xff]
  %v59 = vld [vmem:[%s1 + $0xc8] sm:$0xff]
  %v60 = vld [vmem:[%s1 + $0xd0] sm:$0xff]
  %v61 = vld [vmem:[%s1 + $0xd8] sm:$0xff]
  %v62 = vld [vmem:[%s1 + $0xe0] sm:$0xff]
  %v63 = vld [vmem:[%s1 + $0xe8] sm:$0xff]
  %v64 = vld [vmem:[%s1 + $0xf0] sm:$0xff]
  %v65 = vld [vmem:[%s1 + $0xf8] sm:$0xff]
  %v66 = vld [vmem:[%s1 + $0x100] sm:$0xff]
  %v67 = vld [vmem:[%s1 + $0x108] sm:$0xff]
  %v68 = vld [vmem:[%s1 + $0x110] sm:$0xff]
  %v69 = vld [vmem:[%s1 + $0x118] sm:$0xff]
  %v70 = vld [vmem:[%s1 + $0x120] sm:$0xff]
  %v71 = vld [vmem:[%s1 + $0x128] sm:$0xff]
  %v72 = vld [vmem:[%s1 + $0x130] sm:$0xff]
  %v73 = vld [vmem:[%s1 + $0x138] sm:$0xff]
  %v74 = vld [vmem:[%s1 + $0x140] sm:$0xff]
  %v75 = vld [vmem:[%s1 + $0x148] sm:$0xff]
  %v76 = vld [vmem:[%s1 + $0x150] sm:$0xff]
  %v77 = vld [vmem:[%s1 + $0x158] sm:$0xff]
  %v78 = vld [vmem:[%s1 + $0x160] sm:$0xff]
  %v79 = vld [vmem:[%s1 + $0x168] sm:$0xff]
  %v80 = vld [vmem:[%s1 + $0x170] sm:$0xff]
  %v81 = vld [vmem:[%s1 + $0x178] sm:$0xff]
  %v82 = vld [vmem:[%s1 + $0x180] sm:$0xff]
  %v83 = vld [vmem:[%s1 + $0x188] sm:$0xff]
  %v84 = vld [vmem:[%s1 + $0x190] sm:$0xff]
  %v85 = vld [vmem:[%s1 + $0x198] sm:$0xff]
  %v86 = vld [vmem:[%s1 + $0x1a0] sm:$0xff]
  %v87 = vld [vmem:[%s1 + $0x1a8] sm:$0xff]
  %v88 = vld [vmem:[%s1 + $0x1b0] sm:$0xff]
  %v89 = vld [vmem:[%s1 + $0x1b8] sm:$0xff]
  %v90 = vld [vmem:[%s1 + $0x1c0] sm:$0xff]
  %v91 = vld [vmem:[%s1 + $0x1c8] sm:$0xff]
  %v92 = vld [vmem:[%s1 + $0x1d0] sm:$0xff]
  %v93 = vld [vmem:[%s1 + $0x1d8] sm:$0xff]
  %v94 = vld [vmem:[%s1 + $0x1e0] sm:$0xff]
  %v95 = vld [vmem:[%s1 + $0x1e8] sm:$0xff]
  %v96 = vld [vmem:[%s1 + $0x1f0] sm:$0xff]
  %v97 = vld [vmem:[%s1 + $0x1f8] sm:$0xff]
  %v98 = vld [vmem:[%s1 + $0x200] sm:$0xff]
  %v99 = vld [vmem:[%s1 + $0x208] sm:$0xff]
  %v100 = vld [vmem:[%s1 + $0x210] sm:$0xff]
  %v101 = vld [vmem:[%s1 + $0x218] sm:$0xff]
  %v102 = vld [vmem:[%s1 + $0x220] sm:$0xff]
  %v103 = vld [vmem:[%s1 + $0x228] sm:$0xff]
  %v104 = vld [vmem:[%s1 + $0x230] sm:$0xff]
  %v105 = vld [vmem:[%s1 + $0x238] sm:$0xff]
  %v106 = vld [vmem:[%s1 + $0x240] sm:$0xff]
  %v107 = vld [vmem:[%s1 + $0x248] sm:$0xff]
  %v108 = vld [vmem:[%s1 + $0x250] sm:$0xff]
  %v109 = vld [vmem:[%s1 + $0x258] sm:$0xff]
  %v110 = vld [vmem:[%s1 + $0x260] sm:$0xff]
  %v111 = vld [vmem:[%s1 + $0x268] sm:$0xff]
  %v112 = vld [vmem:[%s1 + $0x270] sm:$0xff]
  %v113 = vld [vmem:[%s1 + $0x278] sm:$0xff]
  %v114 = vld [vmem:[%s1 + $0x280] sm:$0xff]
  %v115 = vld [vmem:[%s1 + $0x288] sm:$0xff]
  %v116 = vld [vmem:[%s1 + $0x290] sm:$0xff]
  %v117 = vld [vmem:[%s1 + $0x298] sm:$0xff]
  %v118 = vld [vmem:[%s1 + $0x2a0] sm:$0xff]
  %v119 = vld [vmem:[%s1 + $0x2a8] sm:$0xff]
  %v120 = vld [vmem:[%s1 + $0x2b0] sm:$0xff]
  %v121 = vld [vmem:[%s1 + $0x2b8] sm:$0xff]
  %v122 = vld [vmem:[%s1 + $0x2c0] sm:$0xff]
  %v123 = vld [vmem:[%s1 + $0x2c8] sm:$0xff]
  %v124 = vld [vmem:[%s1 + $0x2d0] sm:$0xff]
  %v125 = vld [vmem:[%s1 + $0x2d8] sm:$0xff]
  %v126 = vld [vmem:[%s1 + $0x2e0] sm:$0xff]
  %v127 = vld [vmem:[%s1 + $0x2e8] sm:$0xff]
  %v128 = vld [vmem:[%s1 + $0x2f0] sm:$0xff]
  %v129 = vld [vmem:[%s1 + $0x2f8] sm:$0xff]
  %v130 = vld [vmem:[%s1 + $0x300] sm:$0xff]
  %v131 = vld [vmem:[%s1 + $0x308] sm:$0xff]
  %v132 = vld [vmem:[%s1 + $0x310] sm:$0xff]
  %v133 = vld [vmem:[%s1 + $0x318] sm:$0xff]
  %v134 = vld [vmem:[%s1 + $0x320] sm:$0xff]
  %v135 = vld [vmem:[%s1 + $0x328] sm:$0xff]
  %v136 = vld [vmem:[%s1 + $0x330] sm:$0xff]
  %v137 = vld [vmem:[%s1 + $0x338] sm:$0xff]
  %v138 = vld [vmem:[%s1 + $0x340] sm:$0xff]
  %v139 = vld [vmem:[%s1 + $0x348] sm:$0xff]
  %v140 = vld [vmem:[%s1 + $0x350] sm:$0xff]
  %v141 = vld [vmem:[%s1 + $0x358] sm:$0xff]
  %v142 = vld [vmem:[%s1 + $0x360] sm:$0xff]
  %v143 = vld [vmem:[%s1 + $0x368] sm:$0xff]
  %v144 = vld [vmem:[%s1 + $0x370] sm:$0xff]
  %v145 = vld [vmem:[%s1 + $0x378] sm:$0xff]
  %v146 = vld [vmem:[%s1 + $0x380] sm:$0xff]
  %v147 = vld [vmem:[%s1 + $0x388] sm:$0xff]
  %v148 = vld [vmem:[%s1 + $0x390] sm:$0xff]
  %v149 = vld [vmem:[%s1 + $0x398] sm:$0xff]
  %v150 = vld [vmem:[%s1 + $0x3a0] sm:$0xff]
  %v151 = vld [vmem:[%s1 + $0x3a8] sm:$0xff]
  %v152 = vld [vmem:[%s1 + $0x3b0] sm:$0xff]
  %v153 = vld [vmem:[%s1 + $0x3b8] sm:$0xff]
  %v154 = vld [vmem:[%s1 + $0x3c0] sm:$0xff]
  %v155 = vld [vmem:[%s1 + $0x3c8] sm:$0xff]
  %v156 = vld [vmem:[%s1 + $0x3d0] sm:$0xff]
  %v157 = vld [vmem:[%s1 + $0x3d8] sm:$0xff]
  %v158 = vld [vmem:[%s1 + $0x3e0] sm:$0xff]
  %v159 = vld [vmem:[%s1 + $0x3e8] sm:$0xff]
  %v160 = vld [vmem:[%s1 + $0x3f0] sm:$0xff]
  %v161 = vld [vmem:[%s1 + $0x3f8] sm:$0xff]
  %v162 = vld [vmem:[%s1 + $0x400] sm:$0xff]
  %v163 = vld [vmem:[%s1 + $0x408] sm:$0xff]
  %v164 = vld [vmem:[%s1 + $0x410] sm:$0xff]
  %v165 = vld [vmem:[%s1 + $0x418] sm:$0xff]
  %v166 = vld [vmem:[%s1 + $0x420] sm:$0xff]
  %v167 = vld [vmem:[%s1 + $0x428] sm:$0xff]
  %v168 = vld [vmem:[%s1 + $0x430] sm:$0xff]
  %v169 = vld [vmem:[%s1 + $0x438] sm:$0xff]
  %v170 = vld [vmem:[%s1 + $0x440] sm:$0xff]
  %v171 = vld [vmem:[%s1 + $0x448] sm:$0xff]
  %v172 = vld [vmem:[%s1 + $0x450] sm:$0xff]
  %v173 = vld [vmem:[%s1 + $0x458] sm:$0xff]
  %v174 = vld [vmem:[%s1 + $0x460] sm:$0xff]
  %v175 = vld [vmem:[%s1 + $0x468] sm:$0xff]
  %v176 = vld [vmem:[%s1 + $0x470] sm:$0xff]
  %v177 = vld [vmem:[%s1 + $0x478] sm:$0xff]
  %v178 = vld [vmem:[%s2] sm:$0x3]
  %v180 = vperm.slane %v178, 0
  %v181 = vperm.slane %v178, 1
  %v204 = vunpack.c.l.b16 %v14
  %v205 = vunpack.c.h.b16 %v14
  %v206 = vunpack.c.l.b16 %v15
  %v207 = vunpack.c.h.b16 %v15
  %v208 = vunpack.c.l.b16 %v16
  %v209 = vunpack.c.h.b16 %v16
  %v210 = vunpack.c.l.b16 %v17
  %v211 = vunpack.c.h.b16 %v17
  %v212 = vunpack.c.l.b16 %v18
  %v213 = vunpack.c.l.b16 %v19
  %v214 = vunpack.c.h.b16 %v19
  %v215 = vunpack.c.l.b16 %v20
  %v216 = vunpack.c.h.b16 %v20
  %v217 = vunpack.c.l.b16 %v21
  %v218 = vunpack.c.h.b16 %v21
  %v219 = vunpack.c.l.b16 %v22
  %v220 = vunpack.c.h.b16 %v22
  %v221 = vunpack.c.l.b16 %v23
  %v222 = vunpack.c.l.b16 %v24
  %v223 = vunpack.c.h.b16 %v24
  %v224 = vunpack.c.l.b16 %v25
  %v225 = vunpack.c.h.b16 %v25
  %v226 = vunpack.c.l.b16 %v26
  %v227 = vunpack.c.h.b16 %v26
  %v228 = vunpack.c.l.b16 %v27
  %v229 = vunpack.c.h.b16 %v27
  %v230 = vunpack.c.l.b16 %v28
  %v231 = vunpack.c.l.b16 %v29
  %v232 = vunpack.c.h.b16 %v29
  %v233 = vunpack.c.l.b16 %v30
  %v234 = vunpack.c.h.b16 %v30
  %v235 = vunpack.c.l.b16 %v31
  %v236 = vunpack.c.h.b16 %v31
  %v237 = vunpack.c.l.b16 %v32
  %v238 = vunpack.c.h.b16 %v32
  %v239 = vunpack.c.l.b16 %v33
  %v240 = vpack.c.b16 %v213, %v204
  %v241 = vpack.c.b16 %v214, %v205
  %v242 = vpack.c.b16 %v215, %v206
  %v243 = vpack.c.b16 %v216, %v207
  %v244 = vpack.c.b16 %v217, %v208
  %v245 = vpack.c.b16 %v218, %v209
  %v246 = vpack.c.b16 %v219, %v210
  %v247 = vpack.c.b16 %v220, %v211
  %v248 = vpack.c.b16 %v221, %v212
  %v249 = vpack.c.b16 %v231, %v222
  %v250 = vpack.c.b16 %v232, %v223
  %v251 = vpack.c.b16 %v233, %v224
  %v252 = vpack.c.b16 %v234, %v225
  %v253 = vpack.c.b16 %v235, %v226
  %v254 = vpack.c.b16 %v236, %v227
  %v255 = vpack.c.b16 %v237, %v228
  %v256 = vpack.c.b16 %v238, %v229
  %v257 = vpack.c.b16 %v239, %v230
  %v420 = vunpack.c.l.b16 %v34
  %v421 = vunpack.c.h.b16 %v34
  %v422 = vunpack.c.l.b16 %v35
  %v423 = vunpack.c.h.b16 %v35
  %v424 = vunpack.c.l.b16 %v36
  %v425 = vunpack.c.h.b16 %v36
  %v426 = vunpack.c.l.b16 %v37
  %v427 = vunpack.c.h.b16 %v37
  %v428 = vunpack.c.l.b16 %v38
  %v429 = vunpack.c.h.b16 %v38
  %v430 = vunpack.c.l.b16 %v39
  %v431 = vunpack.c.h.b16 %v39
  %v432 = vunpack.c.l.b16 %v40
  %v433 = vunpack.c.h.b16 %v40
  %v434 = vunpack.c.l.b16 %v41
  %v435 = vunpack.c.h.b16 %v41
  %v436 = vunpack.c.l.b16 %v42
  %v437 = vunpack.c.h.b16 %v42
  %v438 = vunpack.c.l.b16 %v43
  %v439 = vunpack.c.h.b16 %v43
  %v440 = vunpack.c.l.b16 %v44
  %v441 = vunpack.c.h.b16 %v44
  %v442 = vunpack.c.l.b16 %v45
  %v443 = vunpack.c.h.b16 %v45
  %v444 = vunpack.c.l.b16 %v46
  %v445 = vunpack.c.h.b16 %v46
  %v446 = vunpack.c.l.b16 %v47
  %v447 = vunpack.c.h.b16 %v47
  %v448 = vunpack.c.l.b16 %v48
  %v449 = vunpack.c.h.b16 %v48
  %v450 = vunpack.c.l.b16 %v49
  %v451 = vunpack.c.h.b16 %v49
  %v452 = vunpack.c.l.b16 %v50
  %v453 = vunpack.c.h.b16 %v50
  %v454 = vunpack.c.l.b16 %v51
  %v455 = vunpack.c.h.b16 %v51
  %v456 = vunpack.c.l.b16 %v52
  %v457 = vunpack.c.h.b16 %v52
  %v458 = vunpack.c.l.b16 %v53
  %v459 = vunpack.c.h.b16 %v53
  %v460 = vunpack.c.l.b16 %v54
  %v461 = vunpack.c.h.b16 %v54
  %v462 = vunpack.c.l.b16 %v55
  %v463 = vunpack.c.h.b16 %v55
  %v464 = vunpack.c.l.b16 %v56
  %v465 = vunpack.c.h.b16 %v56
  %v466 = vunpack.c.l.b16 %v57
  %v467 = vunpack.c.h.b16 %v57
  %v468 = vunpack.c.l.b16 %v58
  %v469 = vunpack.c.h.b16 %v58
  %v470 = vunpack.c.l.b16 %v59
  %v471 = vunpack.c.h.b16 %v59
  %v472 = vunpack.c.l.b16 %v60
  %v473 = vunpack.c.h.b16 %v60
  %v474 = vunpack.c.l.b16 %v61
  %v475 = vunpack.c.h.b16 %v61
  %v476 = vunpack.c.l.b16 %v62
  %v477 = vunpack.c.h.b16 %v62
  %v478 = vunpack.c.l.b16 %v63
  %v479 = vunpack.c.h.b16 %v63
  %v480 = vunpack.c.l.b16 %v64
  %v481 = vunpack.c.h.b16 %v64
  %v482 = vunpack.c.l.b16 %v65
  %v483 = vunpack.c.h.b16 %v65
  %v484 = vunpack.c.l.b16 %v66
  %v485 = vunpack.c.h.b16 %v66
  %v486 = vunpack.c.l.b16 %v67
  %v487 = vunpack.c.h.b16 %v67
  %v488 = vunpack.c.l.b16 %v68
  %v489 = vunpack.c.h.b16 %v68
  %v490 = vunpack.c.l.b16 %v69
  %v491 = vunpack.c.h.b16 %v69
  %v492 = vunpack.c.l.b16 %v70
  %v493 = vunpack.c.h.b16 %v70
  %v494 = vunpack.c.l.b16 %v71
  %v495 = vunpack.c.h.b16 %v71
  %v496 = vunpack.c.l.b16 %v72
  %v497 = vunpack.c.h.b16 %v72
  %v498 = vunpack.c.l.b16 %v73
  %v499 = vunpack.c.h.b16 %v73
  %v500 = vunpack.c.l.b16 %v74
  %v501 = vunpack.c.h.b16 %v74
  %v502 = vunpack.c.l.b16 %v75
  %v503 = vunpack.c.h.b16 %v75
  %v504 = vunpack.c.l.b16 %v76
  %v505 = vunpack.c.h.b16 %v76
  %v506 = vunpack.c.l.b16 %v77
  %v507 = vunpack.c.h.b16 %v77
  %v508 = vunpack.c.l.b16 %v78
  %v509 = vunpack.c.h.b16 %v78
  %v510 = vunpack.c.l.b16 %v79
  %v511 = vunpack.c.h.b16 %v79
  %v512 = vunpack.c.l.b16 %v80
  %v513 = vunpack.c.h.b16 %v80
  %v514 = vunpack.c.l.b16 %v81
  %v515 = vunpack.c.h.b16 %v81
  %v516 = vunpack.c.l.b16 %v82
  %v517 = vunpack.c.h.b16 %v82
  %v518 = vunpack.c.l.b16 %v83
  %v519 = vunpack.c.h.b16 %v83
  %v520 = vunpack.c.l.b16 %v84
  %v521 = vunpack.c.h.b16 %v84
  %v522 = vunpack.c.l.b16 %v85
  %v523 = vunpack.c.h.b16 %v85
  %v524 = vunpack.c.l.b16 %v86
  %v525 = vunpack.c.h.b16 %v86
  %v526 = vunpack.c.l.b16 %v87
  %v527 = vunpack.c.h.b16 %v87
  %v528 = vunpack.c.l.b16 %v88
  %v529 = vunpack.c.h.b16 %v88
  %v530 = vunpack.c.l.b16 %v89
  %v531 = vunpack.c.h.b16 %v89
  %v532 = vunpack.c.l.b16 %v90
  %v533 = vunpack.c.h.b16 %v90
  %v534 = vunpack.c.l.b16 %v91
  %v535 = vunpack.c.h.b16 %v91
  %v536 = vunpack.c.l.b16 %v92
  %v537 = vunpack.c.h.b16 %v92
  %v538 = vunpack.c.l.b16 %v93
  %v539 = vunpack.c.h.b16 %v93
  %v540 = vunpack.c.l.b16 %v94
  %v541 = vunpack.c.h.b16 %v94
  %v542 = vunpack.c.l.b16 %v95
  %v543 = vunpack.c.h.b16 %v95
  %v544 = vunpack.c.l.b16 %v96
  %v545 = vunpack.c.h.b16 %v96
  %v546 = vunpack.c.l.b16 %v97
  %v547 = vunpack.c.h.b16 %v97
  %v548 = vunpack.c.l.b16 %v98
  %v549 = vunpack.c.h.b16 %v98
  %v550 = vunpack.c.l.b16 %v99
  %v551 = vunpack.c.h.b16 %v99
  %v552 = vunpack.c.l.b16 %v100
  %v553 = vunpack.c.h.b16 %v100
  %v554 = vunpack.c.l.b16 %v101
  %v555 = vunpack.c.h.b16 %v101
  %v556 = vunpack.c.l.b16 %v102
  %v557 = vunpack.c.h.b16 %v102
  %v558 = vunpack.c.l.b16 %v103
  %v559 = vunpack.c.h.b16 %v103
  %v560 = vunpack.c.l.b16 %v104
  %v561 = vunpack.c.h.b16 %v104
  %v562 = vunpack.c.l.b16 %v105
  %v563 = vunpack.c.h.b16 %v105
  %v564 = vunpack.c.l.b16 %v106
  %v565 = vunpack.c.h.b16 %v106
  %v566 = vunpack.c.l.b16 %v107
  %v567 = vunpack.c.h.b16 %v107
  %v568 = vunpack.c.l.b16 %v108
  %v569 = vunpack.c.h.b16 %v108
  %v570 = vunpack.c.l.b16 %v109
  %v571 = vunpack.c.h.b16 %v109
  %v572 = vunpack.c.l.b16 %v110
  %v573 = vunpack.c.h.b16 %v110
  %v574 = vunpack.c.l.b16 %v111
  %v575 = vunpack.c.h.b16 %v111
  %v576 = vunpack.c.l.b16 %v112
  %v577 = vunpack.c.h.b16 %v112
  %v578 = vunpack.c.l.b16 %v113
  %v579 = vunpack.c.h.b16 %v113
  %v580 = vunpack.c.l.b16 %v114
  %v581 = vunpack.c.h.b16 %v114
  %v582 = vunpack.c.l.b16 %v115
  %v583 = vunpack.c.h.b16 %v115
  %v584 = vunpack.c.l.b16 %v116
  %v585 = vunpack.c.h.b16 %v116
  %v586 = vunpack.c.l.b16 %v117
  %v587 = vunpack.c.h.b16 %v117
  %v588 = vunpack.c.l.b16 %v118
  %v589 = vunpack.c.h.b16 %v118
  %v590 = vunpack.c.l.b16 %v119
  %v591 = vunpack.c.h.b16 %v119
  %v592 = vunpack.c.l.b16 %v120
  %v593 = vunpack.c.h.b16 %v120
  %v594 = vunpack.c.l.b16 %v121
  %v595 = vunpack.c.h.b16 %v121
  %v596 = vunpack.c.l.b16 %v122
  %v597 = vunpack.c.h.b16 %v122
  %v598 = vunpack.c.l.b16 %v123
  %v599 = vunpack.c.h.b16 %v123
  %v600 = vunpack.c.l.b16 %v124
  %v601 = vunpack.c.h.b16 %v124
  %v602 = vunpack.c.l.b16 %v125
  %v603 = vunpack.c.h.b16 %v125
  %v604 = vunpack.c.l.b16 %v126
  %v605 = vunpack.c.h.b16 %v126
  %v606 = vunpack.c.l.b16 %v127
  %v607 = vunpack.c.h.b16 %v127
  %v608 = vunpack.c.l.b16 %v128
  %v609 = vunpack.c.h.b16 %v128
  %v610 = vunpack.c.l.b16 %v129
  %v611 = vunpack.c.h.b16 %v129
  %v612 = vunpack.c.l.b16 %v130
  %v613 = vunpack.c.h.b16 %v130
  %v614 = vunpack.c.l.b16 %v131
  %v615 = vunpack.c.h.b16 %v131
  %v616 = vunpack.c.l.b16 %v132
  %v617 = vunpack.c.h.b16 %v132
  %v618 = vunpack.c.l.b16 %v133
  %v619 = vunpack.c.h.b16 %v133
  %v620 = vunpack.c.l.b16 %v134
  %v621 = vunpack.c.h.b16 %v134
  %v622 = vunpack.c.l.b16 %v135
  %v623 = vunpack.c.h.b16 %v135
  %v624 = vunpack.c.l.b16 %v136
  %v625 = vunpack.c.h.b16 %v136
  %v626 = vunpack.c.l.b16 %v137
  %v627 = vunpack.c.h.b16 %v137
  %v628 = vunpack.c.l.b16 %v138
  %v629 = vunpack.c.h.b16 %v138
  %v630 = vunpack.c.l.b16 %v139
  %v631 = vunpack.c.h.b16 %v139
  %v632 = vunpack.c.l.b16 %v140
  %v633 = vunpack.c.h.b16 %v140
  %v634 = vunpack.c.l.b16 %v141
  %v635 = vunpack.c.h.b16 %v141
  %v636 = vunpack.c.l.b16 %v142
  %v637 = vunpack.c.h.b16 %v142
  %v638 = vunpack.c.l.b16 %v143
  %v639 = vunpack.c.h.b16 %v143
  %v640 = vunpack.c.l.b16 %v144
  %v641 = vunpack.c.h.b16 %v144
  %v642 = vunpack.c.l.b16 %v145
  %v643 = vunpack.c.h.b16 %v145
  %v644 = vunpack.c.l.b16 %v146
  %v645 = vunpack.c.h.b16 %v146
  %v646 = vunpack.c.l.b16 %v147
  %v647 = vunpack.c.h.b16 %v147
  %v648 = vunpack.c.l.b16 %v148
  %v649 = vunpack.c.h.b16 %v148
  %v650 = vunpack.c.l.b16 %v149
  %v651 = vunpack.c.h.b16 %v149
  %v652 = vunpack.c.l.b16 %v150
  %v653 = vunpack.c.h.b16 %v150
  %v654 = vunpack.c.l.b16 %v151
  %v655 = vunpack.c.h.b16 %v151
  %v656 = vunpack.c.l.b16 %v152
  %v657 = vunpack.c.h.b16 %v152
  %v658 = vunpack.c.l.b16 %v153
  %v659 = vunpack.c.h.b16 %v153
  %v660 = vunpack.c.l.b16 %v154
  %v661 = vunpack.c.h.b16 %v154
  %v662 = vunpack.c.l.b16 %v155
  %v663 = vunpack.c.h.b16 %v155
  %v664 = vunpack.c.l.b16 %v156
  %v665 = vunpack.c.h.b16 %v156
  %v666 = vunpack.c.l.b16 %v157
  %v667 = vunpack.c.h.b16 %v157
  %v668 = vunpack.c.l.b16 %v158
  %v669 = vunpack.c.h.b16 %v158
  %v670 = vunpack.c.l.b16 %v159
  %v671 = vunpack.c.h.b16 %v159
  %v672 = vunpack.c.l.b16 %v160
  %v673 = vunpack.c.h.b16 %v160
  %v674 = vunpack.c.l.b16 %v161
  %v675 = vunpack.c.h.b16 %v161
  %v676 = vunpack.c.l.b16 %v162
  %v677 = vunpack.c.h.b16 %v162
  %v678 = vunpack.c.l.b16 %v163
  %v679 = vunpack.c.h.b16 %v163
  %v680 = vunpack.c.l.b16 %v164
  %v681 = vunpack.c.h.b16 %v164
  %v682 = vunpack.c.l.b16 %v165
  %v683 = vunpack.c.h.b16 %v165
  %v684 = vunpack.c.l.b16 %v166
  %v685 = vunpack.c.h.b16 %v166
  %v686 = vunpack.c.l.b16 %v167
  %v687 = vunpack.c.h.b16 %v167
  %v688 = vunpack.c.l.b16 %v168
  %v689 = vunpack.c.h.b16 %v168
  %v690 = vunpack.c.l.b16 %v169
  %v691 = vunpack.c.h.b16 %v169
  %v692 = vunpack.c.l.b16 %v170
  %v693 = vunpack.c.h.b16 %v170
  %v694 = vunpack.c.l.b16 %v171
  %v695 = vunpack.c.h.b16 %v171
  %v696 = vunpack.c.l.b16 %v172
  %v697 = vunpack.c.h.b16 %v172
  %v698 = vunpack.c.l.b16 %v173
  %v699 = vunpack.c.h.b16 %v173
  %v700 = vunpack.c.l.b16 %v174
  %v701 = vunpack.c.h.b16 %v174
  %v702 = vunpack.c.l.b16 %v175
  %v703 = vunpack.c.h.b16 %v175
  %v704 = vunpack.c.l.b16 %v176
  %v705 = vunpack.c.h.b16 %v176
  %v706 = vunpack.c.l.b16 %v177
  %v707 = vunpack.c.h.b16 %v177
  %v708 = vpack.c.b16 %v422, %v420
  %v709 = vpack.c.b16 %v423, %v421
  %v710 = vpack.c.b16 %v426, %v424
  %v711 = vpack.c.b16 %v427, %v425
  %v712 = vpack.c.b16 %v430, %v428
  %v713 = vpack.c.b16 %v431, %v429
  %v714 = vpack.c.b16 %v434, %v432
  %v715 = vpack.c.b16 %v435, %v433
  %v716 = vpack.c.b16 %v438, %v436
  %v717 = vpack.c.b16 %v439, %v437
  %v718 = vpack.c.b16 %v442, %v440
  %v719 = vpack.c.b16 %v443, %v441
  %v720 = vpack.c.b16 %v446, %v444
  %v721 = vpack.c.b16 %v447, %v445
  %v722 = vpack.c.b16 %v450, %v448
  %v723 = vpack.c.b16 %v451, %v449
  %v724 = vpack.c.b16 %v454, %v452
  %v725 = vpack.c.b16 %v455, %v453
  %v726 = vpack.c.b16 %v458, %v456
  %v727 = vpack.c.b16 %v459, %v457
  %v728 = vpack.c.b16 %v462, %v460
  %v729 = vpack.c.b16 %v463, %v461
  %v730 = vpack.c.b16 %v466, %v464
  %v731 = vpack.c.b16 %v467, %v465
  %v732 = vpack.c.b16 %v470, %v468
  %v733 = vpack.c.b16 %v471, %v469
  %v734 = vpack.c.b16 %v474, %v472
  %v735 = vpack.c.b16 %v475, %v473
  %v736 = vpack.c.b16 %v478, %v476
  %v737 = vpack.c.b16 %v479, %v477
  %v738 = vpack.c.b16 %v482, %v480
  %v739 = vpack.c.b16 %v483, %v481
  %v740 = vpack.c.b16 %v486, %v484
  %v741 = vpack.c.b16 %v487, %v485
  %v742 = vpack.c.b16 %v490, %v488
  %v743 = vpack.c.b16 %v491, %v489
  %v744 = vpack.c.b16 %v494, %v492
  %v745 = vpack.c.b16 %v495, %v493
  %v746 = vpack.c.b16 %v498, %v496
  %v747 = vpack.c.b16 %v499, %v497
  %v748 = vpack.c.b16 %v502, %v500
  %v749 = vpack.c.b16 %v503, %v501
  %v750 = vpack.c.b16 %v506, %v504
  %v751 = vpack.c.b16 %v507, %v505
  %v752 = vpack.c.b16 %v510, %v508
  %v753 = vpack.c.b16 %v511, %v509
  %v754 = vpack.c.b16 %v514, %v512
  %v755 = vpack.c.b16 %v515, %v513
  %v756 = vpack.c.b16 %v518, %v516
  %v757 = vpack.c.b16 %v519, %v517
  %v758 = vpack.c.b16 %v522, %v520
  %v759 = vpack.c.b16 %v523, %v521
  %v760 = vpack.c.b16 %v526, %v524
  %v761 = vpack.c.b16 %v527, %v525
  %v762 = vpack.c.b16 %v530, %v528
  %v763 = vpack.c.b16 %v531, %v529
  %v764 = vpack.c.b16 %v534, %v532
  %v765 = vpack.c.b16 %v535, %v533
  %v766 = vpack.c.b16 %v538, %v536
  %v767 = vpack.c.b16 %v539, %v537
  %v768 = vpack.c.b16 %v542, %v540
  %v769 = vpack.c.b16 %v543, %v541
  %v770 = vpack.c.b16 %v546, %v544
  %v771 = vpack.c.b16 %v547, %v545
  %v772 = vpack.c.b16 %v550, %v548
  %v773 = vpack.c.b16 %v551, %v549
  %v774 = vpack.c.b16 %v554, %v552
  %v775 = vpack.c.b16 %v555, %v553
  %v776 = vpack.c.b16 %v558, %v556
  %v777 = vpack.c.b16 %v559, %v557
  %v778 = vpack.c.b16 %v562, %v560
  %v779 = vpack.c.b16 %v563, %v561
  %v780 = vpack.c.b16 %v566, %v564
  %v781 = vpack.c.b16 %v567, %v565
  %v782 = vpack.c.b16 %v570, %v568
  %v783 = vpack.c.b16 %v571, %v569
  %v784 = vpack.c.b16 %v574, %v572
  %v785 = vpack.c.b16 %v575, %v573
  %v786 = vpack.c.b16 %v578, %v576
  %v787 = vpack.c.b16 %v579, %v577
  %v788 = vpack.c.b16 %v582, %v580
  %v789 = vpack.c.b16 %v583, %v581
  %v790 = vpack.c.b16 %v586, %v584
  %v791 = vpack.c.b16 %v587, %v585
  %v792 = vpack.c.b16 %v590, %v588
  %v793 = vpack.c.b16 %v591, %v589
  %v794 = vpack.c.b16 %v594, %v592
  %v795 = vpack.c.b16 %v595, %v593
  %v796 = vpack.c.b16 %v598, %v596
  %v797 = vpack.c.b16 %v599, %v597
  %v798 = vpack.c.b16 %v602, %v600
  %v799 = vpack.c.b16 %v603, %v601
  %v800 = vpack.c.b16 %v606, %v604
  %v801 = vpack.c.b16 %v607, %v605
  %v802 = vpack.c.b16 %v610, %v608
  %v803 = vpack.c.b16 %v611, %v609
  %v804 = vpack.c.b16 %v614, %v612
  %v805 = vpack.c.b16 %v615, %v613
  %v806 = vpack.c.b16 %v618, %v616
  %v807 = vpack.c.b16 %v619, %v617
  %v808 = vpack.c.b16 %v622, %v620
  %v809 = vpack.c.b16 %v623, %v621
  %v810 = vpack.c.b16 %v626, %v624
  %v811 = vpack.c.b16 %v627, %v625
  %v812 = vpack.c.b16 %v630, %v628
  %v813 = vpack.c.b16 %v631, %v629
  %v814 = vpack.c.b16 %v634, %v632
  %v815 = vpack.c.b16 %v635, %v633
  %v816 = vpack.c.b16 %v638, %v636
  %v817 = vpack.c.b16 %v639, %v637
  %v818 = vpack.c.b16 %v642, %v640
  %v819 = vpack.c.b16 %v643, %v641
  %v820 = vpack.c.b16 %v646, %v644
  %v821 = vpack.c.b16 %v647, %v645
  %v822 = vpack.c.b16 %v650, %v648
  %v823 = vpack.c.b16 %v651, %v649
  %v824 = vpack.c.b16 %v654, %v652
  %v825 = vpack.c.b16 %v655, %v653
  %v826 = vpack.c.b16 %v658, %v656
  %v827 = vpack.c.b16 %v659, %v657
  %v828 = vpack.c.b16 %v662, %v660
  %v829 = vpack.c.b16 %v663, %v661
  %v830 = vpack.c.b16 %v666, %v664
  %v831 = vpack.c.b16 %v667, %v665
  %v832 = vpack.c.b16 %v670, %v668
  %v833 = vpack.c.b16 %v671, %v669
  %v834 = vpack.c.b16 %v674, %v672
  %v835 = vpack.c.b16 %v675, %v673
  %v836 = vpack.c.b16 %v678, %v676
  %v837 = vpack.c.b16 %v679, %v677
  %v838 = vpack.c.b16 %v682, %v680
  %v839 = vpack.c.b16 %v683, %v681
  %v840 = vpack.c.b16 %v686, %v684
  %v841 = vpack.c.b16 %v687, %v685
  %v842 = vpack.c.b16 %v690, %v688
  %v843 = vpack.c.b16 %v691, %v689
  %v844 = vpack.c.b16 %v694, %v692
  %v845 = vpack.c.b16 %v695, %v693
  %v846 = vpack.c.b16 %v698, %v696
  %v847 = vpack.c.b16 %v699, %v697
  %v848 = vpack.c.b16 %v702, %v700
  %v849 = vpack.c.b16 %v703, %v701
  %v850 = vpack.c.b16 %v706, %v704
  %v851 = vpack.c.b16 %v707, %v705
  %996 = vmatpush.bf16.msra.mxu0 %v722
  %997 = vmatpush.bf16.msra.mxu0 %v720
  %998 = vmatpush.bf16.msra.mxu0 %v718
  %999 = vmatpush.bf16.msra.mxu0 %v716
  %1000 = vmatpush.bf16.msra.mxu0 %v714
  %1001 = vmatpush.bf16.msra.mxu0 %v712
  %1002 = vmatpush.bf16.msra.mxu0 %v710
  %1003 = vmatpush.bf16.msra.mxu0 %v708
  %1004 = vmatmul.bf16.gmra.mxu0 %v240
  %v1005 = vpop.f32.mrf.mxu0
  %v1006 = vadd.f32 %v180, %v1005
  %v1007 = vpop.f32.mrf.mxu0
  %v1008 = vadd.f32 %v180, %v1007
  %1009 = vmatmul.bf16.gmra.mxu0 %v249
  %v1010 = vpop.f32.mrf.mxu0
  %v1011 = vadd.f32 %v180, %v1010
  %v1012 = vpop.f32.mrf.mxu0
  %v1013 = vadd.f32 %v180, %v1012
  %1014 = vdwg.mxu0
  %1015 = vmatpush.bf16.msra.mxu0 %v738
  %1016 = vmatpush.bf16.msra.mxu0 %v736
  %1017 = vmatpush.bf16.msra.mxu0 %v734
  %1018 = vmatpush.bf16.msra.mxu0 %v732
  %1019 = vmatpush.bf16.msra.mxu0 %v730
  %1020 = vmatpush.bf16.msra.mxu0 %v728
  %1021 = vmatpush.bf16.msra.mxu0 %v726
  %1022 = vmatpush.bf16.msra.mxu0 %v724
  %1023 = vmatmul.bf16.gmra.mxu0 %v241
  %v1024 = vpop.f32.mrf.mxu0
  %v1025 = vadd.f32 %v1006, %v1024
  %v1026 = vpop.f32.mrf.mxu0
  %v1027 = vadd.f32 %v1008, %v1026
  %1028 = vmatmul.bf16.gmra.mxu0 %v250
  %v1029 = vpop.f32.mrf.mxu0
  %v1030 = vadd.f32 %v1011, %v1029
  %v1031 = vpop.f32.mrf.mxu0
  %v1032 = vadd.f32 %v1013, %v1031
  %1033 = vdwg.mxu0
  %1034 = vmatpush.bf16.msra.mxu0 %v754
  %1035 = vmatpush.bf16.msra.mxu0 %v752
  %1036 = vmatpush.bf16.msra.mxu0 %v750
  %1037 = vmatpush.bf16.msra.mxu0 %v748
  %1038 = vmatpush.bf16.msra.mxu0 %v746
  %1039 = vmatpush.bf16.msra.mxu0 %v744
  %1040 = vmatpush.bf16.msra.mxu0 %v742
  %1041 = vmatpush.bf16.msra.mxu0 %v740
  %1042 = vmatmul.bf16.gmra.mxu0 %v242
  %v1043 = vpop.f32.mrf.mxu0
  %v1044 = vadd.f32 %v1025, %v1043
  %v1045 = vpop.f32.mrf.mxu0
  %v1046 = vadd.f32 %v1027, %v1045
  %1047 = vmatmul.bf16.gmra.mxu0 %v251
  %v1048 = vpop.f32.mrf.mxu0
  %v1049 = vadd.f32 %v1030, %v1048
  %v1050 = vpop.f32.mrf.mxu0
  %v1051 = vadd.f32 %v1032, %v1050
  %1052 = vdwg.mxu0
  %1053 = vmatpush.bf16.msra.mxu0 %v770
  %1054 = vmatpush.bf16.msra.mxu0 %v768
  %1055 = vmatpush.bf16.msra.mxu0 %v766
  %1056 = vmatpush.bf16.msra.mxu0 %v764
  %1057 = vmatpush.bf16.msra.mxu0 %v762
  %1058 = vmatpush.bf16.msra.mxu0 %v760
  %1059 = vmatpush.bf16.msra.mxu0 %v758
  %1060 = vmatpush.bf16.msra.mxu0 %v756
  %1061 = vmatmul.bf16.gmra.mxu0 %v243
  %v1062 = vpop.f32.mrf.mxu0
  %v1063 = vadd.f32 %v1044, %v1062
  %v1064 = vpop.f32.mrf.mxu0
  %v1065 = vadd.f32 %v1046, %v1064
  %1066 = vmatmul.bf16.gmra.mxu0 %v252
  %v1067 = vpop.f32.mrf.mxu0
  %v1068 = vadd.f32 %v1049, %v1067
  %v1069 = vpop.f32.mrf.mxu0
  %v1070 = vadd.f32 %v1051, %v1069
  %1071 = vdwg.mxu0
  %1072 = vmatpush.bf16.msra.mxu0 %v786
  %1073 = vmatpush.bf16.msra.mxu0 %v784
  %1074 = vmatpush.bf16.msra.mxu0 %v782
  %1075 = vmatpush.bf16.msra.mxu0 %v780
  %1076 = vmatpush.bf16.msra.mxu0 %v778
  %1077 = vmatpush.bf16.msra.mxu0 %v776
  %1078 = vmatpush.bf16.msra.mxu0 %v774
  %1079 = vmatpush.bf16.msra.mxu0 %v772
  %1080 = vmatmul.bf16.gmra.mxu0 %v244
  %v1081 = vpop.f32.mrf.mxu0
  %v1082 = vadd.f32 %v1063, %v1081
  %v1083 = vpop.f32.mrf.mxu0
  %v1084 = vadd.f32 %v1065, %v1083
  %1085 = vmatmul.bf16.gmra.mxu0 %v253
  %v1086 = vpop.f32.mrf.mxu0
  %v1087 = vadd.f32 %v1068, %v1086
  %v1088 = vpop.f32.mrf.mxu0
  %v1089 = vadd.f32 %v1070, %v1088
  %1090 = vdwg.mxu0
  %1091 = vmatpush.bf16.msra.mxu0 %v802
  %1092 = vmatpush.bf16.msra.mxu0 %v800
  %1093 = vmatpush.bf16.msra.mxu0 %v798
  %1094 = vmatpush.bf16.msra.mxu0 %v796
  %1095 = vmatpush.bf16.msra.mxu0 %v794
  %1096 = vmatpush.bf16.msra.mxu0 %v792
  %1097 = vmatpush.bf16.msra.mxu0 %v790
  %1098 = vmatpush.bf16.msra.mxu0 %v788
  %1099 = vmatmul.bf16.gmra.mxu0 %v245
  %v1100 = vpop.f32.mrf.mxu0
  %v1101 = vadd.f32 %v1082, %v1100
  %v1102 = vpop.f32.mrf.mxu0
  %v1103 = vadd.f32 %v1084, %v1102
  %1104 = vmatmul.bf16.gmra.mxu0 %v254
  %v1105 = vpop.f32.mrf.mxu0
  %v1106 = vadd.f32 %v1087, %v1105
  %v1107 = vpop.f32.mrf.mxu0
  %v1108 = vadd.f32 %v1089, %v1107
  %1109 = vdwg.mxu0
  %1110 = vmatpush.bf16.msra.mxu0 %v818
  %1111 = vmatpush.bf16.msra.mxu0 %v816
  %1112 = vmatpush.bf16.msra.mxu0 %v814
  %1113 = vmatpush.bf16.msra.mxu0 %v812
  %1114 = vmatpush.bf16.msra.mxu0 %v810
  %1115 = vmatpush.bf16.msra.mxu0 %v808
  %1116 = vmatpush.bf16.msra.mxu0 %v806
  %1117 = vmatpush.bf16.msra.mxu0 %v804
  %1118 = vmatmul.bf16.gmra.mxu0 %v246
  %v1119 = vpop.f32.mrf.mxu0
  %v1120 = vadd.f32 %v1101, %v1119
  %v1121 = vpop.f32.mrf.mxu0
  %v1122 = vadd.f32 %v1103, %v1121
  %1123 = vmatmul.bf16.gmra.mxu0 %v255
  %v1124 = vpop.f32.mrf.mxu0
  %v1125 = vadd.f32 %v1106, %v1124
  %v1126 = vpop.f32.mrf.mxu0
  %v1127 = vadd.f32 %v1108, %v1126
  %1128 = vdwg.mxu0
  %1129 = vmatpush.bf16.msra.mxu0 %v834
  %1130 = vmatpush.bf16.msra.mxu0 %v832
  %1131 = vmatpush.bf16.msra.mxu0 %v830
  %1132 = vmatpush.bf16.msra.mxu0 %v828
  %1133 = vmatpush.bf16.msra.mxu0 %v826
  %1134 = vmatpush.bf16.msra.mxu0 %v824
  %1135 = vmatpush.bf16.msra.mxu0 %v822
  %1136 = vmatpush.bf16.msra.mxu0 %v820
  %1137 = vmatmul.bf16.gmra.mxu0 %v247
  %v1138 = vpop.f32.mrf.mxu0
  %v1139 = vadd.f32 %v1120, %v1138
  %v1140 = vpop.f32.mrf.mxu0
  %v1141 = vadd.f32 %v1122, %v1140
  %1142 = vmatmul.bf16.gmra.mxu0 %v256
  %v1143 = vpop.f32.mrf.mxu0
  %v1144 = vadd.f32 %v1125, %v1143
  %v1145 = vpop.f32.mrf.mxu0
  %v1146 = vadd.f32 %v1127, %v1145
  %1147 = vdwg.mxu0
  %1148 = vmatpush.bf16.msra.mxu0 %v850
  %1149 = vmatpush.bf16.msra.mxu0 %v848
  %1150 = vmatpush.bf16.msra.mxu0 %v846
  %1151 = vmatpush.bf16.msra.mxu0 %v844
  %1152 = vmatpush.bf16.msra.mxu0 %v842
  %1153 = vmatpush.bf16.msra.mxu0 %v840
  %1154 = vmatpush.bf16.msra.mxu0 %v838
  %1155 = vmatpush.bf16.msra.mxu0 %v836
  %1156 = vmatmul.bf16.gmra.mxu0 %v248
  %v1157 = vpop.f32.mrf.mxu0
  %v1158 = vadd.f32 %v1139, %v1157
  %v1159 = vpop.f32.mrf.mxu0
  %v1160 = vadd.f32 %v1141, %v1159
  %1161 = vmatmul.bf16.gmra.mxu0 %v257
  %v1162 = vpop.f32.mrf.mxu0
  %v1163 = vadd.f32 %v1144, %v1162
  %v1164 = vpop.f32.mrf.mxu0
  %v1165 = vadd.f32 %v1146, %v1164
  %1166 = vdwg.mxu0
  %1167 = vmatpush.bf16.msra.mxu0 %v723
  %1168 = vmatpush.bf16.msra.mxu0 %v721
  %1169 = vmatpush.bf16.msra.mxu0 %v719
  %1170 = vmatpush.bf16.msra.mxu0 %v717
  %1171 = vmatpush.bf16.msra.mxu0 %v715
  %1172 = vmatpush.bf16.msra.mxu0 %v713
  %1173 = vmatpush.bf16.msra.mxu0 %v711
  %1174 = vmatpush.bf16.msra.mxu0 %v709
  %1175 = vmatmul.bf16.gmra.mxu0 %v240
  %v1176 = vpop.f32.mrf.mxu0
  %v1177 = vadd.f32 %v181, %v1176
  %v1178 = vpop.f32.mrf.mxu0
  %v1179 = vadd.f32 %v181, %v1178
  %1180 = vmatmul.bf16.gmra.mxu0 %v249
  %v1181 = vpop.f32.mrf.mxu0
  %v1182 = vadd.f32 %v181, %v1181
  %v1183 = vpop.f32.mrf.mxu0
  %v1184 = vadd.f32 %v181, %v1183
  %1185 = vdwg.mxu0
  %1186 = vmatpush.bf16.msra.mxu0 %v739
  %1187 = vmatpush.bf16.msra.mxu0 %v737
  %1188 = vmatpush.bf16.msra.mxu0 %v735
  %1189 = vmatpush.bf16.msra.mxu0 %v733
  %1190 = vmatpush.bf16.msra.mxu0 %v731
  %1191 = vmatpush.bf16.msra.mxu0 %v729
  %1192 = vmatpush.bf16.msra.mxu0 %v727
  %1193 = vmatpush.bf16.msra.mxu0 %v725
  %1194 = vmatmul.bf16.gmra.mxu0 %v241
  %v1195 = vpop.f32.mrf.mxu0
  %v1196 = vadd.f32 %v1177, %v1195
  %v1197 = vpop.f32.mrf.mxu0
  %v1198 = vadd.f32 %v1179, %v1197
  %1199 = vmatmul.bf16.gmra.mxu0 %v250
  %v1200 = vpop.f32.mrf.mxu0
  %v1201 = vadd.f32 %v1182, %v1200
  %v1202 = vpop.f32.mrf.mxu0
  %v1203 = vadd.f32 %v1184, %v1202
  %1204 = vdwg.mxu0
  %1205 = vmatpush.bf16.msra.mxu0 %v755
  %1206 = vmatpush.bf16.msra.mxu0 %v753
  %1207 = vmatpush.bf16.msra.mxu0 %v751
  %1208 = vmatpush.bf16.msra.mxu0 %v749
  %1209 = vmatpush.bf16.msra.mxu0 %v747
  %1210 = vmatpush.bf16.msra.mxu0 %v745
  %1211 = vmatpush.bf16.msra.mxu0 %v743
  %1212 = vmatpush.bf16.msra.mxu0 %v741
  %1213 = vmatmul.bf16.gmra.mxu0 %v242
  %v1214 = vpop.f32.mrf.mxu0
  %v1215 = vadd.f32 %v1196, %v1214
  %v1216 = vpop.f32.mrf.mxu0
  %v1217 = vadd.f32 %v1198, %v1216
  %1218 = vmatmul.bf16.gmra.mxu0 %v251
  %v1219 = vpop.f32.mrf.mxu0
  %v1220 = vadd.f32 %v1201, %v1219
  %v1221 = vpop.f32.mrf.mxu0
  %v1222 = vadd.f32 %v1203, %v1221
  %1223 = vdwg.mxu0
  %1224 = vmatpush.bf16.msra.mxu0 %v771
  %1225 = vmatpush.bf16.msra.mxu0 %v769
  %1226 = vmatpush.bf16.msra.mxu0 %v767
  %1227 = vmatpush.bf16.msra.mxu0 %v765
  %1228 = vmatpush.bf16.msra.mxu0 %v763
  %1229 = vmatpush.bf16.msra.mxu0 %v761
  %1230 = vmatpush.bf16.msra.mxu0 %v759
  %1231 = vmatpush.bf16.msra.mxu0 %v757
  %1232 = vmatmul.bf16.gmra.mxu0 %v243
  %v1233 = vpop.f32.mrf.mxu0
  %v1234 = vadd.f32 %v1215, %v1233
  %v1235 = vpop.f32.mrf.mxu0
  %v1236 = vadd.f32 %v1217, %v1235
  %1237 = vmatmul.bf16.gmra.mxu0 %v252
  %v1238 = vpop.f32.mrf.mxu0
  %v1239 = vadd.f32 %v1220, %v1238
  %v1240 = vpop.f32.mrf.mxu0
  %v1241 = vadd.f32 %v1222, %v1240
  %1242 = vdwg.mxu0
  %1243 = vmatpush.bf16.msra.mxu0 %v787
  %1244 = vmatpush.bf16.msra.mxu0 %v785
  %1245 = vmatpush.bf16.msra.mxu0 %v783
  %1246 = vmatpush.bf16.msra.mxu0 %v781
  %1247 = vmatpush.bf16.msra.mxu0 %v779
  %1248 = vmatpush.bf16.msra.mxu0 %v777
  %1249 = vmatpush.bf16.msra.mxu0 %v775
  %1250 = vmatpush.bf16.msra.mxu0 %v773
  %1251 = vmatmul.bf16.gmra.mxu0 %v244
  %v1252 = vpop.f32.mrf.mxu0
  %v1253 = vadd.f32 %v1234, %v1252
  %v1254 = vpop.f32.mrf.mxu0
  %v1255 = vadd.f32 %v1236, %v1254
  %1256 = vmatmul.bf16.gmra.mxu0 %v253
  %v1257 = vpop.f32.mrf.mxu0
  %v1258 = vadd.f32 %v1239, %v1257
  %v1259 = vpop.f32.mrf.mxu0
  %v1260 = vadd.f32 %v1241, %v1259
  %1261 = vdwg.mxu0
  %1262 = vmatpush.bf16.msra.mxu0 %v803
  %1263 = vmatpush.bf16.msra.mxu0 %v801
  %1264 = vmatpush.bf16.msra.mxu0 %v799
  %1265 = vmatpush.bf16.msra.mxu0 %v797
  %1266 = vmatpush.bf16.msra.mxu0 %v795
  %1267 = vmatpush.bf16.msra.mxu0 %v793
  %1268 = vmatpush.bf16.msra.mxu0 %v791
  %1269 = vmatpush.bf16.msra.mxu0 %v789
  %1270 = vmatmul.bf16.gmra.mxu0 %v245
  %v1271 = vpop.f32.mrf.mxu0
  %v1272 = vadd.f32 %v1253, %v1271
  %v1273 = vpop.f32.mrf.mxu0
  %v1274 = vadd.f32 %v1255, %v1273
  %1275 = vmatmul.bf16.gmra.mxu0 %v254
  %v1276 = vpop.f32.mrf.mxu0
  %v1277 = vadd.f32 %v1258, %v1276
  %v1278 = vpop.f32.mrf.mxu0
  %v1279 = vadd.f32 %v1260, %v1278
  %1280 = vdwg.mxu0
  %1281 = vmatpush.bf16.msra.mxu0 %v819
  %1282 = vmatpush.bf16.msra.mxu0 %v817
  %1283 = vmatpush.bf16.msra.mxu0 %v815
  %1284 = vmatpush.bf16.msra.mxu0 %v813
  %1285 = vmatpush.bf16.msra.mxu0 %v811
  %1286 = vmatpush.bf16.msra.mxu0 %v809
  %1287 = vmatpush.bf16.msra.mxu0 %v807
  %1288 = vmatpush.bf16.msra.mxu0 %v805
  %1289 = vmatmul.bf16.gmra.mxu0 %v246
  %v1290 = vpop.f32.mrf.mxu0
  %v1291 = vadd.f32 %v1272, %v1290
  %v1292 = vpop.f32.mrf.mxu0
  %v1293 = vadd.f32 %v1274, %v1292
  %1294 = vmatmul.bf16.gmra.mxu0 %v255
  %v1295 = vpop.f32.mrf.mxu0
  %v1296 = vadd.f32 %v1277, %v1295
  %v1297 = vpop.f32.mrf.mxu0
  %v1298 = vadd.f32 %v1279, %v1297
  %1299 = vdwg.mxu0
  %1300 = vmatpush.bf16.msra.mxu0 %v835
  %1301 = vmatpush.bf16.msra.mxu0 %v833
  %1302 = vmatpush.bf16.msra.mxu0 %v831
  %1303 = vmatpush.bf16.msra.mxu0 %v829
  %1304 = vmatpush.bf16.msra.mxu0 %v827
  %1305 = vmatpush.bf16.msra.mxu0 %v825
  %1306 = vmatpush.bf16.msra.mxu0 %v823
  %1307 = vmatpush.bf16.msra.mxu0 %v821
  %1308 = vmatmul.bf16.gmra.mxu0 %v247
  %v1309 = vpop.f32.mrf.mxu0
  %v1310 = vadd.f32 %v1291, %v1309
  %v1311 = vpop.f32.mrf.mxu0
  %v1312 = vadd.f32 %v1293, %v1311
  %1313 = vmatmul.bf16.gmra.mxu0 %v256
  %v1314 = vpop.f32.mrf.mxu0
  %v1315 = vadd.f32 %v1296, %v1314
  %v1316 = vpop.f32.mrf.mxu0
  %v1317 = vadd.f32 %v1298, %v1316
  %1318 = vdwg.mxu0
  %1319 = vmatpush.bf16.msra.mxu0 %v851
  %1320 = vmatpush.bf16.msra.mxu0 %v849
  %1321 = vmatpush.bf16.msra.mxu0 %v847
  %1322 = vmatpush.bf16.msra.mxu0 %v845
  %1323 = vmatpush.bf16.msra.mxu0 %v843
  %1324 = vmatpush.bf16.msra.mxu0 %v841
  %1325 = vmatpush.bf16.msra.mxu0 %v839
  %1326 = vmatpush.bf16.msra.mxu0 %v837
  %1327 = vmatmul.bf16.gmra.mxu0 %v248
  %v1328 = vpop.f32.mrf.mxu0
  %v1329 = vadd.f32 %v1310, %v1328
  %v1330 = vpop.f32.mrf.mxu0
  %v1331 = vadd.f32 %v1312, %v1330
  %1332 = vmatmul.bf16.gmra.mxu0 %v257
  %v1333 = vpop.f32.mrf.mxu0
  %v1334 = vadd.f32 %v1315, %v1333
  %v1335 = vpop.f32.mrf.mxu0
  %v1336 = vadd.f32 %v1317, %v1335
  %1337 = vdwg.mxu0
  %v1338 = vmax.f32 %v1158, 0.0
  %v1339 = vmax.f32 %v1329, 0.0
  %v1340 = vmax.f32 %v1160, 0.0
  %v1341 = vmax.f32 %v1331, 0.0
  %v1342 = vmax.f32 %v1163, 0.0
  %v1343 = vmax.f32 %v1334, 0.0
  %v1344 = vmax.f32 %v1165, 0.0
  %v1345 = vmax.f32 %v1336, 0.0
  %v1346 = vpack.c.bf16 %v1339, %v1338
  %v1347 = vpack.c.bf16 %v1341, %v1340
  %v1348 = vpack.c.bf16 %v1343, %v1342
  %v1349 = vpack.c.bf16 %v1345, %v1344
  %1350 = vst [vmem:[%s3] sm:$0xff] %v1346
  %1351 = vst [vmem:[%s3 + $0x8] sm:$0xff] %v1347
  %1352 = vst [vmem:[%s3 + $0x10] sm:$0xff] %v1348
  %1353 = vst [vmem:[%s3 + $0x18] sm:$0xff] %v1349
  // Predicated region
  $region14: #{_lambda_.8} parent=0 // pred_check
    _
  $region15: #{_lambda_.8} parent=0 // pred_check_branch
    %1355 = sbr.rel (0) target = $region17
  $region16: #{_lambda_.8} parent=0 // pred_region
    _
  $region17: #{_lambda_.8} parent=0 // pred_fallthru
    _
  // Predicated region
  $region18: #{_lambda_.8} parent=0 // pred_check
    _
  $region19: #{_lambda_.8} parent=0 // pred_check_branch
    %1357 = sbr.rel (0) target = $region21
  $region20: #{_lambda_.8} parent=0 // pred_region
    _
  $region21: #{_lambda_.8} parent=0 // pred_fallthru
    _

// kernel: _lambda_.9
$region0: #{_lambda_.9}
  #allocation0 [shape = 'u32[]', space=smem, size = 0x4, offset = 0x4, fixed_abs, tag = 'smem constant byte address 0x4 - core index']
  #allocation1 [shape = 'u32[72,128]{1,0:T(1,128)}', space=vmem, size = 0x9000, scoped, tag = 'internal scratch']
  %s0 = inlined_call_operand.vmem [shape: bf16[16,4096], index: 0, kind: input, shape index: {}]
  %s1 = inlined_call_operand.vmem [shape: f32[16,1], index: 1, kind: input, shape index: {}]
  %s2 = inlined_call_operand.vmem [shape: f32[1,32], index: 2, kind: input, shape index: {}]
  %s3 = inlined_call_operand.vmem [shape: f32[1,32], index: 3, kind: input, shape index: {}]
  %s4 = inlined_call_operand.vmem [shape: bf16[4096,512], index: 4, kind: input, shape index: {}]
  %s5 = inlined_call_operand.vmem [shape: bf16[32,512], index: 5, kind: input, shape index: {}]
  %s6 = inlined_call_operand.vmem [shape: f32[1,512], index: 6, kind: input, shape index: {}]
  %s7 = inlined_call_operand.vmem [shape: bf16[512,128], index: 7, kind: input, shape index: {}]
  %s8 = inlined_call_operand.vmem [shape: f32[1,128], index: 8, kind: input, shape index: {}]
  %s9 = inlined_call_operand.vmem [shape: f32[16,128], index: 9, kind: output, shape index: {}]
  %s10 = sld [smem:[#allocation0]]
  $region46: #{_lambda_.9} parent=0
    _
  %s12 = ssub.s32 1, %s10
  %s13 = scalar_select 0, %s12, %s10
  // Predicated region
  $region2: #{_lambda_.9} parent=0 // pred_check
    _
  $region3: #{_lambda_.9} parent=0 // pred_check_branch
    %15 = sbr.rel (0) target = $region5
  $region4: #{_lambda_.9} parent=0 // pred_region
    _
  $region5: #{_lambda_.9} parent=0 // pred_fallthru
    _
  // Predicated region
  $region6: #{_lambda_.9} parent=0 // pred_check
    _
  $region7: #{_lambda_.9} parent=0 // pred_check_branch
    %17 = sbr.rel (0) target = $region9
  $region8: #{_lambda_.9} parent=0 // pred_region
    _
  $region9: #{_lambda_.9} parent=0 // pred_fallthru
    _
  // Predicated region
  $region10: #{_lambda_.9} parent=0 // pred_check
    _
  $region11: #{_lambda_.9} parent=0 // pred_check_branch
    %19 = sbr.rel (0) target = $region13
  $region12: #{_lambda_.9} parent=0 // pred_region
    _
  $region13: #{_lambda_.9} parent=0 // pred_fallthru
    _
  // Predicated region
  $region14: #{_lambda_.9} parent=0 // pred_check
    _
  $region15: #{_lambda_.9} parent=0 // pred_check_branch
    %21 = sbr.rel (0) target = $region17
  $region16: #{_lambda_.9} parent=0 // pred_region
    _
  $region17: #{_lambda_.9} parent=0 // pred_fallthru
    _
  // Predicated region
  $region18: #{_lambda_.9} parent=0 // pred_check
    _
  $region19: #{_lambda_.9} parent=0 // pred_check_branch
    %23 = sbr.rel (0) target = $region21
  $region20: #{_lambda_.9} parent=0 // pred_region
    _
  $region21: #{_lambda_.9} parent=0 // pred_fallthru
    _
  // Predicated region
  $region22: #{_lambda_.9} parent=0 // pred_check
    _
  $region23: #{_lambda_.9} parent=0 // pred_check_branch
    %25 = sbr.rel (0) target = $region25
  $region24: #{_lambda_.9} parent=0 // pred_region
    _
  $region25: #{_lambda_.9} parent=0 // pred_fallthru
    _
  // Predicated region
  $region26: #{_lambda_.9} parent=0 // pred_check
    _
  $region27: #{_lambda_.9} parent=0 // pred_check_branch
    %27 = sbr.rel (0) target = $region29
  $region28: #{_lambda_.9} parent=0 // pred_region
    _
  $region29: #{_lambda_.9} parent=0 // pred_fallthru
    _
  // Predicated region
  $region30: #{_lambda_.9} parent=0 // pred_check
    _
  $region31: #{_lambda_.9} parent=0 // pred_check_branch
    %29 = sbr.rel (0) target = $region33
  $region32: #{_lambda_.9} parent=0 // pred_region
    _
  $region33: #{_lambda_.9} parent=0 // pred_fallthru
    _
  // Predicated region
  $region34: #{_lambda_.9} parent=0 // pred_check
    _
  $region35: #{_lambda_.9} parent=0 // pred_check_branch
    %31 = sbr.rel (0) target = $region37
  $region36: #{_lambda_.9} parent=0 // pred_region
    _
  $region37: #{_lambda_.9} parent=0 // pred_fallthru
    _
  %v33 = vld [vmem:[%s1] sm:$0xff]
  %v34 = vld [vmem:[%s1 + $0x8] sm:$0xff]
  %v35 = vld [vmem:[%s2] sm:$0x1]
  %37 = vset.pattern.permute.xlu0 0
  %38 = vperm.xlu0 %37, %v33
  %v39 = vpop.permute.xlu0 %38
  %42 = vset.pattern.permute.xlu0 0
  %43 = vperm.xlu0 %42, %v34
  %v44 = vpop.permute.xlu0 %43
  %v47 = vperm.slane %v35, 0
  %v49 = vmul.f32 %v39, %v47
  %v50 = vmul.f32 %v44, %v47
  %v51 = vld [vmem:[%s3] sm:$0x1]
  %v53 = vperm.slane %v51, 0
  %v55 = vadd.f32 %v49, %v53
  %v56 = vadd.f32 %v50, %v53
  %v57 = vmax.f32 %v55, 0.0
  %v58 = vmax.f32 %v56, 0.0
  %v59 = vld [vmem:[%s0] sm:$0xff]
  %v60 = vld [vmem:[%s0 + $0x8] sm:$0xff]
  %v61 = vld [vmem:[%s0 + $0x10] sm:$0xff]
  %v62 = vld [vmem:[%s0 + $0x18] sm:$0xff]
  %v63 = vld [vmem:[%s0 + $0x20] sm:$0xff]
  %v64 = vld [vmem:[%s0 + $0x28] sm:$0xff]
  %v65 = vld [vmem:[%s0 + $0x30] sm:$0xff]
  %v66 = vld [vmem:[%s0 + $0x38] sm:$0xff]
  %v67 = vld [vmem:[%s0 + $0x40] sm:$0xff]
  %v68 = vld [vmem:[%s0 + $0x48] sm:$0xff]
  %v69 = vld [vmem:[%s0 + $0x50] sm:$0xff]
  %v70 = vld [vmem:[%s0 + $0x58] sm:$0xff]
  %v71 = vld [vmem:[%s0 + $0x60] sm:$0xff]
  %v72 = vld [vmem:[%s0 + $0x68] sm:$0xff]
  %v73 = vld [vmem:[%s0 + $0x70] sm:$0xff]
  %v74 = vld [vmem:[%s0 + $0x78] sm:$0xff]
  %v75 = vld [vmem:[%s0 + $0x80] sm:$0xff]
  %v76 = vld [vmem:[%s0 + $0x88] sm:$0xff]
  %v77 = vld [vmem:[%s0 + $0x90] sm:$0xff]
  %v78 = vld [vmem:[%s0 + $0x98] sm:$0xff]
  %v79 = vld [vmem:[%s0 + $0xa0] sm:$0xff]
  %v80 = vld [vmem:[%s0 + $0xa8] sm:$0xff]
  %v81 = vld [vmem:[%s0 + $0xb0] sm:$0xff]
  %v82 = vld [vmem:[%s0 + $0xb8] sm:$0xff]
  %v83 = vld [vmem:[%s0 + $0xc0] sm:$0xff]
  %v84 = vld [vmem:[%s0 + $0xc8] sm:$0xff]
  %v85 = vld [vmem:[%s0 + $0xd0] sm:$0xff]
  %v86 = vld [vmem:[%s0 + $0xd8] sm:$0xff]
  %v87 = vld [vmem:[%s0 + $0xe0] sm:$0xff]
  %v88 = vld [vmem:[%s0 + $0xe8] sm:$0xff]
  %v89 = vld [vmem:[%s0 + $0xf0] sm:$0xff]
  %v90 = vld [vmem:[%s0 + $0xf8] sm:$0xff]
  %v91 = vld [vmem:[%s4] sm:$0xff]
  %v92 = vld [vmem:[%s4 + $0x8] sm:$0xff]
  %v93 = vld [vmem:[%s4 + $0x10] sm:$0xff]
  %v94 = vld [vmem:[%s4 + $0x18] sm:$0xff]
  %v95 = vld [vmem:[%s4 + $0x20] sm:$0xff]
  %v96 = vld [vmem:[%s4 + $0x28] sm:$0xff]
  %v97 = vld [vmem:[%s4 + $0x30] sm:$0xff]
  %v98 = vld [vmem:[%s4 + $0x38] sm:$0xff]
  %v99 = vld [vmem:[%s4 + $0x40] sm:$0xff]
  %v100 = vld [vmem:[%s4 + $0x48] sm:$0xff]
  %v101 = vld [vmem:[%s4 + $0x50] sm:$0xff]
  %v102 = vld [vmem:[%s4 + $0x58] sm:$0xff]
  %v103 = vld [vmem:[%s4 + $0x60] sm:$0xff]
  %v104 = vld [vmem:[%s4 + $0x68] sm:$0xff]
  %v105 = vld [vmem:[%s4 + $0x70] sm:$0xff]
  %v106 = vld [vmem:[%s4 + $0x78] sm:$0xff]
  %v107 = vld [vmem:[%s4 + $0x80] sm:$0xff]
  %v108 = vld [vmem:[%s4 + $0x88] sm:$0xff]
  %v109 = vld [vmem:[%s4 + $0x90] sm:$0xff]
  %v110 = vld [vmem:[%s4 + $0x98] sm:$0xff]
  %v111 = vld [vmem:[%s4 + $0xa0] sm:$0xff]
  %v112 = vld [vmem:[%s4 + $0xa8] sm:$0xff]
  %v113 = vld [vmem:[%s4 + $0xb0] sm:$0xff]
  %v114 = vld [vmem:[%s4 + $0xb8] sm:$0xff]
  %v115 = vld [vmem:[%s4 + $0xc0] sm:$0xff]
  %v116 = vld [vmem:[%s4 + $0xc8] sm:$0xff]
  %v117 = vld [vmem:[%s4 + $0xd0] sm:$0xff]
  %v118 = vld [vmem:[%s4 + $0xd8] sm:$0xff]
  %v119 = vld [vmem:[%s4 + $0xe0] sm:$0xff]
  %v120 = vld [vmem:[%s4 + $0xe8] sm:$0xff]
  %v121 = vld [vmem:[%s4 + $0xf0] sm:$0xff]
  %v122 = vld [vmem:[%s4 + $0xf8] sm:$0xff]
  %v123 = vld [vmem:[%s4 + $0x100] sm:$0xff]
  %v124 = vld [vmem:[%s4 + $0x108] sm:$0xff]
  %v125 = vld [vmem:[%s4 + $0x110] sm:$0xff]
  %v126 = vld [vmem:[%s4 + $0x118] sm:$0xff]
  %v127 = vld [vmem:[%s4 + $0x120] sm:$0xff]
  %v128 = vld [vmem:[%s4 + $0x128] sm:$0xff]
  %v129 = vld [vmem:[%s4 + $0x130] sm:$0xff]
  %v130 = vld [vmem:[%s4 + $0x138] sm:$0xff]
  %v131 = vld [vmem:[%s4 + $0x140] sm:$0xff]
  %v132 = vld [vmem:[%s4 + $0x148] sm:$0xff]
  %v133 = vld [vmem:[%s4 + $0x150] sm:$0xff]
  %v134 = vld [vmem:[%s4 + $0x158] sm:$0xff]
  %v135 = vld [vmem:[%s4 + $0x160] sm:$0xff]
  %v136 = vld [vmem:[%s4 + $0x168] sm:$0xff]
  %v137 = vld [vmem:[%s4 + $0x170] sm:$0xff]
  %v138 = vld [vmem:[%s4 + $0x178] sm:$0xff]
  %v139 = vld [vmem:[%s4 + $0x180] sm:$0xff]
  %v140 = vld [vmem:[%s4 + $0x188] sm:$0xff]
  %v141 = vld [vmem:[%s4 + $0x190] sm:$0xff]
  %v142 = vld [vmem:[%s4 + $0x198] sm:$0xff]
  %v143 = vld [vmem:[%s4 + $0x1a0] sm:$0xff]
  %v144 = vld [vmem:[%s4 + $0x1a8] sm:$0xff]
  %v145 = vld [vmem:[%s4 + $0x1b0] sm:$0xff]
  %v146 = vld [vmem:[%s4 + $0x1b8] sm:$0xff]
  %v147 = vld [vmem:[%s4 + $0x1c0] sm:$0xff]
  %v148 = vld [vmem:[%s4 + $0x1c8] sm:$0xff]
  %v149 = vld [vmem:[%s4 + $0x1d0] sm:$0xff]
  %v150 = vld [vmem:[%s4 + $0x1d8] sm:$0xff]
  %v151 = vld [vmem:[%s4 + $0x1e0] sm:$0xff]
  %v152 = vld [vmem:[%s4 + $0x1e8] sm:$0xff]
  %v153 = vld [vmem:[%s4 + $0x1f0] sm:$0xff]
  %v154 = vld [vmem:[%s4 + $0x1f8] sm:$0xff]
  %v155 = vld [vmem:[%s4 + $0x200] sm:$0xff]
  %v156 = vld [vmem:[%s4 + $0x208] sm:$0xff]
  %v157 = vld [vmem:[%s4 + $0x210] sm:$0xff]
  %v158 = vld [vmem:[%s4 + $0x218] sm:$0xff]
  %v159 = vld [vmem:[%s4 + $0x220] sm:$0xff]
  %v160 = vld [vmem:[%s4 + $0x228] sm:$0xff]
  %v161 = vld [vmem:[%s4 + $0x230] sm:$0xff]
  %v162 = vld [vmem:[%s4 + $0x238] sm:$0xff]
  %v163 = vld [vmem:[%s4 + $0x240] sm:$0xff]
  %v164 = vld [vmem:[%s4 + $0x248] sm:$0xff]
  %v165 = vld [vmem:[%s4 + $0x250] sm:$0xff]
  %v166 = vld [vmem:[%s4 + $0x258] sm:$0xff]
  %v167 = vld [vmem:[%s4 + $0x260] sm:$0xff]
  %v168 = vld [vmem:[%s4 + $0x268] sm:$0xff]
  %v169 = vld [vmem:[%s4 + $0x270] sm:$0xff]
  %v170 = vld [vmem:[%s4 + $0x278] sm:$0xff]
  %v171 = vld [vmem:[%s4 + $0x280] sm:$0xff]
  %v172 = vld [vmem:[%s4 + $0x288] sm:$0xff]
  %v173 = vld [vmem:[%s4 + $0x290] sm:$0xff]
  %v174 = vld [vmem:[%s4 + $0x298] sm:$0xff]
  %v175 = vld [vmem:[%s4 + $0x2a0] sm:$0xff]
  %v176 = vld [vmem:[%s4 + $0x2a8] sm:$0xff]
  %v177 = vld [vmem:[%s4 + $0x2b0] sm:$0xff]
  %v178 = vld [vmem:[%s4 + $0x2b8] sm:$0xff]
  %v179 = vld [vmem:[%s4 + $0x2c0] sm:$0xff]
  %v180 = vld [vmem:[%s4 + $0x2c8] sm:$0xff]
  %v181 = vld [vmem:[%s4 + $0x2d0] sm:$0xff]
  %v182 = vld [vmem:[%s4 + $0x2d8] sm:$0xff]
  %v183 = vld [vmem:[%s4 + $0x2e0] sm:$0xff]
  %v184 = vld [vmem:[%s4 + $0x2e8] sm:$0xff]
  %v185 = vld [vmem:[%s4 + $0x2f0] sm:$0xff]
  %v186 = vld [vmem:[%s4 + $0x2f8] sm:$0xff]
  %v187 = vld [vmem:[%s4 + $0x300] sm:$0xff]
  %v188 = vld [vmem:[%s4 + $0x308] sm:$0xff]
  %v189 = vld [vmem:[%s4 + $0x310] sm:$0xff]
  %v190 = vld [vmem:[%s4 + $0x318] sm:$0xff]
  %v191 = vld [vmem:[%s4 + $0x320] sm:$0xff]
  %v192 = vld [vmem:[%s4 + $0x328] sm:$0xff]
  %v193 = vld [vmem:[%s4 + $0x330] sm:$0xff]
  %v194 = vld [vmem:[%s4 + $0x338] sm:$0xff]
  %v195 = vld [vmem:[%s4 + $0x340] sm:$0xff]
  %v196 = vld [vmem:[%s4 + $0x348] sm:$0xff]
  %v197 = vld [vmem:[%s4 + $0x350] sm:$0xff]
  %v198 = vld [vmem:[%s4 + $0x358] sm:$0xff]
  %v199 = vld [vmem:[%s4 + $0x360] sm:$0xff]
  %v200 = vld [vmem:[%s4 + $0x368] sm:$0xff]
  %v201 = vld [vmem:[%s4 + $0x370] sm:$0xff]
  %v202 = vld [vmem:[%s4 + $0x378] sm:$0xff]
  %v203 = vld [vmem:[%s4 + $0x380] sm:$0xff]
  %v204 = vld [vmem:[%s4 + $0x388] sm:$0xff]
  %v205 = vld [vmem:[%s4 + $0x390] sm:$0xff]
  %v206 = vld [vmem:[%s4 + $0x398] sm:$0xff]
  %v207 = vld [vmem:[%s4 + $0x3a0] sm:$0xff]
  %v208 = vld [vmem:[%s4 + $0x3a8] sm:$0xff]
  %v209 = vld [vmem:[%s4 + $0x3b0] sm:$0xff]
  %v210 = vld [vmem:[%s4 + $0x3b8] sm:$0xff]
  %v211 = vld [vmem:[%s4 + $0x3c0] sm:$0xff]
  %v212 = vld [vmem:[%s4 + $0x3c8] sm:$0xff]
  %v213 = vld [vmem:[%s4 + $0x3d0] sm:$0xff]
  %v214 = vld [vmem:[%s4 + $0x3d8] sm:$0xff]
  %v215 = vld [vmem:[%s4 + $0x3e0] sm:$0xff]
  %v216 = vld [vmem:[%s4 + $0x3e8] sm:$0xff]
  %v217 = vld [vmem:[%s4 + $0x3f0] sm:$0xff]
  %v218 = vld [vmem:[%s4 + $0x3f8] sm:$0xff]
  %v219 = vld [vmem:[%s4 + $0x400] sm:$0xff]
  %v220 = vld [vmem:[%s4 + $0x408] sm:$0xff]
  %v221 = vld [vmem:[%s4 + $0x410] sm:$0xff]
  %v222 = vld [vmem:[%s4 + $0x418] sm:$0xff]
  %v223 = vld [vmem:[%s4 + $0x420] sm:$0xff]
  %v224 = vld [vmem:[%s4 + $0x428] sm:$0xff]
  %v225 = vld [vmem:[%s4 + $0x430] sm:$0xff]
  %v226 = vld [vmem:[%s4 + $0x438] sm:$0xff]
  %v227 = vld [vmem:[%s4 + $0x440] sm:$0xff]
  %v228 = vld [vmem:[%s4 + $0x448] sm:$0xff]
  %v229 = vld [vmem:[%s4 + $0x450] sm:$0xff]
  %v230 = vld [vmem:[%s4 + $0x458] sm:$0xff]
  %v231 = vld [vmem:[%s4 + $0x460] sm:$0xff]
  %v232 = vld [vmem:[%s4 + $0x468] sm:$0xff]
  %v233 = vld [vmem:[%s4 + $0x470] sm:$0xff]
  %v234 = vld [vmem:[%s4 + $0x478] sm:$0xff]
  %v235 = vld [vmem:[%s4 + $0x480] sm:$0xff]
  %v236 = vld [vmem:[%s4 + $0x488] sm:$0xff]
  %v237 = vld [vmem:[%s4 + $0x490] sm:$0xff]
  %v238 = vld [vmem:[%s4 + $0x498] sm:$0xff]
  %v239 = vld [vmem:[%s4 + $0x4a0] sm:$0xff]
  %v240 = vld [vmem:[%s4 + $0x4a8] sm:$0xff]
  %v241 = vld [vmem:[%s4 + $0x4b0] sm:$0xff]
  %v242 = vld [vmem:[%s4 + $0x4b8] sm:$0xff]
  %v243 = vld [vmem:[%s4 + $0x4c0] sm:$0xff]
  %v244 = vld [vmem:[%s4 + $0x4c8] sm:$0xff]
  %v245 = vld [vmem:[%s4 + $0x4d0] sm:$0xff]
  %v246 = vld [vmem:[%s4 + $0x4d8] sm:$0xff]
  %v247 = vld [vmem:[%s4 + $0x4e0] sm:$0xff]
  %v248 = vld [vmem:[%s4 + $0x4e8] sm:$0xff]
  %v249 = vld [vmem:[%s4 + $0x4f0] sm:$0xff]
  %v250 = vld [vmem:[%s4 + $0x4f8] sm:$0xff]
  %v251 = vld [vmem:[%s4 + $0x500] sm:$0xff]
  %v252 = vld [vmem:[%s4 + $0x508] sm:$0xff]
  %v253 = vld [vmem:[%s4 + $0x510] sm:$0xff]
  %v254 = vld [vmem:[%s4 + $0x518] sm:$0xff]
  %v255 = vld [vmem:[%s4 + $0x520] sm:$0xff]
  %v256 = vld [vmem:[%s4 + $0x528] sm:$0xff]
  %v257 = vld [vmem:[%s4 + $0x530] sm:$0xff]
  %v258 = vld [vmem:[%s4 + $0x538] sm:$0xff]
  %v259 = vld [vmem:[%s4 + $0x540] sm:$0xff]
  %v260 = vld [vmem:[%s4 + $0x548] sm:$0xff]
  %v261 = vld [vmem:[%s4 + $0x550] sm:$0xff]
  %v262 = vld [vmem:[%s4 + $0x558] sm:$0xff]
  %v263 = vld [vmem:[%s4 + $0x560] sm:$0xff]
  %v264 = vld [vmem:[%s4 + $0x568] sm:$0xff]
  %v265 = vld [vmem:[%s4 + $0x570] sm:$0xff]
  %v266 = vld [vmem:[%s4 + $0x578] sm:$0xff]
  %v267 = vld [vmem:[%s4 + $0x580] sm:$0xff]
  %v268 = vld [vmem:[%s4 + $0x588] sm:$0xff]
  %v269 = vld [vmem:[%s4 + $0x590] sm:$0xff]
  %v270 = vld [vmem:[%s4 + $0x598] sm:$0xff]
  %v271 = vld [vmem:[%s4 + $0x5a0] sm:$0xff]
  %v272 = vld [vmem:[%s4 + $0x5a8] sm:$0xff]
  %v273 = vld [vmem:[%s4 + $0x5b0] sm:$0xff]
  %v274 = vld [vmem:[%s4 + $0x5b8] sm:$0xff]
  %v275 = vld [vmem:[%s4 + $0x5c0] sm:$0xff]
  %v276 = vld [vmem:[%s4 + $0x5c8] sm:$0xff]
  %v277 = vld [vmem:[%s4 + $0x5d0] sm:$0xff]
  %v278 = vld [vmem:[%s4 + $0x5d8] sm:$0xff]
  %v279 = vld [vmem:[%s4 + $0x5e0] sm:$0xff]
  %v280 = vld [vmem:[%s4 + $0x5e8] sm:$0xff]
  %v281 = vld [vmem:[%s4 + $0x5f0] sm:$0xff]
  %v282 = vld [vmem:[%s4 + $0x5f8] sm:$0xff]
  %v283 = vld [vmem:[%s4 + $0x600] sm:$0xff]
  %v284 = vld [vmem:[%s4 + $0x608] sm:$0xff]
  %v285 = vld [vmem:[%s4 + $0x610] sm:$0xff]
  %v286 = vld [vmem:[%s4 + $0x618] sm:$0xff]
  %v287 = vld [vmem:[%s4 + $0x620] sm:$0xff]
  %v288 = vld [vmem:[%s4 + $0x628] sm:$0xff]
  %v289 = vld [vmem:[%s4 + $0x630] sm:$0xff]
  %v290 = vld [vmem:[%s4 + $0x638] sm:$0xff]
  %v291 = vld [vmem:[%s4 + $0x640] sm:$0xff]
  %v292 = vld [vmem:[%s4 + $0x648] sm:$0xff]
  %v293 = vld [vmem:[%s4 + $0x650] sm:$0xff]
  %v294 = vld [vmem:[%s4 + $0x658] sm:$0xff]
  %v295 = vld [vmem:[%s4 + $0x660] sm:$0xff]
  %v296 = vld [vmem:[%s4 + $0x668] sm:$0xff]
  %v297 = vld [vmem:[%s4 + $0x670] sm:$0xff]
  %v298 = vld [vmem:[%s4 + $0x678] sm:$0xff]
  %v299 = vld [vmem:[%s4 + $0x680] sm:$0xff]
  %v300 = vld [vmem:[%s4 + $0x688] sm:$0xff]
  %v301 = vld [vmem:[%s4 + $0x690] sm:$0xff]
  %v302 = vld [vmem:[%s4 + $0x698] sm:$0xff]
  %v303 = vld [vmem:[%s4 + $0x6a0] sm:$0xff]
  %v304 = vld [vmem:[%s4 + $0x6a8] sm:$0xff]
  %v305 = vld [vmem:[%s4 + $0x6b0] sm:$0xff]
  %v306 = vld [vmem:[%s4 + $0x6b8] sm:$0xff]
  %v307 = vld [vmem:[%s4 + $0x6c0] sm:$0xff]
  %v308 = vld [vmem:[%s4 + $0x6c8] sm:$0xff]
  %v309 = vld [vmem:[%s4 + $0x6d0] sm:$0xff]
  %v310 = vld [vmem:[%s4 + $0x6d8] sm:$0xff]
  %v311 = vld [vmem:[%s4 + $0x6e0] sm:$0xff]
  %v312 = vld [vmem:[%s4 + $0x6e8] sm:$0xff]
  %v313 = vld [vmem:[%s4 + $0x6f0] sm:$0xff]
  %v314 = vld [vmem:[%s4 + $0x6f8] sm:$0xff]
  %v315 = vld [vmem:[%s4 + $0x700] sm:$0xff]
  %v316 = vld [vmem:[%s4 + $0x708] sm:$0xff]
  %v317 = vld [vmem:[%s4 + $0x710] sm:$0xff]
  %v318 = vld [vmem:[%s4 + $0x718] sm:$0xff]
  %v319 = vld [vmem:[%s4 + $0x720] sm:$0xff]
  %v320 = vld [vmem:[%s4 + $0x728] sm:$0xff]
  %v321 = vld [vmem:[%s4 + $0x730] sm:$0xff]
  %v322 = vld [vmem:[%s4 + $0x738] sm:$0xff]
  %v323 = vld [vmem:[%s4 + $0x740] sm:$0xff]
  %v324 = vld [vmem:[%s4 + $0x748] sm:$0xff]
  %v325 = vld [vmem:[%s4 + $0x750] sm:$0xff]
  %v326 = vld [vmem:[%s4 + $0x758] sm:$0xff]
  %v327 = vld [vmem:[%s4 + $0x760] sm:$0xff]
  %v328 = vld [vmem:[%s4 + $0x768] sm:$0xff]
  %v329 = vld [vmem:[%s4 + $0x770] sm:$0xff]
  %v330 = vld [vmem:[%s4 + $0x778] sm:$0xff]
  %v331 = vld [vmem:[%s4 + $0x780] sm:$0xff]
  %v332 = vld [vmem:[%s4 + $0x788] sm:$0xff]
  %v333 = vld [vmem:[%s4 + $0x790] sm:$0xff]
  %v334 = vld [vmem:[%s4 + $0x798] sm:$0xff]
  %v335 = vld [vmem:[%s4 + $0x7a0] sm:$0xff]
  %v336 = vld [vmem:[%s4 + $0x7a8] sm:$0xff]
  %v337 = vld [vmem:[%s4 + $0x7b0] sm:$0xff]
  %v338 = vld [vmem:[%s4 + $0x7b8] sm:$0xff]
  %v339 = vld [vmem:[%s4 + $0x7c0] sm:$0xff]
  %v340 = vld [vmem:[%s4 + $0x7c8] sm:$0xff]
  %v341 = vld [vmem:[%s4 + $0x7d0] sm:$0xff]
  %v342 = vld [vmem:[%s4 + $0x7d8] sm:$0xff]
  %v343 = vld [vmem:[%s4 + $0x7e0] sm:$0xff]
  %v344 = vld [vmem:[%s4 + $0x7e8] sm:$0xff]
  %v345 = vld [vmem:[%s4 + $0x7f0] sm:$0xff]
  %v346 = vld [vmem:[%s4 + $0x7f8] sm:$0xff]
  %v347 = vld [vmem:[%s4 + $0x800] sm:$0xff]
  %v348 = vld [vmem:[%s4 + $0x808] sm:$0xff]
  %v349 = vld [vmem:[%s4 + $0x810] sm:$0xff]
  %v350 = vld [vmem:[%s4 + $0x818] sm:$0xff]
  %v351 = vld [vmem:[%s4 + $0x820] sm:$0xff]
  %v352 = vld [vmem:[%s4 + $0x828] sm:$0xff]
  %v353 = vld [vmem:[%s4 + $0x830] sm:$0xff]
  %v354 = vld [vmem:[%s4 + $0x838] sm:$0xff]
  %v355 = vld [vmem:[%s4 + $0x840] sm:$0xff]
  %v356 = vld [vmem:[%s4 + $0x848] sm:$0xff]
  %v357 = vld [vmem:[%s4 + $0x850] sm:$0xff]
  %v358 = vld [vmem:[%s4 + $0x858] sm:$0xff]
  %v359 = vld [vmem:[%s4 + $0x860] sm:$0xff]
  %v360 = vld [vmem:[%s4 + $0x868] sm:$0xff]
  %v361 = vld [vmem:[%s4 + $0x870] sm:$0xff]
  %v362 = vld [vmem:[%s4 + $0x878] sm:$0xff]
  %v363 = vld [vmem:[%s4 + $0x880] sm:$0xff]
  %v364 = vld [vmem:[%s4 + $0x888] sm:$0xff]
  %v365 = vld [vmem:[%s4 + $0x890] sm:$0xff]
  %v366 = vld [vmem:[%s4 + $0x898] sm:$0xff]
  %v367 = vld [vmem:[%s4 + $0x8a0] sm:$0xff]
  %v368 = vld [vmem:[%s4 + $0x8a8] sm:$0xff]
  %v369 = vld [vmem:[%s4 + $0x8b0] sm:$0xff]
  %v370 = vld [vmem:[%s4 + $0x8b8] sm:$0xff]
  %v371 = vld [vmem:[%s4 + $0x8c0] sm:$0xff]
  %v372 = vld [vmem:[%s4 + $0x8c8] sm:$0xff]
  %v373 = vld [vmem:[%s4 + $0x8d0] sm:$0xff]
  %v374 = vld [vmem:[%s4 + $0x8d8] sm:$0xff]
  %v375 = vld [vmem:[%s4 + $0x8e0] sm:$0xff]
  %v376 = vld [vmem:[%s4 + $0x8e8] sm:$0xff]
  %v377 = vld [vmem:[%s4 + $0x8f0] sm:$0xff]
  %v378 = vld [vmem:[%s4 + $0x8f8] sm:$0xff]
  %v379 = vld [vmem:[%s4 + $0x900] sm:$0xff]
  %v380 = vld [vmem:[%s4 + $0x908] sm:$0xff]
  %v381 = vld [vmem:[%s4 + $0x910] sm:$0xff]
  %v382 = vld [vmem:[%s4 + $0x918] sm:$0xff]
  %v383 = vld [vmem:[%s4 + $0x920] sm:$0xff]
  %v384 = vld [vmem:[%s4 + $0x928] sm:$0xff]
  %v385 = vld [vmem:[%s4 + $0x930] sm:$0xff]
  %v386 = vld [vmem:[%s4 + $0x938] sm:$0xff]
  %v387 = vld [vmem:[%s4 + $0x940] sm:$0xff]
  %v388 = vld [vmem:[%s4 + $0x948] sm:$0xff]
  %v389 = vld [vmem:[%s4 + $0x950] sm:$0xff]
  %v390 = vld [vmem:[%s4 + $0x958] sm:$0xff]
  %v391 = vld [vmem:[%s4 + $0x960] sm:$0xff]
  %v392 = vld [vmem:[%s4 + $0x968] sm:$0xff]
  %v393 = vld [vmem:[%s4 + $0x970] sm:$0xff]
  %v394 = vld [vmem:[%s4 + $0x978] sm:$0xff]
  %v395 = vld [vmem:[%s4 + $0x980] sm:$0xff]
  %v396 = vld [vmem:[%s4 + $0x988] sm:$0xff]
  %v397 = vld [vmem:[%s4 + $0x990] sm:$0xff]
  %v398 = vld [vmem:[%s4 + $0x998] sm:$0xff]
  %v399 = vld [vmem:[%s4 + $0x9a0] sm:$0xff]
  %v400 = vld [vmem:[%s4 + $0x9a8] sm:$0xff]
  %v401 = vld [vmem:[%s4 + $0x9b0] sm:$0xff]
  %v402 = vld [vmem:[%s4 + $0x9b8] sm:$0xff]
  %v403 = vld [vmem:[%s4 + $0x9c0] sm:$0xff]
  %v404 = vld [vmem:[%s4 + $0x9c8] sm:$0xff]
  %v405 = vld [vmem:[%s4 + $0x9d0] sm:$0xff]
  %v406 = vld [vmem:[%s4 + $0x9d8] sm:$0xff]
  %v407 = vld [vmem:[%s4 + $0x9e0] sm:$0xff]
  %v408 = vld [vmem:[%s4 + $0x9e8] sm:$0xff]
  %v409 = vld [vmem:[%s4 + $0x9f0] sm:$0xff]
  %v410 = vld [vmem:[%s4 + $0x9f8] sm:$0xff]
  %v411 = vld [vmem:[%s4 + $0xa00] sm:$0xff]
  %v412 = vld [vmem:[%s4 + $0xa08] sm:$0xff]
  %v413 = vld [vmem:[%s4 + $0xa10] sm:$0xff]
  %v414 = vld [vmem:[%s4 + $0xa18] sm:$0xff]
  %v415 = vld [vmem:[%s4 + $0xa20] sm:$0xff]
  %v416 = vld [vmem:[%s4 + $0xa28] sm:$0xff]
  %v417 = vld [vmem:[%s4 + $0xa30] sm:$0xff]
  %v418 = vld [vmem:[%s4 + $0xa38] sm:$0xff]
  %v419 = vld [vmem:[%s4 + $0xa40] sm:$0xff]
  %v420 = vld [vmem:[%s4 + $0xa48] sm:$0xff]
  %v421 = vld [vmem:[%s4 + $0xa50] sm:$0xff]
  %v422 = vld [vmem:[%s4 + $0xa58] sm:$0xff]
  %v423 = vld [vmem:[%s4 + $0xa60] sm:$0xff]
  %v424 = vld [vmem:[%s4 + $0xa68] sm:$0xff]
  %v425 = vld [vmem:[%s4 + $0xa70] sm:$0xff]
  %v426 = vld [vmem:[%s4 + $0xa78] sm:$0xff]
  %v427 = vld [vmem:[%s4 + $0xa80] sm:$0xff]
  %v428 = vld [vmem:[%s4 + $0xa88] sm:$0xff]
  %v429 = vld [vmem:[%s4 + $0xa90] sm:$0xff]
  %v430 = vld [vmem:[%s4 + $0xa98] sm:$0xff]
  %v431 = vld [vmem:[%s4 + $0xaa0] sm:$0xff]
  %v432 = vld [vmem:[%s4 + $0xaa8] sm:$0xff]
  %v433 = vld [vmem:[%s4 + $0xab0] sm:$0xff]
  %v434 = vld [vmem:[%s4 + $0xab8] sm:$0xff]
  %v435 = vld [vmem:[%s4 + $0xac0] sm:$0xff]
  %v436 = vld [vmem:[%s4 + $0xac8] sm:$0xff]
  %v437 = vld [vmem:[%s4 + $0xad0] sm:$0xff]
  %v438 = vld [vmem:[%s4 + $0xad8] sm:$0xff]
  %v439 = vld [vmem:[%s4 + $0xae0] sm:$0xff]
  %v440 = vld [vmem:[%s4 + $0xae8] sm:$0xff]
  %v441 = vld [vmem:[%s4 + $0xaf0] sm:$0xff]
  %v442 = vld [vmem:[%s4 + $0xaf8] sm:$0xff]
  %v443 = vld [vmem:[%s4 + $0xb00] sm:$0xff]
  %v444 = vld [vmem:[%s4 + $0xb08] sm:$0xff]
  %v445 = vld [vmem:[%s4 + $0xb10] sm:$0xff]
  %v446 = vld [vmem:[%s4 + $0xb18] sm:$0xff]
  %v447 = vld [vmem:[%s4 + $0xb20] sm:$0xff]
  %v448 = vld [vmem:[%s4 + $0xb28] sm:$0xff]
  %v449 = vld [vmem:[%s4 + $0xb30] sm:$0xff]
  %v450 = vld [vmem:[%s4 + $0xb38] sm:$0xff]
  %v451 = vld [vmem:[%s4 + $0xb40] sm:$0xff]
  %v452 = vld [vmem:[%s4 + $0xb48] sm:$0xff]
  %v453 = vld [vmem:[%s4 + $0xb50] sm:$0xff]
  %v454 = vld [vmem:[%s4 + $0xb58] sm:$0xff]
  %v455 = vld [vmem:[%s4 + $0xb60] sm:$0xff]
  %v456 = vld [vmem:[%s4 + $0xb68] sm:$0xff]
  %v457 = vld [vmem:[%s4 + $0xb70] sm:$0xff]
  %v458 = vld [vmem:[%s4 + $0xb78] sm:$0xff]
  %v459 = vld [vmem:[%s4 + $0xb80] sm:$0xff]
  %v460 = vld [vmem:[%s4 + $0xb88] sm:$0xff]
  %v461 = vld [vmem:[%s4 + $0xb90] sm:$0xff]
  %v462 = vld [vmem:[%s4 + $0xb98] sm:$0xff]
  %v463 = vld [vmem:[%s4 + $0xba0] sm:$0xff]
  %v464 = vld [vmem:[%s4 + $0xba8] sm:$0xff]
  %v465 = vld [vmem:[%s4 + $0xbb0] sm:$0xff]
  %v466 = vld [vmem:[%s4 + $0xbb8] sm:$0xff]
  %v467 = vld [vmem:[%s4 + $0xbc0] sm:$0xff]
  %v468 = vld [vmem:[%s4 + $0xbc8] sm:$0xff]
  %v469 = vld [vmem:[%s4 + $0xbd0] sm:$0xff]
  %v470 = vld [vmem:[%s4 + $0xbd8] sm:$0xff]
  %v471 = vld [vmem:[%s4 + $0xbe0] sm:$0xff]
  %v472 = vld [vmem:[%s4 + $0xbe8] sm:$0xff]
  %v473 = vld [vmem:[%s4 + $0xbf0] sm:$0xff]
  %v474 = vld [vmem:[%s4 + $0xbf8] sm:$0xff]
  %v475 = vld [vmem:[%s4 + $0xc00] sm:$0xff]
  %v476 = vld [vmem:[%s4 + $0xc08] sm:$0xff]
  %v477 = vld [vmem:[%s4 + $0xc10] sm:$0xff]
  %v478 = vld [vmem:[%s4 + $0xc18] sm:$0xff]
  %v479 = vld [vmem:[%s4 + $0xc20] sm:$0xff]
  %v480 = vld [vmem:[%s4 + $0xc28] sm:$0xff]
  %v481 = vld [vmem:[%s4 + $0xc30] sm:$0xff]
  %v482 = vld [vmem:[%s4 + $0xc38] sm:$0xff]
  %v483 = vld [vmem:[%s4 + $0xc40] sm:$0xff]
  %v484 = vld [vmem:[%s4 + $0xc48] sm:$0xff]
  %v485 = vld [vmem:[%s4 + $0xc50] sm:$0xff]
  %v486 = vld [vmem:[%s4 + $0xc58] sm:$0xff]
  %v487 = vld [vmem:[%s4 + $0xc60] sm:$0xff]
  %v488 = vld [vmem:[%s4 + $0xc68] sm:$0xff]
  %v489 = vld [vmem:[%s4 + $0xc70] sm:$0xff]
  %v490 = vld [vmem:[%s4 + $0xc78] sm:$0xff]
  %v491 = vld [vmem:[%s4 + $0xc80] sm:$0xff]
  %v492 = vld [vmem:[%s4 + $0xc88] sm:$0xff]
  %v493 = vld [vmem:[%s4 + $0xc90] sm:$0xff]
  %v494 = vld [vmem:[%s4 + $0xc98] sm:$0xff]
  %v495 = vld [vmem:[%s4 + $0xca0] sm:$0xff]
  %v496 = vld [vmem:[%s4 + $0xca8] sm:$0xff]
  %v497 = vld [vmem:[%s4 + $0xcb0] sm:$0xff]
  %v498 = vld [vmem:[%s4 + $0xcb8] sm:$0xff]
  %v499 = vld [vmem:[%s4 + $0xcc0] sm:$0xff]
  %v500 = vld [vmem:[%s4 + $0xcc8] sm:$0xff]
  %v501 = vld [vmem:[%s4 + $0xcd0] sm:$0xff]
  %v502 = vld [vmem:[%s4 + $0xcd8] sm:$0xff]
  %v503 = vld [vmem:[%s4 + $0xce0] sm:$0xff]
  %v504 = vld [vmem:[%s4 + $0xce8] sm:$0xff]
  %v505 = vld [vmem:[%s4 + $0xcf0] sm:$0xff]
  %v506 = vld [vmem:[%s4 + $0xcf8] sm:$0xff]
  %v507 = vld [vmem:[%s4 + $0xd00] sm:$0xff]
  %v508 = vld [vmem:[%s4 + $0xd08] sm:$0xff]
  %v509 = vld [vmem:[%s4 + $0xd10] sm:$0xff]
  %v510 = vld [vmem:[%s4 + $0xd18] sm:$0xff]
  %v511 = vld [vmem:[%s4 + $0xd20] sm:$0xff]
  %v512 = vld [vmem:[%s4 + $0xd28] sm:$0xff]
  %v513 = vld [vmem:[%s4 + $0xd30] sm:$0xff]
  %v514 = vld [vmem:[%s4 + $0xd38] sm:$0xff]
  %v515 = vld [vmem:[%s4 + $0xd40] sm:$0xff]
  %v516 = vld [vmem:[%s4 + $0xd48] sm:$0xff]
  %v517 = vld [vmem:[%s4 + $0xd50] sm:$0xff]
  %v518 = vld [vmem:[%s4 + $0xd58] sm:$0xff]
  %v519 = vld [vmem:[%s4 + $0xd60] sm:$0xff]
  %v520 = vld [vmem:[%s4 + $0xd68] sm:$0xff]
  %v521 = vld [vmem:[%s4 + $0xd70] sm:$0xff]
  %v522 = vld [vmem:[%s4 + $0xd78] sm:$0xff]
  %v523 = vld [vmem:[%s4 + $0xd80] sm:$0xff]
  %v524 = vld [vmem:[%s4 + $0xd88] sm:$0xff]
  %v525 = vld [vmem:[%s4 + $0xd90] sm:$0xff]
  %v526 = vld [vmem:[%s4 + $0xd98] sm:$0xff]
  %v527 = vld [vmem:[%s4 + $0xda0] sm:$0xff]
  %v528 = vld [vmem:[%s4 + $0xda8] sm:$0xff]
  %v529 = vld [vmem:[%s4 + $0xdb0] sm:$0xff]
  %v530 = vld [vmem:[%s4 + $0xdb8] sm:$0xff]
  %v531 = vld [vmem:[%s4 + $0xdc0] sm:$0xff]
  %v532 = vld [vmem:[%s4 + $0xdc8] sm:$0xff]
  %v533 = vld [vmem:[%s4 + $0xdd0] sm:$0xff]
  %v534 = vld [vmem:[%s4 + $0xdd8] sm:$0xff]
  %v535 = vld [vmem:[%s4 + $0xde0] sm:$0xff]
  %v536 = vld [vmem:[%s4 + $0xde8] sm:$0xff]
  %v537 = vld [vmem:[%s4 + $0xdf0] sm:$0xff]
  %v538 = vld [vmem:[%s4 + $0xdf8] sm:$0xff]
  %v539 = vld [vmem:[%s4 + $0xe00] sm:$0xff]
  %v540 = vld [vmem:[%s4 + $0xe08] sm:$0xff]
  %v541 = vld [vmem:[%s4 + $0xe10] sm:$0xff]
  %v542 = vld [vmem:[%s4 + $0xe18] sm:$0xff]
  %v543 = vld [vmem:[%s4 + $0xe20] sm:$0xff]
  %v544 = vld [vmem:[%s4 + $0xe28] sm:$0xff]
  %v545 = vld [vmem:[%s4 + $0xe30] sm:$0xff]
  %v546 = vld [vmem:[%s4 + $0xe38] sm:$0xff]
  %v547 = vld [vmem:[%s4 + $0xe40] sm:$0xff]
  %v548 = vld [vmem:[%s4 + $0xe48] sm:$0xff]
  %v549 = vld [vmem:[%s4 + $0xe50] sm:$0xff]
  %v550 = vld [vmem:[%s4 + $0xe58] sm:$0xff]
  %v551 = vld [vmem:[%s4 + $0xe60] sm:$0xff]
  %v552 = vld [vmem:[%s4 + $0xe68] sm:$0xff]
  %v553 = vld [vmem:[%s4 + $0xe70] sm:$0xff]
  %v554 = vld [vmem:[%s4 + $0xe78] sm:$0xff]
  %v555 = vld [vmem:[%s4 + $0xe80] sm:$0xff]
  %v556 = vld [vmem:[%s4 + $0xe88] sm:$0xff]
  %v557 = vld [vmem:[%s4 + $0xe90] sm:$0xff]
  %v558 = vld [vmem:[%s4 + $0xe98] sm:$0xff]
  %v559 = vld [vmem:[%s4 + $0xea0] sm:$0xff]
  %v560 = vld [vmem:[%s4 + $0xea8] sm:$0xff]
  %v561 = vld [vmem:[%s4 + $0xeb0] sm:$0xff]
  %v562 = vld [vmem:[%s4 + $0xeb8] sm:$0xff]
  %v563 = vld [vmem:[%s4 + $0xec0] sm:$0xff]
  %v564 = vld [vmem:[%s4 + $0xec8] sm:$0xff]
  %v565 = vld [vmem:[%s4 + $0xed0] sm:$0xff]
  %v566 = vld [vmem:[%s4 + $0xed8] sm:$0xff]
  %v567 = vld [vmem:[%s4 + $0xee0] sm:$0xff]
  %v568 = vld [vmem:[%s4 + $0xee8] sm:$0xff]
  %v569 = vld [vmem:[%s4 + $0xef0] sm:$0xff]
  %v570 = vld [vmem:[%s4 + $0xef8] sm:$0xff]
  %v571 = vld [vmem:[%s4 + $0xf00] sm:$0xff]
  %v572 = vld [vmem:[%s4 + $0xf08] sm:$0xff]
  %v573 = vld [vmem:[%s4 + $0xf10] sm:$0xff]
  %v574 = vld [vmem:[%s4 + $0xf18] sm:$0xff]
  %v575 = vld [vmem:[%s4 + $0xf20] sm:$0xff]
  %v576 = vld [vmem:[%s4 + $0xf28] sm:$0xff]
  %v577 = vld [vmem:[%s4 + $0xf30] sm:$0xff]
  %v578 = vld [vmem:[%s4 + $0xf38] sm:$0xff]
  %v579 = vld [vmem:[%s4 + $0xf40] sm:$0xff]
  %v580 = vld [vmem:[%s4 + $0xf48] sm:$0xff]
  %v581 = vld [vmem:[%s4 + $0xf50] sm:$0xff]
  %v582 = vld [vmem:[%s4 + $0xf58] sm:$0xff]
  %v583 = vld [vmem:[%s4 + $0xf60] sm:$0xff]
  %v584 = vld [vmem:[%s4 + $0xf68] sm:$0xff]
  %v585 = vld [vmem:[%s4 + $0xf70] sm:$0xff]
  %v586 = vld [vmem:[%s4 + $0xf78] sm:$0xff]
  %v587 = vld [vmem:[%s4 + $0xf80] sm:$0xff]
  %v588 = vld [vmem:[%s4 + $0xf88] sm:$0xff]
  %v589 = vld [vmem:[%s4 + $0xf90] sm:$0xff]
  %v590 = vld [vmem:[%s4 + $0xf98] sm:$0xff]
  %v591 = vld [vmem:[%s4 + $0xfa0] sm:$0xff]
  %v592 = vld [vmem:[%s4 + $0xfa8] sm:$0xff]
  %v593 = vld [vmem:[%s4 + $0xfb0] sm:$0xff]
  %v594 = vld [vmem:[%s4 + $0xfb8] sm:$0xff]
  %v595 = vld [vmem:[%s4 + $0xfc0] sm:$0xff]
  %v596 = vld [vmem:[%s4 + $0xfc8] sm:$0xff]
  %v597 = vld [vmem:[%s4 + $0xfd0] sm:$0xff]
  %v598 = vld [vmem:[%s4 + $0xfd8] sm:$0xff]
  %v599 = vld [vmem:[%s4 + $0xfe0] sm:$0xff]
  %v600 = vld [vmem:[%s4 + $0xfe8] sm:$0xff]
  %v601 = vld [vmem:[%s4 + $0xff0] sm:$0xff]
  %v602 = vld [vmem:[%s4 + $0xff8] sm:$0xff]
  %v603 = vld [vmem:[%s4 + $0x1000] sm:$0xff]
  %v604 = vld [vmem:[%s4 + $0x1008] sm:$0xff]
  %v605 = vld [vmem:[%s4 + $0x1010] sm:$0xff]
  %v606 = vld [vmem:[%s4 + $0x1018] sm:$0xff]
  %v607 = vld [vmem:[%s4 + $0x1020] sm:$0xff]
  %v608 = vld [vmem:[%s4 + $0x1028] sm:$0xff]
  %v609 = vld [vmem:[%s4 + $0x1030] sm:$0xff]
  %v610 = vld [vmem:[%s4 + $0x1038] sm:$0xff]
  %v611 = vld [vmem:[%s4 + $0x1040] sm:$0xff]
  %v612 = vld [vmem:[%s4 + $0x1048] sm:$0xff]
  %v613 = vld [vmem:[%s4 + $0x1050] sm:$0xff]
  %v614 = vld [vmem:[%s4 + $0x1058] sm:$0xff]
  %v615 = vld [vmem:[%s4 + $0x1060] sm:$0xff]
  %v616 = vld [vmem:[%s4 + $0x1068] sm:$0xff]
  %v617 = vld [vmem:[%s4 + $0x1070] sm:$0xff]
  %v618 = vld [vmem:[%s4 + $0x1078] sm:$0xff]
  %v619 = vld [vmem:[%s4 + $0x1080] sm:$0xff]
  %v620 = vld [vmem:[%s4 + $0x1088] sm:$0xff]
  %v621 = vld [vmem:[%s4 + $0x1090] sm:$0xff]
  %v622 = vld [vmem:[%s4 + $0x1098] sm:$0xff]
  %v623 = vld [vmem:[%s4 + $0x10a0] sm:$0xff]
  %v624 = vld [vmem:[%s4 + $0x10a8] sm:$0xff]
  %v625 = vld [vmem:[%s4 + $0x10b0] sm:$0xff]
  %v626 = vld [vmem:[%s4 + $0x10b8] sm:$0xff]
  %v627 = vld [vmem:[%s4 + $0x10c0] sm:$0xff]
  %v628 = vld [vmem:[%s4 + $0x10c8] sm:$0xff]
  %v629 = vld [vmem:[%s4 + $0x10d0] sm:$0xff]
  %v630 = vld [vmem:[%s4 + $0x10d8] sm:$0xff]
  %v631 = vld [vmem:[%s4 + $0x10e0] sm:$0xff]
  %v632 = vld [vmem:[%s4 + $0x10e8] sm:$0xff]
  %v633 = vld [vmem:[%s4 + $0x10f0] sm:$0xff]
  %v634 = vld [vmem:[%s4 + $0x10f8] sm:$0xff]
  %v635 = vld [vmem:[%s4 + $0x1100] sm:$0xff]
  %v636 = vld [vmem:[%s4 + $0x1108] sm:$0xff]
  %v637 = vld [vmem:[%s4 + $0x1110] sm:$0xff]
  %v638 = vld [vmem:[%s4 + $0x1118] sm:$0xff]
  %v639 = vld [vmem:[%s4 + $0x1120] sm:$0xff]
  %v640 = vld [vmem:[%s4 + $0x1128] sm:$0xff]
  %v641 = vld [vmem:[%s4 + $0x1130] sm:$0xff]
  %v642 = vld [vmem:[%s4 + $0x1138] sm:$0xff]
  %v643 = vld [vmem:[%s4 + $0x1140] sm:$0xff]
  %v644 = vld [vmem:[%s4 + $0x1148] sm:$0xff]
  %v645 = vld [vmem:[%s4 + $0x1150] sm:$0xff]
  %v646 = vld [vmem:[%s4 + $0x1158] sm:$0xff]
  %v647 = vld [vmem:[%s4 + $0x1160] sm:$0xff]
  %v648 = vld [vmem:[%s4 + $0x1168] sm:$0xff]
  %v649 = vld [vmem:[%s4 + $0x1170] sm:$0xff]
  %v650 = vld [vmem:[%s4 + $0x1178] sm:$0xff]
  %v651 = vld [vmem:[%s4 + $0x1180] sm:$0xff]
  %v652 = vld [vmem:[%s4 + $0x1188] sm:$0xff]
  %v653 = vld [vmem:[%s4 + $0x1190] sm:$0xff]
  %v654 = vld [vmem:[%s4 + $0x1198] sm:$0xff]
  %v655 = vld [vmem:[%s4 + $0x11a0] sm:$0xff]
  %v656 = vld [vmem:[%s4 + $0x11a8] sm:$0xff]
  %v657 = vld [vmem:[%s4 + $0x11b0] sm:$0xff]
  %v658 = vld [vmem:[%s4 + $0x11b8] sm:$0xff]
  %v659 = vld [vmem:[%s4 + $0x11c0] sm:$0xff]
  %v660 = vld [vmem:[%s4 + $0x11c8] sm:$0xff]
  %v661 = vld [vmem:[%s4 + $0x11d0] sm:$0xff]
  %v662 = vld [vmem:[%s4 + $0x11d8] sm:$0xff]
  %v663 = vld [vmem:[%s4 + $0x11e0] sm:$0xff]
  %v664 = vld [vmem:[%s4 + $0x11e8] sm:$0xff]
  %v665 = vld [vmem:[%s4 + $0x11f0] sm:$0xff]
  %v666 = vld [vmem:[%s4 + $0x11f8] sm:$0xff]
  %v667 = vld [vmem:[%s4 + $0x1200] sm:$0xff]
  %v668 = vld [vmem:[%s4 + $0x1208] sm:$0xff]
  %v669 = vld [vmem:[%s4 + $0x1210] sm:$0xff]
  %v670 = vld [vmem:[%s4 + $0x1218] sm:$0xff]
  %v671 = vld [vmem:[%s4 + $0x1220] sm:$0xff]
  %v672 = vld [vmem:[%s4 + $0x1228] sm:$0xff]
  %v673 = vld [vmem:[%s4 + $0x1230] sm:$0xff]
  %v674 = vld [vmem:[%s4 + $0x1238] sm:$0xff]
  %v675 = vld [vmem:[%s4 + $0x1240] sm:$0xff]
  %v676 = vld [vmem:[%s4 + $0x1248] sm:$0xff]
  %v677 = vld [vmem:[%s4 + $0x1250] sm:$0xff]
  %v678 = vld [vmem:[%s4 + $0x1258] sm:$0xff]
  %v679 = vld [vmem:[%s4 + $0x1260] sm:$0xff]
  %v680 = vld [vmem:[%s4 + $0x1268] sm:$0xff]
  %v681 = vld [vmem:[%s4 + $0x1270] sm:$0xff]
  %v682 = vld [vmem:[%s4 + $0x1278] sm:$0xff]
  %v683 = vld [vmem:[%s4 + $0x1280] sm:$0xff]
  %v684 = vld [vmem:[%s4 + $0x1288] sm:$0xff]
  %v685 = vld [vmem:[%s4 + $0x1290] sm:$0xff]
  %v686 = vld [vmem:[%s4 + $0x1298] sm:$0xff]
  %v687 = vld [vmem:[%s4 + $0x12a0] sm:$0xff]
  %v688 = vld [vmem:[%s4 + $0x12a8] sm:$0xff]
  %v689 = vld [vmem:[%s4 + $0x12b0] sm:$0xff]
  %v690 = vld [vmem:[%s4 + $0x12b8] sm:$0xff]
  %v691 = vld [vmem:[%s4 + $0x12c0] sm:$0xff]
  %v692 = vld [vmem:[%s4 + $0x12c8] sm:$0xff]
  %v693 = vld [vmem:[%s4 + $0x12d0] sm:$0xff]
  %v694 = vld [vmem:[%s4 + $0x12d8] sm:$0xff]
  %v695 = vld [vmem:[%s4 + $0x12e0] sm:$0xff]
  %v696 = vld [vmem:[%s4 + $0x12e8] sm:$0xff]
  %v697 = vld [vmem:[%s4 + $0x12f0] sm:$0xff]
  %v698 = vld [vmem:[%s4 + $0x12f8] sm:$0xff]
  %v699 = vld [vmem:[%s4 + $0x1300] sm:$0xff]
  %v700 = vld [vmem:[%s4 + $0x1308] sm:$0xff]
  %v701 = vld [vmem:[%s4 + $0x1310] sm:$0xff]
  %v702 = vld [vmem:[%s4 + $0x1318] sm:$0xff]
  %v703 = vld [vmem:[%s4 + $0x1320] sm:$0xff]
  %v704 = vld [vmem:[%s4 + $0x1328] sm:$0xff]
  %v705 = vld [vmem:[%s4 + $0x1330] sm:$0xff]
  %v706 = vld [vmem:[%s4 + $0x1338] sm:$0xff]
  %v707 = vld [vmem:[%s4 + $0x1340] sm:$0xff]
  %v708 = vld [vmem:[%s4 + $0x1348] sm:$0xff]
  %v709 = vld [vmem:[%s4 + $0x1350] sm:$0xff]
  %v710 = vld [vmem:[%s4 + $0x1358] sm:$0xff]
  %v711 = vld [vmem:[%s4 + $0x1360] sm:$0xff]
  %v712 = vld [vmem:[%s4 + $0x1368] sm:$0xff]
  %v713 = vld [vmem:[%s4 + $0x1370] sm:$0xff]
  %v714 = vld [vmem:[%s4 + $0x1378] sm:$0xff]
  %v715 = vld [vmem:[%s4 + $0x1380] sm:$0xff]
  %v716 = vld [vmem:[%s4 + $0x1388] sm:$0xff]
  %v717 = vld [vmem:[%s4 + $0x1390] sm:$0xff]
  %v718 = vld [vmem:[%s4 + $0x1398] sm:$0xff]
  %v719 = vld [vmem:[%s4 + $0x13a0] sm:$0xff]
  %v720 = vld [vmem:[%s4 + $0x13a8] sm:$0xff]
  %v721 = vld [vmem:[%s4 + $0x13b0] sm:$0xff]
  %v722 = vld [vmem:[%s4 + $0x13b8] sm:$0xff]
  %v723 = vld [vmem:[%s4 + $0x13c0] sm:$0xff]
  %v724 = vld [vmem:[%s4 + $0x13c8] sm:$0xff]
  %v725 = vld [vmem:[%s4 + $0x13d0] sm:$0xff]
  %v726 = vld [vmem:[%s4 + $0x13d8] sm:$0xff]
  %v727 = vld [vmem:[%s4 + $0x13e0] sm:$0xff]
  %v728 = vld [vmem:[%s4 + $0x13e8] sm:$0xff]
  %v729 = vld [vmem:[%s4 + $0x13f0] sm:$0xff]
  %v730 = vld [vmem:[%s4 + $0x13f8] sm:$0xff]
  %v731 = vld [vmem:[%s4 + $0x1400] sm:$0xff]
  %v732 = vld [vmem:[%s4 + $0x1408] sm:$0xff]
  %v733 = vld [vmem:[%s4 + $0x1410] sm:$0xff]
  %v734 = vld [vmem:[%s4 + $0x1418] sm:$0xff]
  %v735 = vld [vmem:[%s4 + $0x1420] sm:$0xff]
  %v736 = vld [vmem:[%s4 + $0x1428] sm:$0xff]
  %v737 = vld [vmem:[%s4 + $0x1430] sm:$0xff]
  %v738 = vld [vmem:[%s4 + $0x1438] sm:$0xff]
  %v739 = vld [vmem:[%s4 + $0x1440] sm:$0xff]
  %v740 = vld [vmem:[%s4 + $0x1448] sm:$0xff]
  %v741 = vld [vmem:[%s4 + $0x1450] sm:$0xff]
  %v742 = vld [vmem:[%s4 + $0x1458] sm:$0xff]
  %v743 = vld [vmem:[%s4 + $0x1460] sm:$0xff]
  %v744 = vld [vmem:[%s4 + $0x1468] sm:$0xff]
  %v745 = vld [vmem:[%s4 + $0x1470] sm:$0xff]
  %v746 = vld [vmem:[%s4 + $0x1478] sm:$0xff]
  %v747 = vld [vmem:[%s4 + $0x1480] sm:$0xff]
  %v748 = vld [vmem:[%s4 + $0x1488] sm:$0xff]
  %v749 = vld [vmem:[%s4 + $0x1490] sm:$0xff]
  %v750 = vld [vmem:[%s4 + $0x1498] sm:$0xff]
  %v751 = vld [vmem:[%s4 + $0x14a0] sm:$0xff]
  %v752 = vld [vmem:[%s4 + $0x14a8] sm:$0xff]
  %v753 = vld [vmem:[%s4 + $0x14b0] sm:$0xff]
  %v754 = vld [vmem:[%s4 + $0x14b8] sm:$0xff]
  %v755 = vld [vmem:[%s4 + $0x14c0] sm:$0xff]
  %v756 = vld [vmem:[%s4 + $0x14c8] sm:$0xff]
  %v757 = vld [vmem:[%s4 + $0x14d0] sm:$0xff]
  %v758 = vld [vmem:[%s4 + $0x14d8] sm:$0xff]
  %v759 = vld [vmem:[%s4 + $0x14e0] sm:$0xff]
  %v760 = vld [vmem:[%s4 + $0x14e8] sm:$0xff]
  %v761 = vld [vmem:[%s4 + $0x14f0] sm:$0xff]
  %v762 = vld [vmem:[%s4 + $0x14f8] sm:$0xff]
  %v763 = vld [vmem:[%s4 + $0x1500] sm:$0xff]
  %v764 = vld [vmem:[%s4 + $0x1508] sm:$0xff]
  %v765 = vld [vmem:[%s4 + $0x1510] sm:$0xff]
  %v766 = vld [vmem:[%s4 + $0x1518] sm:$0xff]
  %v767 = vld [vmem:[%s4 + $0x1520] sm:$0xff]
  %v768 = vld [vmem:[%s4 + $0x1528] sm:$0xff]
  %v769 = vld [vmem:[%s4 + $0x1530] sm:$0xff]
  %v770 = vld [vmem:[%s4 + $0x1538] sm:$0xff]
  %v771 = vld [vmem:[%s4 + $0x1540] sm:$0xff]
  %v772 = vld [vmem:[%s4 + $0x1548] sm:$0xff]
  %v773 = vld [vmem:[%s4 + $0x1550] sm:$0xff]
  %v774 = vld [vmem:[%s4 + $0x1558] sm:$0xff]
  %v775 = vld [vmem:[%s4 + $0x1560] sm:$0xff]
  %v776 = vld [vmem:[%s4 + $0x1568] sm:$0xff]
  %v777 = vld [vmem:[%s4 + $0x1570] sm:$0xff]
  %v778 = vld [vmem:[%s4 + $0x1578] sm:$0xff]
  %v779 = vld [vmem:[%s4 + $0x1580] sm:$0xff]
  %v780 = vld [vmem:[%s4 + $0x1588] sm:$0xff]
  %v781 = vld [vmem:[%s4 + $0x1590] sm:$0xff]
  %v782 = vld [vmem:[%s4 + $0x1598] sm:$0xff]
  %v783 = vld [vmem:[%s4 + $0x15a0] sm:$0xff]
  %v784 = vld [vmem:[%s4 + $0x15a8] sm:$0xff]
  %v785 = vld [vmem:[%s4 + $0x15b0] sm:$0xff]
  %v786 = vld [vmem:[%s4 + $0x15b8] sm:$0xff]
  %v787 = vld [vmem:[%s4 + $0x15c0] sm:$0xff]
  %v788 = vld [vmem:[%s4 + $0x15c8] sm:$0xff]
  %v789 = vld [vmem:[%s4 + $0x15d0] sm:$0xff]
  %v790 = vld [vmem:[%s4 + $0x15d8] sm:$0xff]
  %v791 = vld [vmem:[%s4 + $0x15e0] sm:$0xff]
  %v792 = vld [vmem:[%s4 + $0x15e8] sm:$0xff]
  %v793 = vld [vmem:[%s4 + $0x15f0] sm:$0xff]
  %v794 = vld [vmem:[%s4 + $0x15f8] sm:$0xff]
  %v795 = vld [vmem:[%s4 + $0x1600] sm:$0xff]
  %v796 = vld [vmem:[%s4 + $0x1608] sm:$0xff]
  %v797 = vld [vmem:[%s4 + $0x1610] sm:$0xff]
  %v798 = vld [vmem:[%s4 + $0x1618] sm:$0xff]
  %v799 = vld [vmem:[%s4 + $0x1620] sm:$0xff]
  %v800 = vld [vmem:[%s4 + $0x1628] sm:$0xff]
  %v801 = vld [vmem:[%s4 + $0x1630] sm:$0xff]
  %v802 = vld [vmem:[%s4 + $0x1638] sm:$0xff]
  %v803 = vld [vmem:[%s4 + $0x1640] sm:$0xff]
  %v804 = vld [vmem:[%s4 + $0x1648] sm:$0xff]
  %v805 = vld [vmem:[%s4 + $0x1650] sm:$0xff]
  %v806 = vld [vmem:[%s4 + $0x1658] sm:$0xff]
  %v807 = vld [vmem:[%s4 + $0x1660] sm:$0xff]
  %v808 = vld [vmem:[%s4 + $0x1668] sm:$0xff]
  %v809 = vld [vmem:[%s4 + $0x1670] sm:$0xff]
  %v810 = vld [vmem:[%s4 + $0x1678] sm:$0xff]
  %v811 = vld [vmem:[%s4 + $0x1680] sm:$0xff]
  %v812 = vld [vmem:[%s4 + $0x1688] sm:$0xff]
  %v813 = vld [vmem:[%s4 + $0x1690] sm:$0xff]
  %v814 = vld [vmem:[%s4 + $0x1698] sm:$0xff]
  %v815 = vld [vmem:[%s4 + $0x16a0] sm:$0xff]
  %v816 = vld [vmem:[%s4 + $0x16a8] sm:$0xff]
  %v817 = vld [vmem:[%s4 + $0x16b0] sm:$0xff]
  %v818 = vld [vmem:[%s4 + $0x16b8] sm:$0xff]
  %v819 = vld [vmem:[%s4 + $0x16c0] sm:$0xff]
  %v820 = vld [vmem:[%s4 + $0x16c8] sm:$0xff]
  %v821 = vld [vmem:[%s4 + $0x16d0] sm:$0xff]
  %v822 = vld [vmem:[%s4 + $0x16d8] sm:$0xff]
  %v823 = vld [vmem:[%s4 + $0x16e0] sm:$0xff]
  %v824 = vld [vmem:[%s4 + $0x16e8] sm:$0xff]
  %v825 = vld [vmem:[%s4 + $0x16f0] sm:$0xff]
  %v826 = vld [vmem:[%s4 + $0x16f8] sm:$0xff]
  %v827 = vld [vmem:[%s4 + $0x1700] sm:$0xff]
  %v828 = vld [vmem:[%s4 + $0x1708] sm:$0xff]
  %v829 = vld [vmem:[%s4 + $0x1710] sm:$0xff]
  %v830 = vld [vmem:[%s4 + $0x1718] sm:$0xff]
  %v831 = vld [vmem:[%s4 + $0x1720] sm:$0xff]
  %v832 = vld [vmem:[%s4 + $0x1728] sm:$0xff]
  %v833 = vld [vmem:[%s4 + $0x1730] sm:$0xff]
  %v834 = vld [vmem:[%s4 + $0x1738] sm:$0xff]
  %v835 = vld [vmem:[%s4 + $0x1740] sm:$0xff]
  %v836 = vld [vmem:[%s4 + $0x1748] sm:$0xff]
  %v837 = vld [vmem:[%s4 + $0x1750] sm:$0xff]
  %v838 = vld [vmem:[%s4 + $0x1758] sm:$0xff]
  %v839 = vld [vmem:[%s4 + $0x1760] sm:$0xff]
  %v840 = vld [vmem:[%s4 + $0x1768] sm:$0xff]
  %v841 = vld [vmem:[%s4 + $0x1770] sm:$0xff]
  %v842 = vld [vmem:[%s4 + $0x1778] sm:$0xff]
  %v843 = vld [vmem:[%s4 + $0x1780] sm:$0xff]
  %v844 = vld [vmem:[%s4 + $0x1788] sm:$0xff]
  %v845 = vld [vmem:[%s4 + $0x1790] sm:$0xff]
  %v846 = vld [vmem:[%s4 + $0x1798] sm:$0xff]
  %v847 = vld [vmem:[%s4 + $0x17a0] sm:$0xff]
  %v848 = vld [vmem:[%s4 + $0x17a8] sm:$0xff]
  %v849 = vld [vmem:[%s4 + $0x17b0] sm:$0xff]
  %v850 = vld [vmem:[%s4 + $0x17b8] sm:$0xff]
  %v851 = vld [vmem:[%s4 + $0x17c0] sm:$0xff]
  %v852 = vld [vmem:[%s4 + $0x17c8] sm:$0xff]
  %v853 = vld [vmem:[%s4 + $0x17d0] sm:$0xff]
  %v854 = vld [vmem:[%s4 + $0x17d8] sm:$0xff]
  %v855 = vld [vmem:[%s4 + $0x17e0] sm:$0xff]
  %v856 = vld [vmem:[%s4 + $0x17e8] sm:$0xff]
  %v857 = vld [vmem:[%s4 + $0x17f0] sm:$0xff]
  %v858 = vld [vmem:[%s4 + $0x17f8] sm:$0xff]
  %v859 = vld [vmem:[%s4 + $0x1800] sm:$0xff]
  %v860 = vld [vmem:[%s4 + $0x1808] sm:$0xff]
  %v861 = vld [vmem:[%s4 + $0x1810] sm:$0xff]
  %v862 = vld [vmem:[%s4 + $0x1818] sm:$0xff]
  %v863 = vld [vmem:[%s4 + $0x1820] sm:$0xff]
  %v864 = vld [vmem:[%s4 + $0x1828] sm:$0xff]
  %v865 = vld [vmem:[%s4 + $0x1830] sm:$0xff]
  %v866 = vld [vmem:[%s4 + $0x1838] sm:$0xff]
  %v867 = vld [vmem:[%s4 + $0x1840] sm:$0xff]
  %v868 = vld [vmem:[%s4 + $0x1848] sm:$0xff]
  %v869 = vld [vmem:[%s4 + $0x1850] sm:$0xff]
  %v870 = vld [vmem:[%s4 + $0x1858] sm:$0xff]
  %v871 = vld [vmem:[%s4 + $0x1860] sm:$0xff]
  %v872 = vld [vmem:[%s4 + $0x1868] sm:$0xff]
  %v873 = vld [vmem:[%s4 + $0x1870] sm:$0xff]
  %v874 = vld [vmem:[%s4 + $0x1878] sm:$0xff]
  %v875 = vld [vmem:[%s4 + $0x1880] sm:$0xff]
  %v876 = vld [vmem:[%s4 + $0x1888] sm:$0xff]
  %v877 = vld [vmem:[%s4 + $0x1890] sm:$0xff]
  %v878 = vld [vmem:[%s4 + $0x1898] sm:$0xff]
  %v879 = vld [vmem:[%s4 + $0x18a0] sm:$0xff]
  %v880 = vld [vmem:[%s4 + $0x18a8] sm:$0xff]
  %v881 = vld [vmem:[%s4 + $0x18b0] sm:$0xff]
  %v882 = vld [vmem:[%s4 + $0x18b8] sm:$0xff]
  %v883 = vld [vmem:[%s4 + $0x18c0] sm:$0xff]
  %v884 = vld [vmem:[%s4 + $0x18c8] sm:$0xff]
  %v885 = vld [vmem:[%s4 + $0x18d0] sm:$0xff]
  %v886 = vld [vmem:[%s4 + $0x18d8] sm:$0xff]
  %v887 = vld [vmem:[%s4 + $0x18e0] sm:$0xff]
  %v888 = vld [vmem:[%s4 + $0x18e8] sm:$0xff]
  %v889 = vld [vmem:[%s4 + $0x18f0] sm:$0xff]
  %v890 = vld [vmem:[%s4 + $0x18f8] sm:$0xff]
  %v891 = vld [vmem:[%s4 + $0x1900] sm:$0xff]
  %v892 = vld [vmem:[%s4 + $0x1908] sm:$0xff]
  %v893 = vld [vmem:[%s4 + $0x1910] sm:$0xff]
  %v894 = vld [vmem:[%s4 + $0x1918] sm:$0xff]
  %v895 = vld [vmem:[%s4 + $0x1920] sm:$0xff]
  %v896 = vld [vmem:[%s4 + $0x1928] sm:$0xff]
  %v897 = vld [vmem:[%s4 + $0x1930] sm:$0xff]
  %v898 = vld [vmem:[%s4 + $0x1938] sm:$0xff]
  %v899 = vld [vmem:[%s4 + $0x1940] sm:$0xff]
  %v900 = vld [vmem:[%s4 + $0x1948] sm:$0xff]
  %v901 = vld [vmem:[%s4 + $0x1950] sm:$0xff]
  %v902 = vld [vmem:[%s4 + $0x1958] sm:$0xff]
  %v903 = vld [vmem:[%s4 + $0x1960] sm:$0xff]
  %v904 = vld [vmem:[%s4 + $0x1968] sm:$0xff]
  %v905 = vld [vmem:[%s4 + $0x1970] sm:$0xff]
  %v906 = vld [vmem:[%s4 + $0x1978] sm:$0xff]
  %v907 = vld [vmem:[%s4 + $0x1980] sm:$0xff]
  %v908 = vld [vmem:[%s4 + $0x1988] sm:$0xff]
  %v909 = vld [vmem:[%s4 + $0x1990] sm:$0xff]
  %v910 = vld [vmem:[%s4 + $0x1998] sm:$0xff]
  %v911 = vld [vmem:[%s4 + $0x19a0] sm:$0xff]
  %v912 = vld [vmem:[%s4 + $0x19a8] sm:$0xff]
  %v913 = vld [vmem:[%s4 + $0x19b0] sm:$0xff]
  %v914 = vld [vmem:[%s4 + $0x19b8] sm:$0xff]
  %v915 = vld [vmem:[%s4 + $0x19c0] sm:$0xff]
  %v916 = vld [vmem:[%s4 + $0x19c8] sm:$0xff]
  %v917 = vld [vmem:[%s4 + $0x19d0] sm:$0xff]
  %v918 = vld [vmem:[%s4 + $0x19d8] sm:$0xff]
  %v919 = vld [vmem:[%s4 + $0x19e0] sm:$0xff]
  %v920 = vld [vmem:[%s4 + $0x19e8] sm:$0xff]
  %v921 = vld [vmem:[%s4 + $0x19f0] sm:$0xff]
  %v922 = vld [vmem:[%s4 + $0x19f8] sm:$0xff]
  %v923 = vld [vmem:[%s4 + $0x1a00] sm:$0xff]
  %v924 = vld [vmem:[%s4 + $0x1a08] sm:$0xff]
  %v925 = vld [vmem:[%s4 + $0x1a10] sm:$0xff]
  %v926 = vld [vmem:[%s4 + $0x1a18] sm:$0xff]
  %v927 = vld [vmem:[%s4 + $0x1a20] sm:$0xff]
  %v928 = vld [vmem:[%s4 + $0x1a28] sm:$0xff]
  %v929 = vld [vmem:[%s4 + $0x1a30] sm:$0xff]
  %v930 = vld [vmem:[%s4 + $0x1a38] sm:$0xff]
  %v931 = vld [vmem:[%s4 + $0x1a40] sm:$0xff]
  %v932 = vld [vmem:[%s4 + $0x1a48] sm:$0xff]
  %v933 = vld [vmem:[%s4 + $0x1a50] sm:$0xff]
  %v934 = vld [vmem:[%s4 + $0x1a58] sm:$0xff]
  %v935 = vld [vmem:[%s4 + $0x1a60] sm:$0xff]
  %v936 = vld [vmem:[%s4 + $0x1a68] sm:$0xff]
  %v937 = vld [vmem:[%s4 + $0x1a70] sm:$0xff]
  %v938 = vld [vmem:[%s4 + $0x1a78] sm:$0xff]
  %v939 = vld [vmem:[%s4 + $0x1a80] sm:$0xff]
  %v940 = vld [vmem:[%s4 + $0x1a88] sm:$0xff]
  %v941 = vld [vmem:[%s4 + $0x1a90] sm:$0xff]
  %v942 = vld [vmem:[%s4 + $0x1a98] sm:$0xff]
  %v943 = vld [vmem:[%s4 + $0x1aa0] sm:$0xff]
  %v944 = vld [vmem:[%s4 + $0x1aa8] sm:$0xff]
  %v945 = vld [vmem:[%s4 + $0x1ab0] sm:$0xff]
  %v946 = vld [vmem:[%s4 + $0x1ab8] sm:$0xff]
  %v947 = vld [vmem:[%s4 + $0x1ac0] sm:$0xff]
  %v948 = vld [vmem:[%s4 + $0x1ac8] sm:$0xff]
  %v949 = vld [vmem:[%s4 + $0x1ad0] sm:$0xff]
  %v950 = vld [vmem:[%s4 + $0x1ad8] sm:$0xff]
  %v951 = vld [vmem:[%s4 + $0x1ae0] sm:$0xff]
  %v952 = vld [vmem:[%s4 + $0x1ae8] sm:$0xff]
  %v953 = vld [vmem:[%s4 + $0x1af0] sm:$0xff]
  %v954 = vld [vmem:[%s4 + $0x1af8] sm:$0xff]
  %v955 = vld [vmem:[%s4 + $0x1b00] sm:$0xff]
  %v956 = vld [vmem:[%s4 + $0x1b08] sm:$0xff]
  %v957 = vld [vmem:[%s4 + $0x1b10] sm:$0xff]
  %v958 = vld [vmem:[%s4 + $0x1b18] sm:$0xff]
  %v959 = vld [vmem:[%s4 + $0x1b20] sm:$0xff]
  %v960 = vld [vmem:[%s4 + $0x1b28] sm:$0xff]
  %v961 = vld [vmem:[%s4 + $0x1b30] sm:$0xff]
  %v962 = vld [vmem:[%s4 + $0x1b38] sm:$0xff]
  %v963 = vld [vmem:[%s4 + $0x1b40] sm:$0xff]
  %v964 = vld [vmem:[%s4 + $0x1b48] sm:$0xff]
  %v965 = vld [vmem:[%s4 + $0x1b50] sm:$0xff]
  %v966 = vld [vmem:[%s4 + $0x1b58] sm:$0xff]
  %v967 = vld [vmem:[%s4 + $0x1b60] sm:$0xff]
  %v968 = vld [vmem:[%s4 + $0x1b68] sm:$0xff]
  %v969 = vld [vmem:[%s4 + $0x1b70] sm:$0xff]
  %v970 = vld [vmem:[%s4 + $0x1b78] sm:$0xff]
  %v971 = vld [vmem:[%s4 + $0x1b80] sm:$0xff]
  %v972 = vld [vmem:[%s4 + $0x1b88] sm:$0xff]
  %v973 = vld [vmem:[%s4 + $0x1b90] sm:$0xff]
  %v974 = vld [vmem:[%s4 + $0x1b98] sm:$0xff]
  %v975 = vld [vmem:[%s4 + $0x1ba0] sm:$0xff]
  %v976 = vld [vmem:[%s4 + $0x1ba8] sm:$0xff]
  %v977 = vld [vmem:[%s4 + $0x1bb0] sm:$0xff]
  %v978 = vld [vmem:[%s4 + $0x1bb8] sm:$0xff]
  %v979 = vld [vmem:[%s4 + $0x1bc0] sm:$0xff]
  %v980 = vld [vmem:[%s4 + $0x1bc8] sm:$0xff]
  %v981 = vld [vmem:[%s4 + $0x1bd0] sm:$0xff]
  %v982 = vld [vmem:[%s4 + $0x1bd8] sm:$0xff]
  %v983 = vld [vmem:[%s4 + $0x1be0] sm:$0xff]
  %v984 = vld [vmem:[%s4 + $0x1be8] sm:$0xff]
  %v985 = vld [vmem:[%s4 + $0x1bf0] sm:$0xff]
  %v986 = vld [vmem:[%s4 + $0x1bf8] sm:$0xff]
  %v987 = vld [vmem:[%s4 + $0x1c00] sm:$0xff]
  %v988 = vld [vmem:[%s4 + $0x1c08] sm:$0xff]
  %v989 = vld [vmem:[%s4 + $0x1c10] sm:$0xff]
  %v990 = vld [vmem:[%s4 + $0x1c18] sm:$0xff]
  %v991 = vld [vmem:[%s4 + $0x1c20] sm:$0xff]
  %v992 = vld [vmem:[%s4 + $0x1c28] sm:$0xff]
  %v993 = vld [vmem:[%s4 + $0x1c30] sm:$0xff]
  %v994 = vld [vmem:[%s4 + $0x1c38] sm:$0xff]
  %v995 = vld [vmem:[%s4 + $0x1c40] sm:$0xff]
  %v996 = vld [vmem:[%s4 + $0x1c48] sm:$0xff]
  %v997 = vld [vmem:[%s4 + $0x1c50] sm:$0xff]
  %v998 = vld [vmem:[%s4 + $0x1c58] sm:$0xff]
  %v999 = vld [vmem:[%s4 + $0x1c60] sm:$0xff]
  %v1000 = vld [vmem:[%s4 + $0x1c68] sm:$0xff]
  %v1001 = vld [vmem:[%s4 + $0x1c70] sm:$0xff]
  %v1002 = vld [vmem:[%s4 + $0x1c78] sm:$0xff]
  %v1003 = vld [vmem:[%s4 + $0x1c80] sm:$0xff]
  %v1004 = vld [vmem:[%s4 + $0x1c88] sm:$0xff]
  %v1005 = vld [vmem:[%s4 + $0x1c90] sm:$0xff]
  %v1006 = vld [vmem:[%s4 + $0x1c98] sm:$0xff]
  %v1007 = vld [vmem:[%s4 + $0x1ca0] sm:$0xff]
  %v1008 = vld [vmem:[%s4 + $0x1ca8] sm:$0xff]
  %v1009 = vld [vmem:[%s4 + $0x1cb0] sm:$0xff]
  %v1010 = vld [vmem:[%s4 + $0x1cb8] sm:$0xff]
  %v1011 = vld [vmem:[%s4 + $0x1cc0] sm:$0xff]
  %v1012 = vld [vmem:[%s4 + $0x1cc8] sm:$0xff]
  %v1013 = vld [vmem:[%s4 + $0x1cd0] sm:$0xff]
  %v1014 = vld [vmem:[%s4 + $0x1cd8] sm:$0xff]
  %v1015 = vld [vmem:[%s4 + $0x1ce0] sm:$0xff]
  %v1016 = vld [vmem:[%s4 + $0x1ce8] sm:$0xff]
  %v1017 = vld [vmem:[%s4 + $0x1cf0] sm:$0xff]
  %v1018 = vld [vmem:[%s4 + $0x1cf8] sm:$0xff]
  %v1019 = vld [vmem:[%s4 + $0x1d00] sm:$0xff]
  %v1020 = vld [vmem:[%s4 + $0x1d08] sm:$0xff]
  %v1021 = vld [vmem:[%s4 + $0x1d10] sm:$0xff]
  %v1022 = vld [vmem:[%s4 + $0x1d18] sm:$0xff]
  %v1023 = vld [vmem:[%s4 + $0x1d20] sm:$0xff]
  %v1024 = vld [vmem:[%s4 + $0x1d28] sm:$0xff]
  %v1025 = vld [vmem:[%s4 + $0x1d30] sm:$0xff]
  %v1026 = vld [vmem:[%s4 + $0x1d38] sm:$0xff]
  %v1027 = vld [vmem:[%s4 + $0x1d40] sm:$0xff]
  %v1028 = vld [vmem:[%s4 + $0x1d48] sm:$0xff]
  %v1029 = vld [vmem:[%s4 + $0x1d50] sm:$0xff]
  %v1030 = vld [vmem:[%s4 + $0x1d58] sm:$0xff]
  %v1031 = vld [vmem:[%s4 + $0x1d60] sm:$0xff]
  %v1032 = vld [vmem:[%s4 + $0x1d68] sm:$0xff]
  %v1033 = vld [vmem:[%s4 + $0x1d70] sm:$0xff]
  %v1034 = vld [vmem:[%s4 + $0x1d78] sm:$0xff]
  %v1035 = vld [vmem:[%s4 + $0x1d80] sm:$0xff]
  %v1036 = vld [vmem:[%s4 + $0x1d88] sm:$0xff]
  %v1037 = vld [vmem:[%s4 + $0x1d90] sm:$0xff]
  %v1038 = vld [vmem:[%s4 + $0x1d98] sm:$0xff]
  %v1039 = vld [vmem:[%s4 + $0x1da0] sm:$0xff]
  %v1040 = vld [vmem:[%s4 + $0x1da8] sm:$0xff]
  %v1041 = vld [vmem:[%s4 + $0x1db0] sm:$0xff]
  %v1042 = vld [vmem:[%s4 + $0x1db8] sm:$0xff]
  %v1043 = vld [vmem:[%s4 + $0x1dc0] sm:$0xff]
  %v1044 = vld [vmem:[%s4 + $0x1dc8] sm:$0xff]
  %v1045 = vld [vmem:[%s4 + $0x1dd0] sm:$0xff]
  %v1046 = vld [vmem:[%s4 + $0x1dd8] sm:$0xff]
  %v1047 = vld [vmem:[%s4 + $0x1de0] sm:$0xff]
  %v1048 = vld [vmem:[%s4 + $0x1de8] sm:$0xff]
  %v1049 = vld [vmem:[%s4 + $0x1df0] sm:$0xff]
  %v1050 = vld [vmem:[%s4 + $0x1df8] sm:$0xff]
  %v1051 = vld [vmem:[%s4 + $0x1e00] sm:$0xff]
  %v1052 = vld [vmem:[%s4 + $0x1e08] sm:$0xff]
  %v1053 = vld [vmem:[%s4 + $0x1e10] sm:$0xff]
  %v1054 = vld [vmem:[%s4 + $0x1e18] sm:$0xff]
  %v1055 = vld [vmem:[%s4 + $0x1e20] sm:$0xff]
  %v1056 = vld [vmem:[%s4 + $0x1e28] sm:$0xff]
  %v1057 = vld [vmem:[%s4 + $0x1e30] sm:$0xff]
  %v1058 = vld [vmem:[%s4 + $0x1e38] sm:$0xff]
  %v1059 = vld [vmem:[%s4 + $0x1e40] sm:$0xff]
  %v1060 = vld [vmem:[%s4 + $0x1e48] sm:$0xff]
  %v1061 = vld [vmem:[%s4 + $0x1e50] sm:$0xff]
  %v1062 = vld [vmem:[%s4 + $0x1e58] sm:$0xff]
  %v1063 = vld [vmem:[%s4 + $0x1e60] sm:$0xff]
  %v1064 = vld [vmem:[%s4 + $0x1e68] sm:$0xff]
  %v1065 = vld [vmem:[%s4 + $0x1e70] sm:$0xff]
  %v1066 = vld [vmem:[%s4 + $0x1e78] sm:$0xff]
  %v1067 = vld [vmem:[%s4 + $0x1e80] sm:$0xff]
  %v1068 = vld [vmem:[%s4 + $0x1e88] sm:$0xff]
  %v1069 = vld [vmem:[%s4 + $0x1e90] sm:$0xff]
  %v1070 = vld [vmem:[%s4 + $0x1e98] sm:$0xff]
  %v1071 = vld [vmem:[%s4 + $0x1ea0] sm:$0xff]
  %v1072 = vld [vmem:[%s4 + $0x1ea8] sm:$0xff]
  %v1073 = vld [vmem:[%s4 + $0x1eb0] sm:$0xff]
  %v1074 = vld [vmem:[%s4 + $0x1eb8] sm:$0xff]
  %v1075 = vld [vmem:[%s4 + $0x1ec0] sm:$0xff]
  %v1076 = vld [vmem:[%s4 + $0x1ec8] sm:$0xff]
  %v1077 = vld [vmem:[%s4 + $0x1ed0] sm:$0xff]
  %v1078 = vld [vmem:[%s4 + $0x1ed8] sm:$0xff]
  %v1079 = vld [vmem:[%s4 + $0x1ee0] sm:$0xff]
  %v1080 = vld [vmem:[%s4 + $0x1ee8] sm:$0xff]
  %v1081 = vld [vmem:[%s4 + $0x1ef0] sm:$0xff]
  %v1082 = vld [vmem:[%s4 + $0x1ef8] sm:$0xff]
  %v1083 = vld [vmem:[%s4 + $0x1f00] sm:$0xff]
  %v1084 = vld [vmem:[%s4 + $0x1f08] sm:$0xff]
  %v1085 = vld [vmem:[%s4 + $0x1f10] sm:$0xff]
  %v1086 = vld [vmem:[%s4 + $0x1f18] sm:$0xff]
  %v1087 = vld [vmem:[%s4 + $0x1f20] sm:$0xff]
  %v1088 = vld [vmem:[%s4 + $0x1f28] sm:$0xff]
  %v1089 = vld [vmem:[%s4 + $0x1f30] sm:$0xff]
  %v1090 = vld [vmem:[%s4 + $0x1f38] sm:$0xff]
  %v1091 = vld [vmem:[%s4 + $0x1f40] sm:$0xff]
  %v1092 = vld [vmem:[%s4 + $0x1f48] sm:$0xff]
  %v1093 = vld [vmem:[%s4 + $0x1f50] sm:$0xff]
  %v1094 = vld [vmem:[%s4 + $0x1f58] sm:$0xff]
  %v1095 = vld [vmem:[%s4 + $0x1f60] sm:$0xff]
  %v1096 = vld [vmem:[%s4 + $0x1f68] sm:$0xff]
  %v1097 = vld [vmem:[%s4 + $0x1f70] sm:$0xff]
  %v1098 = vld [vmem:[%s4 + $0x1f78] sm:$0xff]
  %v1099 = vld [vmem:[%s4 + $0x1f80] sm:$0xff]
  %v1100 = vld [vmem:[%s4 + $0x1f88] sm:$0xff]
  %v1101 = vld [vmem:[%s4 + $0x1f90] sm:$0xff]
  %v1102 = vld [vmem:[%s4 + $0x1f98] sm:$0xff]
  %v1103 = vld [vmem:[%s4 + $0x1fa0] sm:$0xff]
  %v1104 = vld [vmem:[%s4 + $0x1fa8] sm:$0xff]
  %v1105 = vld [vmem:[%s4 + $0x1fb0] sm:$0xff]
  %v1106 = vld [vmem:[%s4 + $0x1fb8] sm:$0xff]
  %v1107 = vld [vmem:[%s4 + $0x1fc0] sm:$0xff]
  %v1108 = vld [vmem:[%s4 + $0x1fc8] sm:$0xff]
  %v1109 = vld [vmem:[%s4 + $0x1fd0] sm:$0xff]
  %v1110 = vld [vmem:[%s4 + $0x1fd8] sm:$0xff]
  %v1111 = vld [vmem:[%s4 + $0x1fe0] sm:$0xff]
  %v1112 = vld [vmem:[%s4 + $0x1fe8] sm:$0xff]
  %v1113 = vld [vmem:[%s4 + $0x1ff0] sm:$0xff]
  %v1114 = vld [vmem:[%s4 + $0x1ff8] sm:$0xff]
  %v1115 = vpack.c.bf16 %v58, %v57
  %v1116 = vld [vmem:[%s5] sm:$0xff]
  %v1117 = vld [vmem:[%s5 + $0x8] sm:$0xff]
  %v1118 = vld [vmem:[%s5 + $0x10] sm:$0xff]
  %v1119 = vld [vmem:[%s5 + $0x18] sm:$0xff]
  %v1120 = vld [vmem:[%s5 + $0x20] sm:$0xff]
  %v1121 = vld [vmem:[%s5 + $0x28] sm:$0xff]
  %v1122 = vld [vmem:[%s5 + $0x30] sm:$0xff]
  %v1123 = vld [vmem:[%s5 + $0x38] sm:$0xff]
  %v1132 = vunpack.c.l.b16 %v1116
  %v1133 = vunpack.c.h.b16 %v1116
  %v1134 = vunpack.c.l.b16 %v1117
  %v1135 = vunpack.c.h.b16 %v1117
  %v1136 = vunpack.c.l.b16 %v1118
  %v1137 = vunpack.c.h.b16 %v1118
  %v1138 = vunpack.c.l.b16 %v1119
  %v1139 = vunpack.c.h.b16 %v1119
  %v1140 = vunpack.c.l.b16 %v1120
  %v1141 = vunpack.c.h.b16 %v1120
  %v1142 = vunpack.c.l.b16 %v1121
  %v1143 = vunpack.c.h.b16 %v1121
  %v1144 = vunpack.c.l.b16 %v1122
  %v1145 = vunpack.c.h.b16 %v1122
  %v1146 = vunpack.c.l.b16 %v1123
  %v1147 = vunpack.c.h.b16 %v1123
  %v1148 = vpack.c.b16 %v1136, %v1132
  %v1149 = vpack.c.b16 %v1137, %v1133
  %v1150 = vpack.c.b16 %v1138, %v1134
  %v1151 = vpack.c.b16 %v1139, %v1135
  %v1152 = vpack.c.b16 %v1144, %v1140
  %v1153 = vpack.c.b16 %v1145, %v1141
  %v1154 = vpack.c.b16 %v1146, %v1142
  %v1155 = vpack.c.b16 %v1147, %v1143
  %vm1164 = vcmask 261120
  %v1166 = vsel %vm1164, %v1115, 0
  %1168 = vmatpush.bf16.msra.mxu0 0
  %1169 = vmatpush.bf16.msra.mxu0 0
  %1170 = vmatpush.bf16.msra.mxu0 0
  %1171 = vmatpush.bf16.msra.mxu0 0
  %1172 = vmatpush.bf16.msra.mxu0 0
  %1173 = vmatpush.bf16.msra.mxu0 0
  %1174 = vmatpush.bf16.msra.mxu0 %v1152
  %1175 = vmatpush.bf16.msra.mxu0 %v1148
  %1176 = vmatmul.bf16.gmra.mxu0 %v1166
  %v1177 = vpop.f32.mrf.mxu0
  %v1178 = vadd.f32 0.0, %v1177
  %v1179 = vpop.f32.mrf.mxu0
  %v1180 = vadd.f32 0.0, %v1179
  %1181 = vdwg.mxu0
  %1182 = vmatpush.bf16.msra.mxu0 0
  %1183 = vmatpush.bf16.msra.mxu0 0
  %1184 = vmatpush.bf16.msra.mxu0 0
  %1185 = vmatpush.bf16.msra.mxu0 0
  %1186 = vmatpush.bf16.msra.mxu0 0
  %1187 = vmatpush.bf16.msra.mxu0 0
  %1188 = vmatpush.bf16.msra.mxu0 %v1153
  %1189 = vmatpush.bf16.msra.mxu0 %v1149
  %1190 = vmatmul.bf16.gmra.mxu0 %v1166
  %v1191 = vpop.f32.mrf.mxu0
  %v1192 = vadd.f32 0.0, %v1191
  %v1193 = vpop.f32.mrf.mxu0
  %v1194 = vadd.f32 0.0, %v1193
  %1195 = vdwg.mxu0
  %1196 = vmatpush.bf16.msra.mxu0 0
  %1197 = vmatpush.bf16.msra.mxu0 0
  %1198 = vmatpush.bf16.msra.mxu0 0
  %1199 = vmatpush.bf16.msra.mxu0 0
  %1200 = vmatpush.bf16.msra.mxu0 0
  %1201 = vmatpush.bf16.msra.mxu0 0
  %1202 = vmatpush.bf16.msra.mxu0 %v1154
  %1203 = vmatpush.bf16.msra.mxu0 %v1150
  %1204 = vmatmul.bf16.gmra.mxu0 %v1166
  %v1205 = vpop.f32.mrf.mxu0
  %v1206 = vadd.f32 0.0, %v1205
  %v1207 = vpop.f32.mrf.mxu0
  %v1208 = vadd.f32 0.0, %v1207
  %1209 = vdwg.mxu0
  %1210 = vmatpush.bf16.msra.mxu0 0
  %1211 = vmatpush.bf16.msra.mxu0 0
  %1212 = vmatpush.bf16.msra.mxu0 0
  %1213 = vmatpush.bf16.msra.mxu0 0
  %1214 = vmatpush.bf16.msra.mxu0 0
  %1215 = vmatpush.bf16.msra.mxu0 0
  %1216 = vmatpush.bf16.msra.mxu0 %v1155
  %1217 = vmatpush.bf16.msra.mxu0 %v1151
  %1218 = vmatmul.bf16.gmra.mxu0 %v1166
  %v1219 = vpop.f32.mrf.mxu0
  %v1220 = vadd.f32 0.0, %v1219
  %v1221 = vpop.f32.mrf.mxu0
  %v1222 = vadd.f32 0.0, %v1221
  %1223 = vdwg.mxu0
  %v1256 = vunpack.c.l.b16 %v59
  %v1257 = vunpack.c.h.b16 %v59
  %v1258 = vunpack.c.l.b16 %v60
  %v1259 = vunpack.c.h.b16 %v60
  %v1260 = vunpack.c.l.b16 %v61
  %v1261 = vunpack.c.h.b16 %v61
  %v1262 = vunpack.c.l.b16 %v62
  %v1263 = vunpack.c.h.b16 %v62
  %v1264 = vunpack.c.l.b16 %v63
  %v1265 = vunpack.c.h.b16 %v63
  %v1266 = vunpack.c.l.b16 %v64
  %v1267 = vunpack.c.h.b16 %v64
  %v1268 = vunpack.c.l.b16 %v65
  %v1269 = vunpack.c.h.b16 %v65
  %v1270 = vunpack.c.l.b16 %v66
  %v1271 = vunpack.c.h.b16 %v66
  %v1272 = vunpack.c.l.b16 %v67
  %v1273 = vunpack.c.h.b16 %v67
  %v1274 = vunpack.c.l.b16 %v68
  %v1275 = vunpack.c.h.b16 %v68
  %v1276 = vunpack.c.l.b16 %v69
  %v1277 = vunpack.c.h.b16 %v69
  %v1278 = vunpack.c.l.b16 %v70
  %v1279 = vunpack.c.h.b16 %v70
  %v1280 = vunpack.c.l.b16 %v71
  %v1281 = vunpack.c.h.b16 %v71
  %v1282 = vunpack.c.l.b16 %v72
  %v1283 = vunpack.c.h.b16 %v72
  %v1284 = vunpack.c.l.b16 %v73
  %v1285 = vunpack.c.h.b16 %v73
  %v1286 = vunpack.c.l.b16 %v74
  %v1287 = vunpack.c.h.b16 %v74
  %v1288 = vunpack.c.l.b16 %v75
  %v1289 = vunpack.c.h.b16 %v75
  %v1290 = vunpack.c.l.b16 %v76
  %v1291 = vunpack.c.h.b16 %v76
  %v1292 = vunpack.c.l.b16 %v77
  %v1293 = vunpack.c.h.b16 %v77
  %v1294 = vunpack.c.l.b16 %v78
  %v1295 = vunpack.c.h.b16 %v78
  %v1296 = vunpack.c.l.b16 %v79
  %v1297 = vunpack.c.h.b16 %v79
  %v1298 = vunpack.c.l.b16 %v80
  %v1299 = vunpack.c.h.b16 %v80
  %v1300 = vunpack.c.l.b16 %v81
  %v1301 = vunpack.c.h.b16 %v81
  %v1302 = vunpack.c.l.b16 %v82
  %v1303 = vunpack.c.h.b16 %v82
  %v1304 = vunpack.c.l.b16 %v83
  %v1305 = vunpack.c.h.b16 %v83
  %v1306 = vunpack.c.l.b16 %v84
  %v1307 = vunpack.c.h.b16 %v84
  %v1308 = vunpack.c.l.b16 %v85
  %v1309 = vunpack.c.h.b16 %v85
  %v1310 = vunpack.c.l.b16 %v86
  %v1311 = vunpack.c.h.b16 %v86
  %v1312 = vunpack.c.l.b16 %v87
  %v1313 = vunpack.c.h.b16 %v87
  %v1314 = vunpack.c.l.b16 %v88
  %v1315 = vunpack.c.h.b16 %v88
  %v1316 = vunpack.c.l.b16 %v89
  %v1317 = vunpack.c.h.b16 %v89
  %v1318 = vunpack.c.l.b16 %v90
  %v1319 = vunpack.c.h.b16 %v90
  %v1320 = vpack.c.b16 %v1288, %v1256
  %v1321 = vpack.c.b16 %v1289, %v1257
  %v1322 = vpack.c.b16 %v1290, %v1258
  %v1323 = vpack.c.b16 %v1291, %v1259
  %v1324 = vpack.c.b16 %v1292, %v1260
  %v1325 = vpack.c.b16 %v1293, %v1261
  %v1326 = vpack.c.b16 %v1294, %v1262
  %v1327 = vpack.c.b16 %v1295, %v1263
  %v1328 = vpack.c.b16 %v1296, %v1264
  %v1329 = vpack.c.b16 %v1297, %v1265
  %v1330 = vpack.c.b16 %v1298, %v1266
  %v1331 = vpack.c.b16 %v1299, %v1267
  %v1332 = vpack.c.b16 %v1300, %v1268
  %v1333 = vpack.c.b16 %v1301, %v1269
  %v1334 = vpack.c.b16 %v1302, %v1270
  %v1335 = vpack.c.b16 %v1303, %v1271
  %v1336 = vpack.c.b16 %v1304, %v1272
  %v1337 = vpack.c.b16 %v1305, %v1273
  %v1338 = vpack.c.b16 %v1306, %v1274
  %v1339 = vpack.c.b16 %v1307, %v1275
  %v1340 = vpack.c.b16 %v1308, %v1276
  %v1341 = vpack.c.b16 %v1309, %v1277
  %v1342 = vpack.c.b16 %v1310, %v1278
  %v1343 = vpack.c.b16 %v1311, %v1279
  %v1344 = vpack.c.b16 %v1312, %v1280
  %v1345 = vpack.c.b16 %v1313, %v1281
  %v1346 = vpack.c.b16 %v1314, %v1282
  %v1347 = vpack.c.b16 %v1315, %v1283
  %v1348 = vpack.c.b16 %v1316, %v1284
  %v1349 = vpack.c.b16 %v1317, %v1285
  %v1350 = vpack.c.b16 %v1318, %v1286
  %v1351 = vpack.c.b16 %v1319, %v1287
  %v2408 = vunpack.c.l.b16 %v91
  %v2409 = vunpack.c.h.b16 %v91
  %v2410 = vunpack.c.l.b16 %v92
  %v2411 = vunpack.c.h.b16 %v92
  %v2412 = vunpack.c.l.b16 %v93
  %v2413 = vunpack.c.h.b16 %v93
  %v2414 = vunpack.c.l.b16 %v94
  %v2415 = vunpack.c.h.b16 %v94
  %v2416 = vunpack.c.l.b16 %v95
  %v2417 = vunpack.c.h.b16 %v95
  %v2418 = vunpack.c.l.b16 %v96
  %v2419 = vunpack.c.h.b16 %v96
  %v2420 = vunpack.c.l.b16 %v97
  %v2421 = vunpack.c.h.b16 %v97
  %v2422 = vunpack.c.l.b16 %v98
  %v2423 = vunpack.c.h.b16 %v98
  %v2424 = vunpack.c.l.b16 %v99
  %v2425 = vunpack.c.h.b16 %v99
  %v2426 = vunpack.c.l.b16 %v100
  %v2427 = vunpack.c.h.b16 %v100
  %v2428 = vunpack.c.l.b16 %v101
  %v2429 = vunpack.c.h.b16 %v101
  %v2430 = vunpack.c.l.b16 %v102
  %v2431 = vunpack.c.h.b16 %v102
  %v2432 = vunpack.c.l.b16 %v103
  %v2433 = vunpack.c.h.b16 %v103
  %v2434 = vunpack.c.l.b16 %v104
  %v2435 = vunpack.c.h.b16 %v104
  %v2436 = vunpack.c.l.b16 %v105
  %v2437 = vunpack.c.h.b16 %v105
  %v2438 = vunpack.c.l.b16 %v106
  %v2439 = vunpack.c.h.b16 %v106
  %v2440 = vunpack.c.l.b16 %v107
  %v2441 = vunpack.c.h.b16 %v107
  %v2442 = vunpack.c.l.b16 %v108
  %v2443 = vunpack.c.h.b16 %v108
  %v2444 = vunpack.c.l.b16 %v109
  %v2445 = vunpack.c.h.b16 %v109
  %v2446 = vunpack.c.l.b16 %v110
  %v2447 = vunpack.c.h.b16 %v110
  %v2448 = vunpack.c.l.b16 %v111
  %v2449 = vunpack.c.h.b16 %v111
  %v2450 = vunpack.c.l.b16 %v112
  %v2451 = vunpack.c.h.b16 %v112
  %v2452 = vunpack.c.l.b16 %v113
  %v2453 = vunpack.c.h.b16 %v113
  %v2454 = vunpack.c.l.b16 %v114
  %v2455 = vunpack.c.h.b16 %v114
  %v2456 = vunpack.c.l.b16 %v115
  %v2457 = vunpack.c.h.b16 %v115
  %v2458 = vunpack.c.l.b16 %v116
  %v2459 = vunpack.c.h.b16 %v116
  %v2460 = vunpack.c.l.b16 %v117
  %v2461 = vunpack.c.h.b16 %v117
  %v2462 = vunpack.c.l.b16 %v118
  %v2463 = vunpack.c.h.b16 %v118
  %v2464 = vunpack.c.l.b16 %v119
  %v2465 = vunpack.c.h.b16 %v119
  %v2466 = vunpack.c.l.b16 %v120
  %v2467 = vunpack.c.h.b16 %v120
  %v2468 = vunpack.c.l.b16 %v121
  %v2469 = vunpack.c.h.b16 %v121
  %v2470 = vunpack.c.l.b16 %v122
  %v2471 = vunpack.c.h.b16 %v122
  %v2472 = vunpack.c.l.b16 %v123
  %v2473 = vunpack.c.h.b16 %v123
  %v2474 = vunpack.c.l.b16 %v124
  %v2475 = vunpack.c.h.b16 %v124
  %v2476 = vunpack.c.l.b16 %v125
  %v2477 = vunpack.c.h.b16 %v125
  %v2478 = vunpack.c.l.b16 %v126
  %v2479 = vunpack.c.h.b16 %v126
  %v2480 = vunpack.c.l.b16 %v127
  %v2481 = vunpack.c.h.b16 %v127
  %v2482 = vunpack.c.l.b16 %v128
  %v2483 = vunpack.c.h.b16 %v128
  %v2484 = vunpack.c.l.b16 %v129
  %v2485 = vunpack.c.h.b16 %v129
  %v2486 = vunpack.c.l.b16 %v130
  %v2487 = vunpack.c.h.b16 %v130
  %v2488 = vunpack.c.l.b16 %v131
  %v2489 = vunpack.c.h.b16 %v131
  %v2490 = vunpack.c.l.b16 %v132
  %v2491 = vunpack.c.h.b16 %v132
  %v2492 = vunpack.c.l.b16 %v133
  %v2493 = vunpack.c.h.b16 %v133
  %v2494 = vunpack.c.l.b16 %v134
  %v2495 = vunpack.c.h.b16 %v134
  %v2496 = vunpack.c.l.b16 %v135
  %v2497 = vunpack.c.h.b16 %v135
  %v2498 = vunpack.c.l.b16 %v136
  %v2499 = vunpack.c.h.b16 %v136
  %v2500 = vunpack.c.l.b16 %v137
  %v2501 = vunpack.c.h.b16 %v137
  %v2502 = vunpack.c.l.b16 %v138
  %v2503 = vunpack.c.h.b16 %v138
  %v2504 = vunpack.c.l.b16 %v139
  %v2505 = vunpack.c.h.b16 %v139
  %v2506 = vunpack.c.l.b16 %v140
  %v2507 = vunpack.c.h.b16 %v140
  %v2508 = vunpack.c.l.b16 %v141
  %v2509 = vunpack.c.h.b16 %v141
  %v2510 = vunpack.c.l.b16 %v142
  %v2511 = vunpack.c.h.b16 %v142
  %v2512 = vunpack.c.l.b16 %v143
  %v2513 = vunpack.c.h.b16 %v143
  %v2514 = vunpack.c.l.b16 %v144
  %v2515 = vunpack.c.h.b16 %v144
  %v2516 = vunpack.c.l.b16 %v145
  %v2517 = vunpack.c.h.b16 %v145
  %v2518 = vunpack.c.l.b16 %v146
  %v2519 = vunpack.c.h.b16 %v146
  %v2520 = vunpack.c.l.b16 %v147
  %v2521 = vunpack.c.h.b16 %v147
  %v2522 = vunpack.c.l.b16 %v148
  %v2523 = vunpack.c.h.b16 %v148
  %v2524 = vunpack.c.l.b16 %v149
  %v2525 = vunpack.c.h.b16 %v149
  %v2526 = vunpack.c.l.b16 %v150
  %v2527 = vunpack.c.h.b16 %v150
  %v2528 = vunpack.c.l.b16 %v151
  %v2529 = vunpack.c.h.b16 %v151
  %v2530 = vunpack.c.l.b16 %v152
  %v2531 = vunpack.c.h.b16 %v152
  %v2532 = vunpack.c.l.b16 %v153
  %v2533 = vunpack.c.h.b16 %v153
  %v2534 = vunpack.c.l.b16 %v154
  %v2535 = vunpack.c.h.b16 %v154
  %v2536 = vunpack.c.l.b16 %v155
  %v2537 = vunpack.c.h.b16 %v155
  %v2538 = vunpack.c.l.b16 %v156
  %v2539 = vunpack.c.h.b16 %v156
  %v2540 = vunpack.c.l.b16 %v157
  %v2541 = vunpack.c.h.b16 %v157
  %v2542 = vunpack.c.l.b16 %v158
  %v2543 = vunpack.c.h.b16 %v158
  %v2544 = vunpack.c.l.b16 %v159
  %v2545 = vunpack.c.h.b16 %v159
  %v2546 = vunpack.c.l.b16 %v160
  %v2547 = vunpack.c.h.b16 %v160
  %v2548 = vunpack.c.l.b16 %v161
  %v2549 = vunpack.c.h.b16 %v161
  %v2550 = vunpack.c.l.b16 %v162
  %v2551 = vunpack.c.h.b16 %v162
  %v2552 = vunpack.c.l.b16 %v163
  %v2553 = vunpack.c.h.b16 %v163
  %v2554 = vunpack.c.l.b16 %v164
  %v2555 = vunpack.c.h.b16 %v164
  %v2556 = vunpack.c.l.b16 %v165
  %v2557 = vunpack.c.h.b16 %v165
  %v2558 = vunpack.c.l.b16 %v166
  %v2559 = vunpack.c.h.b16 %v166
  %v2560 = vunpack.c.l.b16 %v167
  %v2561 = vunpack.c.h.b16 %v167
  %v2562 = vunpack.c.l.b16 %v168
  %v2563 = vunpack.c.h.b16 %v168
  %v2564 = vunpack.c.l.b16 %v169
  %v2565 = vunpack.c.h.b16 %v169
  %v2566 = vunpack.c.l.b16 %v170
  %v2567 = vunpack.c.h.b16 %v170
  %v2568 = vunpack.c.l.b16 %v171
  %v2569 = vunpack.c.h.b16 %v171
  %v2570 = vunpack.c.l.b16 %v172
  %v2571 = vunpack.c.h.b16 %v172
  %v2572 = vunpack.c.l.b16 %v173
  %v2573 = vunpack.c.h.b16 %v173
  %v2574 = vunpack.c.l.b16 %v174
  %v2575 = vunpack.c.h.b16 %v174
  %v2576 = vunpack.c.l.b16 %v175
  %v2577 = vunpack.c.h.b16 %v175
  %v2578 = vunpack.c.l.b16 %v176
  %v2579 = vunpack.c.h.b16 %v176
  %v2580 = vunpack.c.l.b16 %v177
  %v2581 = vunpack.c.h.b16 %v177
  %v2582 = vunpack.c.l.b16 %v178
  %v2583 = vunpack.c.h.b16 %v178
  %v2584 = vunpack.c.l.b16 %v179
  %v2585 = vunpack.c.h.b16 %v179
  %v2586 = vunpack.c.l.b16 %v180
  %v2587 = vunpack.c.h.b16 %v180
  %v2588 = vunpack.c.l.b16 %v181
  %v2589 = vunpack.c.h.b16 %v181
  %v2590 = vunpack.c.l.b16 %v182
  %v2591 = vunpack.c.h.b16 %v182
  %v2592 = vunpack.c.l.b16 %v183
  %v2593 = vunpack.c.h.b16 %v183
  %v2594 = vunpack.c.l.b16 %v184
  %v2595 = vunpack.c.h.b16 %v184
  %v2596 = vunpack.c.l.b16 %v185
  %v2597 = vunpack.c.h.b16 %v185
  %v2598 = vunpack.c.l.b16 %v186
  %v2599 = vunpack.c.h.b16 %v186
  %v2600 = vunpack.c.l.b16 %v187
  %v2601 = vunpack.c.h.b16 %v187
  %v2602 = vunpack.c.l.b16 %v188
  %v2603 = vunpack.c.h.b16 %v188
  %v2604 = vunpack.c.l.b16 %v189
  %v2605 = vunpack.c.h.b16 %v189
  %v2606 = vunpack.c.l.b16 %v190
  %v2607 = vunpack.c.h.b16 %v190
  %v2608 = vunpack.c.l.b16 %v191
  %v2609 = vunpack.c.h.b16 %v191
  %v2610 = vunpack.c.l.b16 %v192
  %v2611 = vunpack.c.h.b16 %v192
  %v2612 = vunpack.c.l.b16 %v193
  %v2613 = vunpack.c.h.b16 %v193
  %v2614 = vunpack.c.l.b16 %v194
  %v2615 = vunpack.c.h.b16 %v194
  %v2616 = vunpack.c.l.b16 %v195
  %v2617 = vunpack.c.h.b16 %v195
  %v2618 = vunpack.c.l.b16 %v196
  %v2619 = vunpack.c.h.b16 %v196
  %v2620 = vunpack.c.l.b16 %v197
  %v2621 = vunpack.c.h.b16 %v197
  %v2622 = vunpack.c.l.b16 %v198
  %v2623 = vunpack.c.h.b16 %v198
  %v2624 = vunpack.c.l.b16 %v199
  %v2625 = vunpack.c.h.b16 %v199
  %v2626 = vunpack.c.l.b16 %v200
  %v2627 = vunpack.c.h.b16 %v200
  %v2628 = vunpack.c.l.b16 %v201
  %v2629 = vunpack.c.h.b16 %v201
  %v2630 = vunpack.c.l.b16 %v202
  %v2631 = vunpack.c.h.b16 %v202
  %v2632 = vunpack.c.l.b16 %v203
  %v2633 = vunpack.c.h.b16 %v203
  %v2634 = vunpack.c.l.b16 %v204
  %v2635 = vunpack.c.h.b16 %v204
  %v2636 = vunpack.c.l.b16 %v205
  %v2637 = vunpack.c.h.b16 %v205
  %v2638 = vunpack.c.l.b16 %v206
  %v2639 = vunpack.c.h.b16 %v206
  %v2640 = vunpack.c.l.b16 %v207
  %v2641 = vunpack.c.h.b16 %v207
  %v2642 = vunpack.c.l.b16 %v208
  %v2643 = vunpack.c.h.b16 %v208
  %v2644 = vunpack.c.l.b16 %v209
  %v2645 = vunpack.c.h.b16 %v209
  %v2646 = vunpack.c.l.b16 %v210
  %v2647 = vunpack.c.h.b16 %v210
  %v2648 = vunpack.c.l.b16 %v211
  %v2649 = vunpack.c.h.b16 %v211
  %v2650 = vunpack.c.l.b16 %v212
  %v2651 = vunpack.c.h.b16 %v212
  %v2652 = vunpack.c.l.b16 %v213
  %v2653 = vunpack.c.h.b16 %v213
  %v2654 = vunpack.c.l.b16 %v214
  %v2655 = vunpack.c.h.b16 %v214
  %v2656 = vunpack.c.l.b16 %v215
  %v2657 = vunpack.c.h.b16 %v215
  %v2658 = vunpack.c.l.b16 %v216
  %v2659 = vunpack.c.h.b16 %v216
  %v2660 = vunpack.c.l.b16 %v217
  %v2661 = vunpack.c.h.b16 %v217
  %v2662 = vunpack.c.l.b16 %v218
  %v2663 = vunpack.c.h.b16 %v218
  %v2664 = vunpack.c.l.b16 %v219
  %v2665 = vunpack.c.h.b16 %v219
  %v2666 = vunpack.c.l.b16 %v220
  %v2667 = vunpack.c.h.b16 %v220
  %v2668 = vunpack.c.l.b16 %v221
  %v2669 = vunpack.c.h.b16 %v221
  %v2670 = vunpack.c.l.b16 %v222
  %v2671 = vunpack.c.h.b16 %v222
  %v2672 = vunpack.c.l.b16 %v223
  %v2673 = vunpack.c.h.b16 %v223
  %v2674 = vunpack.c.l.b16 %v224
  %v2675 = vunpack.c.h.b16 %v224
  %v2676 = vunpack.c.l.b16 %v225
  %v2677 = vunpack.c.h.b16 %v225
  %v2678 = vunpack.c.l.b16 %v226
  %v2679 = vunpack.c.h.b16 %v226
  %v2680 = vunpack.c.l.b16 %v227
  %v2681 = vunpack.c.h.b16 %v227
  %v2682 = vunpack.c.l.b16 %v228
  %v2683 = vunpack.c.h.b16 %v228
  %v2684 = vunpack.c.l.b16 %v229
  %v2685 = vunpack.c.h.b16 %v229
  %v2686 = vunpack.c.l.b16 %v230
  %v2687 = vunpack.c.h.b16 %v230
  %v2688 = vunpack.c.l.b16 %v231
  %v2689 = vunpack.c.h.b16 %v231
  %v2690 = vunpack.c.l.b16 %v232
  %v2691 = vunpack.c.h.b16 %v232
  %v2692 = vunpack.c.l.b16 %v233
  %v2693 = vunpack.c.h.b16 %v233
  %v2694 = vunpack.c.l.b16 %v234
  %v2695 = vunpack.c.h.b16 %v234
  %v2696 = vunpack.c.l.b16 %v235
  %v2697 = vunpack.c.h.b16 %v235
  %v2698 = vunpack.c.l.b16 %v236
  %v2699 = vunpack.c.h.b16 %v236
  %v2700 = vunpack.c.l.b16 %v237
  %v2701 = vunpack.c.h.b16 %v237
  %v2702 = vunpack.c.l.b16 %v238
  %v2703 = vunpack.c.h.b16 %v238
  %v2704 = vunpack.c.l.b16 %v239
  %v2705 = vunpack.c.h.b16 %v239
  %v2706 = vunpack.c.l.b16 %v240
  %v2707 = vunpack.c.h.b16 %v240
  %v2708 = vunpack.c.l.b16 %v241
  %v2709 = vunpack.c.h.b16 %v241
  %v2710 = vunpack.c.l.b16 %v242
  %v2711 = vunpack.c.h.b16 %v242
  %v2712 = vunpack.c.l.b16 %v243
  %v2713 = vunpack.c.h.b16 %v243
  %v2714 = vunpack.c.l.b16 %v244
  %v2715 = vunpack.c.h.b16 %v244
  %v2716 = vunpack.c.l.b16 %v245
  %v2717 = vunpack.c.h.b16 %v245
  %v2718 = vunpack.c.l.b16 %v246
  %v2719 = vunpack.c.h.b16 %v246
  %v2720 = vunpack.c.l.b16 %v247
  %v2721 = vunpack.c.h.b16 %v247
  %v2722 = vunpack.c.l.b16 %v248
  %v2723 = vunpack.c.h.b16 %v248
  %v2724 = vunpack.c.l.b16 %v249
  %v2725 = vunpack.c.h.b16 %v249
  %v2726 = vunpack.c.l.b16 %v250
  %v2727 = vunpack.c.h.b16 %v250
  %v2728 = vunpack.c.l.b16 %v251
  %v2729 = vunpack.c.h.b16 %v251
  %v2730 = vunpack.c.l.b16 %v252
  %v2731 = vunpack.c.h.b16 %v252
  %v2732 = vunpack.c.l.b16 %v253
  %v2733 = vunpack.c.h.b16 %v253
  %v2734 = vunpack.c.l.b16 %v254
  %v2735 = vunpack.c.h.b16 %v254
  %v2736 = vunpack.c.l.b16 %v255
  %v2737 = vunpack.c.h.b16 %v255
  %v2738 = vunpack.c.l.b16 %v256
  %v2739 = vunpack.c.h.b16 %v256
  %v2740 = vunpack.c.l.b16 %v257
  %v2741 = vunpack.c.h.b16 %v257
  %v2742 = vunpack.c.l.b16 %v258
  %v2743 = vunpack.c.h.b16 %v258
  %v2744 = vunpack.c.l.b16 %v259
  %v2745 = vunpack.c.h.b16 %v259
  %v2746 = vunpack.c.l.b16 %v260
  %v2747 = vunpack.c.h.b16 %v260
  %v2748 = vunpack.c.l.b16 %v261
  %v2749 = vunpack.c.h.b16 %v261
  %v2750 = vunpack.c.l.b16 %v262
  %v2751 = vunpack.c.h.b16 %v262
  %v2752 = vunpack.c.l.b16 %v263
  %v2753 = vunpack.c.h.b16 %v263
  %v2754 = vunpack.c.l.b16 %v264
  %v2755 = vunpack.c.h.b16 %v264
  %v2756 = vunpack.c.l.b16 %v265
  %v2757 = vunpack.c.h.b16 %v265
  %v2758 = vunpack.c.l.b16 %v266
  %v2759 = vunpack.c.h.b16 %v266
  %v2760 = vunpack.c.l.b16 %v267
  %v2761 = vunpack.c.h.b16 %v267
  %v2762 = vunpack.c.l.b16 %v268
  %v2763 = vunpack.c.h.b16 %v268
  %v2764 = vunpack.c.l.b16 %v269
  %v2765 = vunpack.c.h.b16 %v269
  %v2766 = vunpack.c.l.b16 %v270
  %v2767 = vunpack.c.h.b16 %v270
  %v2768 = vunpack.c.l.b16 %v271
  %v2769 = vunpack.c.h.b16 %v271
  %v2770 = vunpack.c.l.b16 %v272
  %v2771 = vunpack.c.h.b16 %v272
  %v2772 = vunpack.c.l.b16 %v273
  %v2773 = vunpack.c.h.b16 %v273
  %v2774 = vunpack.c.l.b16 %v274
  %v2775 = vunpack.c.h.b16 %v274
  %v2776 = vunpack.c.l.b16 %v275
  %v2777 = vunpack.c.h.b16 %v275
  %v2778 = vunpack.c.l.b16 %v276
  %v2779 = vunpack.c.h.b16 %v276
  %v2780 = vunpack.c.l.b16 %v277
  %v2781 = vunpack.c.h.b16 %v277
  %v2782 = vunpack.c.l.b16 %v278
  %v2783 = vunpack.c.h.b16 %v278
  %v2784 = vunpack.c.l.b16 %v279
  %v2785 = vunpack.c.h.b16 %v279
  %v2786 = vunpack.c.l.b16 %v280
  %v2787 = vunpack.c.h.b16 %v280
  %v2788 = vunpack.c.l.b16 %v281
  %v2789 = vunpack.c.h.b16 %v281
  %v2790 = vunpack.c.l.b16 %v282
  %v2791 = vunpack.c.h.b16 %v282
  %v2792 = vunpack.c.l.b16 %v283
  %v2793 = vunpack.c.h.b16 %v283
  %v2794 = vunpack.c.l.b16 %v284
  %v2795 = vunpack.c.h.b16 %v284
  %v2796 = vunpack.c.l.b16 %v285
  %v2797 = vunpack.c.h.b16 %v285
  %v2798 = vunpack.c.l.b16 %v286
  %v2799 = vunpack.c.h.b16 %v286
  %v2800 = vunpack.c.l.b16 %v287
  %v2801 = vunpack.c.h.b16 %v287
  %v2802 = vunpack.c.l.b16 %v288
  %v2803 = vunpack.c.h.b16 %v288
  %v2804 = vunpack.c.l.b16 %v289
  %v2805 = vunpack.c.h.b16 %v289
  %v2806 = vunpack.c.l.b16 %v290
  %v2807 = vunpack.c.h.b16 %v290
  %v2808 = vunpack.c.l.b16 %v291
  %v2809 = vunpack.c.h.b16 %v291
  %v2810 = vunpack.c.l.b16 %v292
  %v2811 = vunpack.c.h.b16 %v292
  %v2812 = vunpack.c.l.b16 %v293
  %v2813 = vunpack.c.h.b16 %v293
  %v2814 = vunpack.c.l.b16 %v294
  %v2815 = vunpack.c.h.b16 %v294
  %v2816 = vunpack.c.l.b16 %v295
  %v2817 = vunpack.c.h.b16 %v295
  %v2818 = vunpack.c.l.b16 %v296
  %v2819 = vunpack.c.h.b16 %v296
  %v2820 = vunpack.c.l.b16 %v297
  %v2821 = vunpack.c.h.b16 %v297
  %v2822 = vunpack.c.l.b16 %v298
  %v2823 = vunpack.c.h.b16 %v298
  %v2824 = vunpack.c.l.b16 %v299
  %v2825 = vunpack.c.h.b16 %v299
  %v2826 = vunpack.c.l.b16 %v300
  %v2827 = vunpack.c.h.b16 %v300
  %v2828 = vunpack.c.l.b16 %v301
  %v2829 = vunpack.c.h.b16 %v301
  %v2830 = vunpack.c.l.b16 %v302
  %v2831 = vunpack.c.h.b16 %v302
  %v2832 = vunpack.c.l.b16 %v303
  %v2833 = vunpack.c.h.b16 %v303
  %v2834 = vunpack.c.l.b16 %v304
  %v2835 = vunpack.c.h.b16 %v304
  %v2836 = vunpack.c.l.b16 %v305
  %v2837 = vunpack.c.h.b16 %v305
  %v2838 = vunpack.c.l.b16 %v306
  %v2839 = vunpack.c.h.b16 %v306
  %v2840 = vunpack.c.l.b16 %v307
  %v2841 = vunpack.c.h.b16 %v307
  %v2842 = vunpack.c.l.b16 %v308
  %v2843 = vunpack.c.h.b16 %v308
  %v2844 = vunpack.c.l.b16 %v309
  %v2845 = vunpack.c.h.b16 %v309
  %v2846 = vunpack.c.l.b16 %v310
  %v2847 = vunpack.c.h.b16 %v310
  %v2848 = vunpack.c.l.b16 %v311
  %v2849 = vunpack.c.h.b16 %v311
  %v2850 = vunpack.c.l.b16 %v312
  %v2851 = vunpack.c.h.b16 %v312
  %v2852 = vunpack.c.l.b16 %v313
  %v2853 = vunpack.c.h.b16 %v313
  %v2854 = vunpack.c.l.b16 %v314
  %v2855 = vunpack.c.h.b16 %v314
  %v2856 = vunpack.c.l.b16 %v315
  %v2857 = vunpack.c.h.b16 %v315
  %v2858 = vunpack.c.l.b16 %v316
  %v2859 = vunpack.c.h.b16 %v316
  %v2860 = vunpack.c.l.b16 %v317
  %v2861 = vunpack.c.h.b16 %v317
  %v2862 = vunpack.c.l.b16 %v318
  %v2863 = vunpack.c.h.b16 %v318
  %v2864 = vunpack.c.l.b16 %v319
  %v2865 = vunpack.c.h.b16 %v319
  %v2866 = vunpack.c.l.b16 %v320
  %v2867 = vunpack.c.h.b16 %v320
  %v2868 = vunpack.c.l.b16 %v321
  %v2869 = vunpack.c.h.b16 %v321
  %v2870 = vunpack.c.l.b16 %v322
  %v2871 = vunpack.c.h.b16 %v322
  %v2872 = vunpack.c.l.b16 %v323
  %v2873 = vunpack.c.h.b16 %v323
  %v2874 = vunpack.c.l.b16 %v324
  %v2875 = vunpack.c.h.b16 %v324
  %v2876 = vunpack.c.l.b16 %v325
  %v2877 = vunpack.c.h.b16 %v325
  %v2878 = vunpack.c.l.b16 %v326
  %v2879 = vunpack.c.h.b16 %v326
  %v2880 = vunpack.c.l.b16 %v327
  %v2881 = vunpack.c.h.b16 %v327
  %v2882 = vunpack.c.l.b16 %v328
  %v2883 = vunpack.c.h.b16 %v328
  %v2884 = vunpack.c.l.b16 %v329
  %v2885 = vunpack.c.h.b16 %v329
  %v2886 = vunpack.c.l.b16 %v330
  %v2887 = vunpack.c.h.b16 %v330
  %v2888 = vunpack.c.l.b16 %v331
  %v2889 = vunpack.c.h.b16 %v331
  %v2890 = vunpack.c.l.b16 %v332
  %v2891 = vunpack.c.h.b16 %v332
  %v2892 = vunpack.c.l.b16 %v333
  %v2893 = vunpack.c.h.b16 %v333
  %v2894 = vunpack.c.l.b16 %v334
  %v2895 = vunpack.c.h.b16 %v334
  %v2896 = vunpack.c.l.b16 %v335
  %v2897 = vunpack.c.h.b16 %v335
  %v2898 = vunpack.c.l.b16 %v336
  %v2899 = vunpack.c.h.b16 %v336
  %v2900 = vunpack.c.l.b16 %v337
  %v2901 = vunpack.c.h.b16 %v337
  %v2902 = vunpack.c.l.b16 %v338
  %v2903 = vunpack.c.h.b16 %v338
  %v2904 = vunpack.c.l.b16 %v339
  %v2905 = vunpack.c.h.b16 %v339
  %v2906 = vunpack.c.l.b16 %v340
  %v2907 = vunpack.c.h.b16 %v340
  %v2908 = vunpack.c.l.b16 %v341
  %v2909 = vunpack.c.h.b16 %v341
  %v2910 = vunpack.c.l.b16 %v342
  %v2911 = vunpack.c.h.b16 %v342
  %v2912 = vunpack.c.l.b16 %v343
  %v2913 = vunpack.c.h.b16 %v343
  %v2914 = vunpack.c.l.b16 %v344
  %v2915 = vunpack.c.h.b16 %v344
  %v2916 = vunpack.c.l.b16 %v345
  %v2917 = vunpack.c.h.b16 %v345
  %v2918 = vunpack.c.l.b16 %v346
  %v2919 = vunpack.c.h.b16 %v346
  %v2920 = vunpack.c.l.b16 %v347
  %v2921 = vunpack.c.h.b16 %v347
  %v2922 = vunpack.c.l.b16 %v348
  %v2923 = vunpack.c.h.b16 %v348
  %v2924 = vunpack.c.l.b16 %v349
  %v2925 = vunpack.c.h.b16 %v349
  %v2926 = vunpack.c.l.b16 %v350
  %v2927 = vunpack.c.h.b16 %v350
  %v2928 = vunpack.c.l.b16 %v351
  %v2929 = vunpack.c.h.b16 %v351
  %v2930 = vunpack.c.l.b16 %v352
  %v2931 = vunpack.c.h.b16 %v352
  %v2932 = vunpack.c.l.b16 %v353
  %v2933 = vunpack.c.h.b16 %v353
  %v2934 = vunpack.c.l.b16 %v354
  %v2935 = vunpack.c.h.b16 %v354
  %v2936 = vunpack.c.l.b16 %v355
  %v2937 = vunpack.c.h.b16 %v355
  %v2938 = vunpack.c.l.b16 %v356
  %v2939 = vunpack.c.h.b16 %v356
  %v2940 = vunpack.c.l.b16 %v357
  %v2941 = vunpack.c.h.b16 %v357
  %v2942 = vunpack.c.l.b16 %v358
  %v2943 = vunpack.c.h.b16 %v358
  %v2944 = vunpack.c.l.b16 %v359
  %v2945 = vunpack.c.h.b16 %v359
  %v2946 = vunpack.c.l.b16 %v360
  %v2947 = vunpack.c.h.b16 %v360
  %v2948 = vunpack.c.l.b16 %v361
  %v2949 = vunpack.c.h.b16 %v361
  %v2950 = vunpack.c.l.b16 %v362
  %v2951 = vunpack.c.h.b16 %v362
  %v2952 = vunpack.c.l.b16 %v363
  %v2953 = vunpack.c.h.b16 %v363
  %v2954 = vunpack.c.l.b16 %v364
  %v2955 = vunpack.c.h.b16 %v364
  %v2956 = vunpack.c.l.b16 %v365
  %v2957 = vunpack.c.h.b16 %v365
  %v2958 = vunpack.c.l.b16 %v366
  %v2959 = vunpack.c.h.b16 %v366
  %v2960 = vunpack.c.l.b16 %v367
  %v2961 = vunpack.c.h.b16 %v367
  %v2962 = vunpack.c.l.b16 %v368
  %v2963 = vunpack.c.h.b16 %v368
  %v2964 = vunpack.c.l.b16 %v369
  %v2965 = vunpack.c.h.b16 %v369
  %v2966 = vunpack.c.l.b16 %v370
  %v2967 = vunpack.c.h.b16 %v370
  %v2968 = vunpack.c.l.b16 %v371
  %v2969 = vunpack.c.h.b16 %v371
  %v2970 = vunpack.c.l.b16 %v372
  %v2971 = vunpack.c.h.b16 %v372
  %v2972 = vunpack.c.l.b16 %v373
  %v2973 = vunpack.c.h.b16 %v373
  %v2974 = vunpack.c.l.b16 %v374
  %v2975 = vunpack.c.h.b16 %v374
  %v2976 = vunpack.c.l.b16 %v375
  %v2977 = vunpack.c.h.b16 %v375
  %v2978 = vunpack.c.l.b16 %v376
  %v2979 = vunpack.c.h.b16 %v376
  %v2980 = vunpack.c.l.b16 %v377
  %v2981 = vunpack.c.h.b16 %v377
  %v2982 = vunpack.c.l.b16 %v378
  %v2983 = vunpack.c.h.b16 %v378
  %v2984 = vunpack.c.l.b16 %v379
  %v2985 = vunpack.c.h.b16 %v379
  %v2986 = vunpack.c.l.b16 %v380
  %v2987 = vunpack.c.h.b16 %v380
  %v2988 = vunpack.c.l.b16 %v381
  %v2989 = vunpack.c.h.b16 %v381
  %v2990 = vunpack.c.l.b16 %v382
  %v2991 = vunpack.c.h.b16 %v382
  %v2992 = vunpack.c.l.b16 %v383
  %v2993 = vunpack.c.h.b16 %v383
  %v2994 = vunpack.c.l.b16 %v384
  %v2995 = vunpack.c.h.b16 %v384
  %v2996 = vunpack.c.l.b16 %v385
  %v2997 = vunpack.c.h.b16 %v385
  %v2998 = vunpack.c.l.b16 %v386
  %v2999 = vunpack.c.h.b16 %v386
  %v3000 = vunpack.c.l.b16 %v387
  %v3001 = vunpack.c.h.b16 %v387
  %v3002 = vunpack.c.l.b16 %v388
  %v3003 = vunpack.c.h.b16 %v388
  %v3004 = vunpack.c.l.b16 %v389
  %v3005 = vunpack.c.h.b16 %v389
  %v3006 = vunpack.c.l.b16 %v390
  %v3007 = vunpack.c.h.b16 %v390
  %v3008 = vunpack.c.l.b16 %v391
  %v3009 = vunpack.c.h.b16 %v391
  %v3010 = vunpack.c.l.b16 %v392
  %v3011 = vunpack.c.h.b16 %v392
  %v3012 = vunpack.c.l.b16 %v393
  %v3013 = vunpack.c.h.b16 %v393
  %v3014 = vunpack.c.l.b16 %v394
  %v3015 = vunpack.c.h.b16 %v394
  %v3016 = vunpack.c.l.b16 %v395
  %v3017 = vunpack.c.h.b16 %v395
  %v3018 = vunpack.c.l.b16 %v396
  %v3019 = vunpack.c.h.b16 %v396
  %v3020 = vunpack.c.l.b16 %v397
  %v3021 = vunpack.c.h.b16 %v397
  %v3022 = vunpack.c.l.b16 %v398
  %v3023 = vunpack.c.h.b16 %v398
  %v3024 = vunpack.c.l.b16 %v399
  %v3025 = vunpack.c.h.b16 %v399
  %v3026 = vunpack.c.l.b16 %v400
  %v3027 = vunpack.c.h.b16 %v400
  %v3028 = vunpack.c.l.b16 %v401
  %v3029 = vunpack.c.h.b16 %v401
  %v3030 = vunpack.c.l.b16 %v402
  %v3031 = vunpack.c.h.b16 %v402
  %v3032 = vunpack.c.l.b16 %v403
  %v3033 = vunpack.c.h.b16 %v403
  %v3034 = vunpack.c.l.b16 %v404
  %v3035 = vunpack.c.h.b16 %v404
  %v3036 = vunpack.c.l.b16 %v405
  %v3037 = vunpack.c.h.b16 %v405
  %v3038 = vunpack.c.l.b16 %v406
  %v3039 = vunpack.c.h.b16 %v406
  %v3040 = vunpack.c.l.b16 %v407
  %v3041 = vunpack.c.h.b16 %v407
  %v3042 = vunpack.c.l.b16 %v408
  %v3043 = vunpack.c.h.b16 %v408
  %v3044 = vunpack.c.l.b16 %v409
  %v3045 = vunpack.c.h.b16 %v409
  %v3046 = vunpack.c.l.b16 %v410
  %v3047 = vunpack.c.h.b16 %v410
  %v3048 = vunpack.c.l.b16 %v411
  %v3049 = vunpack.c.h.b16 %v411
  %v3050 = vunpack.c.l.b16 %v412
  %v3051 = vunpack.c.h.b16 %v412
  %v3052 = vunpack.c.l.b16 %v413
  %v3053 = vunpack.c.h.b16 %v413
  %v3054 = vunpack.c.l.b16 %v414
  %v3055 = vunpack.c.h.b16 %v414
  %v3056 = vunpack.c.l.b16 %v415
  %v3057 = vunpack.c.h.b16 %v415
  %v3058 = vunpack.c.l.b16 %v416
  %v3059 = vunpack.c.h.b16 %v416
  %v3060 = vunpack.c.l.b16 %v417
  %v3061 = vunpack.c.h.b16 %v417
  %v3062 = vunpack.c.l.b16 %v418
  %v3063 = vunpack.c.h.b16 %v418
  %v3064 = vunpack.c.l.b16 %v419
  %v3065 = vunpack.c.h.b16 %v419
  %v3066 = vunpack.c.l.b16 %v420
  %v3067 = vunpack.c.h.b16 %v420
  %v3068 = vunpack.c.l.b16 %v421
  %v3069 = vunpack.c.h.b16 %v421
  %v3070 = vunpack.c.l.b16 %v422
  %v3071 = vunpack.c.h.b16 %v422
  %v3072 = vunpack.c.l.b16 %v423
  %v3073 = vunpack.c.h.b16 %v423
  %v3074 = vunpack.c.l.b16 %v424
  %v3075 = vunpack.c.h.b16 %v424
  %v3076 = vunpack.c.l.b16 %v425
  %v3077 = vunpack.c.h.b16 %v425
  %v3078 = vunpack.c.l.b16 %v426
  %v3079 = vunpack.c.h.b16 %v426
  %v3080 = vunpack.c.l.b16 %v427
  %v3081 = vunpack.c.h.b16 %v427
  %v3082 = vunpack.c.l.b16 %v428
  %v3083 = vunpack.c.h.b16 %v428
  %v3084 = vunpack.c.l.b16 %v429
  %v3085 = vunpack.c.h.b16 %v429
  %v3086 = vunpack.c.l.b16 %v430
  %v3087 = vunpack.c.h.b16 %v430
  %v3088 = vunpack.c.l.b16 %v431
  %v3089 = vunpack.c.h.b16 %v431
  %v3090 = vunpack.c.l.b16 %v432
  %v3091 = vunpack.c.h.b16 %v432
  %v3092 = vunpack.c.l.b16 %v433
  %v3093 = vunpack.c.h.b16 %v433
  %v3094 = vunpack.c.l.b16 %v434
  %v3095 = vunpack.c.h.b16 %v434
  %v3096 = vunpack.c.l.b16 %v435
  %v3097 = vunpack.c.h.b16 %v435
  %v3098 = vunpack.c.l.b16 %v436
  %v3099 = vunpack.c.h.b16 %v436
  %v3100 = vunpack.c.l.b16 %v437
  %v3101 = vunpack.c.h.b16 %v437
  %v3102 = vunpack.c.l.b16 %v438
  %v3103 = vunpack.c.h.b16 %v438
  %v3104 = vunpack.c.l.b16 %v439
  %v3105 = vunpack.c.h.b16 %v439
  %v3106 = vunpack.c.l.b16 %v440
  %v3107 = vunpack.c.h.b16 %v440
  %v3108 = vunpack.c.l.b16 %v441
  %v3109 = vunpack.c.h.b16 %v441
  %v3110 = vunpack.c.l.b16 %v442
  %v3111 = vunpack.c.h.b16 %v442
  %v3112 = vunpack.c.l.b16 %v443
  %v3113 = vunpack.c.h.b16 %v443
  %v3114 = vunpack.c.l.b16 %v444
  %v3115 = vunpack.c.h.b16 %v444
  %v3116 = vunpack.c.l.b16 %v445
  %v3117 = vunpack.c.h.b16 %v445
  %v3118 = vunpack.c.l.b16 %v446
  %v3119 = vunpack.c.h.b16 %v446
  %v3120 = vunpack.c.l.b16 %v447
  %v3121 = vunpack.c.h.b16 %v447
  %v3122 = vunpack.c.l.b16 %v448
  %v3123 = vunpack.c.h.b16 %v448
  %v3124 = vunpack.c.l.b16 %v449
  %v3125 = vunpack.c.h.b16 %v449
  %v3126 = vunpack.c.l.b16 %v450
  %v3127 = vunpack.c.h.b16 %v450
  %v3128 = vunpack.c.l.b16 %v451
  %v3129 = vunpack.c.h.b16 %v451
  %v3130 = vunpack.c.l.b16 %v452
  %v3131 = vunpack.c.h.b16 %v452
  %v3132 = vunpack.c.l.b16 %v453
  %v3133 = vunpack.c.h.b16 %v453
  %v3134 = vunpack.c.l.b16 %v454
  %v3135 = vunpack.c.h.b16 %v454
  %v3136 = vunpack.c.l.b16 %v455
  %v3137 = vunpack.c.h.b16 %v455
  %v3138 = vunpack.c.l.b16 %v456
  %v3139 = vunpack.c.h.b16 %v456
  %v3140 = vunpack.c.l.b16 %v457
  %v3141 = vunpack.c.h.b16 %v457
  %v3142 = vunpack.c.l.b16 %v458
  %v3143 = vunpack.c.h.b16 %v458
  %v3144 = vunpack.c.l.b16 %v459
  %v3145 = vunpack.c.h.b16 %v459
  %v3146 = vunpack.c.l.b16 %v460
  %v3147 = vunpack.c.h.b16 %v460
  %v3148 = vunpack.c.l.b16 %v461
  %v3149 = vunpack.c.h.b16 %v461
  %v3150 = vunpack.c.l.b16 %v462
  %v3151 = vunpack.c.h.b16 %v462
  %v3152 = vunpack.c.l.b16 %v463
  %v3153 = vunpack.c.h.b16 %v463
  %v3154 = vunpack.c.l.b16 %v464
  %v3155 = vunpack.c.h.b16 %v464
  %v3156 = vunpack.c.l.b16 %v465
  %v3157 = vunpack.c.h.b16 %v465
  %v3158 = vunpack.c.l.b16 %v466
  %v3159 = vunpack.c.h.b16 %v466
  %v3160 = vunpack.c.l.b16 %v467
  %v3161 = vunpack.c.h.b16 %v467
  %v3162 = vunpack.c.l.b16 %v468
  %v3163 = vunpack.c.h.b16 %v468
  %v3164 = vunpack.c.l.b16 %v469
  %v3165 = vunpack.c.h.b16 %v469
  %v3166 = vunpack.c.l.b16 %v470
  %v3167 = vunpack.c.h.b16 %v470
  %v3168 = vunpack.c.l.b16 %v471
  %v3169 = vunpack.c.h.b16 %v471
  %v3170 = vunpack.c.l.b16 %v472
  %v3171 = vunpack.c.h.b16 %v472
  %v3172 = vunpack.c.l.b16 %v473
  %v3173 = vunpack.c.h.b16 %v473
  %v3174 = vunpack.c.l.b16 %v474
  %v3175 = vunpack.c.h.b16 %v474
  %v3176 = vunpack.c.l.b16 %v475
  %v3177 = vunpack.c.h.b16 %v475
  %v3178 = vunpack.c.l.b16 %v476
  %v3179 = vunpack.c.h.b16 %v476
  %v3180 = vunpack.c.l.b16 %v477
  %v3181 = vunpack.c.h.b16 %v477
  %v3182 = vunpack.c.l.b16 %v478
  %v3183 = vunpack.c.h.b16 %v478
  %v3184 = vunpack.c.l.b16 %v479
  %v3185 = vunpack.c.h.b16 %v479
  %v3186 = vunpack.c.l.b16 %v480
  %v3187 = vunpack.c.h.b16 %v480
  %v3188 = vunpack.c.l.b16 %v481
  %v3189 = vunpack.c.h.b16 %v481
  %v3190 = vunpack.c.l.b16 %v482
  %v3191 = vunpack.c.h.b16 %v482
  %v3192 = vunpack.c.l.b16 %v483
  %v3193 = vunpack.c.h.b16 %v483
  %v3194 = vunpack.c.l.b16 %v484
  %v3195 = vunpack.c.h.b16 %v484
  %v3196 = vunpack.c.l.b16 %v485
  %v3197 = vunpack.c.h.b16 %v485
  %v3198 = vunpack.c.l.b16 %v486
  %v3199 = vunpack.c.h.b16 %v486
  %v3200 = vunpack.c.l.b16 %v487
  %v3201 = vunpack.c.h.b16 %v487
  %v3202 = vunpack.c.l.b16 %v488
  %v3203 = vunpack.c.h.b16 %v488
  %v3204 = vunpack.c.l.b16 %v489
  %v3205 = vunpack.c.h.b16 %v489
  %v3206 = vunpack.c.l.b16 %v490
  %v3207 = vunpack.c.h.b16 %v490
  %v3208 = vunpack.c.l.b16 %v491
  %v3209 = vunpack.c.h.b16 %v491
  %v3210 = vunpack.c.l.b16 %v492
  %v3211 = vunpack.c.h.b16 %v492
  %v3212 = vunpack.c.l.b16 %v493
  %v3213 = vunpack.c.h.b16 %v493
  %v3214 = vunpack.c.l.b16 %v494
  %v3215 = vunpack.c.h.b16 %v494
  %v3216 = vunpack.c.l.b16 %v495
  %v3217 = vunpack.c.h.b16 %v495
  %v3218 = vunpack.c.l.b16 %v496
  %v3219 = vunpack.c.h.b16 %v496
  %v3220 = vunpack.c.l.b16 %v497
  %v3221 = vunpack.c.h.b16 %v497
  %v3222 = vunpack.c.l.b16 %v498
  %v3223 = vunpack.c.h.b16 %v498
  %v3224 = vunpack.c.l.b16 %v499
  %v3225 = vunpack.c.h.b16 %v499
  %v3226 = vunpack.c.l.b16 %v500
  %v3227 = vunpack.c.h.b16 %v500
  %v3228 = vunpack.c.l.b16 %v501
  %v3229 = vunpack.c.h.b16 %v501
  %v3230 = vunpack.c.l.b16 %v502
  %v3231 = vunpack.c.h.b16 %v502
  %v3232 = vunpack.c.l.b16 %v503
  %v3233 = vunpack.c.h.b16 %v503
  %v3234 = vunpack.c.l.b16 %v504
  %v3235 = vunpack.c.h.b16 %v504
  %v3236 = vunpack.c.l.b16 %v505
  %v3237 = vunpack.c.h.b16 %v505
  %v3238 = vunpack.c.l.b16 %v506
  %v3239 = vunpack.c.h.b16 %v506
  %v3240 = vunpack.c.l.b16 %v507
  %v3241 = vunpack.c.h.b16 %v507
  %v3242 = vunpack.c.l.b16 %v508
  %v3243 = vunpack.c.h.b16 %v508
  %v3244 = vunpack.c.l.b16 %v509
  %v3245 = vunpack.c.h.b16 %v509
  %v3246 = vunpack.c.l.b16 %v510
  %v3247 = vunpack.c.h.b16 %v510
  %v3248 = vunpack.c.l.b16 %v511
  %v3249 = vunpack.c.h.b16 %v511
  %v3250 = vunpack.c.l.b16 %v512
  %v3251 = vunpack.c.h.b16 %v512
  %v3252 = vunpack.c.l.b16 %v513
  %v3253 = vunpack.c.h.b16 %v513
  %v3254 = vunpack.c.l.b16 %v514
  %v3255 = vunpack.c.h.b16 %v514
  %v3256 = vunpack.c.l.b16 %v515
  %v3257 = vunpack.c.h.b16 %v515
  %v3258 = vunpack.c.l.b16 %v516
  %v3259 = vunpack.c.h.b16 %v516
  %v3260 = vunpack.c.l.b16 %v517
  %v3261 = vunpack.c.h.b16 %v517
  %v3262 = vunpack.c.l.b16 %v518
  %v3263 = vunpack.c.h.b16 %v518
  %v3264 = vunpack.c.l.b16 %v519
  %v3265 = vunpack.c.h.b16 %v519
  %v3266 = vunpack.c.l.b16 %v520
  %v3267 = vunpack.c.h.b16 %v520
  %v3268 = vunpack.c.l.b16 %v521
  %v3269 = vunpack.c.h.b16 %v521
  %v3270 = vunpack.c.l.b16 %v522
  %v3271 = vunpack.c.h.b16 %v522
  %v3272 = vunpack.c.l.b16 %v523
  %v3273 = vunpack.c.h.b16 %v523
  %v3274 = vunpack.c.l.b16 %v524
  %v3275 = vunpack.c.h.b16 %v524
  %v3276 = vunpack.c.l.b16 %v525
  %v3277 = vunpack.c.h.b16 %v525
  %v3278 = vunpack.c.l.b16 %v526
  %v3279 = vunpack.c.h.b16 %v526
  %v3280 = vunpack.c.l.b16 %v527
  %v3281 = vunpack.c.h.b16 %v527
  %v3282 = vunpack.c.l.b16 %v528
  %v3283 = vunpack.c.h.b16 %v528
  %v3284 = vunpack.c.l.b16 %v529
  %v3285 = vunpack.c.h.b16 %v529
  %v3286 = vunpack.c.l.b16 %v530
  %v3287 = vunpack.c.h.b16 %v530
  %v3288 = vunpack.c.l.b16 %v531
  %v3289 = vunpack.c.h.b16 %v531
  %v3290 = vunpack.c.l.b16 %v532
  %v3291 = vunpack.c.h.b16 %v532
  %v3292 = vunpack.c.l.b16 %v533
  %v3293 = vunpack.c.h.b16 %v533
  %v3294 = vunpack.c.l.b16 %v534
  %v3295 = vunpack.c.h.b16 %v534
  %v3296 = vunpack.c.l.b16 %v535
  %v3297 = vunpack.c.h.b16 %v535
  %v3298 = vunpack.c.l.b16 %v536
  %v3299 = vunpack.c.h.b16 %v536
  %v3300 = vunpack.c.l.b16 %v537
  %v3301 = vunpack.c.h.b16 %v537
  %v3302 = vunpack.c.l.b16 %v538
  %v3303 = vunpack.c.h.b16 %v538
  %v3304 = vunpack.c.l.b16 %v539
  %v3305 = vunpack.c.h.b16 %v539
  %v3306 = vunpack.c.l.b16 %v540
  %v3307 = vunpack.c.h.b16 %v540
  %v3308 = vunpack.c.l.b16 %v541
  %v3309 = vunpack.c.h.b16 %v541
  %v3310 = vunpack.c.l.b16 %v542
  %v3311 = vunpack.c.h.b16 %v542
  %v3312 = vunpack.c.l.b16 %v543
  %v3313 = vunpack.c.h.b16 %v543
  %v3314 = vunpack.c.l.b16 %v544
  %v3315 = vunpack.c.h.b16 %v544
  %v3316 = vunpack.c.l.b16 %v545
  %v3317 = vunpack.c.h.b16 %v545
  %v3318 = vunpack.c.l.b16 %v546
  %v3319 = vunpack.c.h.b16 %v546
  %v3320 = vunpack.c.l.b16 %v547
  %v3321 = vunpack.c.h.b16 %v547
  %v3322 = vunpack.c.l.b16 %v548
  %v3323 = vunpack.c.h.b16 %v548
  %v3324 = vunpack.c.l.b16 %v549
  %v3325 = vunpack.c.h.b16 %v549
  %v3326 = vunpack.c.l.b16 %v550
  %v3327 = vunpack.c.h.b16 %v550
  %v3328 = vunpack.c.l.b16 %v551
  %v3329 = vunpack.c.h.b16 %v551
  %v3330 = vunpack.c.l.b16 %v552
  %v3331 = vunpack.c.h.b16 %v552
  %v3332 = vunpack.c.l.b16 %v553
  %v3333 = vunpack.c.h.b16 %v553
  %v3334 = vunpack.c.l.b16 %v554
  %v3335 = vunpack.c.h.b16 %v554
  %v3336 = vunpack.c.l.b16 %v555
  %v3337 = vunpack.c.h.b16 %v555
  %v3338 = vunpack.c.l.b16 %v556
  %v3339 = vunpack.c.h.b16 %v556
  %v3340 = vunpack.c.l.b16 %v557
  %v3341 = vunpack.c.h.b16 %v557
  %v3342 = vunpack.c.l.b16 %v558
  %v3343 = vunpack.c.h.b16 %v558
  %v3344 = vunpack.c.l.b16 %v559
  %v3345 = vunpack.c.h.b16 %v559
  %v3346 = vunpack.c.l.b16 %v560
  %v3347 = vunpack.c.h.b16 %v560
  %v3348 = vunpack.c.l.b16 %v561
  %v3349 = vunpack.c.h.b16 %v561
  %v3350 = vunpack.c.l.b16 %v562
  %v3351 = vunpack.c.h.b16 %v562
  %v3352 = vunpack.c.l.b16 %v563
  %v3353 = vunpack.c.h.b16 %v563
  %v3354 = vunpack.c.l.b16 %v564
  %v3355 = vunpack.c.h.b16 %v564
  %v3356 = vunpack.c.l.b16 %v565
  %v3357 = vunpack.c.h.b16 %v565
  %v3358 = vunpack.c.l.b16 %v566
  %v3359 = vunpack.c.h.b16 %v566
  %v3360 = vunpack.c.l.b16 %v567
  %v3361 = vunpack.c.h.b16 %v567
  %v3362 = vunpack.c.l.b16 %v568
  %v3363 = vunpack.c.h.b16 %v568
  %v3364 = vunpack.c.l.b16 %v569
  %v3365 = vunpack.c.h.b16 %v569
  %v3366 = vunpack.c.l.b16 %v570
  %v3367 = vunpack.c.h.b16 %v570
  %v3368 = vunpack.c.l.b16 %v571
  %v3369 = vunpack.c.h.b16 %v571
  %v3370 = vunpack.c.l.b16 %v572
  %v3371 = vunpack.c.h.b16 %v572
  %v3372 = vunpack.c.l.b16 %v573
  %v3373 = vunpack.c.h.b16 %v573
  %v3374 = vunpack.c.l.b16 %v574
  %v3375 = vunpack.c.h.b16 %v574
  %v3376 = vunpack.c.l.b16 %v575
  %v3377 = vunpack.c.h.b16 %v575
  %v3378 = vunpack.c.l.b16 %v576
  %v3379 = vunpack.c.h.b16 %v576
  %v3380 = vunpack.c.l.b16 %v577
  %v3381 = vunpack.c.h.b16 %v577
  %v3382 = vunpack.c.l.b16 %v578
  %v3383 = vunpack.c.h.b16 %v578
  %v3384 = vunpack.c.l.b16 %v579
  %v3385 = vunpack.c.h.b16 %v579
  %v3386 = vunpack.c.l.b16 %v580
  %v3387 = vunpack.c.h.b16 %v580
  %v3388 = vunpack.c.l.b16 %v581
  %v3389 = vunpack.c.h.b16 %v581
  %v3390 = vunpack.c.l.b16 %v582
  %v3391 = vunpack.c.h.b16 %v582
  %v3392 = vunpack.c.l.b16 %v583
  %v3393 = vunpack.c.h.b16 %v583
  %v3394 = vunpack.c.l.b16 %v584
  %v3395 = vunpack.c.h.b16 %v584
  %v3396 = vunpack.c.l.b16 %v585
  %v3397 = vunpack.c.h.b16 %v585
  %v3398 = vunpack.c.l.b16 %v586
  %v3399 = vunpack.c.h.b16 %v586
  %v3400 = vunpack.c.l.b16 %v587
  %v3401 = vunpack.c.h.b16 %v587
  %v3402 = vunpack.c.l.b16 %v588
  %v3403 = vunpack.c.h.b16 %v588
  %v3404 = vunpack.c.l.b16 %v589
  %v3405 = vunpack.c.h.b16 %v589
  %v3406 = vunpack.c.l.b16 %v590
  %v3407 = vunpack.c.h.b16 %v590
  %v3408 = vunpack.c.l.b16 %v591
  %v3409 = vunpack.c.h.b16 %v591
  %v3410 = vunpack.c.l.b16 %v592
  %v3411 = vunpack.c.h.b16 %v592
  %v3412 = vunpack.c.l.b16 %v593
  %v3413 = vunpack.c.h.b16 %v593
  %v3414 = vunpack.c.l.b16 %v594
  %v3415 = vunpack.c.h.b16 %v594
  %v3416 = vunpack.c.l.b16 %v595
  %v3417 = vunpack.c.h.b16 %v595
  %v3418 = vunpack.c.l.b16 %v596
  %v3419 = vunpack.c.h.b16 %v596
  %v3420 = vunpack.c.l.b16 %v597
  %v3421 = vunpack.c.h.b16 %v597
  %v3422 = vunpack.c.l.b16 %v598
  %v3423 = vunpack.c.h.b16 %v598
  %v3424 = vunpack.c.l.b16 %v599
  %v3425 = vunpack.c.h.b16 %v599
  %v3426 = vunpack.c.l.b16 %v600
  %v3427 = vunpack.c.h.b16 %v600
  %v3428 = vunpack.c.l.b16 %v601
  %v3429 = vunpack.c.h.b16 %v601
  %v3430 = vunpack.c.l.b16 %v602
  %v3431 = vunpack.c.h.b16 %v602
  %v3432 = vunpack.c.l.b16 %v603
  %v3433 = vunpack.c.h.b16 %v603
  %v3434 = vunpack.c.l.b16 %v604
  %v3435 = vunpack.c.h.b16 %v604
  %v3436 = vunpack.c.l.b16 %v605
  %v3437 = vunpack.c.h.b16 %v605
  %v3438 = vunpack.c.l.b16 %v606
  %v3439 = vunpack.c.h.b16 %v606
  %v3440 = vunpack.c.l.b16 %v607
  %v3441 = vunpack.c.h.b16 %v607
  %v3442 = vunpack.c.l.b16 %v608
  %v3443 = vunpack.c.h.b16 %v608
  %v3444 = vunpack.c.l.b16 %v609
  %v3445 = vunpack.c.h.b16 %v609
  %v3446 = vunpack.c.l.b16 %v610
  %v3447 = vunpack.c.h.b16 %v610
  %v3448 = vunpack.c.l.b16 %v611
  %v3449 = vunpack.c.h.b16 %v611
  %v3450 = vunpack.c.l.b16 %v612
  %v3451 = vunpack.c.h.b16 %v612
  %v3452 = vunpack.c.l.b16 %v613
  %v3453 = vunpack.c.h.b16 %v613
  %v3454 = vunpack.c.l.b16 %v614
  %v3455 = vunpack.c.h.b16 %v614
  %v3456 = vunpack.c.l.b16 %v615
  %v3457 = vunpack.c.h.b16 %v615
  %v3458 = vunpack.c.l.b16 %v616
  %v3459 = vunpack.c.h.b16 %v616
  %v3460 = vunpack.c.l.b16 %v617
  %v3461 = vunpack.c.h.b16 %v617
  %v3462 = vunpack.c.l.b16 %v618
  %v3463 = vunpack.c.h.b16 %v618
  %v3464 = vunpack.c.l.b16 %v619
  %v3465 = vunpack.c.h.b16 %v619
  %v3466 = vunpack.c.l.b16 %v620
  %v3467 = vunpack.c.h.b16 %v620
  %v3468 = vunpack.c.l.b16 %v621
  %v3469 = vunpack.c.h.b16 %v621
  %v3470 = vunpack.c.l.b16 %v622
  %v3471 = vunpack.c.h.b16 %v622
  %v3472 = vunpack.c.l.b16 %v623
  %v3473 = vunpack.c.h.b16 %v623
  %v3474 = vunpack.c.l.b16 %v624
  %v3475 = vunpack.c.h.b16 %v624
  %v3476 = vunpack.c.l.b16 %v625
  %v3477 = vunpack.c.h.b16 %v625
  %v3478 = vunpack.c.l.b16 %v626
  %v3479 = vunpack.c.h.b16 %v626
  %v3480 = vunpack.c.l.b16 %v627
  %v3481 = vunpack.c.h.b16 %v627
  %v3482 = vunpack.c.l.b16 %v628
  %v3483 = vunpack.c.h.b16 %v628
  %v3484 = vunpack.c.l.b16 %v629
  %v3485 = vunpack.c.h.b16 %v629
  %v3486 = vunpack.c.l.b16 %v630
  %v3487 = vunpack.c.h.b16 %v630
  %v3488 = vunpack.c.l.b16 %v631
  %v3489 = vunpack.c.h.b16 %v631
  %v3490 = vunpack.c.l.b16 %v632
  %v3491 = vunpack.c.h.b16 %v632
  %v3492 = vunpack.c.l.b16 %v633
  %v3493 = vunpack.c.h.b16 %v633
  %v3494 = vunpack.c.l.b16 %v634
  %v3495 = vunpack.c.h.b16 %v634
  %v3496 = vunpack.c.l.b16 %v635
  %v3497 = vunpack.c.h.b16 %v635
  %v3498 = vunpack.c.l.b16 %v636
  %v3499 = vunpack.c.h.b16 %v636
  %v3500 = vunpack.c.l.b16 %v637
  %v3501 = vunpack.c.h.b16 %v637
  %v3502 = vunpack.c.l.b16 %v638
  %v3503 = vunpack.c.h.b16 %v638
  %v3504 = vunpack.c.l.b16 %v639
  %v3505 = vunpack.c.h.b16 %v639
  %v3506 = vunpack.c.l.b16 %v640
  %v3507 = vunpack.c.h.b16 %v640
  %v3508 = vunpack.c.l.b16 %v641
  %v3509 = vunpack.c.h.b16 %v641
  %v3510 = vunpack.c.l.b16 %v642
  %v3511 = vunpack.c.h.b16 %v642
  %v3512 = vunpack.c.l.b16 %v643
  %v3513 = vunpack.c.h.b16 %v643
  %v3514 = vunpack.c.l.b16 %v644
  %v3515 = vunpack.c.h.b16 %v644
  %v3516 = vunpack.c.l.b16 %v645
  %v3517 = vunpack.c.h.b16 %v645
  %v3518 = vunpack.c.l.b16 %v646
  %v3519 = vunpack.c.h.b16 %v646
  %v3520 = vunpack.c.l.b16 %v647
  %v3521 = vunpack.c.h.b16 %v647
  %v3522 = vunpack.c.l.b16 %v648
  %v3523 = vunpack.c.h.b16 %v648
  %v3524 = vunpack.c.l.b16 %v649
  %v3525 = vunpack.c.h.b16 %v649
  %v3526 = vunpack.c.l.b16 %v650
  %v3527 = vunpack.c.h.b16 %v650
  %v3528 = vunpack.c.l.b16 %v651
  %v3529 = vunpack.c.h.b16 %v651
  %v3530 = vunpack.c.l.b16 %v652
  %v3531 = vunpack.c.h.b16 %v652
  %v3532 = vunpack.c.l.b16 %v653
  %v3533 = vunpack.c.h.b16 %v653
  %v3534 = vunpack.c.l.b16 %v654
  %v3535 = vunpack.c.h.b16 %v654
  %v3536 = vunpack.c.l.b16 %v655
  %v3537 = vunpack.c.h.b16 %v655
  %v3538 = vunpack.c.l.b16 %v656
  %v3539 = vunpack.c.h.b16 %v656
  %v3540 = vunpack.c.l.b16 %v657
  %v3541 = vunpack.c.h.b16 %v657
  %v3542 = vunpack.c.l.b16 %v658
  %v3543 = vunpack.c.h.b16 %v658
  %v3544 = vunpack.c.l.b16 %v659
  %v3545 = vunpack.c.h.b16 %v659
  %v3546 = vunpack.c.l.b16 %v660
  %v3547 = vunpack.c.h.b16 %v660
  %v3548 = vunpack.c.l.b16 %v661
  %v3549 = vunpack.c.h.b16 %v661
  %v3550 = vunpack.c.l.b16 %v662
  %v3551 = vunpack.c.h.b16 %v662
  %v3552 = vunpack.c.l.b16 %v663
  %v3553 = vunpack.c.h.b16 %v663
  %v3554 = vunpack.c.l.b16 %v664
  %v3555 = vunpack.c.h.b16 %v664
  %v3556 = vunpack.c.l.b16 %v665
  %v3557 = vunpack.c.h.b16 %v665
  %v3558 = vunpack.c.l.b16 %v666
  %v3559 = vunpack.c.h.b16 %v666
  %v3560 = vunpack.c.l.b16 %v667
  %v3561 = vunpack.c.h.b16 %v667
  %v3562 = vunpack.c.l.b16 %v668
  %v3563 = vunpack.c.h.b16 %v668
  %v3564 = vunpack.c.l.b16 %v669
  %v3565 = vunpack.c.h.b16 %v669
  %v3566 = vunpack.c.l.b16 %v670
  %v3567 = vunpack.c.h.b16 %v670
  %v3568 = vunpack.c.l.b16 %v671
  %v3569 = vunpack.c.h.b16 %v671
  %v3570 = vunpack.c.l.b16 %v672
  %v3571 = vunpack.c.h.b16 %v672
  %v3572 = vunpack.c.l.b16 %v673
  %v3573 = vunpack.c.h.b16 %v673
  %v3574 = vunpack.c.l.b16 %v674
  %v3575 = vunpack.c.h.b16 %v674
  %v3576 = vunpack.c.l.b16 %v675
  %v3577 = vunpack.c.h.b16 %v675
  %v3578 = vunpack.c.l.b16 %v676
  %v3579 = vunpack.c.h.b16 %v676
  %v3580 = vunpack.c.l.b16 %v677
  %v3581 = vunpack.c.h.b16 %v677
  %v3582 = vunpack.c.l.b16 %v678
  %v3583 = vunpack.c.h.b16 %v678
  %v3584 = vunpack.c.l.b16 %v679
  %v3585 = vunpack.c.h.b16 %v679
  %v3586 = vunpack.c.l.b16 %v680
  %v3587 = vunpack.c.h.b16 %v680
  %v3588 = vunpack.c.l.b16 %v681
  %v3589 = vunpack.c.h.b16 %v681
  %v3590 = vunpack.c.l.b16 %v682
  %v3591 = vunpack.c.h.b16 %v682
  %v3592 = vunpack.c.l.b16 %v683
  %v3593 = vunpack.c.h.b16 %v683
  %v3594 = vunpack.c.l.b16 %v684
  %v3595 = vunpack.c.h.b16 %v684
  %v3596 = vunpack.c.l.b16 %v685
  %v3597 = vunpack.c.h.b16 %v685
  %v3598 = vunpack.c.l.b16 %v686
  %v3599 = vunpack.c.h.b16 %v686
  %v3600 = vunpack.c.l.b16 %v687
  %v3601 = vunpack.c.h.b16 %v687
  %v3602 = vunpack.c.l.b16 %v688
  %v3603 = vunpack.c.h.b16 %v688
  %v3604 = vunpack.c.l.b16 %v689
  %v3605 = vunpack.c.h.b16 %v689
  %v3606 = vunpack.c.l.b16 %v690
  %v3607 = vunpack.c.h.b16 %v690
  %v3608 = vunpack.c.l.b16 %v691
  %v3609 = vunpack.c.h.b16 %v691
  %v3610 = vunpack.c.l.b16 %v692
  %v3611 = vunpack.c.h.b16 %v692
  %v3612 = vunpack.c.l.b16 %v693
  %v3613 = vunpack.c.h.b16 %v693
  %v3614 = vunpack.c.l.b16 %v694
  %v3615 = vunpack.c.h.b16 %v694
  %v3616 = vunpack.c.l.b16 %v695
  %v3617 = vunpack.c.h.b16 %v695
  %v3618 = vunpack.c.l.b16 %v696
  %v3619 = vunpack.c.h.b16 %v696
  %v3620 = vunpack.c.l.b16 %v697
  %v3621 = vunpack.c.h.b16 %v697
  %v3622 = vunpack.c.l.b16 %v698
  %v3623 = vunpack.c.h.b16 %v698
  %v3624 = vunpack.c.l.b16 %v699
  %v3625 = vunpack.c.h.b16 %v699
  %v3626 = vunpack.c.l.b16 %v700
  %v3627 = vunpack.c.h.b16 %v700
  %v3628 = vunpack.c.l.b16 %v701
  %v3629 = vunpack.c.h.b16 %v701
  %v3630 = vunpack.c.l.b16 %v702
  %v3631 = vunpack.c.h.b16 %v702
  %v3632 = vunpack.c.l.b16 %v703
  %v3633 = vunpack.c.h.b16 %v703
  %v3634 = vunpack.c.l.b16 %v704
  %v3635 = vunpack.c.h.b16 %v704
  %v3636 = vunpack.c.l.b16 %v705
  %v3637 = vunpack.c.h.b16 %v705
  %v3638 = vunpack.c.l.b16 %v706
  %v3639 = vunpack.c.h.b16 %v706
  %v3640 = vunpack.c.l.b16 %v707
  %v3641 = vunpack.c.h.b16 %v707
  %v3642 = vunpack.c.l.b16 %v708
  %v3643 = vunpack.c.h.b16 %v708
  %v3644 = vunpack.c.l.b16 %v709
  %v3645 = vunpack.c.h.b16 %v709
  %v3646 = vunpack.c.l.b16 %v710
  %v3647 = vunpack.c.h.b16 %v710
  %v3648 = vunpack.c.l.b16 %v711
  %v3649 = vunpack.c.h.b16 %v711
  %v3650 = vunpack.c.l.b16 %v712
  %v3651 = vunpack.c.h.b16 %v712
  %v3652 = vunpack.c.l.b16 %v713
  %v3653 = vunpack.c.h.b16 %v713
  %v3654 = vunpack.c.l.b16 %v714
  %v3655 = vunpack.c.h.b16 %v714
  %v3656 = vunpack.c.l.b16 %v715
  %v3657 = vunpack.c.h.b16 %v715
  %v3658 = vunpack.c.l.b16 %v716
  %v3659 = vunpack.c.h.b16 %v716
  %v3660 = vunpack.c.l.b16 %v717
  %v3661 = vunpack.c.h.b16 %v717
  %v3662 = vunpack.c.l.b16 %v718
  %v3663 = vunpack.c.h.b16 %v718
  %v3664 = vunpack.c.l.b16 %v719
  %v3665 = vunpack.c.h.b16 %v719
  %v3666 = vunpack.c.l.b16 %v720
  %v3667 = vunpack.c.h.b16 %v720
  %v3668 = vunpack.c.l.b16 %v721
  %v3669 = vunpack.c.h.b16 %v721
  %v3670 = vunpack.c.l.b16 %v722
  %v3671 = vunpack.c.h.b16 %v722
  %v3672 = vunpack.c.l.b16 %v723
  %v3673 = vunpack.c.h.b16 %v723
  %v3674 = vunpack.c.l.b16 %v724
  %v3675 = vunpack.c.h.b16 %v724
  %v3676 = vunpack.c.l.b16 %v725
  %v3677 = vunpack.c.h.b16 %v725
  %v3678 = vunpack.c.l.b16 %v726
  %v3679 = vunpack.c.h.b16 %v726
  %v3680 = vunpack.c.l.b16 %v727
  %v3681 = vunpack.c.h.b16 %v727
  %v3682 = vunpack.c.l.b16 %v728
  %v3683 = vunpack.c.h.b16 %v728
  %v3684 = vunpack.c.l.b16 %v729
  %v3685 = vunpack.c.h.b16 %v729
  %v3686 = vunpack.c.l.b16 %v730
  %v3687 = vunpack.c.h.b16 %v730
  %v3688 = vunpack.c.l.b16 %v731
  %v3689 = vunpack.c.h.b16 %v731
  %v3690 = vunpack.c.l.b16 %v732
  %v3691 = vunpack.c.h.b16 %v732
  %v3692 = vunpack.c.l.b16 %v733
  %v3693 = vunpack.c.h.b16 %v733
  %v3694 = vunpack.c.l.b16 %v734
  %v3695 = vunpack.c.h.b16 %v734
  %v3696 = vunpack.c.l.b16 %v735
  %v3697 = vunpack.c.h.b16 %v735
  %v3698 = vunpack.c.l.b16 %v736
  %v3699 = vunpack.c.h.b16 %v736
  %v3700 = vunpack.c.l.b16 %v737
  %v3701 = vunpack.c.h.b16 %v737
  %v3702 = vunpack.c.l.b16 %v738
  %v3703 = vunpack.c.h.b16 %v738
  %v3704 = vunpack.c.l.b16 %v739
  %v3705 = vunpack.c.h.b16 %v739
  %v3706 = vunpack.c.l.b16 %v740
  %v3707 = vunpack.c.h.b16 %v740
  %v3708 = vunpack.c.l.b16 %v741
  %v3709 = vunpack.c.h.b16 %v741
  %v3710 = vunpack.c.l.b16 %v742
  %v3711 = vunpack.c.h.b16 %v742
  %v3712 = vunpack.c.l.b16 %v743
  %v3713 = vunpack.c.h.b16 %v743
  %v3714 = vunpack.c.l.b16 %v744
  %v3715 = vunpack.c.h.b16 %v744
  %v3716 = vunpack.c.l.b16 %v745
  %v3717 = vunpack.c.h.b16 %v745
  %v3718 = vunpack.c.l.b16 %v746
  %v3719 = vunpack.c.h.b16 %v746
  %v3720 = vunpack.c.l.b16 %v747
  %v3721 = vunpack.c.h.b16 %v747
  %v3722 = vunpack.c.l.b16 %v748
  %v3723 = vunpack.c.h.b16 %v748
  %v3724 = vunpack.c.l.b16 %v749
  %v3725 = vunpack.c.h.b16 %v749
  %v3726 = vunpack.c.l.b16 %v750
  %v3727 = vunpack.c.h.b16 %v750
  %v3728 = vunpack.c.l.b16 %v751
  %v3729 = vunpack.c.h.b16 %v751
  %v3730 = vunpack.c.l.b16 %v752
  %v3731 = vunpack.c.h.b16 %v752
  %v3732 = vunpack.c.l.b16 %v753
  %v3733 = vunpack.c.h.b16 %v753
  %v3734 = vunpack.c.l.b16 %v754
  %v3735 = vunpack.c.h.b16 %v754
  %v3736 = vunpack.c.l.b16 %v755
  %v3737 = vunpack.c.h.b16 %v755
  %v3738 = vunpack.c.l.b16 %v756
  %v3739 = vunpack.c.h.b16 %v756
  %v3740 = vunpack.c.l.b16 %v757
  %v3741 = vunpack.c.h.b16 %v757
  %v3742 = vunpack.c.l.b16 %v758
  %v3743 = vunpack.c.h.b16 %v758
  %v3744 = vunpack.c.l.b16 %v759
  %v3745 = vunpack.c.h.b16 %v759
  %v3746 = vunpack.c.l.b16 %v760
  %v3747 = vunpack.c.h.b16 %v760
  %v3748 = vunpack.c.l.b16 %v761
  %v3749 = vunpack.c.h.b16 %v761
  %v3750 = vunpack.c.l.b16 %v762
  %v3751 = vunpack.c.h.b16 %v762
  %v3752 = vunpack.c.l.b16 %v763
  %v3753 = vunpack.c.h.b16 %v763
  %v3754 = vunpack.c.l.b16 %v764
  %v3755 = vunpack.c.h.b16 %v764
  %v3756 = vunpack.c.l.b16 %v765
  %v3757 = vunpack.c.h.b16 %v765
  %v3758 = vunpack.c.l.b16 %v766
  %v3759 = vunpack.c.h.b16 %v766
  %v3760 = vunpack.c.l.b16 %v767
  %v3761 = vunpack.c.h.b16 %v767
  %v3762 = vunpack.c.l.b16 %v768
  %v3763 = vunpack.c.h.b16 %v768
  %v3764 = vunpack.c.l.b16 %v769
  %v3765 = vunpack.c.h.b16 %v769
  %v3766 = vunpack.c.l.b16 %v770
  %v3767 = vunpack.c.h.b16 %v770
  %v3768 = vunpack.c.l.b16 %v771
  %v3769 = vunpack.c.h.b16 %v771
  %v3770 = vunpack.c.l.b16 %v772
  %v3771 = vunpack.c.h.b16 %v772
  %v3772 = vunpack.c.l.b16 %v773
  %v3773 = vunpack.c.h.b16 %v773
  %v3774 = vunpack.c.l.b16 %v774
  %v3775 = vunpack.c.h.b16 %v774
  %v3776 = vunpack.c.l.b16 %v775
  %v3777 = vunpack.c.h.b16 %v775
  %v3778 = vunpack.c.l.b16 %v776
  %v3779 = vunpack.c.h.b16 %v776
  %v3780 = vunpack.c.l.b16 %v777
  %v3781 = vunpack.c.h.b16 %v777
  %v3782 = vunpack.c.l.b16 %v778
  %v3783 = vunpack.c.h.b16 %v778
  %v3784 = vunpack.c.l.b16 %v779
  %v3785 = vunpack.c.h.b16 %v779
  %v3786 = vunpack.c.l.b16 %v780
  %v3787 = vunpack.c.h.b16 %v780
  %v3788 = vunpack.c.l.b16 %v781
  %v3789 = vunpack.c.h.b16 %v781
  %v3790 = vunpack.c.l.b16 %v782
  %v3791 = vunpack.c.h.b16 %v782
  %v3792 = vunpack.c.l.b16 %v783
  %v3793 = vunpack.c.h.b16 %v783
  %v3794 = vunpack.c.l.b16 %v784
  %v3795 = vunpack.c.h.b16 %v784
  %v3796 = vunpack.c.l.b16 %v785
  %v3797 = vunpack.c.h.b16 %v785
  %v3798 = vunpack.c.l.b16 %v786
  %v3799 = vunpack.c.h.b16 %v786
  %v3800 = vunpack.c.l.b16 %v787
  %v3801 = vunpack.c.h.b16 %v787
  %v3802 = vunpack.c.l.b16 %v788
  %v3803 = vunpack.c.h.b16 %v788
  %v3804 = vunpack.c.l.b16 %v789
  %v3805 = vunpack.c.h.b16 %v789
  %v3806 = vunpack.c.l.b16 %v790
  %v3807 = vunpack.c.h.b16 %v790
  %v3808 = vunpack.c.l.b16 %v791
  %v3809 = vunpack.c.h.b16 %v791
  %v3810 = vunpack.c.l.b16 %v792
  %v3811 = vunpack.c.h.b16 %v792
  %v3812 = vunpack.c.l.b16 %v793
  %v3813 = vunpack.c.h.b16 %v793
  %v3814 = vunpack.c.l.b16 %v794
  %v3815 = vunpack.c.h.b16 %v794
  %v3816 = vunpack.c.l.b16 %v795
  %v3817 = vunpack.c.h.b16 %v795
  %v3818 = vunpack.c.l.b16 %v796
  %v3819 = vunpack.c.h.b16 %v796
  %v3820 = vunpack.c.l.b16 %v797
  %v3821 = vunpack.c.h.b16 %v797
  %v3822 = vunpack.c.l.b16 %v798
  %v3823 = vunpack.c.h.b16 %v798
  %v3824 = vunpack.c.l.b16 %v799
  %v3825 = vunpack.c.h.b16 %v799
  %v3826 = vunpack.c.l.b16 %v800
  %v3827 = vunpack.c.h.b16 %v800
  %v3828 = vunpack.c.l.b16 %v801
  %v3829 = vunpack.c.h.b16 %v801
  %v3830 = vunpack.c.l.b16 %v802
  %v3831 = vunpack.c.h.b16 %v802
  %v3832 = vunpack.c.l.b16 %v803
  %v3833 = vunpack.c.h.b16 %v803
  %v3834 = vunpack.c.l.b16 %v804
  %v3835 = vunpack.c.h.b16 %v804
  %v3836 = vunpack.c.l.b16 %v805
  %v3837 = vunpack.c.h.b16 %v805
  %v3838 = vunpack.c.l.b16 %v806
  %v3839 = vunpack.c.h.b16 %v806
  %v3840 = vunpack.c.l.b16 %v807
  %v3841 = vunpack.c.h.b16 %v807
  %v3842 = vunpack.c.l.b16 %v808
  %v3843 = vunpack.c.h.b16 %v808
  %v3844 = vunpack.c.l.b16 %v809
  %v3845 = vunpack.c.h.b16 %v809
  %v3846 = vunpack.c.l.b16 %v810
  %v3847 = vunpack.c.h.b16 %v810
  %v3848 = vunpack.c.l.b16 %v811
  %v3849 = vunpack.c.h.b16 %v811
  %v3850 = vunpack.c.l.b16 %v812
  %v3851 = vunpack.c.h.b16 %v812
  %v3852 = vunpack.c.l.b16 %v813
  %v3853 = vunpack.c.h.b16 %v813
  %v3854 = vunpack.c.l.b16 %v814
  %v3855 = vunpack.c.h.b16 %v814
  %v3856 = vunpack.c.l.b16 %v815
  %v3857 = vunpack.c.h.b16 %v815
  %v3858 = vunpack.c.l.b16 %v816
  %v3859 = vunpack.c.h.b16 %v816
  %v3860 = vunpack.c.l.b16 %v817
  %v3861 = vunpack.c.h.b16 %v817
  %v3862 = vunpack.c.l.b16 %v818
  %v3863 = vunpack.c.h.b16 %v818
  %v3864 = vunpack.c.l.b16 %v819
  %v3865 = vunpack.c.h.b16 %v819
  %v3866 = vunpack.c.l.b16 %v820
  %v3867 = vunpack.c.h.b16 %v820
  %v3868 = vunpack.c.l.b16 %v821
  %v3869 = vunpack.c.h.b16 %v821
  %v3870 = vunpack.c.l.b16 %v822
  %v3871 = vunpack.c.h.b16 %v822
  %v3872 = vunpack.c.l.b16 %v823
  %v3873 = vunpack.c.h.b16 %v823
  %v3874 = vunpack.c.l.b16 %v824
  %v3875 = vunpack.c.h.b16 %v824
  %v3876 = vunpack.c.l.b16 %v825
  %v3877 = vunpack.c.h.b16 %v825
  %v3878 = vunpack.c.l.b16 %v826
  %v3879 = vunpack.c.h.b16 %v826
  %v3880 = vunpack.c.l.b16 %v827
  %v3881 = vunpack.c.h.b16 %v827
  %v3882 = vunpack.c.l.b16 %v828
  %v3883 = vunpack.c.h.b16 %v828
  %v3884 = vunpack.c.l.b16 %v829
  %v3885 = vunpack.c.h.b16 %v829
  %v3886 = vunpack.c.l.b16 %v830
  %v3887 = vunpack.c.h.b16 %v830
  %v3888 = vunpack.c.l.b16 %v831
  %v3889 = vunpack.c.h.b16 %v831
  %v3890 = vunpack.c.l.b16 %v832
  %v3891 = vunpack.c.h.b16 %v832
  %v3892 = vunpack.c.l.b16 %v833
  %v3893 = vunpack.c.h.b16 %v833
  %v3894 = vunpack.c.l.b16 %v834
  %v3895 = vunpack.c.h.b16 %v834
  %v3896 = vunpack.c.l.b16 %v835
  %v3897 = vunpack.c.h.b16 %v835
  %v3898 = vunpack.c.l.b16 %v836
  %v3899 = vunpack.c.h.b16 %v836
  %v3900 = vunpack.c.l.b16 %v837
  %v3901 = vunpack.c.h.b16 %v837
  %v3902 = vunpack.c.l.b16 %v838
  %v3903 = vunpack.c.h.b16 %v838
  %v3904 = vunpack.c.l.b16 %v839
  %v3905 = vunpack.c.h.b16 %v839
  %v3906 = vunpack.c.l.b16 %v840
  %v3907 = vunpack.c.h.b16 %v840
  %v3908 = vunpack.c.l.b16 %v841
  %v3909 = vunpack.c.h.b16 %v841
  %v3910 = vunpack.c.l.b16 %v842
  %v3911 = vunpack.c.h.b16 %v842
  %v3912 = vunpack.c.l.b16 %v843
  %v3913 = vunpack.c.h.b16 %v843
  %v3914 = vunpack.c.l.b16 %v844
  %v3915 = vunpack.c.h.b16 %v844
  %v3916 = vunpack.c.l.b16 %v845
  %v3917 = vunpack.c.h.b16 %v845
  %v3918 = vunpack.c.l.b16 %v846
  %v3919 = vunpack.c.h.b16 %v846
  %v3920 = vunpack.c.l.b16 %v847
  %v3921 = vunpack.c.h.b16 %v847
  %v3922 = vunpack.c.l.b16 %v848
  %v3923 = vunpack.c.h.b16 %v848
  %v3924 = vunpack.c.l.b16 %v849
  %v3925 = vunpack.c.h.b16 %v849
  %v3926 = vunpack.c.l.b16 %v850
  %v3927 = vunpack.c.h.b16 %v850
  %v3928 = vunpack.c.l.b16 %v851
  %v3929 = vunpack.c.h.b16 %v851
  %v3930 = vunpack.c.l.b16 %v852
  %v3931 = vunpack.c.h.b16 %v852
  %v3932 = vunpack.c.l.b16 %v853
  %v3933 = vunpack.c.h.b16 %v853
  %v3934 = vunpack.c.l.b16 %v854
  %v3935 = vunpack.c.h.b16 %v854
  %v3936 = vunpack.c.l.b16 %v855
  %v3937 = vunpack.c.h.b16 %v855
  %v3938 = vunpack.c.l.b16 %v856
  %v3939 = vunpack.c.h.b16 %v856
  %v3940 = vunpack.c.l.b16 %v857
  %v3941 = vunpack.c.h.b16 %v857
  %v3942 = vunpack.c.l.b16 %v858
  %v3943 = vunpack.c.h.b16 %v858
  %v3944 = vunpack.c.l.b16 %v859
  %v3945 = vunpack.c.h.b16 %v859
  %v3946 = vunpack.c.l.b16 %v860
  %v3947 = vunpack.c.h.b16 %v860
  %v3948 = vunpack.c.l.b16 %v861
  %v3949 = vunpack.c.h.b16 %v861
  %v3950 = vunpack.c.l.b16 %v862
  %v3951 = vunpack.c.h.b16 %v862
  %v3952 = vunpack.c.l.b16 %v863
  %v3953 = vunpack.c.h.b16 %v863
  %v3954 = vunpack.c.l.b16 %v864
  %v3955 = vunpack.c.h.b16 %v864
  %v3956 = vunpack.c.l.b16 %v865
  %v3957 = vunpack.c.h.b16 %v865
  %v3958 = vunpack.c.l.b16 %v866
  %v3959 = vunpack.c.h.b16 %v866
  %v3960 = vunpack.c.l.b16 %v867
  %v3961 = vunpack.c.h.b16 %v867
  %v3962 = vunpack.c.l.b16 %v868
  %v3963 = vunpack.c.h.b16 %v868
  %v3964 = vunpack.c.l.b16 %v869
  %v3965 = vunpack.c.h.b16 %v869
  %v3966 = vunpack.c.l.b16 %v870
  %v3967 = vunpack.c.h.b16 %v870
  %v3968 = vunpack.c.l.b16 %v871
  %v3969 = vunpack.c.h.b16 %v871
  %v3970 = vunpack.c.l.b16 %v872
  %v3971 = vunpack.c.h.b16 %v872
  %v3972 = vunpack.c.l.b16 %v873
  %v3973 = vunpack.c.h.b16 %v873
  %v3974 = vunpack.c.l.b16 %v874
  %v3975 = vunpack.c.h.b16 %v874
  %v3976 = vunpack.c.l.b16 %v875
  %v3977 = vunpack.c.h.b16 %v875
  %v3978 = vunpack.c.l.b16 %v876
  %v3979 = vunpack.c.h.b16 %v876
  %v3980 = vunpack.c.l.b16 %v877
  %v3981 = vunpack.c.h.b16 %v877
  %v3982 = vunpack.c.l.b16 %v878
  %v3983 = vunpack.c.h.b16 %v878
  %v3984 = vunpack.c.l.b16 %v879
  %v3985 = vunpack.c.h.b16 %v879
  %v3986 = vunpack.c.l.b16 %v880
  %v3987 = vunpack.c.h.b16 %v880
  %v3988 = vunpack.c.l.b16 %v881
  %v3989 = vunpack.c.h.b16 %v881
  %v3990 = vunpack.c.l.b16 %v882
  %v3991 = vunpack.c.h.b16 %v882
  %v3992 = vunpack.c.l.b16 %v883
  %v3993 = vunpack.c.h.b16 %v883
  %v3994 = vunpack.c.l.b16 %v884
  %v3995 = vunpack.c.h.b16 %v884
  %v3996 = vunpack.c.l.b16 %v885
  %v3997 = vunpack.c.h.b16 %v885
  %v3998 = vunpack.c.l.b16 %v886
  %v3999 = vunpack.c.h.b16 %v886
  %v4000 = vunpack.c.l.b16 %v887
  %v4001 = vunpack.c.h.b16 %v887
  %v4002 = vunpack.c.l.b16 %v888
  %v4003 = vunpack.c.h.b16 %v888
  %v4004 = vunpack.c.l.b16 %v889
  %v4005 = vunpack.c.h.b16 %v889
  %v4006 = vunpack.c.l.b16 %v890
  %v4007 = vunpack.c.h.b16 %v890
  %v4008 = vunpack.c.l.b16 %v891
  %v4009 = vunpack.c.h.b16 %v891
  %v4010 = vunpack.c.l.b16 %v892
  %v4011 = vunpack.c.h.b16 %v892
  %v4012 = vunpack.c.l.b16 %v893
  %v4013 = vunpack.c.h.b16 %v893
  %v4014 = vunpack.c.l.b16 %v894
  %v4015 = vunpack.c.h.b16 %v894
  %v4016 = vunpack.c.l.b16 %v895
  %v4017 = vunpack.c.h.b16 %v895
  %v4018 = vunpack.c.l.b16 %v896
  %v4019 = vunpack.c.h.b16 %v896
  %v4020 = vunpack.c.l.b16 %v897
  %v4021 = vunpack.c.h.b16 %v897
  %v4022 = vunpack.c.l.b16 %v898
  %v4023 = vunpack.c.h.b16 %v898
  %v4024 = vunpack.c.l.b16 %v899
  %v4025 = vunpack.c.h.b16 %v899
  %v4026 = vunpack.c.l.b16 %v900
  %v4027 = vunpack.c.h.b16 %v900
  %v4028 = vunpack.c.l.b16 %v901
  %v4029 = vunpack.c.h.b16 %v901
  %v4030 = vunpack.c.l.b16 %v902
  %v4031 = vunpack.c.h.b16 %v902
  %v4032 = vunpack.c.l.b16 %v903
  %v4033 = vunpack.c.h.b16 %v903
  %v4034 = vunpack.c.l.b16 %v904
  %v4035 = vunpack.c.h.b16 %v904
  %v4036 = vunpack.c.l.b16 %v905
  %v4037 = vunpack.c.h.b16 %v905
  %v4038 = vunpack.c.l.b16 %v906
  %v4039 = vunpack.c.h.b16 %v906
  %v4040 = vunpack.c.l.b16 %v907
  %v4041 = vunpack.c.h.b16 %v907
  %v4042 = vunpack.c.l.b16 %v908
  %v4043 = vunpack.c.h.b16 %v908
  %v4044 = vunpack.c.l.b16 %v909
  %v4045 = vunpack.c.h.b16 %v909
  %v4046 = vunpack.c.l.b16 %v910
  %v4047 = vunpack.c.h.b16 %v910
  %v4048 = vunpack.c.l.b16 %v911
  %v4049 = vunpack.c.h.b16 %v911
  %v4050 = vunpack.c.l.b16 %v912
  %v4051 = vunpack.c.h.b16 %v912
  %v4052 = vunpack.c.l.b16 %v913
  %v4053 = vunpack.c.h.b16 %v913
  %v4054 = vunpack.c.l.b16 %v914
  %v4055 = vunpack.c.h.b16 %v914
  %v4056 = vunpack.c.l.b16 %v915
  %v4057 = vunpack.c.h.b16 %v915
  %v4058 = vunpack.c.l.b16 %v916
  %v4059 = vunpack.c.h.b16 %v916
  %v4060 = vunpack.c.l.b16 %v917
  %v4061 = vunpack.c.h.b16 %v917
  %v4062 = vunpack.c.l.b16 %v918
  %v4063 = vunpack.c.h.b16 %v918
  %v4064 = vunpack.c.l.b16 %v919
  %v4065 = vunpack.c.h.b16 %v919
  %v4066 = vunpack.c.l.b16 %v920
  %v4067 = vunpack.c.h.b16 %v920
  %v4068 = vunpack.c.l.b16 %v921
  %v4069 = vunpack.c.h.b16 %v921
  %v4070 = vunpack.c.l.b16 %v922
  %v4071 = vunpack.c.h.b16 %v922
  %v4072 = vunpack.c.l.b16 %v923
  %v4073 = vunpack.c.h.b16 %v923
  %v4074 = vunpack.c.l.b16 %v924
  %v4075 = vunpack.c.h.b16 %v924
  %v4076 = vunpack.c.l.b16 %v925
  %v4077 = vunpack.c.h.b16 %v925
  %v4078 = vunpack.c.l.b16 %v926
  %v4079 = vunpack.c.h.b16 %v926
  %v4080 = vunpack.c.l.b16 %v927
  %v4081 = vunpack.c.h.b16 %v927
  %v4082 = vunpack.c.l.b16 %v928
  %v4083 = vunpack.c.h.b16 %v928
  %v4084 = vunpack.c.l.b16 %v929
  %v4085 = vunpack.c.h.b16 %v929
  %v4086 = vunpack.c.l.b16 %v930
  %v4087 = vunpack.c.h.b16 %v930
  %v4088 = vunpack.c.l.b16 %v931
  %v4089 = vunpack.c.h.b16 %v931
  %v4090 = vunpack.c.l.b16 %v932
  %v4091 = vunpack.c.h.b16 %v932
  %v4092 = vunpack.c.l.b16 %v933
  %v4093 = vunpack.c.h.b16 %v933
  %v4094 = vunpack.c.l.b16 %v934
  %v4095 = vunpack.c.h.b16 %v934
  %v4096 = vunpack.c.l.b16 %v935
  %v4097 = vunpack.c.h.b16 %v935
  %v4098 = vunpack.c.l.b16 %v936
  %v4099 = vunpack.c.h.b16 %v936
  %v4100 = vunpack.c.l.b16 %v937
  %v4101 = vunpack.c.h.b16 %v937
  %v4102 = vunpack.c.l.b16 %v938
  %v4103 = vunpack.c.h.b16 %v938
  %v4104 = vunpack.c.l.b16 %v939
  %v4105 = vunpack.c.h.b16 %v939
  %v4106 = vunpack.c.l.b16 %v940
  %v4107 = vunpack.c.h.b16 %v940
  %v4108 = vunpack.c.l.b16 %v941
  %v4109 = vunpack.c.h.b16 %v941
  %v4110 = vunpack.c.l.b16 %v942
  %v4111 = vunpack.c.h.b16 %v942
  %v4112 = vunpack.c.l.b16 %v943
  %v4113 = vunpack.c.h.b16 %v943
  %v4114 = vunpack.c.l.b16 %v944
  %v4115 = vunpack.c.h.b16 %v944
  %v4116 = vunpack.c.l.b16 %v945
  %v4117 = vunpack.c.h.b16 %v945
  %v4118 = vunpack.c.l.b16 %v946
  %v4119 = vunpack.c.h.b16 %v946
  %v4120 = vunpack.c.l.b16 %v947
  %v4121 = vunpack.c.h.b16 %v947
  %v4122 = vunpack.c.l.b16 %v948
  %v4123 = vunpack.c.h.b16 %v948
  %v4124 = vunpack.c.l.b16 %v949
  %v4125 = vunpack.c.h.b16 %v949
  %v4126 = vunpack.c.l.b16 %v950
  %v4127 = vunpack.c.h.b16 %v950
  %v4128 = vunpack.c.l.b16 %v951
  %v4129 = vunpack.c.h.b16 %v951
  %v4130 = vunpack.c.l.b16 %v952
  %v4131 = vunpack.c.h.b16 %v952
  %v4132 = vunpack.c.l.b16 %v953
  %v4133 = vunpack.c.h.b16 %v953
  %v4134 = vunpack.c.l.b16 %v954
  %v4135 = vunpack.c.h.b16 %v954
  %v4136 = vunpack.c.l.b16 %v955
  %v4137 = vunpack.c.h.b16 %v955
  %v4138 = vunpack.c.l.b16 %v956
  %v4139 = vunpack.c.h.b16 %v956
  %v4140 = vunpack.c.l.b16 %v957
  %v4141 = vunpack.c.h.b16 %v957
  %v4142 = vunpack.c.l.b16 %v958
  %v4143 = vunpack.c.h.b16 %v958
  %v4144 = vunpack.c.l.b16 %v959
  %v4145 = vunpack.c.h.b16 %v959
  %v4146 = vunpack.c.l.b16 %v960
  %v4147 = vunpack.c.h.b16 %v960
  %v4148 = vunpack.c.l.b16 %v961
  %v4149 = vunpack.c.h.b16 %v961
  %v4150 = vunpack.c.l.b16 %v962
  %v4151 = vunpack.c.h.b16 %v962
  %v4152 = vunpack.c.l.b16 %v963
  %v4153 = vunpack.c.h.b16 %v963
  %v4154 = vunpack.c.l.b16 %v964
  %v4155 = vunpack.c.h.b16 %v964
  %v4156 = vunpack.c.l.b16 %v965
  %v4157 = vunpack.c.h.b16 %v965
  %v4158 = vunpack.c.l.b16 %v966
  %v4159 = vunpack.c.h.b16 %v966
  %v4160 = vunpack.c.l.b16 %v967
  %v4161 = vunpack.c.h.b16 %v967
  %v4162 = vunpack.c.l.b16 %v968
  %v4163 = vunpack.c.h.b16 %v968
  %v4164 = vunpack.c.l.b16 %v969
  %v4165 = vunpack.c.h.b16 %v969
  %v4166 = vunpack.c.l.b16 %v970
  %v4167 = vunpack.c.h.b16 %v970
  %v4168 = vunpack.c.l.b16 %v971
  %v4169 = vunpack.c.h.b16 %v971
  %v4170 = vunpack.c.l.b16 %v972
  %v4171 = vunpack.c.h.b16 %v972
  %v4172 = vunpack.c.l.b16 %v973
  %v4173 = vunpack.c.h.b16 %v973
  %v4174 = vunpack.c.l.b16 %v974
  %v4175 = vunpack.c.h.b16 %v974
  %v4176 = vunpack.c.l.b16 %v975
  %v4177 = vunpack.c.h.b16 %v975
  %v4178 = vunpack.c.l.b16 %v976
  %v4179 = vunpack.c.h.b16 %v976
  %v4180 = vunpack.c.l.b16 %v977
  %v4181 = vunpack.c.h.b16 %v977
  %v4182 = vunpack.c.l.b16 %v978
  %v4183 = vunpack.c.h.b16 %v978
  %v4184 = vunpack.c.l.b16 %v979
  %v4185 = vunpack.c.h.b16 %v979
  %v4186 = vunpack.c.l.b16 %v980
  %v4187 = vunpack.c.h.b16 %v980
  %v4188 = vunpack.c.l.b16 %v981
  %v4189 = vunpack.c.h.b16 %v981
  %v4190 = vunpack.c.l.b16 %v982
  %v4191 = vunpack.c.h.b16 %v982
  %v4192 = vunpack.c.l.b16 %v983
  %v4193 = vunpack.c.h.b16 %v983
  %v4194 = vunpack.c.l.b16 %v984
  %v4195 = vunpack.c.h.b16 %v984
  %v4196 = vunpack.c.l.b16 %v985
  %v4197 = vunpack.c.h.b16 %v985
  %v4198 = vunpack.c.l.b16 %v986
  %v4199 = vunpack.c.h.b16 %v986
  %v4200 = vunpack.c.l.b16 %v987
  %v4201 = vunpack.c.h.b16 %v987
  %v4202 = vunpack.c.l.b16 %v988
  %v4203 = vunpack.c.h.b16 %v988
  %v4204 = vunpack.c.l.b16 %v989
  %v4205 = vunpack.c.h.b16 %v989
  %v4206 = vunpack.c.l.b16 %v990
  %v4207 = vunpack.c.h.b16 %v990
  %v4208 = vunpack.c.l.b16 %v991
  %v4209 = vunpack.c.h.b16 %v991
  %v4210 = vunpack.c.l.b16 %v992
  %v4211 = vunpack.c.h.b16 %v992
  %v4212 = vunpack.c.l.b16 %v993
  %v4213 = vunpack.c.h.b16 %v993
  %v4214 = vunpack.c.l.b16 %v994
  %v4215 = vunpack.c.h.b16 %v994
  %v4216 = vunpack.c.l.b16 %v995
  %v4217 = vunpack.c.h.b16 %v995
  %v4218 = vunpack.c.l.b16 %v996
  %v4219 = vunpack.c.h.b16 %v996
  %v4220 = vunpack.c.l.b16 %v997
  %v4221 = vunpack.c.h.b16 %v997
  %v4222 = vunpack.c.l.b16 %v998
  %v4223 = vunpack.c.h.b16 %v998
  %v4224 = vunpack.c.l.b16 %v999
  %v4225 = vunpack.c.h.b16 %v999
  %v4226 = vunpack.c.l.b16 %v1000
  %v4227 = vunpack.c.h.b16 %v1000
  %v4228 = vunpack.c.l.b16 %v1001
  %v4229 = vunpack.c.h.b16 %v1001
  %v4230 = vunpack.c.l.b16 %v1002
  %v4231 = vunpack.c.h.b16 %v1002
  %v4232 = vunpack.c.l.b16 %v1003
  %v4233 = vunpack.c.h.b16 %v1003
  %v4234 = vunpack.c.l.b16 %v1004
  %v4235 = vunpack.c.h.b16 %v1004
  %v4236 = vunpack.c.l.b16 %v1005
  %v4237 = vunpack.c.h.b16 %v1005
  %v4238 = vunpack.c.l.b16 %v1006
  %v4239 = vunpack.c.h.b16 %v1006
  %v4240 = vunpack.c.l.b16 %v1007
  %v4241 = vunpack.c.h.b16 %v1007
  %v4242 = vunpack.c.l.b16 %v1008
  %v4243 = vunpack.c.h.b16 %v1008
  %v4244 = vunpack.c.l.b16 %v1009
  %v4245 = vunpack.c.h.b16 %v1009
  %v4246 = vunpack.c.l.b16 %v1010
  %v4247 = vunpack.c.h.b16 %v1010
  %v4248 = vunpack.c.l.b16 %v1011
  %v4249 = vunpack.c.h.b16 %v1011
  %v4250 = vunpack.c.l.b16 %v1012
  %v4251 = vunpack.c.h.b16 %v1012
  %v4252 = vunpack.c.l.b16 %v1013
  %v4253 = vunpack.c.h.b16 %v1013
  %v4254 = vunpack.c.l.b16 %v1014
  %v4255 = vunpack.c.h.b16 %v1014
  %v4256 = vunpack.c.l.b16 %v1015
  %v4257 = vunpack.c.h.b16 %v1015
  %v4258 = vunpack.c.l.b16 %v1016
  %v4259 = vunpack.c.h.b16 %v1016
  %v4260 = vunpack.c.l.b16 %v1017
  %v4261 = vunpack.c.h.b16 %v1017
  %v4262 = vunpack.c.l.b16 %v1018
  %v4263 = vunpack.c.h.b16 %v1018
  %v4264 = vunpack.c.l.b16 %v1019
  %v4265 = vunpack.c.h.b16 %v1019
  %v4266 = vunpack.c.l.b16 %v1020
  %v4267 = vunpack.c.h.b16 %v1020
  %v4268 = vunpack.c.l.b16 %v1021
  %v4269 = vunpack.c.h.b16 %v1021
  %v4270 = vunpack.c.l.b16 %v1022
  %v4271 = vunpack.c.h.b16 %v1022
  %v4272 = vunpack.c.l.b16 %v1023
  %v4273 = vunpack.c.h.b16 %v1023
  %v4274 = vunpack.c.l.b16 %v1024
  %v4275 = vunpack.c.h.b16 %v1024
  %v4276 = vunpack.c.l.b16 %v1025
  %v4277 = vunpack.c.h.b16 %v1025
  %v4278 = vunpack.c.l.b16 %v1026
  %v4279 = vunpack.c.h.b16 %v1026
  %v4280 = vunpack.c.l.b16 %v1027
  %v4281 = vunpack.c.h.b16 %v1027
  %v4282 = vunpack.c.l.b16 %v1028
  %v4283 = vunpack.c.h.b16 %v1028
  %v4284 = vunpack.c.l.b16 %v1029
  %v4285 = vunpack.c.h.b16 %v1029
  %v4286 = vunpack.c.l.b16 %v1030
  %v4287 = vunpack.c.h.b16 %v1030
  %v4288 = vunpack.c.l.b16 %v1031
  %v4289 = vunpack.c.h.b16 %v1031
  %v4290 = vunpack.c.l.b16 %v1032
  %v4291 = vunpack.c.h.b16 %v1032
  %v4292 = vunpack.c.l.b16 %v1033
  %v4293 = vunpack.c.h.b16 %v1033
  %v4294 = vunpack.c.l.b16 %v1034
  %v4295 = vunpack.c.h.b16 %v1034
  %v4296 = vunpack.c.l.b16 %v1035
  %v4297 = vunpack.c.h.b16 %v1035
  %v4298 = vunpack.c.l.b16 %v1036
  %v4299 = vunpack.c.h.b16 %v1036
  %v4300 = vunpack.c.l.b16 %v1037
  %v4301 = vunpack.c.h.b16 %v1037
  %v4302 = vunpack.c.l.b16 %v1038
  %v4303 = vunpack.c.h.b16 %v1038
  %v4304 = vunpack.c.l.b16 %v1039
  %v4305 = vunpack.c.h.b16 %v1039
  %v4306 = vunpack.c.l.b16 %v1040
  %v4307 = vunpack.c.h.b16 %v1040
  %v4308 = vunpack.c.l.b16 %v1041
  %v4309 = vunpack.c.h.b16 %v1041
  %v4310 = vunpack.c.l.b16 %v1042
  %v4311 = vunpack.c.h.b16 %v1042
  %v4312 = vunpack.c.l.b16 %v1043
  %v4313 = vunpack.c.h.b16 %v1043
  %v4314 = vunpack.c.l.b16 %v1044
  %v4315 = vunpack.c.h.b16 %v1044
  %v4316 = vunpack.c.l.b16 %v1045
  %v4317 = vunpack.c.h.b16 %v1045
  %v4318 = vunpack.c.l.b16 %v1046
  %v4319 = vunpack.c.h.b16 %v1046
  %v4320 = vunpack.c.l.b16 %v1047
  %v4321 = vunpack.c.h.b16 %v1047
  %v4322 = vunpack.c.l.b16 %v1048
  %v4323 = vunpack.c.h.b16 %v1048
  %v4324 = vunpack.c.l.b16 %v1049
  %v4325 = vunpack.c.h.b16 %v1049
  %v4326 = vunpack.c.l.b16 %v1050
  %v4327 = vunpack.c.h.b16 %v1050
  %v4328 = vunpack.c.l.b16 %v1051
  %v4329 = vunpack.c.h.b16 %v1051
  %v4330 = vunpack.c.l.b16 %v1052
  %v4331 = vunpack.c.h.b16 %v1052
  %v4332 = vunpack.c.l.b16 %v1053
  %v4333 = vunpack.c.h.b16 %v1053
  %v4334 = vunpack.c.l.b16 %v1054
  %v4335 = vunpack.c.h.b16 %v1054
  %v4336 = vunpack.c.l.b16 %v1055
  %v4337 = vunpack.c.h.b16 %v1055
  %v4338 = vunpack.c.l.b16 %v1056
  %v4339 = vunpack.c.h.b16 %v1056
  %v4340 = vunpack.c.l.b16 %v1057
  %v4341 = vunpack.c.h.b16 %v1057
  %v4342 = vunpack.c.l.b16 %v1058
  %v4343 = vunpack.c.h.b16 %v1058
  %v4344 = vunpack.c.l.b16 %v1059
  %v4345 = vunpack.c.h.b16 %v1059
  %v4346 = vunpack.c.l.b16 %v1060
  %v4347 = vunpack.c.h.b16 %v1060
  %v4348 = vunpack.c.l.b16 %v1061
  %v4349 = vunpack.c.h.b16 %v1061
  %v4350 = vunpack.c.l.b16 %v1062
  %v4351 = vunpack.c.h.b16 %v1062
  %v4352 = vunpack.c.l.b16 %v1063
  %v4353 = vunpack.c.h.b16 %v1063
  %v4354 = vunpack.c.l.b16 %v1064
  %v4355 = vunpack.c.h.b16 %v1064
  %v4356 = vunpack.c.l.b16 %v1065
  %v4357 = vunpack.c.h.b16 %v1065
  %v4358 = vunpack.c.l.b16 %v1066
  %v4359 = vunpack.c.h.b16 %v1066
  %v4360 = vunpack.c.l.b16 %v1067
  %v4361 = vunpack.c.h.b16 %v1067
  %v4362 = vunpack.c.l.b16 %v1068
  %v4363 = vunpack.c.h.b16 %v1068
  %v4364 = vunpack.c.l.b16 %v1069
  %v4365 = vunpack.c.h.b16 %v1069
  %v4366 = vunpack.c.l.b16 %v1070
  %v4367 = vunpack.c.h.b16 %v1070
  %v4368 = vunpack.c.l.b16 %v1071
  %v4369 = vunpack.c.h.b16 %v1071
  %v4370 = vunpack.c.l.b16 %v1072
  %v4371 = vunpack.c.h.b16 %v1072
  %v4372 = vunpack.c.l.b16 %v1073
  %v4373 = vunpack.c.h.b16 %v1073
  %v4374 = vunpack.c.l.b16 %v1074
  %v4375 = vunpack.c.h.b16 %v1074
  %v4376 = vunpack.c.l.b16 %v1075
  %v4377 = vunpack.c.h.b16 %v1075
  %v4378 = vunpack.c.l.b16 %v1076
  %v4379 = vunpack.c.h.b16 %v1076
  %v4380 = vunpack.c.l.b16 %v1077
  %v4381 = vunpack.c.h.b16 %v1077
  %v4382 = vunpack.c.l.b16 %v1078
  %v4383 = vunpack.c.h.b16 %v1078
  %v4384 = vunpack.c.l.b16 %v1079
  %v4385 = vunpack.c.h.b16 %v1079
  %v4386 = vunpack.c.l.b16 %v1080
  %v4387 = vunpack.c.h.b16 %v1080
  %v4388 = vunpack.c.l.b16 %v1081
  %v4389 = vunpack.c.h.b16 %v1081
  %v4390 = vunpack.c.l.b16 %v1082
  %v4391 = vunpack.c.h.b16 %v1082
  %v4392 = vunpack.c.l.b16 %v1083
  %v4393 = vunpack.c.h.b16 %v1083
  %v4394 = vunpack.c.l.b16 %v1084
  %v4395 = vunpack.c.h.b16 %v1084
  %v4396 = vunpack.c.l.b16 %v1085
  %v4397 = vunpack.c.h.b16 %v1085
  %v4398 = vunpack.c.l.b16 %v1086
  %v4399 = vunpack.c.h.b16 %v1086
  %v4400 = vunpack.c.l.b16 %v1087
  %v4401 = vunpack.c.h.b16 %v1087
  %v4402 = vunpack.c.l.b16 %v1088
  %v4403 = vunpack.c.h.b16 %v1088
  %v4404 = vunpack.c.l.b16 %v1089
  %v4405 = vunpack.c.h.b16 %v1089
  %v4406 = vunpack.c.l.b16 %v1090
  %v4407 = vunpack.c.h.b16 %v1090
  %v4408 = vunpack.c.l.b16 %v1091
  %v4409 = vunpack.c.h.b16 %v1091
  %v4410 = vunpack.c.l.b16 %v1092
  %v4411 = vunpack.c.h.b16 %v1092
  %v4412 = vunpack.c.l.b16 %v1093
  %v4413 = vunpack.c.h.b16 %v1093
  %v4414 = vunpack.c.l.b16 %v1094
  %v4415 = vunpack.c.h.b16 %v1094
  %v4416 = vunpack.c.l.b16 %v1095
  %v4417 = vunpack.c.h.b16 %v1095
  %v4418 = vunpack.c.l.b16 %v1096
  %v4419 = vunpack.c.h.b16 %v1096
  %v4420 = vunpack.c.l.b16 %v1097
  %v4421 = vunpack.c.h.b16 %v1097
  %v4422 = vunpack.c.l.b16 %v1098
  %v4423 = vunpack.c.h.b16 %v1098
  %v4424 = vunpack.c.l.b16 %v1099
  %v4425 = vunpack.c.h.b16 %v1099
  %v4426 = vunpack.c.l.b16 %v1100
  %v4427 = vunpack.c.h.b16 %v1100
  %v4428 = vunpack.c.l.b16 %v1101
  %v4429 = vunpack.c.h.b16 %v1101
  %v4430 = vunpack.c.l.b16 %v1102
  %v4431 = vunpack.c.h.b16 %v1102
  %v4432 = vunpack.c.l.b16 %v1103
  %v4433 = vunpack.c.h.b16 %v1103
  %v4434 = vunpack.c.l.b16 %v1104
  %v4435 = vunpack.c.h.b16 %v1104
  %v4436 = vunpack.c.l.b16 %v1105
  %v4437 = vunpack.c.h.b16 %v1105
  %v4438 = vunpack.c.l.b16 %v1106
  %v4439 = vunpack.c.h.b16 %v1106
  %v4440 = vunpack.c.l.b16 %v1107
  %v4441 = vunpack.c.h.b16 %v1107
  %v4442 = vunpack.c.l.b16 %v1108
  %v4443 = vunpack.c.h.b16 %v1108
  %v4444 = vunpack.c.l.b16 %v1109
  %v4445 = vunpack.c.h.b16 %v1109
  %v4446 = vunpack.c.l.b16 %v1110
  %v4447 = vunpack.c.h.b16 %v1110
  %v4448 = vunpack.c.l.b16 %v1111
  %v4449 = vunpack.c.h.b16 %v1111
  %v4450 = vunpack.c.l.b16 %v1112
  %v4451 = vunpack.c.h.b16 %v1112
  %v4452 = vunpack.c.l.b16 %v1113
  %v4453 = vunpack.c.h.b16 %v1113
  %v4454 = vunpack.c.l.b16 %v1114
  %v4455 = vunpack.c.h.b16 %v1114
  %v4456 = vpack.c.b16 %v2412, %v2408
  %v4457 = vpack.c.b16 %v2413, %v2409
  %v4458 = vpack.c.b16 %v2414, %v2410
  %v4459 = vpack.c.b16 %v2415, %v2411
  %v4460 = vpack.c.b16 %v2420, %v2416
  %v4461 = vpack.c.b16 %v2421, %v2417
  %v4462 = vpack.c.b16 %v2422, %v2418
  %v4463 = vpack.c.b16 %v2423, %v2419
  %v4464 = vpack.c.b16 %v2428, %v2424
  %v4465 = vpack.c.b16 %v2429, %v2425
  %v4466 = vpack.c.b16 %v2430, %v2426
  %v4467 = vpack.c.b16 %v2431, %v2427
  %v4468 = vpack.c.b16 %v2436, %v2432
  %v4469 = vpack.c.b16 %v2437, %v2433
  %v4470 = vpack.c.b16 %v2438, %v2434
  %v4471 = vpack.c.b16 %v2439, %v2435
  %v4472 = vpack.c.b16 %v2444, %v2440
  %v4473 = vpack.c.b16 %v2445, %v2441
  %v4474 = vpack.c.b16 %v2446, %v2442
  %v4475 = vpack.c.b16 %v2447, %v2443
  %v4476 = vpack.c.b16 %v2452, %v2448
  %v4477 = vpack.c.b16 %v2453, %v2449
  %v4478 = vpack.c.b16 %v2454, %v2450
  %v4479 = vpack.c.b16 %v2455, %v2451
  %v4480 = vpack.c.b16 %v2460, %v2456
  %v4481 = vpack.c.b16 %v2461, %v2457
  %v4482 = vpack.c.b16 %v2462, %v2458
  %v4483 = vpack.c.b16 %v2463, %v2459
  %v4484 = vpack.c.b16 %v2468, %v2464
  %v4485 = vpack.c.b16 %v2469, %v2465
  %v4486 = vpack.c.b16 %v2470, %v2466
  %v4487 = vpack.c.b16 %v2471, %v2467
  %v4488 = vpack.c.b16 %v2476, %v2472
  %v4489 = vpack.c.b16 %v2477, %v2473
  %v4490 = vpack.c.b16 %v2478, %v2474
  %v4491 = vpack.c.b16 %v2479, %v2475
  %v4492 = vpack.c.b16 %v2484, %v2480
  %v4493 = vpack.c.b16 %v2485, %v2481
  %v4494 = vpack.c.b16 %v2486, %v2482
  %v4495 = vpack.c.b16 %v2487, %v2483
  %v4496 = vpack.c.b16 %v2492, %v2488
  %v4497 = vpack.c.b16 %v2493, %v2489
  %v4498 = vpack.c.b16 %v2494, %v2490
  %v4499 = vpack.c.b16 %v2495, %v2491
  %v4500 = vpack.c.b16 %v2500, %v2496
  %v4501 = vpack.c.b16 %v2501, %v2497
  %v4502 = vpack.c.b16 %v2502, %v2498
  %v4503 = vpack.c.b16 %v2503, %v2499
  %v4504 = vpack.c.b16 %v2508, %v2504
  %v4505 = vpack.c.b16 %v2509, %v2505
  %v4506 = vpack.c.b16 %v2510, %v2506
  %v4507 = vpack.c.b16 %v2511, %v2507
  %v4508 = vpack.c.b16 %v2516, %v2512
  %v4509 = vpack.c.b16 %v2517, %v2513
  %v4510 = vpack.c.b16 %v2518, %v2514
  %v4511 = vpack.c.b16 %v2519, %v2515
  %v4512 = vpack.c.b16 %v2524, %v2520
  %v4513 = vpack.c.b16 %v2525, %v2521
  %v4514 = vpack.c.b16 %v2526, %v2522
  %v4515 = vpack.c.b16 %v2527, %v2523
  %v4516 = vpack.c.b16 %v2532, %v2528
  %v4517 = vpack.c.b16 %v2533, %v2529
  %v4518 = vpack.c.b16 %v2534, %v2530
  %v4519 = vpack.c.b16 %v2535, %v2531
  %v4520 = vpack.c.b16 %v2540, %v2536
  %v4521 = vpack.c.b16 %v2541, %v2537
  %v4522 = vpack.c.b16 %v2542, %v2538
  %v4523 = vpack.c.b16 %v2543, %v2539
  %v4524 = vpack.c.b16 %v2548, %v2544
  %v4525 = vpack.c.b16 %v2549, %v2545
  %v4526 = vpack.c.b16 %v2550, %v2546
  %v4527 = vpack.c.b16 %v2551, %v2547
  %v4528 = vpack.c.b16 %v2556, %v2552
  %v4529 = vpack.c.b16 %v2557, %v2553
  %v4530 = vpack.c.b16 %v2558, %v2554
  %v4531 = vpack.c.b16 %v2559, %v2555
  %v4532 = vpack.c.b16 %v2564, %v2560
  %v4533 = vpack.c.b16 %v2565, %v2561
  %v4534 = vpack.c.b16 %v2566, %v2562
  %v4535 = vpack.c.b16 %v2567, %v2563
  %v4536 = vpack.c.b16 %v2572, %v2568
  %v4537 = vpack.c.b16 %v2573, %v2569
  %v4538 = vpack.c.b16 %v2574, %v2570
  %v4539 = vpack.c.b16 %v2575, %v2571
  %v4540 = vpack.c.b16 %v2580, %v2576
  %v4541 = vpack.c.b16 %v2581, %v2577
  %v4542 = vpack.c.b16 %v2582, %v2578
  %v4543 = vpack.c.b16 %v2583, %v2579
  %v4544 = vpack.c.b16 %v2588, %v2584
  %v4545 = vpack.c.b16 %v2589, %v2585
  %v4546 = vpack.c.b16 %v2590, %v2586
  %v4547 = vpack.c.b16 %v2591, %v2587
  %v4548 = vpack.c.b16 %v2596, %v2592
  %v4549 = vpack.c.b16 %v2597, %v2593
  %v4550 = vpack.c.b16 %v2598, %v2594
  %v4551 = vpack.c.b16 %v2599, %v2595
  %v4552 = vpack.c.b16 %v2604, %v2600
  %v4553 = vpack.c.b16 %v2605, %v2601
  %v4554 = vpack.c.b16 %v2606, %v2602
  %v4555 = vpack.c.b16 %v2607, %v2603
  %v4556 = vpack.c.b16 %v2612, %v2608
  %v4557 = vpack.c.b16 %v2613, %v2609
  %v4558 = vpack.c.b16 %v2614, %v2610
  %v4559 = vpack.c.b16 %v2615, %v2611
  %v4560 = vpack.c.b16 %v2620, %v2616
  %v4561 = vpack.c.b16 %v2621, %v2617
  %v4562 = vpack.c.b16 %v2622, %v2618
  %v4563 = vpack.c.b16 %v2623, %v2619
  %v4564 = vpack.c.b16 %v2628, %v2624
  %v4565 = vpack.c.b16 %v2629, %v2625
  %v4566 = vpack.c.b16 %v2630, %v2626
  %v4567 = vpack.c.b16 %v2631, %v2627
  %v4568 = vpack.c.b16 %v2636, %v2632
  %v4569 = vpack.c.b16 %v2637, %v2633
  %v4570 = vpack.c.b16 %v2638, %v2634
  %v4571 = vpack.c.b16 %v2639, %v2635
  %v4572 = vpack.c.b16 %v2644, %v2640
  %v4573 = vpack.c.b16 %v2645, %v2641
  %v4574 = vpack.c.b16 %v2646, %v2642
  %v4575 = vpack.c.b16 %v2647, %v2643
  %v4576 = vpack.c.b16 %v2652, %v2648
  %v4577 = vpack.c.b16 %v2653, %v2649
  %v4578 = vpack.c.b16 %v2654, %v2650
  %v4579 = vpack.c.b16 %v2655, %v2651
  %v4580 = vpack.c.b16 %v2660, %v2656
  %v4581 = vpack.c.b16 %v2661, %v2657
  %v4582 = vpack.c.b16 %v2662, %v2658
  %v4583 = vpack.c.b16 %v2663, %v2659
  %v4584 = vpack.c.b16 %v2668, %v2664
  %v4585 = vpack.c.b16 %v2669, %v2665
  %v4586 = vpack.c.b16 %v2670, %v2666
  %v4587 = vpack.c.b16 %v2671, %v2667
  %v4588 = vpack.c.b16 %v2676, %v2672
  %v4589 = vpack.c.b16 %v2677, %v2673
  %v4590 = vpack.c.b16 %v2678, %v2674
  %v4591 = vpack.c.b16 %v2679, %v2675
  %v4592 = vpack.c.b16 %v2684, %v2680
  %v4593 = vpack.c.b16 %v2685, %v2681
  %v4594 = vpack.c.b16 %v2686, %v2682
  %v4595 = vpack.c.b16 %v2687, %v2683
  %v4596 = vpack.c.b16 %v2692, %v2688
  %v4597 = vpack.c.b16 %v2693, %v2689
  %v4598 = vpack.c.b16 %v2694, %v2690
  %v4599 = vpack.c.b16 %v2695, %v2691
  %v4600 = vpack.c.b16 %v2700, %v2696
  %v4601 = vpack.c.b16 %v2701, %v2697
  %v4602 = vpack.c.b16 %v2702, %v2698
  %v4603 = vpack.c.b16 %v2703, %v2699
  %v4604 = vpack.c.b16 %v2708, %v2704
  %v4605 = vpack.c.b16 %v2709, %v2705
  %v4606 = vpack.c.b16 %v2710, %v2706
  %v4607 = vpack.c.b16 %v2711, %v2707
  %v4608 = vpack.c.b16 %v2716, %v2712
  %v4609 = vpack.c.b16 %v2717, %v2713
  %v4610 = vpack.c.b16 %v2718, %v2714
  %v4611 = vpack.c.b16 %v2719, %v2715
  %v4612 = vpack.c.b16 %v2724, %v2720
  %v4613 = vpack.c.b16 %v2725, %v2721
  %v4614 = vpack.c.b16 %v2726, %v2722
  %v4615 = vpack.c.b16 %v2727, %v2723
  %v4616 = vpack.c.b16 %v2732, %v2728
  %v4617 = vpack.c.b16 %v2733, %v2729
  %v4618 = vpack.c.b16 %v2734, %v2730
  %v4619 = vpack.c.b16 %v2735, %v2731
  %v4620 = vpack.c.b16 %v2740, %v2736
  %v4621 = vpack.c.b16 %v2741, %v2737
  %v4622 = vpack.c.b16 %v2742, %v2738
  %v4623 = vpack.c.b16 %v2743, %v2739
  %v4624 = vpack.c.b16 %v2748, %v2744
  %v4625 = vpack.c.b16 %v2749, %v2745
  %v4626 = vpack.c.b16 %v2750, %v2746
  %v4627 = vpack.c.b16 %v2751, %v2747
  %v4628 = vpack.c.b16 %v2756, %v2752
  %v4629 = vpack.c.b16 %v2757, %v2753
  %v4630 = vpack.c.b16 %v2758, %v2754
  %v4631 = vpack.c.b16 %v2759, %v2755
  %v4632 = vpack.c.b16 %v2764, %v2760
  %v4633 = vpack.c.b16 %v2765, %v2761
  %v4634 = vpack.c.b16 %v2766, %v2762
  %v4635 = vpack.c.b16 %v2767, %v2763
  %v4636 = vpack.c.b16 %v2772, %v2768
  %v4637 = vpack.c.b16 %v2773, %v2769
  %v4638 = vpack.c.b16 %v2774, %v2770
  %v4639 = vpack.c.b16 %v2775, %v2771
  %v4640 = vpack.c.b16 %v2780, %v2776
  %v4641 = vpack.c.b16 %v2781, %v2777
  %v4642 = vpack.c.b16 %v2782, %v2778
  %v4643 = vpack.c.b16 %v2783, %v2779
  %v4644 = vpack.c.b16 %v2788, %v2784
  %v4645 = vpack.c.b16 %v2789, %v2785
  %v4646 = vpack.c.b16 %v2790, %v2786
  %v4647 = vpack.c.b16 %v2791, %v2787
  %v4648 = vpack.c.b16 %v2796, %v2792
  %v4649 = vpack.c.b16 %v2797, %v2793
  %v4650 = vpack.c.b16 %v2798, %v2794
  %v4651 = vpack.c.b16 %v2799, %v2795
  %v4652 = vpack.c.b16 %v2804, %v2800
  %v4653 = vpack.c.b16 %v2805, %v2801
  %v4654 = vpack.c.b16 %v2806, %v2802
  %v4655 = vpack.c.b16 %v2807, %v2803
  %v4656 = vpack.c.b16 %v2812, %v2808
  %v4657 = vpack.c.b16 %v2813, %v2809
  %v4658 = vpack.c.b16 %v2814, %v2810
  %v4659 = vpack.c.b16 %v2815, %v2811
  %v4660 = vpack.c.b16 %v2820, %v2816
  %v4661 = vpack.c.b16 %v2821, %v2817
  %v4662 = vpack.c.b16 %v2822, %v2818
  %v4663 = vpack.c.b16 %v2823, %v2819
  %v4664 = vpack.c.b16 %v2828, %v2824
  %v4665 = vpack.c.b16 %v2829, %v2825
  %v4666 = vpack.c.b16 %v2830, %v2826
  %v4667 = vpack.c.b16 %v2831, %v2827
  %v4668 = vpack.c.b16 %v2836, %v2832
  %v4669 = vpack.c.b16 %v2837, %v2833
  %v4670 = vpack.c.b16 %v2838, %v2834
  %v4671 = vpack.c.b16 %v2839, %v2835
  %v4672 = vpack.c.b16 %v2844, %v2840
  %v4673 = vpack.c.b16 %v2845, %v2841
  %v4674 = vpack.c.b16 %v2846, %v2842
  %v4675 = vpack.c.b16 %v2847, %v2843
  %v4676 = vpack.c.b16 %v2852, %v2848
  %v4677 = vpack.c.b16 %v2853, %v2849
  %v4678 = vpack.c.b16 %v2854, %v2850
  %v4679 = vpack.c.b16 %v2855, %v2851
  %v4680 = vpack.c.b16 %v2860, %v2856
  %v4681 = vpack.c.b16 %v2861, %v2857
  %v4682 = vpack.c.b16 %v2862, %v2858
  %v4683 = vpack.c.b16 %v2863, %v2859
  %v4684 = vpack.c.b16 %v2868, %v2864
  %v4685 = vpack.c.b16 %v2869, %v2865
  %v4686 = vpack.c.b16 %v2870, %v2866
  %v4687 = vpack.c.b16 %v2871, %v2867
  %v4688 = vpack.c.b16 %v2876, %v2872
  %v4689 = vpack.c.b16 %v2877, %v2873
  %v4690 = vpack.c.b16 %v2878, %v2874
  %v4691 = vpack.c.b16 %v2879, %v2875
  %v4692 = vpack.c.b16 %v2884, %v2880
  %v4693 = vpack.c.b16 %v2885, %v2881
  %v4694 = vpack.c.b16 %v2886, %v2882
  %v4695 = vpack.c.b16 %v2887, %v2883
  %v4696 = vpack.c.b16 %v2892, %v2888
  %v4697 = vpack.c.b16 %v2893, %v2889
  %v4698 = vpack.c.b16 %v2894, %v2890
  %v4699 = vpack.c.b16 %v2895, %v2891
  %v4700 = vpack.c.b16 %v2900, %v2896
  %v4701 = vpack.c.b16 %v2901, %v2897
  %v4702 = vpack.c.b16 %v2902, %v2898
  %v4703 = vpack.c.b16 %v2903, %v2899
  %v4704 = vpack.c.b16 %v2908, %v2904
  %v4705 = vpack.c.b16 %v2909, %v2905
  %v4706 = vpack.c.b16 %v2910, %v2906
  %v4707 = vpack.c.b16 %v2911, %v2907
  %v4708 = vpack.c.b16 %v2916, %v2912
  %v4709 = vpack.c.b16 %v2917, %v2913
  %v4710 = vpack.c.b16 %v2918, %v2914
  %v4711 = vpack.c.b16 %v2919, %v2915
  %v4712 = vpack.c.b16 %v2924, %v2920
  %v4713 = vpack.c.b16 %v2925, %v2921
  %v4714 = vpack.c.b16 %v2926, %v2922
  %v4715 = vpack.c.b16 %v2927, %v2923
  %v4716 = vpack.c.b16 %v2932, %v2928
  %v4717 = vpack.c.b16 %v2933, %v2929
  %v4718 = vpack.c.b16 %v2934, %v2930
  %v4719 = vpack.c.b16 %v2935, %v2931
  %v4720 = vpack.c.b16 %v2940, %v2936
  %v4721 = vpack.c.b16 %v2941, %v2937
  %v4722 = vpack.c.b16 %v2942, %v2938
  %v4723 = vpack.c.b16 %v2943, %v2939
  %v4724 = vpack.c.b16 %v2948, %v2944
  %v4725 = vpack.c.b16 %v2949, %v2945
  %v4726 = vpack.c.b16 %v2950, %v2946
  %v4727 = vpack.c.b16 %v2951, %v2947
  %v4728 = vpack.c.b16 %v2956, %v2952
  %v4729 = vpack.c.b16 %v2957, %v2953
  %v4730 = vpack.c.b16 %v2958, %v2954
  %v4731 = vpack.c.b16 %v2959, %v2955
  %v4732 = vpack.c.b16 %v2964, %v2960
  %v4733 = vpack.c.b16 %v2965, %v2961
  %v4734 = vpack.c.b16 %v2966, %v2962
  %v4735 = vpack.c.b16 %v2967, %v2963
  %v4736 = vpack.c.b16 %v2972, %v2968
  %v4737 = vpack.c.b16 %v2973, %v2969
  %v4738 = vpack.c.b16 %v2974, %v2970
  %v4739 = vpack.c.b16 %v2975, %v2971
  %v4740 = vpack.c.b16 %v2980, %v2976
  %v4741 = vpack.c.b16 %v2981, %v2977
  %v4742 = vpack.c.b16 %v2982, %v2978
  %v4743 = vpack.c.b16 %v2983, %v2979
  %v4744 = vpack.c.b16 %v2988, %v2984
  %v4745 = vpack.c.b16 %v2989, %v2985
  %v4746 = vpack.c.b16 %v2990, %v2986
  %v4747 = vpack.c.b16 %v2991, %v2987
  %v4748 = vpack.c.b16 %v2996, %v2992
  %v4749 = vpack.c.b16 %v2997, %v2993
  %v4750 = vpack.c.b16 %v2998, %v2994
  %v4751 = vpack.c.b16 %v2999, %v2995
  %v4752 = vpack.c.b16 %v3004, %v3000
  %v4753 = vpack.c.b16 %v3005, %v3001
  %v4754 = vpack.c.b16 %v3006, %v3002
  %v4755 = vpack.c.b16 %v3007, %v3003
  %v4756 = vpack.c.b16 %v3012, %v3008
  %v4757 = vpack.c.b16 %v3013, %v3009
  %v4758 = vpack.c.b16 %v3014, %v3010
  %v4759 = vpack.c.b16 %v3015, %v3011
  %v4760 = vpack.c.b16 %v3020, %v3016
  %v4761 = vpack.c.b16 %v3021, %v3017
  %v4762 = vpack.c.b16 %v3022, %v3018
  %v4763 = vpack.c.b16 %v3023, %v3019
  %v4764 = vpack.c.b16 %v3028, %v3024
  %v4765 = vpack.c.b16 %v3029, %v3025
  %v4766 = vpack.c.b16 %v3030, %v3026
  %v4767 = vpack.c.b16 %v3031, %v3027
  %v4768 = vpack.c.b16 %v3036, %v3032
  %v4769 = vpack.c.b16 %v3037, %v3033
  %v4770 = vpack.c.b16 %v3038, %v3034
  %v4771 = vpack.c.b16 %v3039, %v3035
  %v4772 = vpack.c.b16 %v3044, %v3040
  %v4773 = vpack.c.b16 %v3045, %v3041
  %v4774 = vpack.c.b16 %v3046, %v3042
  %v4775 = vpack.c.b16 %v3047, %v3043
  %v4776 = vpack.c.b16 %v3052, %v3048
  %v4777 = vpack.c.b16 %v3053, %v3049
  %v4778 = vpack.c.b16 %v3054, %v3050
  %v4779 = vpack.c.b16 %v3055, %v3051
  %v4780 = vpack.c.b16 %v3060, %v3056
  %v4781 = vpack.c.b16 %v3061, %v3057
  %v4782 = vpack.c.b16 %v3062, %v3058
  %v4783 = vpack.c.b16 %v3063, %v3059
  %v4784 = vpack.c.b16 %v3068, %v3064
  %v4785 = vpack.c.b16 %v3069, %v3065
  %v4786 = vpack.c.b16 %v3070, %v3066
  %v4787 = vpack.c.b16 %v3071, %v3067
  %v4788 = vpack.c.b16 %v3076, %v3072
  %v4789 = vpack.c.b16 %v3077, %v3073
  %v4790 = vpack.c.b16 %v3078, %v3074
  %v4791 = vpack.c.b16 %v3079, %v3075
  %v4792 = vpack.c.b16 %v3084, %v3080
  %v4793 = vpack.c.b16 %v3085, %v3081
  %v4794 = vpack.c.b16 %v3086, %v3082
  %v4795 = vpack.c.b16 %v3087, %v3083
  %v4796 = vpack.c.b16 %v3092, %v3088
  %v4797 = vpack.c.b16 %v3093, %v3089
  %v4798 = vpack.c.b16 %v3094, %v3090
  %v4799 = vpack.c.b16 %v3095, %v3091
  %v4800 = vpack.c.b16 %v3100, %v3096
  %v4801 = vpack.c.b16 %v3101, %v3097
  %v4802 = vpack.c.b16 %v3102, %v3098
  %v4803 = vpack.c.b16 %v3103, %v3099
  %v4804 = vpack.c.b16 %v3108, %v3104
  %v4805 = vpack.c.b16 %v3109, %v3105
  %v4806 = vpack.c.b16 %v3110, %v3106
  %v4807 = vpack.c.b16 %v3111, %v3107
  %v4808 = vpack.c.b16 %v3116, %v3112
  %v4809 = vpack.c.b16 %v3117, %v3113
  %v4810 = vpack.c.b16 %v3118, %v3114
  %v4811 = vpack.c.b16 %v3119, %v3115
  %v4812 = vpack.c.b16 %v3124, %v3120
  %v4813 = vpack.c.b16 %v3125, %v3121
  %v4814 = vpack.c.b16 %v3126, %v3122
  %v4815 = vpack.c.b16 %v3127, %v3123
  %v4816 = vpack.c.b16 %v3132, %v3128
  %v4817 = vpack.c.b16 %v3133, %v3129
  %v4818 = vpack.c.b16 %v3134, %v3130
  %v4819 = vpack.c.b16 %v3135, %v3131
  %v4820 = vpack.c.b16 %v3140, %v3136
  %v4821 = vpack.c.b16 %v3141, %v3137
  %v4822 = vpack.c.b16 %v3142, %v3138
  %v4823 = vpack.c.b16 %v3143, %v3139
  %v4824 = vpack.c.b16 %v3148, %v3144
  %v4825 = vpack.c.b16 %v3149, %v3145
  %v4826 = vpack.c.b16 %v3150, %v3146
  %v4827 = vpack.c.b16 %v3151, %v3147
  %v4828 = vpack.c.b16 %v3156, %v3152
  %v4829 = vpack.c.b16 %v3157, %v3153
  %v4830 = vpack.c.b16 %v3158, %v3154
  %v4831 = vpack.c.b16 %v3159, %v3155
  %v4832 = vpack.c.b16 %v3164, %v3160
  %v4833 = vpack.c.b16 %v3165, %v3161
  %v4834 = vpack.c.b16 %v3166, %v3162
  %v4835 = vpack.c.b16 %v3167, %v3163
  %v4836 = vpack.c.b16 %v3172, %v3168
  %v4837 = vpack.c.b16 %v3173, %v3169
  %v4838 = vpack.c.b16 %v3174, %v3170
  %v4839 = vpack.c.b16 %v3175, %v3171
  %v4840 = vpack.c.b16 %v3180, %v3176
  %v4841 = vpack.c.b16 %v3181, %v3177
  %v4842 = vpack.c.b16 %v3182, %v3178
  %v4843 = vpack.c.b16 %v3183, %v3179
  %v4844 = vpack.c.b16 %v3188, %v3184
  %v4845 = vpack.c.b16 %v3189, %v3185
  %v4846 = vpack.c.b16 %v3190, %v3186
  %v4847 = vpack.c.b16 %v3191, %v3187
  %v4848 = vpack.c.b16 %v3196, %v3192
  %v4849 = vpack.c.b16 %v3197, %v3193
  %v4850 = vpack.c.b16 %v3198, %v3194
  %v4851 = vpack.c.b16 %v3199, %v3195
  %v4852 = vpack.c.b16 %v3204, %v3200
  %v4853 = vpack.c.b16 %v3205, %v3201
  %v4854 = vpack.c.b16 %v3206, %v3202
  %v4855 = vpack.c.b16 %v3207, %v3203
  %v4856 = vpack.c.b16 %v3212, %v3208
  %v4857 = vpack.c.b16 %v3213, %v3209
  %v4858 = vpack.c.b16 %v3214, %v3210
  %v4859 = vpack.c.b16 %v3215, %v3211
  %v4860 = vpack.c.b16 %v3220, %v3216
  %v4861 = vpack.c.b16 %v3221, %v3217
  %v4862 = vpack.c.b16 %v3222, %v3218
  %v4863 = vpack.c.b16 %v3223, %v3219
  %v4864 = vpack.c.b16 %v3228, %v3224
  %v4865 = vpack.c.b16 %v3229, %v3225
  %v4866 = vpack.c.b16 %v3230, %v3226
  %v4867 = vpack.c.b16 %v3231, %v3227
  %v4868 = vpack.c.b16 %v3236, %v3232
  %v4869 = vpack.c.b16 %v3237, %v3233
  %v4870 = vpack.c.b16 %v3238, %v3234
  %v4871 = vpack.c.b16 %v3239, %v3235
  %v4872 = vpack.c.b16 %v3244, %v3240
  %v4873 = vpack.c.b16 %v3245, %v3241
  %v4874 = vpack.c.b16 %v3246, %v3242
  %v4875 = vpack.c.b16 %v3247, %v3243
  %v4876 = vpack.c.b16 %v3252, %v3248
  %v4877 = vpack.c.b16 %v3253, %v3249
  %v4878 = vpack.c.b16 %v3254, %v3250
  %v4879 = vpack.c.b16 %v3255, %v3251
  %v4880 = vpack.c.b16 %v3260, %v3256
  %v4881 = vpack.c.b16 %v3261, %v3257
  %v4882 = vpack.c.b16 %v3262, %v3258
  %v4883 = vpack.c.b16 %v3263, %v3259
  %v4884 = vpack.c.b16 %v3268, %v3264
  %v4885 = vpack.c.b16 %v3269, %v3265
  %v4886 = vpack.c.b16 %v3270, %v3266
  %v4887 = vpack.c.b16 %v3271, %v3267
  %v4888 = vpack.c.b16 %v3276, %v3272
  %v4889 = vpack.c.b16 %v3277, %v3273
  %v4890 = vpack.c.b16 %v3278, %v3274
  %v4891 = vpack.c.b16 %v3279, %v3275
  %v4892 = vpack.c.b16 %v3284, %v3280
  %v4893 = vpack.c.b16 %v3285, %v3281
  %v4894 = vpack.c.b16 %v3286, %v3282
  %v4895 = vpack.c.b16 %v3287, %v3283
  %v4896 = vpack.c.b16 %v3292, %v3288
  %v4897 = vpack.c.b16 %v3293, %v3289
  %v4898 = vpack.c.b16 %v3294, %v3290
  %v4899 = vpack.c.b16 %v3295, %v3291
  %v4900 = vpack.c.b16 %v3300, %v3296
  %v4901 = vpack.c.b16 %v3301, %v3297
  %v4902 = vpack.c.b16 %v3302, %v3298
  %v4903 = vpack.c.b16 %v3303, %v3299
  %v4904 = vpack.c.b16 %v3308, %v3304
  %v4905 = vpack.c.b16 %v3309, %v3305
  %v4906 = vpack.c.b16 %v3310, %v3306
  %v4907 = vpack.c.b16 %v3311, %v3307
  %v4908 = vpack.c.b16 %v3316, %v3312
  %v4909 = vpack.c.b16 %v3317, %v3313
  %v4910 = vpack.c.b16 %v3318, %v3314
  %v4911 = vpack.c.b16 %v3319, %v3315
  %v4912 = vpack.c.b16 %v3324, %v3320
  %v4913 = vpack.c.b16 %v3325, %v3321
  %v4914 = vpack.c.b16 %v3326, %v3322
  %v4915 = vpack.c.b16 %v3327, %v3323
  %v4916 = vpack.c.b16 %v3332, %v3328
  %v4917 = vpack.c.b16 %v3333, %v3329
  %v4918 = vpack.c.b16 %v3334, %v3330
  %v4919 = vpack.c.b16 %v3335, %v3331
  %v4920 = vpack.c.b16 %v3340, %v3336
  %v4921 = vpack.c.b16 %v3341, %v3337
  %v4922 = vpack.c.b16 %v3342, %v3338
  %v4923 = vpack.c.b16 %v3343, %v3339
  %v4924 = vpack.c.b16 %v3348, %v3344
  %v4925 = vpack.c.b16 %v3349, %v3345
  %v4926 = vpack.c.b16 %v3350, %v3346
  %v4927 = vpack.c.b16 %v3351, %v3347
  %v4928 = vpack.c.b16 %v3356, %v3352
  %v4929 = vpack.c.b16 %v3357, %v3353
  %v4930 = vpack.c.b16 %v3358, %v3354
  %v4931 = vpack.c.b16 %v3359, %v3355
  %v4932 = vpack.c.b16 %v3364, %v3360
  %v4933 = vpack.c.b16 %v3365, %v3361
  %v4934 = vpack.c.b16 %v3366, %v3362
  %v4935 = vpack.c.b16 %v3367, %v3363
  %v4936 = vpack.c.b16 %v3372, %v3368
  %v4937 = vpack.c.b16 %v3373, %v3369
  %v4938 = vpack.c.b16 %v3374, %v3370
  %v4939 = vpack.c.b16 %v3375, %v3371
  %v4940 = vpack.c.b16 %v3380, %v3376
  %v4941 = vpack.c.b16 %v3381, %v3377
  %v4942 = vpack.c.b16 %v3382, %v3378
  %v4943 = vpack.c.b16 %v3383, %v3379
  %v4944 = vpack.c.b16 %v3388, %v3384
  %v4945 = vpack.c.b16 %v3389, %v3385
  %v4946 = vpack.c.b16 %v3390, %v3386
  %v4947 = vpack.c.b16 %v3391, %v3387
  %v4948 = vpack.c.b16 %v3396, %v3392
  %v4949 = vpack.c.b16 %v3397, %v3393
  %v4950 = vpack.c.b16 %v3398, %v3394
  %v4951 = vpack.c.b16 %v3399, %v3395
  %v4952 = vpack.c.b16 %v3404, %v3400
  %v4953 = vpack.c.b16 %v3405, %v3401
  %v4954 = vpack.c.b16 %v3406, %v3402
  %v4955 = vpack.c.b16 %v3407, %v3403
  %v4956 = vpack.c.b16 %v3412, %v3408
  %v4957 = vpack.c.b16 %v3413, %v3409
  %v4958 = vpack.c.b16 %v3414, %v3410
  %v4959 = vpack.c.b16 %v3415, %v3411
  %v4960 = vpack.c.b16 %v3420, %v3416
  %v4961 = vpack.c.b16 %v3421, %v3417
  %v4962 = vpack.c.b16 %v3422, %v3418
  %v4963 = vpack.c.b16 %v3423, %v3419
  %v4964 = vpack.c.b16 %v3428, %v3424
  %v4965 = vpack.c.b16 %v3429, %v3425
  %v4966 = vpack.c.b16 %v3430, %v3426
  %v4967 = vpack.c.b16 %v3431, %v3427
  %v4968 = vpack.c.b16 %v3436, %v3432
  %v4969 = vpack.c.b16 %v3437, %v3433
  %v4970 = vpack.c.b16 %v3438, %v3434
  %v4971 = vpack.c.b16 %v3439, %v3435
  %v4972 = vpack.c.b16 %v3444, %v3440
  %v4973 = vpack.c.b16 %v3445, %v3441
  %v4974 = vpack.c.b16 %v3446, %v3442
  %v4975 = vpack.c.b16 %v3447, %v3443
  %v4976 = vpack.c.b16 %v3452, %v3448
  %v4977 = vpack.c.b16 %v3453, %v3449
  %v4978 = vpack.c.b16 %v3454, %v3450
  %v4979 = vpack.c.b16 %v3455, %v3451
  %v4980 = vpack.c.b16 %v3460, %v3456
  %v4981 = vpack.c.b16 %v3461, %v3457
  %v4982 = vpack.c.b16 %v3462, %v3458
  %v4983 = vpack.c.b16 %v3463, %v3459
  %v4984 = vpack.c.b16 %v3468, %v3464
  %v4985 = vpack.c.b16 %v3469, %v3465
  %v4986 = vpack.c.b16 %v3470, %v3466
  %v4987 = vpack.c.b16 %v3471, %v3467
  %v4988 = vpack.c.b16 %v3476, %v3472
  %v4989 = vpack.c.b16 %v3477, %v3473
  %v4990 = vpack.c.b16 %v3478, %v3474
  %v4991 = vpack.c.b16 %v3479, %v3475
  %v4992 = vpack.c.b16 %v3484, %v3480
  %v4993 = vpack.c.b16 %v3485, %v3481
  %v4994 = vpack.c.b16 %v3486, %v3482
  %v4995 = vpack.c.b16 %v3487, %v3483
  %v4996 = vpack.c.b16 %v3492, %v3488
  %v4997 = vpack.c.b16 %v3493, %v3489
  %v4998 = vpack.c.b16 %v3494, %v3490
  %v4999 = vpack.c.b16 %v3495, %v3491
  %v5000 = vpack.c.b16 %v3500, %v3496
  %v5001 = vpack.c.b16 %v3501, %v3497
  %v5002 = vpack.c.b16 %v3502, %v3498
  %v5003 = vpack.c.b16 %v3503, %v3499
  %v5004 = vpack.c.b16 %v3508, %v3504
  %v5005 = vpack.c.b16 %v3509, %v3505
  %v5006 = vpack.c.b16 %v3510, %v3506
  %v5007 = vpack.c.b16 %v3511, %v3507
  %v5008 = vpack.c.b16 %v3516, %v3512
  %v5009 = vpack.c.b16 %v3517, %v3513
  %v5010 = vpack.c.b16 %v3518, %v3514
  %v5011 = vpack.c.b16 %v3519, %v3515
  %v5012 = vpack.c.b16 %v3524, %v3520
  %v5013 = vpack.c.b16 %v3525, %v3521
  %v5014 = vpack.c.b16 %v3526, %v3522
  %v5015 = vpack.c.b16 %v3527, %v3523
  %v5016 = vpack.c.b16 %v3532, %v3528
  %v5017 = vpack.c.b16 %v3533, %v3529
  %v5018 = vpack.c.b16 %v3534, %v3530
  %v5019 = vpack.c.b16 %v3535, %v3531
  %v5020 = vpack.c.b16 %v3540, %v3536
  %v5021 = vpack.c.b16 %v3541, %v3537
  %v5022 = vpack.c.b16 %v3542, %v3538
  %v5023 = vpack.c.b16 %v3543, %v3539
  %v5024 = vpack.c.b16 %v3548, %v3544
  %v5025 = vpack.c.b16 %v3549, %v3545
  %v5026 = vpack.c.b16 %v3550, %v3546
  %v5027 = vpack.c.b16 %v3551, %v3547
  %v5028 = vpack.c.b16 %v3556, %v3552
  %v5029 = vpack.c.b16 %v3557, %v3553
  %v5030 = vpack.c.b16 %v3558, %v3554
  %v5031 = vpack.c.b16 %v3559, %v3555
  %v5032 = vpack.c.b16 %v3564, %v3560
  %v5033 = vpack.c.b16 %v3565, %v3561
  %v5034 = vpack.c.b16 %v3566, %v3562
  %v5035 = vpack.c.b16 %v3567, %v3563
  %v5036 = vpack.c.b16 %v3572, %v3568
  %v5037 = vpack.c.b16 %v3573, %v3569
  %v5038 = vpack.c.b16 %v3574, %v3570
  %v5039 = vpack.c.b16 %v3575, %v3571
  %v5040 = vpack.c.b16 %v3580, %v3576
  %v5041 = vpack.c.b16 %v3581, %v3577
  %v5042 = vpack.c.b16 %v3582, %v3578
  %v5043 = vpack.c.b16 %v3583, %v3579
  %v5044 = vpack.c.b16 %v3588, %v3584
  %v5045 = vpack.c.b16 %v3589, %v3585
  %v5046 = vpack.c.b16 %v3590, %v3586
  %v5047 = vpack.c.b16 %v3591, %v3587
  %v5048 = vpack.c.b16 %v3596, %v3592
  %v5049 = vpack.c.b16 %v3597, %v3593
  %v5050 = vpack.c.b16 %v3598, %v3594
  %v5051 = vpack.c.b16 %v3599, %v3595
  %v5052 = vpack.c.b16 %v3604, %v3600
  %v5053 = vpack.c.b16 %v3605, %v3601
  %v5054 = vpack.c.b16 %v3606, %v3602
  %v5055 = vpack.c.b16 %v3607, %v3603
  %v5056 = vpack.c.b16 %v3612, %v3608
  %v5057 = vpack.c.b16 %v3613, %v3609
  %v5058 = vpack.c.b16 %v3614, %v3610
  %v5059 = vpack.c.b16 %v3615, %v3611
  %v5060 = vpack.c.b16 %v3620, %v3616
  %v5061 = vpack.c.b16 %v3621, %v3617
  %v5062 = vpack.c.b16 %v3622, %v3618
  %v5063 = vpack.c.b16 %v3623, %v3619
  %v5064 = vpack.c.b16 %v3628, %v3624
  %v5065 = vpack.c.b16 %v3629, %v3625
  %v5066 = vpack.c.b16 %v3630, %v3626
  %v5067 = vpack.c.b16 %v3631, %v3627
  %v5068 = vpack.c.b16 %v3636, %v3632
  %v5069 = vpack.c.b16 %v3637, %v3633
  %v5070 = vpack.c.b16 %v3638, %v3634
  %v5071 = vpack.c.b16 %v3639, %v3635
  %v5072 = vpack.c.b16 %v3644, %v3640
  %v5073 = vpack.c.b16 %v3645, %v3641
  %v5074 = vpack.c.b16 %v3646, %v3642
  %v5075 = vpack.c.b16 %v3647, %v3643
  %v5076 = vpack.c.b16 %v3652, %v3648
  %v5077 = vpack.c.b16 %v3653, %v3649
  %v5078 = vpack.c.b16 %v3654, %v3650
  %v5079 = vpack.c.b16 %v3655, %v3651
  %v5080 = vpack.c.b16 %v3660, %v3656
  %v5081 = vpack.c.b16 %v3661, %v3657
  %v5082 = vpack.c.b16 %v3662, %v3658
  %v5083 = vpack.c.b16 %v3663, %v3659
  %v5084 = vpack.c.b16 %v3668, %v3664
  %v5085 = vpack.c.b16 %v3669, %v3665
  %v5086 = vpack.c.b16 %v3670, %v3666
  %v5087 = vpack.c.b16 %v3671, %v3667
  %v5088 = vpack.c.b16 %v3676, %v3672
  %v5089 = vpack.c.b16 %v3677, %v3673
  %v5090 = vpack.c.b16 %v3678, %v3674
  %v5091 = vpack.c.b16 %v3679, %v3675
  %v5092 = vpack.c.b16 %v3684, %v3680
  %v5093 = vpack.c.b16 %v3685, %v3681
  %v5094 = vpack.c.b16 %v3686, %v3682
  %v5095 = vpack.c.b16 %v3687, %v3683
  %v5096 = vpack.c.b16 %v3692, %v3688
  %v5097 = vpack.c.b16 %v3693, %v3689
  %v5098 = vpack.c.b16 %v3694, %v3690
  %v5099 = vpack.c.b16 %v3695, %v3691
  %v5100 = vpack.c.b16 %v3700, %v3696
  %v5101 = vpack.c.b16 %v3701, %v3697
  %v5102 = vpack.c.b16 %v3702, %v3698
  %v5103 = vpack.c.b16 %v3703, %v3699
  %v5104 = vpack.c.b16 %v3708, %v3704
  %v5105 = vpack.c.b16 %v3709, %v3705
  %v5106 = vpack.c.b16 %v3710, %v3706
  %v5107 = vpack.c.b16 %v3711, %v3707
  %v5108 = vpack.c.b16 %v3716, %v3712
  %v5109 = vpack.c.b16 %v3717, %v3713
  %v5110 = vpack.c.b16 %v3718, %v3714
  %v5111 = vpack.c.b16 %v3719, %v3715
  %v5112 = vpack.c.b16 %v3724, %v3720
  %v5113 = vpack.c.b16 %v3725, %v3721
  %v5114 = vpack.c.b16 %v3726, %v3722
  %v5115 = vpack.c.b16 %v3727, %v3723
  %v5116 = vpack.c.b16 %v3732, %v3728
  %v5117 = vpack.c.b16 %v3733, %v3729
  %v5118 = vpack.c.b16 %v3734, %v3730
  %v5119 = vpack.c.b16 %v3735, %v3731
  %v5120 = vpack.c.b16 %v3740, %v3736
  %v5121 = vpack.c.b16 %v3741, %v3737
  %v5122 = vpack.c.b16 %v3742, %v3738
  %v5123 = vpack.c.b16 %v3743, %v3739
  %v5124 = vpack.c.b16 %v3748, %v3744
  %v5125 = vpack.c.b16 %v3749, %v3745
  %v5126 = vpack.c.b16 %v3750, %v3746
  %v5127 = vpack.c.b16 %v3751, %v3747
  %v5128 = vpack.c.b16 %v3756, %v3752
  %v5129 = vpack.c.b16 %v3757, %v3753
  %v5130 = vpack.c.b16 %v3758, %v3754
  %v5131 = vpack.c.b16 %v3759, %v3755
  %v5132 = vpack.c.b16 %v3764, %v3760
  %v5133 = vpack.c.b16 %v3765, %v3761
  %v5134 = vpack.c.b16 %v3766, %v3762
  %v5135 = vpack.c.b16 %v3767, %v3763
  %v5136 = vpack.c.b16 %v3772, %v3768
  %v5137 = vpack.c.b16 %v3773, %v3769
  %v5138 = vpack.c.b16 %v3774, %v3770
  %v5139 = vpack.c.b16 %v3775, %v3771
  %v5140 = vpack.c.b16 %v3780, %v3776
  %v5141 = vpack.c.b16 %v3781, %v3777
  %v5142 = vpack.c.b16 %v3782, %v3778
  %v5143 = vpack.c.b16 %v3783, %v3779
  %v5144 = vpack.c.b16 %v3788, %v3784
  %v5145 = vpack.c.b16 %v3789, %v3785
  %v5146 = vpack.c.b16 %v3790, %v3786
  %v5147 = vpack.c.b16 %v3791, %v3787
  %v5148 = vpack.c.b16 %v3796, %v3792
  %v5149 = vpack.c.b16 %v3797, %v3793
  %v5150 = vpack.c.b16 %v3798, %v3794
  %v5151 = vpack.c.b16 %v3799, %v3795
  %v5152 = vpack.c.b16 %v3804, %v3800
  %v5153 = vpack.c.b16 %v3805, %v3801
  %v5154 = vpack.c.b16 %v3806, %v3802
  %v5155 = vpack.c.b16 %v3807, %v3803
  %v5156 = vpack.c.b16 %v3812, %v3808
  %v5157 = vpack.c.b16 %v3813, %v3809
  %v5158 = vpack.c.b16 %v3814, %v3810
  %v5159 = vpack.c.b16 %v3815, %v3811
  %v5160 = vpack.c.b16 %v3820, %v3816
  %v5161 = vpack.c.b16 %v3821, %v3817
  %v5162 = vpack.c.b16 %v3822, %v3818
  %v5163 = vpack.c.b16 %v3823, %v3819
  %v5164 = vpack.c.b16 %v3828, %v3824
  %v5165 = vpack.c.b16 %v3829, %v3825
  %v5166 = vpack.c.b16 %v3830, %v3826
  %v5167 = vpack.c.b16 %v3831, %v3827
  %v5168 = vpack.c.b16 %v3836, %v3832
  %v5169 = vpack.c.b16 %v3837, %v3833
  %v5170 = vpack.c.b16 %v3838, %v3834
  %v5171 = vpack.c.b16 %v3839, %v3835
  %v5172 = vpack.c.b16 %v3844, %v3840
  %v5173 = vpack.c.b16 %v3845, %v3841
  %v5174 = vpack.c.b16 %v3846, %v3842
  %v5175 = vpack.c.b16 %v3847, %v3843
  %v5176 = vpack.c.b16 %v3852, %v3848
  %v5177 = vpack.c.b16 %v3853, %v3849
  %v5178 = vpack.c.b16 %v3854, %v3850
  %v5179 = vpack.c.b16 %v3855, %v3851
  %v5180 = vpack.c.b16 %v3860, %v3856
  %v5181 = vpack.c.b16 %v3861, %v3857
  %v5182 = vpack.c.b16 %v3862, %v3858
  %v5183 = vpack.c.b16 %v3863, %v3859
  %v5184 = vpack.c.b16 %v3868, %v3864
  %v5185 = vpack.c.b16 %v3869, %v3865
  %v5186 = vpack.c.b16 %v3870, %v3866
  %v5187 = vpack.c.b16 %v3871, %v3867
  %v5188 = vpack.c.b16 %v3876, %v3872
  %v5189 = vpack.c.b16 %v3877, %v3873
  %v5190 = vpack.c.b16 %v3878, %v3874
  %v5191 = vpack.c.b16 %v3879, %v3875
  %v5192 = vpack.c.b16 %v3884, %v3880
  %v5193 = vpack.c.b16 %v3885, %v3881
  %v5194 = vpack.c.b16 %v3886, %v3882
  %v5195 = vpack.c.b16 %v3887, %v3883
  %v5196 = vpack.c.b16 %v3892, %v3888
  %v5197 = vpack.c.b16 %v3893, %v3889
  %v5198 = vpack.c.b16 %v3894, %v3890
  %v5199 = vpack.c.b16 %v3895, %v3891
  %v5200 = vpack.c.b16 %v3900, %v3896
  %v5201 = vpack.c.b16 %v3901, %v3897
  %v5202 = vpack.c.b16 %v3902, %v3898
  %v5203 = vpack.c.b16 %v3903, %v3899
  %v5204 = vpack.c.b16 %v3908, %v3904
  %v5205 = vpack.c.b16 %v3909, %v3905
  %v5206 = vpack.c.b16 %v3910, %v3906
  %v5207 = vpack.c.b16 %v3911, %v3907
  %v5208 = vpack.c.b16 %v3916, %v3912
  %v5209 = vpack.c.b16 %v3917, %v3913
  %v5210 = vpack.c.b16 %v3918, %v3914
  %v5211 = vpack.c.b16 %v3919, %v3915
  %v5212 = vpack.c.b16 %v3924, %v3920
  %v5213 = vpack.c.b16 %v3925, %v3921
  %v5214 = vpack.c.b16 %v3926, %v3922
  %v5215 = vpack.c.b16 %v3927, %v3923
  %v5216 = vpack.c.b16 %v3932, %v3928
  %v5217 = vpack.c.b16 %v3933, %v3929
  %v5218 = vpack.c.b16 %v3934, %v3930
  %v5219 = vpack.c.b16 %v3935, %v3931
  %v5220 = vpack.c.b16 %v3940, %v3936
  %v5221 = vpack.c.b16 %v3941, %v3937
  %v5222 = vpack.c.b16 %v3942, %v3938
  %v5223 = vpack.c.b16 %v3943, %v3939
  %v5224 = vpack.c.b16 %v3948, %v3944
  %v5225 = vpack.c.b16 %v3949, %v3945
  %v5226 = vpack.c.b16 %v3950, %v3946
  %v5227 = vpack.c.b16 %v3951, %v3947
  %v5228 = vpack.c.b16 %v3956, %v3952
  %v5229 = vpack.c.b16 %v3957, %v3953
  %v5230 = vpack.c.b16 %v3958, %v3954
  %v5231 = vpack.c.b16 %v3959, %v3955
  %v5232 = vpack.c.b16 %v3964, %v3960
  %v5233 = vpack.c.b16 %v3965, %v3961
  %v5234 = vpack.c.b16 %v3966, %v3962
  %v5235 = vpack.c.b16 %v3967, %v3963
  %v5236 = vpack.c.b16 %v3972, %v3968
  %v5237 = vpack.c.b16 %v3973, %v3969
  %v5238 = vpack.c.b16 %v3974, %v3970
  %v5239 = vpack.c.b16 %v3975, %v3971
  %v5240 = vpack.c.b16 %v3980, %v3976
  %v5241 = vpack.c.b16 %v3981, %v3977
  %v5242 = vpack.c.b16 %v3982, %v3978
  %v5243 = vpack.c.b16 %v3983, %v3979
  %v5244 = vpack.c.b16 %v3988, %v3984
  %v5245 = vpack.c.b16 %v3989, %v3985
  %v5246 = vpack.c.b16 %v3990, %v3986
  %v5247 = vpack.c.b16 %v3991, %v3987
  %v5248 = vpack.c.b16 %v3996, %v3992
  %v5249 = vpack.c.b16 %v3997, %v3993
  %v5250 = vpack.c.b16 %v3998, %v3994
  %v5251 = vpack.c.b16 %v3999, %v3995
  %v5252 = vpack.c.b16 %v4004, %v4000
  %v5253 = vpack.c.b16 %v4005, %v4001
  %v5254 = vpack.c.b16 %v4006, %v4002
  %v5255 = vpack.c.b16 %v4007, %v4003
  %v5256 = vpack.c.b16 %v4012, %v4008
  %v5257 = vpack.c.b16 %v4013, %v4009
  %v5258 = vpack.c.b16 %v4014, %v4010
  %v5259 = vpack.c.b16 %v4015, %v4011
  %v5260 = vpack.c.b16 %v4020, %v4016
  %v5261 = vpack.c.b16 %v4021, %v4017
  %v5262 = vpack.c.b16 %v4022, %v4018
  %v5263 = vpack.c.b16 %v4023, %v4019
  %v5264 = vpack.c.b16 %v4028, %v4024
  %v5265 = vpack.c.b16 %v4029, %v4025
  %v5266 = vpack.c.b16 %v4030, %v4026
  %v5267 = vpack.c.b16 %v4031, %v4027
  %v5268 = vpack.c.b16 %v4036, %v4032
  %v5269 = vpack.c.b16 %v4037, %v4033
  %v5270 = vpack.c.b16 %v4038, %v4034
  %v5271 = vpack.c.b16 %v4039, %v4035
  %v5272 = vpack.c.b16 %v4044, %v4040
  %v5273 = vpack.c.b16 %v4045, %v4041
  %v5274 = vpack.c.b16 %v4046, %v4042
  %v5275 = vpack.c.b16 %v4047, %v4043
  %v5276 = vpack.c.b16 %v4052, %v4048
  %v5277 = vpack.c.b16 %v4053, %v4049
  %v5278 = vpack.c.b16 %v4054, %v4050
  %v5279 = vpack.c.b16 %v4055, %v4051
  %v5280 = vpack.c.b16 %v4060, %v4056
  %v5281 = vpack.c.b16 %v4061, %v4057
  %v5282 = vpack.c.b16 %v4062, %v4058
  %v5283 = vpack.c.b16 %v4063, %v4059
  %v5284 = vpack.c.b16 %v4068, %v4064
  %v5285 = vpack.c.b16 %v4069, %v4065
  %v5286 = vpack.c.b16 %v4070, %v4066
  %v5287 = vpack.c.b16 %v4071, %v4067
  %v5288 = vpack.c.b16 %v4076, %v4072
  %v5289 = vpack.c.b16 %v4077, %v4073
  %v5290 = vpack.c.b16 %v4078, %v4074
  %v5291 = vpack.c.b16 %v4079, %v4075
  %v5292 = vpack.c.b16 %v4084, %v4080
  %v5293 = vpack.c.b16 %v4085, %v4081
  %v5294 = vpack.c.b16 %v4086, %v4082
  %v5295 = vpack.c.b16 %v4087, %v4083
  %v5296 = vpack.c.b16 %v4092, %v4088
  %v5297 = vpack.c.b16 %v4093, %v4089
  %v5298 = vpack.c.b16 %v4094, %v4090
  %v5299 = vpack.c.b16 %v4095, %v4091
  %v5300 = vpack.c.b16 %v4100, %v4096
  %v5301 = vpack.c.b16 %v4101, %v4097
  %v5302 = vpack.c.b16 %v4102, %v4098
  %v5303 = vpack.c.b16 %v4103, %v4099
  %v5304 = vpack.c.b16 %v4108, %v4104
  %v5305 = vpack.c.b16 %v4109, %v4105
  %v5306 = vpack.c.b16 %v4110, %v4106
  %v5307 = vpack.c.b16 %v4111, %v4107
  %v5308 = vpack.c.b16 %v4116, %v4112
  %v5309 = vpack.c.b16 %v4117, %v4113
  %v5310 = vpack.c.b16 %v4118, %v4114
  %v5311 = vpack.c.b16 %v4119, %v4115
  %v5312 = vpack.c.b16 %v4124, %v4120
  %v5313 = vpack.c.b16 %v4125, %v4121
  %v5314 = vpack.c.b16 %v4126, %v4122
  %v5315 = vpack.c.b16 %v4127, %v4123
  %v5316 = vpack.c.b16 %v4132, %v4128
  %v5317 = vpack.c.b16 %v4133, %v4129
  %v5318 = vpack.c.b16 %v4134, %v4130
  %v5319 = vpack.c.b16 %v4135, %v4131
  %v5320 = vpack.c.b16 %v4140, %v4136
  %v5321 = vpack.c.b16 %v4141, %v4137
  %v5322 = vpack.c.b16 %v4142, %v4138
  %v5323 = vpack.c.b16 %v4143, %v4139
  %v5324 = vpack.c.b16 %v4148, %v4144
  %v5325 = vpack.c.b16 %v4149, %v4145
  %v5326 = vpack.c.b16 %v4150, %v4146
  %v5327 = vpack.c.b16 %v4151, %v4147
  %v5328 = vpack.c.b16 %v4156, %v4152
  %v5329 = vpack.c.b16 %v4157, %v4153
  %v5330 = vpack.c.b16 %v4158, %v4154
  %v5331 = vpack.c.b16 %v4159, %v4155
  %v5332 = vpack.c.b16 %v4164, %v4160
  %v5333 = vpack.c.b16 %v4165, %v4161
  %v5334 = vpack.c.b16 %v4166, %v4162
  %v5335 = vpack.c.b16 %v4167, %v4163
  %v5336 = vpack.c.b16 %v4172, %v4168
  %v5337 = vpack.c.b16 %v4173, %v4169
  %v5338 = vpack.c.b16 %v4174, %v4170
  %v5339 = vpack.c.b16 %v4175, %v4171
  %v5340 = vpack.c.b16 %v4180, %v4176
  %v5341 = vpack.c.b16 %v4181, %v4177
  %v5342 = vpack.c.b16 %v4182, %v4178
  %v5343 = vpack.c.b16 %v4183, %v4179
  %v5344 = vpack.c.b16 %v4188, %v4184
  %v5345 = vpack.c.b16 %v4189, %v4185
  %v5346 = vpack.c.b16 %v4190, %v4186
  %v5347 = vpack.c.b16 %v4191, %v4187
  %v5348 = vpack.c.b16 %v4196, %v4192
  %v5349 = vpack.c.b16 %v4197, %v4193
  %v5350 = vpack.c.b16 %v4198, %v4194
  %v5351 = vpack.c.b16 %v4199, %v4195
  %v5352 = vpack.c.b16 %v4204, %v4200
  %v5353 = vpack.c.b16 %v4205, %v4201
  %v5354 = vpack.c.b16 %v4206, %v4202
  %v5355 = vpack.c.b16 %v4207, %v4203
  %v5356 = vpack.c.b16 %v4212, %v4208
  %v5357 = vpack.c.b16 %v4213, %v4209
  %v5358 = vpack.c.b16 %v4214, %v4210
  %v5359 = vpack.c.b16 %v4215, %v4211
  %v5360 = vpack.c.b16 %v4220, %v4216
  %v5361 = vpack.c.b16 %v4221, %v4217
  %v5362 = vpack.c.b16 %v4222, %v4218
  %v5363 = vpack.c.b16 %v4223, %v4219
  %v5364 = vpack.c.b16 %v4228, %v4224
  %v5365 = vpack.c.b16 %v4229, %v4225
  %v5366 = vpack.c.b16 %v4230, %v4226
  %v5367 = vpack.c.b16 %v4231, %v4227
  %v5368 = vpack.c.b16 %v4236, %v4232
  %v5369 = vpack.c.b16 %v4237, %v4233
  %v5370 = vpack.c.b16 %v4238, %v4234
  %v5371 = vpack.c.b16 %v4239, %v4235
  %v5372 = vpack.c.b16 %v4244, %v4240
  %v5373 = vpack.c.b16 %v4245, %v4241
  %v5374 = vpack.c.b16 %v4246, %v4242
  %v5375 = vpack.c.b16 %v4247, %v4243
  %v5376 = vpack.c.b16 %v4252, %v4248
  %v5377 = vpack.c.b16 %v4253, %v4249
  %v5378 = vpack.c.b16 %v4254, %v4250
  %v5379 = vpack.c.b16 %v4255, %v4251
  %v5380 = vpack.c.b16 %v4260, %v4256
  %v5381 = vpack.c.b16 %v4261, %v4257
  %v5382 = vpack.c.b16 %v4262, %v4258
  %v5383 = vpack.c.b16 %v4263, %v4259
  %v5384 = vpack.c.b16 %v4268, %v4264
  %v5385 = vpack.c.b16 %v4269, %v4265
  %v5386 = vpack.c.b16 %v4270, %v4266
  %v5387 = vpack.c.b16 %v4271, %v4267
  %v5388 = vpack.c.b16 %v4276, %v4272
  %v5389 = vpack.c.b16 %v4277, %v4273
  %v5390 = vpack.c.b16 %v4278, %v4274
  %v5391 = vpack.c.b16 %v4279, %v4275
  %v5392 = vpack.c.b16 %v4284, %v4280
  %v5393 = vpack.c.b16 %v4285, %v4281
  %v5394 = vpack.c.b16 %v4286, %v4282
  %v5395 = vpack.c.b16 %v4287, %v4283
  %v5396 = vpack.c.b16 %v4292, %v4288
  %v5397 = vpack.c.b16 %v4293, %v4289
  %v5398 = vpack.c.b16 %v4294, %v4290
  %v5399 = vpack.c.b16 %v4295, %v4291
  %v5400 = vpack.c.b16 %v4300, %v4296
  %v5401 = vpack.c.b16 %v4301, %v4297
  %v5402 = vpack.c.b16 %v4302, %v4298
  %v5403 = vpack.c.b16 %v4303, %v4299
  %v5404 = vpack.c.b16 %v4308, %v4304
  %v5405 = vpack.c.b16 %v4309, %v4305
  %v5406 = vpack.c.b16 %v4310, %v4306
  %v5407 = vpack.c.b16 %v4311, %v4307
  %v5408 = vpack.c.b16 %v4316, %v4312
  %v5409 = vpack.c.b16 %v4317, %v4313
  %v5410 = vpack.c.b16 %v4318, %v4314
  %v5411 = vpack.c.b16 %v4319, %v4315
  %v5412 = vpack.c.b16 %v4324, %v4320
  %v5413 = vpack.c.b16 %v4325, %v4321
  %v5414 = vpack.c.b16 %v4326, %v4322
  %v5415 = vpack.c.b16 %v4327, %v4323
  %v5416 = vpack.c.b16 %v4332, %v4328
  %v5417 = vpack.c.b16 %v4333, %v4329
  %v5418 = vpack.c.b16 %v4334, %v4330
  %v5419 = vpack.c.b16 %v4335, %v4331
  %v5420 = vpack.c.b16 %v4340, %v4336
  %v5421 = vpack.c.b16 %v4341, %v4337
  %v5422 = vpack.c.b16 %v4342, %v4338
  %v5423 = vpack.c.b16 %v4343, %v4339
  %v5424 = vpack.c.b16 %v4348, %v4344
  %v5425 = vpack.c.b16 %v4349, %v4345
  %v5426 = vpack.c.b16 %v4350, %v4346
  %v5427 = vpack.c.b16 %v4351, %v4347
  %v5428 = vpack.c.b16 %v4356, %v4352
  %v5429 = vpack.c.b16 %v4357, %v4353
  %v5430 = vpack.c.b16 %v4358, %v4354
  %v5431 = vpack.c.b16 %v4359, %v4355
  %v5432 = vpack.c.b16 %v4364, %v4360
  %v5433 = vpack.c.b16 %v4365, %v4361
  %v5434 = vpack.c.b16 %v4366, %v4362
  %v5435 = vpack.c.b16 %v4367, %v4363
  %v5436 = vpack.c.b16 %v4372, %v4368
  %v5437 = vpack.c.b16 %v4373, %v4369
  %v5438 = vpack.c.b16 %v4374, %v4370
  %v5439 = vpack.c.b16 %v4375, %v4371
  %v5440 = vpack.c.b16 %v4380, %v4376
  %v5441 = vpack.c.b16 %v4381, %v4377
  %v5442 = vpack.c.b16 %v4382, %v4378
  %v5443 = vpack.c.b16 %v4383, %v4379
  %v5444 = vpack.c.b16 %v4388, %v4384
  %v5445 = vpack.c.b16 %v4389, %v4385
  %v5446 = vpack.c.b16 %v4390, %v4386
  %v5447 = vpack.c.b16 %v4391, %v4387
  %v5448 = vpack.c.b16 %v4396, %v4392
  %v5449 = vpack.c.b16 %v4397, %v4393
  %v5450 = vpack.c.b16 %v4398, %v4394
  %v5451 = vpack.c.b16 %v4399, %v4395
  %v5452 = vpack.c.b16 %v4404, %v4400
  %v5453 = vpack.c.b16 %v4405, %v4401
  %v5454 = vpack.c.b16 %v4406, %v4402
  %v5455 = vpack.c.b16 %v4407, %v4403
  %v5456 = vpack.c.b16 %v4412, %v4408
  %v5457 = vpack.c.b16 %v4413, %v4409
  %v5458 = vpack.c.b16 %v4414, %v4410
  %v5459 = vpack.c.b16 %v4415, %v4411
  %v5460 = vpack.c.b16 %v4420, %v4416
  %v5461 = vpack.c.b16 %v4421, %v4417
  %v5462 = vpack.c.b16 %v4422, %v4418
  %v5463 = vpack.c.b16 %v4423, %v4419
  %v5464 = vpack.c.b16 %v4428, %v4424
  %v5465 = vpack.c.b16 %v4429, %v4425
  %v5466 = vpack.c.b16 %v4430, %v4426
  %v5467 = vpack.c.b16 %v4431, %v4427
  %v5468 = vpack.c.b16 %v4436, %v4432
  %v5469 = vpack.c.b16 %v4437, %v4433
  %v5470 = vpack.c.b16 %v4438, %v4434
  %v5471 = vpack.c.b16 %v4439, %v4435
  %v5472 = vpack.c.b16 %v4444, %v4440
  %v5473 = vpack.c.b16 %v4445, %v4441
  %v5474 = vpack.c.b16 %v4446, %v4442
  %v5475 = vpack.c.b16 %v4447, %v4443
  %v5476 = vpack.c.b16 %v4452, %v4448
  %v5477 = vpack.c.b16 %v4453, %v4449
  %v5478 = vpack.c.b16 %v4454, %v4450
  %v5479 = vpack.c.b16 %v4455, %v4451
  %6504 = vmatpush.bf16.msra.mxu0 %v4484
  %6505 = vmatpush.bf16.msra.mxu0 %v4480
  %6506 = vmatpush.bf16.msra.mxu0 %v4476
  %6507 = vmatpush.bf16.msra.mxu0 %v4472
  %6508 = vmatpush.bf16.msra.mxu0 %v4468
  %6509 = vmatpush.bf16.msra.mxu0 %v4464
  %6510 = vmatpush.bf16.msra.mxu0 %v4460
  %6511 = vmatpush.bf16.msra.mxu0 %v4456
  %6512 = vmatmul.bf16.gmra.mxu0 %v1320
  %v6513 = vpop.f32.mrf.mxu0
  %v6514 = vadd.f32 %v1178, %v6513
  %v6515 = vpop.f32.mrf.mxu0
  %v6516 = vadd.f32 %v1180, %v6515
  %6517 = vdwg.mxu0
  %6518 = vmatpush.bf16.msra.mxu0 %v4516
  %6519 = vmatpush.bf16.msra.mxu0 %v4512
  %6520 = vmatpush.bf16.msra.mxu0 %v4508
  %6521 = vmatpush.bf16.msra.mxu0 %v4504
  %6522 = vmatpush.bf16.msra.mxu0 %v4500
  %6523 = vmatpush.bf16.msra.mxu0 %v4496
  %6524 = vmatpush.bf16.msra.mxu0 %v4492
  %6525 = vmatpush.bf16.msra.mxu0 %v4488
  %6526 = vmatmul.bf16.gmra.mxu0 %v1321
  %v6527 = vpop.f32.mrf.mxu0
  %v6528 = vadd.f32 %v6514, %v6527
  %v6529 = vpop.f32.mrf.mxu0
  %v6530 = vadd.f32 %v6516, %v6529
  %6531 = vdwg.mxu0
  %6532 = vmatpush.bf16.msra.mxu0 %v4548
  %6533 = vmatpush.bf16.msra.mxu0 %v4544
  %6534 = vmatpush.bf16.msra.mxu0 %v4540
  %6535 = vmatpush.bf16.msra.mxu0 %v4536
  %6536 = vmatpush.bf16.msra.mxu0 %v4532
  %6537 = vmatpush.bf16.msra.mxu0 %v4528
  %6538 = vmatpush.bf16.msra.mxu0 %v4524
  %6539 = vmatpush.bf16.msra.mxu0 %v4520
  %6540 = vmatmul.bf16.gmra.mxu0 %v1322
  %v6541 = vpop.f32.mrf.mxu0
  %v6542 = vadd.f32 %v6528, %v6541
  %v6543 = vpop.f32.mrf.mxu0
  %v6544 = vadd.f32 %v6530, %v6543
  %6545 = vdwg.mxu0
  %6546 = vmatpush.bf16.msra.mxu0 %v4580
  %6547 = vmatpush.bf16.msra.mxu0 %v4576
  %6548 = vmatpush.bf16.msra.mxu0 %v4572
  %6549 = vmatpush.bf16.msra.mxu0 %v4568
  %6550 = vmatpush.bf16.msra.mxu0 %v4564
  %6551 = vmatpush.bf16.msra.mxu0 %v4560
  %6552 = vmatpush.bf16.msra.mxu0 %v4556
  %6553 = vmatpush.bf16.msra.mxu0 %v4552
  %6554 = vmatmul.bf16.gmra.mxu0 %v1323
  %v6555 = vpop.f32.mrf.mxu0
  %v6556 = vadd.f32 %v6542, %v6555
  %v6557 = vpop.f32.mrf.mxu0
  %v6558 = vadd.f32 %v6544, %v6557
  %6559 = vdwg.mxu0
  %6560 = vmatpush.bf16.msra.mxu0 %v4612
  %6561 = vmatpush.bf16.msra.mxu0 %v4608
  %6562 = vmatpush.bf16.msra.mxu0 %v4604
  %6563 = vmatpush.bf16.msra.mxu0 %v4600
  %6564 = vmatpush.bf16.msra.mxu0 %v4596
  %6565 = vmatpush.bf16.msra.mxu0 %v4592
  %6566 = vmatpush.bf16.msra.mxu0 %v4588
  %6567 = vmatpush.bf16.msra.mxu0 %v4584
  %6568 = vmatmul.bf16.gmra.mxu0 %v1324
  %v6569 = vpop.f32.mrf.mxu0
  %v6570 = vadd.f32 %v6556, %v6569
  %v6571 = vpop.f32.mrf.mxu0
  %v6572 = vadd.f32 %v6558, %v6571
  %6573 = vdwg.mxu0
  %6574 = vmatpush.bf16.msra.mxu0 %v4644
  %6575 = vmatpush.bf16.msra.mxu0 %v4640
  %6576 = vmatpush.bf16.msra.mxu0 %v4636
  %6577 = vmatpush.bf16.msra.mxu0 %v4632
  %6578 = vmatpush.bf16.msra.mxu0 %v4628
  %6579 = vmatpush.bf16.msra.mxu0 %v4624
  %6580 = vmatpush.bf16.msra.mxu0 %v4620
  %6581 = vmatpush.bf16.msra.mxu0 %v4616
  %6582 = vmatmul.bf16.gmra.mxu0 %v1325
  %v6583 = vpop.f32.mrf.mxu0
  %v6584 = vadd.f32 %v6570, %v6583
  %v6585 = vpop.f32.mrf.mxu0
  %v6586 = vadd.f32 %v6572, %v6585
  %6587 = vdwg.mxu0
  %6588 = vmatpush.bf16.msra.mxu0 %v4676
  %6589 = vmatpush.bf16.msra.mxu0 %v4672
  %6590 = vmatpush.bf16.msra.mxu0 %v4668
  %6591 = vmatpush.bf16.msra.mxu0 %v4664
  %6592 = vmatpush.bf16.msra.mxu0 %v4660
  %6593 = vmatpush.bf16.msra.mxu0 %v4656
  %6594 = vmatpush.bf16.msra.mxu0 %v4652
  %6595 = vmatpush.bf16.msra.mxu0 %v4648
  %6596 = vmatmul.bf16.gmra.mxu0 %v1326
  %v6597 = vpop.f32.mrf.mxu0
  %v6598 = vadd.f32 %v6584, %v6597
  %v6599 = vpop.f32.mrf.mxu0
  %v6600 = vadd.f32 %v6586, %v6599
  %6601 = vdwg.mxu0
  %6602 = vmatpush.bf16.msra.mxu0 %v4708
  %6603 = vmatpush.bf16.msra.mxu0 %v4704
  %6604 = vmatpush.bf16.msra.mxu0 %v4700
  %6605 = vmatpush.bf16.msra.mxu0 %v4696
  %6606 = vmatpush.bf16.msra.mxu0 %v4692
  %6607 = vmatpush.bf16.msra.mxu0 %v4688
  %6608 = vmatpush.bf16.msra.mxu0 %v4684
  %6609 = vmatpush.bf16.msra.mxu0 %v4680
  %6610 = vmatmul.bf16.gmra.mxu0 %v1327
  %v6611 = vpop.f32.mrf.mxu0
  %v6612 = vadd.f32 %v6598, %v6611
  %v6613 = vpop.f32.mrf.mxu0
  %v6614 = vadd.f32 %v6600, %v6613
  %6615 = vdwg.mxu0
  %6616 = vmatpush.bf16.msra.mxu0 %v4740
  %6617 = vmatpush.bf16.msra.mxu0 %v4736
  %6618 = vmatpush.bf16.msra.mxu0 %v4732
  %6619 = vmatpush.bf16.msra.mxu0 %v4728
  %6620 = vmatpush.bf16.msra.mxu0 %v4724
  %6621 = vmatpush.bf16.msra.mxu0 %v4720
  %6622 = vmatpush.bf16.msra.mxu0 %v4716
  %6623 = vmatpush.bf16.msra.mxu0 %v4712
  %6624 = vmatmul.bf16.gmra.mxu0 %v1328
  %v6625 = vpop.f32.mrf.mxu0
  %v6626 = vadd.f32 %v6612, %v6625
  %v6627 = vpop.f32.mrf.mxu0
  %v6628 = vadd.f32 %v6614, %v6627
  %6629 = vdwg.mxu0
  %6630 = vmatpush.bf16.msra.mxu0 %v4772
  %6631 = vmatpush.bf16.msra.mxu0 %v4768
  %6632 = vmatpush.bf16.msra.mxu0 %v4764
  %6633 = vmatpush.bf16.msra.mxu0 %v4760
  %6634 = vmatpush.bf16.msra.mxu0 %v4756
  %6635 = vmatpush.bf16.msra.mxu0 %v4752
  %6636 = vmatpush.bf16.msra.mxu0 %v4748
  %6637 = vmatpush.bf16.msra.mxu0 %v4744
  %6638 = vmatmul.bf16.gmra.mxu0 %v1329
  %v6639 = vpop.f32.mrf.mxu0
  %v6640 = vadd.f32 %v6626, %v6639
  %v6641 = vpop.f32.mrf.mxu0
  %v6642 = vadd.f32 %v6628, %v6641
  %6643 = vdwg.mxu0
  %6644 = vmatpush.bf16.msra.mxu0 %v4804
  %6645 = vmatpush.bf16.msra.mxu0 %v4800
  %6646 = vmatpush.bf16.msra.mxu0 %v4796
  %6647 = vmatpush.bf16.msra.mxu0 %v4792
  %6648 = vmatpush.bf16.msra.mxu0 %v4788
  %6649 = vmatpush.bf16.msra.mxu0 %v4784
  %6650 = vmatpush.bf16.msra.mxu0 %v4780
  %6651 = vmatpush.bf16.msra.mxu0 %v4776
  %6652 = vmatmul.bf16.gmra.mxu0 %v1330
  %v6653 = vpop.f32.mrf.mxu0
  %v6654 = vadd.f32 %v6640, %v6653
  %v6655 = vpop.f32.mrf.mxu0
  %v6656 = vadd.f32 %v6642, %v6655
  %6657 = vdwg.mxu0
  %6658 = vmatpush.bf16.msra.mxu0 %v4836
  %6659 = vmatpush.bf16.msra.mxu0 %v4832
  %6660 = vmatpush.bf16.msra.mxu0 %v4828
  %6661 = vmatpush.bf16.msra.mxu0 %v4824
  %6662 = vmatpush.bf16.msra.mxu0 %v4820
  %6663 = vmatpush.bf16.msra.mxu0 %v4816
  %6664 = vmatpush.bf16.msra.mxu0 %v4812
  %6665 = vmatpush.bf16.msra.mxu0 %v4808
  %6666 = vmatmul.bf16.gmra.mxu0 %v1331
  %v6667 = vpop.f32.mrf.mxu0
  %v6668 = vadd.f32 %v6654, %v6667
  %v6669 = vpop.f32.mrf.mxu0
  %v6670 = vadd.f32 %v6656, %v6669
  %6671 = vdwg.mxu0
  %6672 = vmatpush.bf16.msra.mxu0 %v4868
  %6673 = vmatpush.bf16.msra.mxu0 %v4864
  %6674 = vmatpush.bf16.msra.mxu0 %v4860
  %6675 = vmatpush.bf16.msra.mxu0 %v4856
  %6676 = vmatpush.bf16.msra.mxu0 %v4852
  %6677 = vmatpush.bf16.msra.mxu0 %v4848
  %6678 = vmatpush.bf16.msra.mxu0 %v4844
  %6679 = vmatpush.bf16.msra.mxu0 %v4840
  %6680 = vmatmul.bf16.gmra.mxu0 %v1332
  %v6681 = vpop.f32.mrf.mxu0
  %v6682 = vadd.f32 %v6668, %v6681
  %v6683 = vpop.f32.mrf.mxu0
  %v6684 = vadd.f32 %v6670, %v6683
  %6685 = vdwg.mxu0
  %6686 = vmatpush.bf16.msra.mxu0 %v4900
  %6687 = vmatpush.bf16.msra.mxu0 %v4896
  %6688 = vmatpush.bf16.msra.mxu0 %v4892
  %6689 = vmatpush.bf16.msra.mxu0 %v4888
  %6690 = vmatpush.bf16.msra.mxu0 %v4884
  %6691 = vmatpush.bf16.msra.mxu0 %v4880
  %6692 = vmatpush.bf16.msra.mxu0 %v4876
  %6693 = vmatpush.bf16.msra.mxu0 %v4872
  %6694 = vmatmul.bf16.gmra.mxu0 %v1333
  %v6695 = vpop.f32.mrf.mxu0
  %v6696 = vadd.f32 %v6682, %v6695
  %v6697 = vpop.f32.mrf.mxu0
  %v6698 = vadd.f32 %v6684, %v6697
  %6699 = vdwg.mxu0
  %6700 = vmatpush.bf16.msra.mxu0 %v4932
  %6701 = vmatpush.bf16.msra.mxu0 %v4928
  %6702 = vmatpush.bf16.msra.mxu0 %v4924
  %6703 = vmatpush.bf16.msra.mxu0 %v4920
  %6704 = vmatpush.bf16.msra.mxu0 %v4916
  %6705 = vmatpush.bf16.msra.mxu0 %v4912
  %6706 = vmatpush.bf16.msra.mxu0 %v4908
  %6707 = vmatpush.bf16.msra.mxu0 %v4904
  %6708 = vmatmul.bf16.gmra.mxu0 %v1334
  %v6709 = vpop.f32.mrf.mxu0
  %v6710 = vadd.f32 %v6696, %v6709
  %v6711 = vpop.f32.mrf.mxu0
  %v6712 = vadd.f32 %v6698, %v6711
  %6713 = vdwg.mxu0
  %6714 = vmatpush.bf16.msra.mxu0 %v4964
  %6715 = vmatpush.bf16.msra.mxu0 %v4960
  %6716 = vmatpush.bf16.msra.mxu0 %v4956
  %6717 = vmatpush.bf16.msra.mxu0 %v4952
  %6718 = vmatpush.bf16.msra.mxu0 %v4948
  %6719 = vmatpush.bf16.msra.mxu0 %v4944
  %6720 = vmatpush.bf16.msra.mxu0 %v4940
  %6721 = vmatpush.bf16.msra.mxu0 %v4936
  %6722 = vmatmul.bf16.gmra.mxu0 %v1335
  %v6723 = vpop.f32.mrf.mxu0
  %v6724 = vadd.f32 %v6710, %v6723
  %v6725 = vpop.f32.mrf.mxu0
  %v6726 = vadd.f32 %v6712, %v6725
  %6727 = vdwg.mxu0
  %6728 = vmatpush.bf16.msra.mxu0 %v4996
  %6729 = vmatpush.bf16.msra.mxu0 %v4992
  %6730 = vmatpush.bf16.msra.mxu0 %v4988
  %6731 = vmatpush.bf16.msra.mxu0 %v4984
  %6732 = vmatpush.bf16.msra.mxu0 %v4980
  %6733 = vmatpush.bf16.msra.mxu0 %v4976
  %6734 = vmatpush.bf16.msra.mxu0 %v4972
  %6735 = vmatpush.bf16.msra.mxu0 %v4968
  %6736 = vmatmul.bf16.gmra.mxu0 %v1336
  %v6737 = vpop.f32.mrf.mxu0
  %v6738 = vadd.f32 %v6724, %v6737
  %v6739 = vpop.f32.mrf.mxu0
  %v6740 = vadd.f32 %v6726, %v6739
  %6741 = vdwg.mxu0
  %6742 = vmatpush.bf16.msra.mxu0 %v5028
  %6743 = vmatpush.bf16.msra.mxu0 %v5024
  %6744 = vmatpush.bf16.msra.mxu0 %v5020
  %6745 = vmatpush.bf16.msra.mxu0 %v5016
  %6746 = vmatpush.bf16.msra.mxu0 %v5012
  %6747 = vmatpush.bf16.msra.mxu0 %v5008
  %6748 = vmatpush.bf16.msra.mxu0 %v5004
  %6749 = vmatpush.bf16.msra.mxu0 %v5000
  %6750 = vmatmul.bf16.gmra.mxu0 %v1337
  %v6751 = vpop.f32.mrf.mxu0
  %v6752 = vadd.f32 %v6738, %v6751
  %v6753 = vpop.f32.mrf.mxu0
  %v6754 = vadd.f32 %v6740, %v6753
  %6755 = vdwg.mxu0
  %6756 = vmatpush.bf16.msra.mxu0 %v5060
  %6757 = vmatpush.bf16.msra.mxu0 %v5056
  %6758 = vmatpush.bf16.msra.mxu0 %v5052
  %6759 = vmatpush.bf16.msra.mxu0 %v5048
  %6760 = vmatpush.bf16.msra.mxu0 %v5044
  %6761 = vmatpush.bf16.msra.mxu0 %v5040
  %6762 = vmatpush.bf16.msra.mxu0 %v5036
  %6763 = vmatpush.bf16.msra.mxu0 %v5032
  %6764 = vmatmul.bf16.gmra.mxu0 %v1338
  %v6765 = vpop.f32.mrf.mxu0
  %v6766 = vadd.f32 %v6752, %v6765
  %v6767 = vpop.f32.mrf.mxu0
  %v6768 = vadd.f32 %v6754, %v6767
  %6769 = vdwg.mxu0
  %6770 = vmatpush.bf16.msra.mxu0 %v5092
  %6771 = vmatpush.bf16.msra.mxu0 %v5088
  %6772 = vmatpush.bf16.msra.mxu0 %v5084
  %6773 = vmatpush.bf16.msra.mxu0 %v5080
  %6774 = vmatpush.bf16.msra.mxu0 %v5076
  %6775 = vmatpush.bf16.msra.mxu0 %v5072
  %6776 = vmatpush.bf16.msra.mxu0 %v5068
  %6777 = vmatpush.bf16.msra.mxu0 %v5064
  %6778 = vmatmul.bf16.gmra.mxu0 %v1339
  %v6779 = vpop.f32.mrf.mxu0
  %v6780 = vadd.f32 %v6766, %v6779
  %v6781 = vpop.f32.mrf.mxu0
  %v6782 = vadd.f32 %v6768, %v6781
  %6783 = vdwg.mxu0
  %6784 = vmatpush.bf16.msra.mxu0 %v5124
  %6785 = vmatpush.bf16.msra.mxu0 %v5120
  %6786 = vmatpush.bf16.msra.mxu0 %v5116
  %6787 = vmatpush.bf16.msra.mxu0 %v5112
  %6788 = vmatpush.bf16.msra.mxu0 %v5108
  %6789 = vmatpush.bf16.msra.mxu0 %v5104
  %6790 = vmatpush.bf16.msra.mxu0 %v5100
  %6791 = vmatpush.bf16.msra.mxu0 %v5096
  %6792 = vmatmul.bf16.gmra.mxu0 %v1340
  %v6793 = vpop.f32.mrf.mxu0
  %v6794 = vadd.f32 %v6780, %v6793
  %v6795 = vpop.f32.mrf.mxu0
  %v6796 = vadd.f32 %v6782, %v6795
  %6797 = vdwg.mxu0
  %6798 = vmatpush.bf16.msra.mxu0 %v5156
  %6799 = vmatpush.bf16.msra.mxu0 %v5152
  %6800 = vmatpush.bf16.msra.mxu0 %v5148
  %6801 = vmatpush.bf16.msra.mxu0 %v5144
  %6802 = vmatpush.bf16.msra.mxu0 %v5140
  %6803 = vmatpush.bf16.msra.mxu0 %v5136
  %6804 = vmatpush.bf16.msra.mxu0 %v5132
  %6805 = vmatpush.bf16.msra.mxu0 %v5128
  %6806 = vmatmul.bf16.gmra.mxu0 %v1341
  %v6807 = vpop.f32.mrf.mxu0
  %v6808 = vadd.f32 %v6794, %v6807
  %v6809 = vpop.f32.mrf.mxu0
  %v6810 = vadd.f32 %v6796, %v6809
  %6811 = vdwg.mxu0
  %6812 = vmatpush.bf16.msra.mxu0 %v5188
  %6813 = vmatpush.bf16.msra.mxu0 %v5184
  %6814 = vmatpush.bf16.msra.mxu0 %v5180
  %6815 = vmatpush.bf16.msra.mxu0 %v5176
  %6816 = vmatpush.bf16.msra.mxu0 %v5172
  %6817 = vmatpush.bf16.msra.mxu0 %v5168
  %6818 = vmatpush.bf16.msra.mxu0 %v5164
  %6819 = vmatpush.bf16.msra.mxu0 %v5160
  %6820 = vmatmul.bf16.gmra.mxu0 %v1342
  %v6821 = vpop.f32.mrf.mxu0
  %v6822 = vadd.f32 %v6808, %v6821
  %v6823 = vpop.f32.mrf.mxu0
  %v6824 = vadd.f32 %v6810, %v6823
  %6825 = vdwg.mxu0
  %6826 = vmatpush.bf16.msra.mxu0 %v5220
  %6827 = vmatpush.bf16.msra.mxu0 %v5216
  %6828 = vmatpush.bf16.msra.mxu0 %v5212
  %6829 = vmatpush.bf16.msra.mxu0 %v5208
  %6830 = vmatpush.bf16.msra.mxu0 %v5204
  %6831 = vmatpush.bf16.msra.mxu0 %v5200
  %6832 = vmatpush.bf16.msra.mxu0 %v5196
  %6833 = vmatpush.bf16.msra.mxu0 %v5192
  %6834 = vmatmul.bf16.gmra.mxu0 %v1343
  %v6835 = vpop.f32.mrf.mxu0
  %v6836 = vadd.f32 %v6822, %v6835
  %v6837 = vpop.f32.mrf.mxu0
  %v6838 = vadd.f32 %v6824, %v6837
  %6839 = vdwg.mxu0
  %6840 = vmatpush.bf16.msra.mxu0 %v5252
  %6841 = vmatpush.bf16.msra.mxu0 %v5248
  %6842 = vmatpush.bf16.msra.mxu0 %v5244
  %6843 = vmatpush.bf16.msra.mxu0 %v5240
  %6844 = vmatpush.bf16.msra.mxu0 %v5236
  %6845 = vmatpush.bf16.msra.mxu0 %v5232
  %6846 = vmatpush.bf16.msra.mxu0 %v5228
  %6847 = vmatpush.bf16.msra.mxu0 %v5224
  %6848 = vmatmul.bf16.gmra.mxu0 %v1344
  %v6849 = vpop.f32.mrf.mxu0
  %v6850 = vadd.f32 %v6836, %v6849
  %v6851 = vpop.f32.mrf.mxu0
  %v6852 = vadd.f32 %v6838, %v6851
  %6853 = vdwg.mxu0
  %6854 = vmatpush.bf16.msra.mxu0 %v5284
  %6855 = vmatpush.bf16.msra.mxu0 %v5280
  %6856 = vmatpush.bf16.msra.mxu0 %v5276
  %6857 = vmatpush.bf16.msra.mxu0 %v5272
  %6858 = vmatpush.bf16.msra.mxu0 %v5268
  %6859 = vmatpush.bf16.msra.mxu0 %v5264
  %6860 = vmatpush.bf16.msra.mxu0 %v5260
  %6861 = vmatpush.bf16.msra.mxu0 %v5256
  %6862 = vmatmul.bf16.gmra.mxu0 %v1345
  %v6863 = vpop.f32.mrf.mxu0
  %v6864 = vadd.f32 %v6850, %v6863
  %v6865 = vpop.f32.mrf.mxu0
  %v6866 = vadd.f32 %v6852, %v6865
  %6867 = vdwg.mxu0
  %6868 = vmatpush.bf16.msra.mxu0 %v5316
  %6869 = vmatpush.bf16.msra.mxu0 %v5312
  %6870 = vmatpush.bf16.msra.mxu0 %v5308
  %6871 = vmatpush.bf16.msra.mxu0 %v5304
  %6872 = vmatpush.bf16.msra.mxu0 %v5300
  %6873 = vmatpush.bf16.msra.mxu0 %v5296
  %6874 = vmatpush.bf16.msra.mxu0 %v5292
  %6875 = vmatpush.bf16.msra.mxu0 %v5288
  %6876 = vmatmul.bf16.gmra.mxu0 %v1346
  %v6877 = vpop.f32.mrf.mxu0
  %v6878 = vadd.f32 %v6864, %v6877
  %v6879 = vpop.f32.mrf.mxu0
  %v6880 = vadd.f32 %v6866, %v6879
  %6881 = vdwg.mxu0
  %6882 = vmatpush.bf16.msra.mxu0 %v5348
  %6883 = vmatpush.bf16.msra.mxu0 %v5344
  %6884 = vmatpush.bf16.msra.mxu0 %v5340
  %6885 = vmatpush.bf16.msra.mxu0 %v5336
  %6886 = vmatpush.bf16.msra.mxu0 %v5332
  %6887 = vmatpush.bf16.msra.mxu0 %v5328
  %6888 = vmatpush.bf16.msra.mxu0 %v5324
  %6889 = vmatpush.bf16.msra.mxu0 %v5320
  %6890 = vmatmul.bf16.gmra.mxu0 %v1347
  %v6891 = vpop.f32.mrf.mxu0
  %v6892 = vadd.f32 %v6878, %v6891
  %v6893 = vpop.f32.mrf.mxu0
  %v6894 = vadd.f32 %v6880, %v6893
  %6895 = vdwg.mxu0
  %6896 = vmatpush.bf16.msra.mxu0 %v5380
  %6897 = vmatpush.bf16.msra.mxu0 %v5376
  %6898 = vmatpush.bf16.msra.mxu0 %v5372
  %6899 = vmatpush.bf16.msra.mxu0 %v5368
  %6900 = vmatpush.bf16.msra.mxu0 %v5364
  %6901 = vmatpush.bf16.msra.mxu0 %v5360
  %6902 = vmatpush.bf16.msra.mxu0 %v5356
  %6903 = vmatpush.bf16.msra.mxu0 %v5352
  %6904 = vmatmul.bf16.gmra.mxu0 %v1348
  %v6905 = vpop.f32.mrf.mxu0
  %v6906 = vadd.f32 %v6892, %v6905
  %v6907 = vpop.f32.mrf.mxu0
  %v6908 = vadd.f32 %v6894, %v6907
  %6909 = vdwg.mxu0
  %6910 = vmatpush.bf16.msra.mxu0 %v5412
  %6911 = vmatpush.bf16.msra.mxu0 %v5408
  %6912 = vmatpush.bf16.msra.mxu0 %v5404
  %6913 = vmatpush.bf16.msra.mxu0 %v5400
  %6914 = vmatpush.bf16.msra.mxu0 %v5396
  %6915 = vmatpush.bf16.msra.mxu0 %v5392
  %6916 = vmatpush.bf16.msra.mxu0 %v5388
  %6917 = vmatpush.bf16.msra.mxu0 %v5384
  %6918 = vmatmul.bf16.gmra.mxu0 %v1349
  %v6919 = vpop.f32.mrf.mxu0
  %v6920 = vadd.f32 %v6906, %v6919
  %v6921 = vpop.f32.mrf.mxu0
  %v6922 = vadd.f32 %v6908, %v6921
  %6923 = vdwg.mxu0
  %6924 = vmatpush.bf16.msra.mxu0 %v5444
  %6925 = vmatpush.bf16.msra.mxu0 %v5440
  %6926 = vmatpush.bf16.msra.mxu0 %v5436
  %6927 = vmatpush.bf16.msra.mxu0 %v5432
  %6928 = vmatpush.bf16.msra.mxu0 %v5428
  %6929 = vmatpush.bf16.msra.mxu0 %v5424
  %6930 = vmatpush.bf16.msra.mxu0 %v5420
  %6931 = vmatpush.bf16.msra.mxu0 %v5416
  %6932 = vmatmul.bf16.gmra.mxu0 %v1350
  %v6933 = vpop.f32.mrf.mxu0
  %v6934 = vadd.f32 %v6920, %v6933
  %v6935 = vpop.f32.mrf.mxu0
  %v6936 = vadd.f32 %v6922, %v6935
  %6937 = vdwg.mxu0
  %6938 = vmatpush.bf16.msra.mxu0 %v5476
  %6939 = vmatpush.bf16.msra.mxu0 %v5472
  %6940 = vmatpush.bf16.msra.mxu0 %v5468
  %6941 = vmatpush.bf16.msra.mxu0 %v5464
  %6942 = vmatpush.bf16.msra.mxu0 %v5460
  %6943 = vmatpush.bf16.msra.mxu0 %v5456
  %6944 = vmatpush.bf16.msra.mxu0 %v5452
  %6945 = vmatpush.bf16.msra.mxu0 %v5448
  %6946 = vmatmul.bf16.gmra.mxu0 %v1351
  %v6947 = vpop.f32.mrf.mxu0
  %v6948 = vadd.f32 %v6934, %v6947
  %v6949 = vpop.f32.mrf.mxu0
  %v6950 = vadd.f32 %v6936, %v6949
  %6951 = vdwg.mxu0
  %6952 = vmatpush.bf16.msra.mxu0 %v4485
  %6953 = vmatpush.bf16.msra.mxu0 %v4481
  %6954 = vmatpush.bf16.msra.mxu0 %v4477
  %6955 = vmatpush.bf16.msra.mxu0 %v4473
  %6956 = vmatpush.bf16.msra.mxu0 %v4469
  %6957 = vmatpush.bf16.msra.mxu0 %v4465
  %6958 = vmatpush.bf16.msra.mxu0 %v4461
  %6959 = vmatpush.bf16.msra.mxu0 %v4457
  %6960 = vmatmul.bf16.gmra.mxu0 %v1320
  %v6961 = vpop.f32.mrf.mxu0
  %v6962 = vadd.f32 %v1192, %v6961
  %v6963 = vpop.f32.mrf.mxu0
  %v6964 = vadd.f32 %v1194, %v6963
  %6965 = vdwg.mxu0
  %6966 = vmatpush.bf16.msra.mxu0 %v4517
  %6967 = vmatpush.bf16.msra.mxu0 %v4513
  %6968 = vmatpush.bf16.msra.mxu0 %v4509
  %6969 = vmatpush.bf16.msra.mxu0 %v4505
  %6970 = vmatpush.bf16.msra.mxu0 %v4501
  %6971 = vmatpush.bf16.msra.mxu0 %v4497
  %6972 = vmatpush.bf16.msra.mxu0 %v4493
  %6973 = vmatpush.bf16.msra.mxu0 %v4489
  %6974 = vmatmul.bf16.gmra.mxu0 %v1321
  %v6975 = vpop.f32.mrf.mxu0
  %v6976 = vadd.f32 %v6962, %v6975
  %v6977 = vpop.f32.mrf.mxu0
  %v6978 = vadd.f32 %v6964, %v6977
  %6979 = vdwg.mxu0
  %6980 = vmatpush.bf16.msra.mxu0 %v4549
  %6981 = vmatpush.bf16.msra.mxu0 %v4545
  %6982 = vmatpush.bf16.msra.mxu0 %v4541
  %6983 = vmatpush.bf16.msra.mxu0 %v4537
  %6984 = vmatpush.bf16.msra.mxu0 %v4533
  %6985 = vmatpush.bf16.msra.mxu0 %v4529
  %6986 = vmatpush.bf16.msra.mxu0 %v4525
  %6987 = vmatpush.bf16.msra.mxu0 %v4521
  %6988 = vmatmul.bf16.gmra.mxu0 %v1322
  %v6989 = vpop.f32.mrf.mxu0
  %v6990 = vadd.f32 %v6976, %v6989
  %v6991 = vpop.f32.mrf.mxu0
  %v6992 = vadd.f32 %v6978, %v6991
  %6993 = vdwg.mxu0
  %6994 = vmatpush.bf16.msra.mxu0 %v4581
  %6995 = vmatpush.bf16.msra.mxu0 %v4577
  %6996 = vmatpush.bf16.msra.mxu0 %v4573
  %6997 = vmatpush.bf16.msra.mxu0 %v4569
  %6998 = vmatpush.bf16.msra.mxu0 %v4565
  %6999 = vmatpush.bf16.msra.mxu0 %v4561
  %7000 = vmatpush.bf16.msra.mxu0 %v4557
  %7001 = vmatpush.bf16.msra.mxu0 %v4553
  %7002 = vmatmul.bf16.gmra.mxu0 %v1323
  %v7003 = vpop.f32.mrf.mxu0
  %v7004 = vadd.f32 %v6990, %v7003
  %v7005 = vpop.f32.mrf.mxu0
  %v7006 = vadd.f32 %v6992, %v7005
  %7007 = vdwg.mxu0
  %7008 = vmatpush.bf16.msra.mxu0 %v4613
  %7009 = vmatpush.bf16.msra.mxu0 %v4609
  %7010 = vmatpush.bf16.msra.mxu0 %v4605
  %7011 = vmatpush.bf16.msra.mxu0 %v4601
  %7012 = vmatpush.bf16.msra.mxu0 %v4597
  %7013 = vmatpush.bf16.msra.mxu0 %v4593
  %7014 = vmatpush.bf16.msra.mxu0 %v4589
  %7015 = vmatpush.bf16.msra.mxu0 %v4585
  %7016 = vmatmul.bf16.gmra.mxu0 %v1324
  %v7017 = vpop.f32.mrf.mxu0
  %v7018 = vadd.f32 %v7004, %v7017
  %v7019 = vpop.f32.mrf.mxu0
  %v7020 = vadd.f32 %v7006, %v7019
  %7021 = vdwg.mxu0
  %7022 = vmatpush.bf16.msra.mxu0 %v4645
  %7023 = vmatpush.bf16.msra.mxu0 %v4641
  %7024 = vmatpush.bf16.msra.mxu0 %v4637
  %7025 = vmatpush.bf16.msra.mxu0 %v4633
  %7026 = vmatpush.bf16.msra.mxu0 %v4629
  %7027 = vmatpush.bf16.msra.mxu0 %v4625
  %7028 = vmatpush.bf16.msra.mxu0 %v4621
  %7029 = vmatpush.bf16.msra.mxu0 %v4617
  %7030 = vmatmul.bf16.gmra.mxu0 %v1325
  %v7031 = vpop.f32.mrf.mxu0
  %v7032 = vadd.f32 %v7018, %v7031
  %v7033 = vpop.f32.mrf.mxu0
  %v7034 = vadd.f32 %v7020, %v7033
  %7035 = vdwg.mxu0
  %7036 = vmatpush.bf16.msra.mxu0 %v4677
  %7037 = vmatpush.bf16.msra.mxu0 %v4673
  %7038 = vmatpush.bf16.msra.mxu0 %v4669
  %7039 = vmatpush.bf16.msra.mxu0 %v4665
  %7040 = vmatpush.bf16.msra.mxu0 %v4661
  %7041 = vmatpush.bf16.msra.mxu0 %v4657
  %7042 = vmatpush.bf16.msra.mxu0 %v4653
  %7043 = vmatpush.bf16.msra.mxu0 %v4649
  %7044 = vmatmul.bf16.gmra.mxu0 %v1326
  %v7045 = vpop.f32.mrf.mxu0
  %v7046 = vadd.f32 %v7032, %v7045
  %v7047 = vpop.f32.mrf.mxu0
  %v7048 = vadd.f32 %v7034, %v7047
  %7049 = vdwg.mxu0
  %7050 = vmatpush.bf16.msra.mxu0 %v4709
  %7051 = vmatpush.bf16.msra.mxu0 %v4705
  %7052 = vmatpush.bf16.msra.mxu0 %v4701
  %7053 = vmatpush.bf16.msra.mxu0 %v4697
  %7054 = vmatpush.bf16.msra.mxu0 %v4693
  %7055 = vmatpush.bf16.msra.mxu0 %v4689
  %7056 = vmatpush.bf16.msra.mxu0 %v4685
  %7057 = vmatpush.bf16.msra.mxu0 %v4681
  %7058 = vmatmul.bf16.gmra.mxu0 %v1327
  %v7059 = vpop.f32.mrf.mxu0
  %v7060 = vadd.f32 %v7046, %v7059
  %v7061 = vpop.f32.mrf.mxu0
  %v7062 = vadd.f32 %v7048, %v7061
  %7063 = vdwg.mxu0
  %7064 = vmatpush.bf16.msra.mxu0 %v4741
  %7065 = vmatpush.bf16.msra.mxu0 %v4737
  %7066 = vmatpush.bf16.msra.mxu0 %v4733
  %7067 = vmatpush.bf16.msra.mxu0 %v4729
  %7068 = vmatpush.bf16.msra.mxu0 %v4725
  %7069 = vmatpush.bf16.msra.mxu0 %v4721
  %7070 = vmatpush.bf16.msra.mxu0 %v4717
  %7071 = vmatpush.bf16.msra.mxu0 %v4713
  %7072 = vmatmul.bf16.gmra.mxu0 %v1328
  %v7073 = vpop.f32.mrf.mxu0
  %v7074 = vadd.f32 %v7060, %v7073
  %v7075 = vpop.f32.mrf.mxu0
  %v7076 = vadd.f32 %v7062, %v7075
  %7077 = vdwg.mxu0
  %7078 = vmatpush.bf16.msra.mxu0 %v4773
  %7079 = vmatpush.bf16.msra.mxu0 %v4769
  %7080 = vmatpush.bf16.msra.mxu0 %v4765
  %7081 = vmatpush.bf16.msra.mxu0 %v4761
  %7082 = vmatpush.bf16.msra.mxu0 %v4757
  %7083 = vmatpush.bf16.msra.mxu0 %v4753
  %7084 = vmatpush.bf16.msra.mxu0 %v4749
  %7085 = vmatpush.bf16.msra.mxu0 %v4745
  %7086 = vmatmul.bf16.gmra.mxu0 %v1329
  %v7087 = vpop.f32.mrf.mxu0
  %v7088 = vadd.f32 %v7074, %v7087
  %v7089 = vpop.f32.mrf.mxu0
  %v7090 = vadd.f32 %v7076, %v7089
  %7091 = vdwg.mxu0
  %7092 = vmatpush.bf16.msra.mxu0 %v4805
  %7093 = vmatpush.bf16.msra.mxu0 %v4801
  %7094 = vmatpush.bf16.msra.mxu0 %v4797
  %7095 = vmatpush.bf16.msra.mxu0 %v4793
  %7096 = vmatpush.bf16.msra.mxu0 %v4789
  %7097 = vmatpush.bf16.msra.mxu0 %v4785
  %7098 = vmatpush.bf16.msra.mxu0 %v4781
  %7099 = vmatpush.bf16.msra.mxu0 %v4777
  %7100 = vmatmul.bf16.gmra.mxu0 %v1330
  %v7101 = vpop.f32.mrf.mxu0
  %v7102 = vadd.f32 %v7088, %v7101
  %v7103 = vpop.f32.mrf.mxu0
  %v7104 = vadd.f32 %v7090, %v7103
  %7105 = vdwg.mxu0
  %7106 = vmatpush.bf16.msra.mxu0 %v4837
  %7107 = vmatpush.bf16.msra.mxu0 %v4833
  %7108 = vmatpush.bf16.msra.mxu0 %v4829
  %7109 = vmatpush.bf16.msra.mxu0 %v4825
  %7110 = vmatpush.bf16.msra.mxu0 %v4821
  %7111 = vmatpush.bf16.msra.mxu0 %v4817
  %7112 = vmatpush.bf16.msra.mxu0 %v4813
  %7113 = vmatpush.bf16.msra.mxu0 %v4809
  %7114 = vmatmul.bf16.gmra.mxu0 %v1331
  %v7115 = vpop.f32.mrf.mxu0
  %v7116 = vadd.f32 %v7102, %v7115
  %v7117 = vpop.f32.mrf.mxu0
  %v7118 = vadd.f32 %v7104, %v7117
  %7119 = vdwg.mxu0
  %7120 = vmatpush.bf16.msra.mxu0 %v4869
  %7121 = vmatpush.bf16.msra.mxu0 %v4865
  %7122 = vmatpush.bf16.msra.mxu0 %v4861
  %7123 = vmatpush.bf16.msra.mxu0 %v4857
  %7124 = vmatpush.bf16.msra.mxu0 %v4853
  %7125 = vmatpush.bf16.msra.mxu0 %v4849
  %7126 = vmatpush.bf16.msra.mxu0 %v4845
  %7127 = vmatpush.bf16.msra.mxu0 %v4841
  %7128 = vmatmul.bf16.gmra.mxu0 %v1332
  %v7129 = vpop.f32.mrf.mxu0
  %v7130 = vadd.f32 %v7116, %v7129
  %v7131 = vpop.f32.mrf.mxu0
  %v7132 = vadd.f32 %v7118, %v7131
  %7133 = vdwg.mxu0
  %7134 = vmatpush.bf16.msra.mxu0 %v4901
  %7135 = vmatpush.bf16.msra.mxu0 %v4897
  %7136 = vmatpush.bf16.msra.mxu0 %v4893
  %7137 = vmatpush.bf16.msra.mxu0 %v4889
  %7138 = vmatpush.bf16.msra.mxu0 %v4885
  %7139 = vmatpush.bf16.msra.mxu0 %v4881
  %7140 = vmatpush.bf16.msra.mxu0 %v4877
  %7141 = vmatpush.bf16.msra.mxu0 %v4873
  %7142 = vmatmul.bf16.gmra.mxu0 %v1333
  %v7143 = vpop.f32.mrf.mxu0
  %v7144 = vadd.f32 %v7130, %v7143
  %v7145 = vpop.f32.mrf.mxu0
  %v7146 = vadd.f32 %v7132, %v7145
  %7147 = vdwg.mxu0
  %7148 = vmatpush.bf16.msra.mxu0 %v4933
  %7149 = vmatpush.bf16.msra.mxu0 %v4929
  %7150 = vmatpush.bf16.msra.mxu0 %v4925
  %7151 = vmatpush.bf16.msra.mxu0 %v4921
  %7152 = vmatpush.bf16.msra.mxu0 %v4917
  %7153 = vmatpush.bf16.msra.mxu0 %v4913
  %7154 = vmatpush.bf16.msra.mxu0 %v4909
  %7155 = vmatpush.bf16.msra.mxu0 %v4905
  %7156 = vmatmul.bf16.gmra.mxu0 %v1334
  %v7157 = vpop.f32.mrf.mxu0
  %v7158 = vadd.f32 %v7144, %v7157
  %v7159 = vpop.f32.mrf.mxu0
  %v7160 = vadd.f32 %v7146, %v7159
  %7161 = vdwg.mxu0
  %7162 = vmatpush.bf16.msra.mxu0 %v4965
  %7163 = vmatpush.bf16.msra.mxu0 %v4961
  %7164 = vmatpush.bf16.msra.mxu0 %v4957
  %7165 = vmatpush.bf16.msra.mxu0 %v4953
  %7166 = vmatpush.bf16.msra.mxu0 %v4949
  %7167 = vmatpush.bf16.msra.mxu0 %v4945
  %7168 = vmatpush.bf16.msra.mxu0 %v4941
  %7169 = vmatpush.bf16.msra.mxu0 %v4937
  %7170 = vmatmul.bf16.gmra.mxu0 %v1335
  %v7171 = vpop.f32.mrf.mxu0
  %v7172 = vadd.f32 %v7158, %v7171
  %v7173 = vpop.f32.mrf.mxu0
  %v7174 = vadd.f32 %v7160, %v7173
  %7175 = vdwg.mxu0
  %7176 = vmatpush.bf16.msra.mxu0 %v4997
  %7177 = vmatpush.bf16.msra.mxu0 %v4993
  %7178 = vmatpush.bf16.msra.mxu0 %v4989
  %7179 = vmatpush.bf16.msra.mxu0 %v4985
  %7180 = vmatpush.bf16.msra.mxu0 %v4981
  %7181 = vmatpush.bf16.msra.mxu0 %v4977
  %7182 = vmatpush.bf16.msra.mxu0 %v4973
  %7183 = vmatpush.bf16.msra.mxu0 %v4969
  %7184 = vmatmul.bf16.gmra.mxu0 %v1336
  %v7185 = vpop.f32.mrf.mxu0
  %v7186 = vadd.f32 %v7172, %v7185
  %v7187 = vpop.f32.mrf.mxu0
  %v7188 = vadd.f32 %v7174, %v7187
  %7189 = vdwg.mxu0
  %7190 = vmatpush.bf16.msra.mxu0 %v5029
  %7191 = vmatpush.bf16.msra.mxu0 %v5025
  %7192 = vmatpush.bf16.msra.mxu0 %v5021
  %7193 = vmatpush.bf16.msra.mxu0 %v5017
  %7194 = vmatpush.bf16.msra.mxu0 %v5013
  %7195 = vmatpush.bf16.msra.mxu0 %v5009
  %7196 = vmatpush.bf16.msra.mxu0 %v5005
  %7197 = vmatpush.bf16.msra.mxu0 %v5001
  %7198 = vmatmul.bf16.gmra.mxu0 %v1337
  %v7199 = vpop.f32.mrf.mxu0
  %v7200 = vadd.f32 %v7186, %v7199
  %v7201 = vpop.f32.mrf.mxu0
  %v7202 = vadd.f32 %v7188, %v7201
  %7203 = vdwg.mxu0
  %7204 = vmatpush.bf16.msra.mxu0 %v5061
  %7205 = vmatpush.bf16.msra.mxu0 %v5057
  %7206 = vmatpush.bf16.msra.mxu0 %v5053
  %7207 = vmatpush.bf16.msra.mxu0 %v5049
  %7208 = vmatpush.bf16.msra.mxu0 %v5045
  %7209 = vmatpush.bf16.msra.mxu0 %v5041
  %7210 = vmatpush.bf16.msra.mxu0 %v5037
  %7211 = vmatpush.bf16.msra.mxu0 %v5033
  %7212 = vmatmul.bf16.gmra.mxu0 %v1338
  %v7213 = vpop.f32.mrf.mxu0
  %v7214 = vadd.f32 %v7200, %v7213
  %v7215 = vpop.f32.mrf.mxu0
  %v7216 = vadd.f32 %v7202, %v7215
  %7217 = vdwg.mxu0
  %7218 = vmatpush.bf16.msra.mxu0 %v5093
  %7219 = vmatpush.bf16.msra.mxu0 %v5089
  %7220 = vmatpush.bf16.msra.mxu0 %v5085
  %7221 = vmatpush.bf16.msra.mxu0 %v5081
  %7222 = vmatpush.bf16.msra.mxu0 %v5077
  %7223 = vmatpush.bf16.msra.mxu0 %v5073
  %7224 = vmatpush.bf16.msra.mxu0 %v5069
  %7225 = vmatpush.bf16.msra.mxu0 %v5065
  %7226 = vmatmul.bf16.gmra.mxu0 %v1339
  %v7227 = vpop.f32.mrf.mxu0
  %v7228 = vadd.f32 %v7214, %v7227
  %v7229 = vpop.f32.mrf.mxu0
  %v7230 = vadd.f32 %v7216, %v7229
  %7231 = vdwg.mxu0
  %7232 = vmatpush.bf16.msra.mxu0 %v5125
  %7233 = vmatpush.bf16.msra.mxu0 %v5121
  %7234 = vmatpush.bf16.msra.mxu0 %v5117
  %7235 = vmatpush.bf16.msra.mxu0 %v5113
  %7236 = vmatpush.bf16.msra.mxu0 %v5109
  %7237 = vmatpush.bf16.msra.mxu0 %v5105
  %7238 = vmatpush.bf16.msra.mxu0 %v5101
  %7239 = vmatpush.bf16.msra.mxu0 %v5097
  %7240 = vmatmul.bf16.gmra.mxu0 %v1340
  %v7241 = vpop.f32.mrf.mxu0
  %v7242 = vadd.f32 %v7228, %v7241
  %v7243 = vpop.f32.mrf.mxu0
  %v7244 = vadd.f32 %v7230, %v7243
  %7245 = vdwg.mxu0
  %7246 = vmatpush.bf16.msra.mxu0 %v5157
  %7247 = vmatpush.bf16.msra.mxu0 %v5153
  %7248 = vmatpush.bf16.msra.mxu0 %v5149
  %7249 = vmatpush.bf16.msra.mxu0 %v5145
  %7250 = vmatpush.bf16.msra.mxu0 %v5141
  %7251 = vmatpush.bf16.msra.mxu0 %v5137
  %7252 = vmatpush.bf16.msra.mxu0 %v5133
  %7253 = vmatpush.bf16.msra.mxu0 %v5129
  %7254 = vmatmul.bf16.gmra.mxu0 %v1341
  %v7255 = vpop.f32.mrf.mxu0
  %v7256 = vadd.f32 %v7242, %v7255
  %v7257 = vpop.f32.mrf.mxu0
  %v7258 = vadd.f32 %v7244, %v7257
  %7259 = vdwg.mxu0
  %7260 = vmatpush.bf16.msra.mxu0 %v5189
  %7261 = vmatpush.bf16.msra.mxu0 %v5185
  %7262 = vmatpush.bf16.msra.mxu0 %v5181
  %7263 = vmatpush.bf16.msra.mxu0 %v5177
  %7264 = vmatpush.bf16.msra.mxu0 %v5173
  %7265 = vmatpush.bf16.msra.mxu0 %v5169
  %7266 = vmatpush.bf16.msra.mxu0 %v5165
  %7267 = vmatpush.bf16.msra.mxu0 %v5161
  %7268 = vmatmul.bf16.gmra.mxu0 %v1342
  %v7269 = vpop.f32.mrf.mxu0
  %v7270 = vadd.f32 %v7256, %v7269
  %v7271 = vpop.f32.mrf.mxu0
  %v7272 = vadd.f32 %v7258, %v7271
  %7273 = vdwg.mxu0
  %7274 = vmatpush.bf16.msra.mxu0 %v5221
  %7275 = vmatpush.bf16.msra.mxu0 %v5217
  %7276 = vmatpush.bf16.msra.mxu0 %v5213
  %7277 = vmatpush.bf16.msra.mxu0 %v5209
  %7278 = vmatpush.bf16.msra.mxu0 %v5205
  %7279 = vmatpush.bf16.msra.mxu0 %v5201
  %7280 = vmatpush.bf16.msra.mxu0 %v5197
  %7281 = vmatpush.bf16.msra.mxu0 %v5193
  %7282 = vmatmul.bf16.gmra.mxu0 %v1343
  %v7283 = vpop.f32.mrf.mxu0
  %v7284 = vadd.f32 %v7270, %v7283
  %v7285 = vpop.f32.mrf.mxu0
  %v7286 = vadd.f32 %v7272, %v7285
  %7287 = vdwg.mxu0
  %7288 = vmatpush.bf16.msra.mxu0 %v5253
  %7289 = vmatpush.bf16.msra.mxu0 %v5249
  %7290 = vmatpush.bf16.msra.mxu0 %v5245
  %7291 = vmatpush.bf16.msra.mxu0 %v5241
  %7292 = vmatpush.bf16.msra.mxu0 %v5237
  %7293 = vmatpush.bf16.msra.mxu0 %v5233
  %7294 = vmatpush.bf16.msra.mxu0 %v5229
  %7295 = vmatpush.bf16.msra.mxu0 %v5225
  %7296 = vmatmul.bf16.gmra.mxu0 %v1344
  %v7297 = vpop.f32.mrf.mxu0
  %v7298 = vadd.f32 %v7284, %v7297
  %v7299 = vpop.f32.mrf.mxu0
  %v7300 = vadd.f32 %v7286, %v7299
  %7301 = vdwg.mxu0
  %7302 = vmatpush.bf16.msra.mxu0 %v5285
  %7303 = vmatpush.bf16.msra.mxu0 %v5281
  %7304 = vmatpush.bf16.msra.mxu0 %v5277
  %7305 = vmatpush.bf16.msra.mxu0 %v5273
  %7306 = vmatpush.bf16.msra.mxu0 %v5269
  %7307 = vmatpush.bf16.msra.mxu0 %v5265
  %7308 = vmatpush.bf16.msra.mxu0 %v5261
  %7309 = vmatpush.bf16.msra.mxu0 %v5257
  %7310 = vmatmul.bf16.gmra.mxu0 %v1345
  %v7311 = vpop.f32.mrf.mxu0
  %v7312 = vadd.f32 %v7298, %v7311
  %v7313 = vpop.f32.mrf.mxu0
  %v7314 = vadd.f32 %v7300, %v7313
  %7315 = vdwg.mxu0
  %7316 = vmatpush.bf16.msra.mxu0 %v5317
  %7317 = vmatpush.bf16.msra.mxu0 %v5313
  %7318 = vmatpush.bf16.msra.mxu0 %v5309
  %7319 = vmatpush.bf16.msra.mxu0 %v5305
  %7320 = vmatpush.bf16.msra.mxu0 %v5301
  %7321 = vmatpush.bf16.msra.mxu0 %v5297
  %7322 = vmatpush.bf16.msra.mxu0 %v5293
  %7323 = vmatpush.bf16.msra.mxu0 %v5289
  %7324 = vmatmul.bf16.gmra.mxu0 %v1346
  %v7325 = vpop.f32.mrf.mxu0
  %v7326 = vadd.f32 %v7312, %v7325
  %v7327 = vpop.f32.mrf.mxu0
  %v7328 = vadd.f32 %v7314, %v7327
  %7329 = vdwg.mxu0
  %7330 = vmatpush.bf16.msra.mxu0 %v5349
  %7331 = vmatpush.bf16.msra.mxu0 %v5345
  %7332 = vmatpush.bf16.msra.mxu0 %v5341
  %7333 = vmatpush.bf16.msra.mxu0 %v5337
  %7334 = vmatpush.bf16.msra.mxu0 %v5333
  %7335 = vmatpush.bf16.msra.mxu0 %v5329
  %7336 = vmatpush.bf16.msra.mxu0 %v5325
  %7337 = vmatpush.bf16.msra.mxu0 %v5321
  %7338 = vmatmul.bf16.gmra.mxu0 %v1347
  %v7339 = vpop.f32.mrf.mxu0
  %v7340 = vadd.f32 %v7326, %v7339
  %v7341 = vpop.f32.mrf.mxu0
  %v7342 = vadd.f32 %v7328, %v7341
  %7343 = vdwg.mxu0
  %7344 = vmatpush.bf16.msra.mxu0 %v5381
  %7345 = vmatpush.bf16.msra.mxu0 %v5377
  %7346 = vmatpush.bf16.msra.mxu0 %v5373
  %7347 = vmatpush.bf16.msra.mxu0 %v5369
  %7348 = vmatpush.bf16.msra.mxu0 %v5365
  %7349 = vmatpush.bf16.msra.mxu0 %v5361
  %7350 = vmatpush.bf16.msra.mxu0 %v5357
  %7351 = vmatpush.bf16.msra.mxu0 %v5353
  %7352 = vmatmul.bf16.gmra.mxu0 %v1348
  %v7353 = vpop.f32.mrf.mxu0
  %v7354 = vadd.f32 %v7340, %v7353
  %v7355 = vpop.f32.mrf.mxu0
  %v7356 = vadd.f32 %v7342, %v7355
  %7357 = vdwg.mxu0
  %7358 = vmatpush.bf16.msra.mxu0 %v5413
  %7359 = vmatpush.bf16.msra.mxu0 %v5409
  %7360 = vmatpush.bf16.msra.mxu0 %v5405
  %7361 = vmatpush.bf16.msra.mxu0 %v5401
  %7362 = vmatpush.bf16.msra.mxu0 %v5397
  %7363 = vmatpush.bf16.msra.mxu0 %v5393
  %7364 = vmatpush.bf16.msra.mxu0 %v5389
  %7365 = vmatpush.bf16.msra.mxu0 %v5385
  %7366 = vmatmul.bf16.gmra.mxu0 %v1349
  %v7367 = vpop.f32.mrf.mxu0
  %v7368 = vadd.f32 %v7354, %v7367
  %v7369 = vpop.f32.mrf.mxu0
  %v7370 = vadd.f32 %v7356, %v7369
  %7371 = vdwg.mxu0
  %7372 = vmatpush.bf16.msra.mxu0 %v5445
  %7373 = vmatpush.bf16.msra.mxu0 %v5441
  %7374 = vmatpush.bf16.msra.mxu0 %v5437
  %7375 = vmatpush.bf16.msra.mxu0 %v5433
  %7376 = vmatpush.bf16.msra.mxu0 %v5429
  %7377 = vmatpush.bf16.msra.mxu0 %v5425
  %7378 = vmatpush.bf16.msra.mxu0 %v5421
  %7379 = vmatpush.bf16.msra.mxu0 %v5417
  %7380 = vmatmul.bf16.gmra.mxu0 %v1350
  %v7381 = vpop.f32.mrf.mxu0
  %v7382 = vadd.f32 %v7368, %v7381
  %v7383 = vpop.f32.mrf.mxu0
  %v7384 = vadd.f32 %v7370, %v7383
  %7385 = vdwg.mxu0
  %7386 = vmatpush.bf16.msra.mxu0 %v5477
  %7387 = vmatpush.bf16.msra.mxu0 %v5473
  %7388 = vmatpush.bf16.msra.mxu0 %v5469
  %7389 = vmatpush.bf16.msra.mxu0 %v5465
  %7390 = vmatpush.bf16.msra.mxu0 %v5461
  %7391 = vmatpush.bf16.msra.mxu0 %v5457
  %7392 = vmatpush.bf16.msra.mxu0 %v5453
  %7393 = vmatpush.bf16.msra.mxu0 %v5449
  %7394 = vmatmul.bf16.gmra.mxu0 %v1351
  %v7395 = vpop.f32.mrf.mxu0
  %v7396 = vadd.f32 %v7382, %v7395
  %v7397 = vpop.f32.mrf.mxu0
  %v7398 = vadd.f32 %v7384, %v7397
  %7399 = vdwg.mxu0
  %7400 = vmatpush.bf16.msra.mxu0 %v4486
  %7401 = vmatpush.bf16.msra.mxu0 %v4482
  %7402 = vmatpush.bf16.msra.mxu0 %v4478
  %7403 = vmatpush.bf16.msra.mxu0 %v4474
  %7404 = vmatpush.bf16.msra.mxu0 %v4470
  %7405 = vmatpush.bf16.msra.mxu0 %v4466
  %7406 = vmatpush.bf16.msra.mxu0 %v4462
  %7407 = vmatpush.bf16.msra.mxu0 %v4458
  %7408 = vmatmul.bf16.gmra.mxu0 %v1320
  %v7409 = vpop.f32.mrf.mxu0
  %v7410 = vadd.f32 %v1206, %v7409
  %v7411 = vpop.f32.mrf.mxu0
  %v7412 = vadd.f32 %v1208, %v7411
  %7413 = vdwg.mxu0
  %7414 = vmatpush.bf16.msra.mxu0 %v4518
  %7415 = vmatpush.bf16.msra.mxu0 %v4514
  %7416 = vmatpush.bf16.msra.mxu0 %v4510
  %7417 = vmatpush.bf16.msra.mxu0 %v4506
  %7418 = vmatpush.bf16.msra.mxu0 %v4502
  %7419 = vmatpush.bf16.msra.mxu0 %v4498
  %7420 = vmatpush.bf16.msra.mxu0 %v4494
  %7421 = vmatpush.bf16.msra.mxu0 %v4490
  %7422 = vmatmul.bf16.gmra.mxu0 %v1321
  %v7423 = vpop.f32.mrf.mxu0
  %v7424 = vadd.f32 %v7410, %v7423
  %v7425 = vpop.f32.mrf.mxu0
  %v7426 = vadd.f32 %v7412, %v7425
  %7427 = vdwg.mxu0
  %7428 = vmatpush.bf16.msra.mxu0 %v4550
  %7429 = vmatpush.bf16.msra.mxu0 %v4546
  %7430 = vmatpush.bf16.msra.mxu0 %v4542
  %7431 = vmatpush.bf16.msra.mxu0 %v4538
  %7432 = vmatpush.bf16.msra.mxu0 %v4534
  %7433 = vmatpush.bf16.msra.mxu0 %v4530
  %7434 = vmatpush.bf16.msra.mxu0 %v4526
  %7435 = vmatpush.bf16.msra.mxu0 %v4522
  %7436 = vmatmul.bf16.gmra.mxu0 %v1322
  %v7437 = vpop.f32.mrf.mxu0
  %v7438 = vadd.f32 %v7424, %v7437
  %v7439 = vpop.f32.mrf.mxu0
  %v7440 = vadd.f32 %v7426, %v7439
  %7441 = vdwg.mxu0
  %7442 = vmatpush.bf16.msra.mxu0 %v4582
  %7443 = vmatpush.bf16.msra.mxu0 %v4578
  %7444 = vmatpush.bf16.msra.mxu0 %v4574
  %7445 = vmatpush.bf16.msra.mxu0 %v4570
  %7446 = vmatpush.bf16.msra.mxu0 %v4566
  %7447 = vmatpush.bf16.msra.mxu0 %v4562
  %7448 = vmatpush.bf16.msra.mxu0 %v4558
  %7449 = vmatpush.bf16.msra.mxu0 %v4554
  %7450 = vmatmul.bf16.gmra.mxu0 %v1323
  %v7451 = vpop.f32.mrf.mxu0
  %v7452 = vadd.f32 %v7438, %v7451
  %v7453 = vpop.f32.mrf.mxu0
  %v7454 = vadd.f32 %v7440, %v7453
  %7455 = vdwg.mxu0
  %7456 = vmatpush.bf16.msra.mxu0 %v4614
  %7457 = vmatpush.bf16.msra.mxu0 %v4610
  %7458 = vmatpush.bf16.msra.mxu0 %v4606
  %7459 = vmatpush.bf16.msra.mxu0 %v4602
  %7460 = vmatpush.bf16.msra.mxu0 %v4598
  %7461 = vmatpush.bf16.msra.mxu0 %v4594
  %7462 = vmatpush.bf16.msra.mxu0 %v4590
  %7463 = vmatpush.bf16.msra.mxu0 %v4586
  %7464 = vmatmul.bf16.gmra.mxu0 %v1324
  %v7465 = vpop.f32.mrf.mxu0
  %v7466 = vadd.f32 %v7452, %v7465
  %v7467 = vpop.f32.mrf.mxu0
  %v7468 = vadd.f32 %v7454, %v7467
  %7469 = vdwg.mxu0
  %7470 = vmatpush.bf16.msra.mxu0 %v4646
  %7471 = vmatpush.bf16.msra.mxu0 %v4642
  %7472 = vmatpush.bf16.msra.mxu0 %v4638
  %7473 = vmatpush.bf16.msra.mxu0 %v4634
  %7474 = vmatpush.bf16.msra.mxu0 %v4630
  %7475 = vmatpush.bf16.msra.mxu0 %v4626
  %7476 = vmatpush.bf16.msra.mxu0 %v4622
  %7477 = vmatpush.bf16.msra.mxu0 %v4618
  %7478 = vmatmul.bf16.gmra.mxu0 %v1325
  %v7479 = vpop.f32.mrf.mxu0
  %v7480 = vadd.f32 %v7466, %v7479
  %v7481 = vpop.f32.mrf.mxu0
  %v7482 = vadd.f32 %v7468, %v7481
  %7483 = vdwg.mxu0
  %7484 = vmatpush.bf16.msra.mxu0 %v4678
  %7485 = vmatpush.bf16.msra.mxu0 %v4674
  %7486 = vmatpush.bf16.msra.mxu0 %v4670
  %7487 = vmatpush.bf16.msra.mxu0 %v4666
  %7488 = vmatpush.bf16.msra.mxu0 %v4662
  %7489 = vmatpush.bf16.msra.mxu0 %v4658
  %7490 = vmatpush.bf16.msra.mxu0 %v4654
  %7491 = vmatpush.bf16.msra.mxu0 %v4650
  %7492 = vmatmul.bf16.gmra.mxu0 %v1326
  %v7493 = vpop.f32.mrf.mxu0
  %v7494 = vadd.f32 %v7480, %v7493
  %v7495 = vpop.f32.mrf.mxu0
  %v7496 = vadd.f32 %v7482, %v7495
  %7497 = vdwg.mxu0
  %7498 = vmatpush.bf16.msra.mxu0 %v4710
  %7499 = vmatpush.bf16.msra.mxu0 %v4706
  %7500 = vmatpush.bf16.msra.mxu0 %v4702
  %7501 = vmatpush.bf16.msra.mxu0 %v4698
  %7502 = vmatpush.bf16.msra.mxu0 %v4694
  %7503 = vmatpush.bf16.msra.mxu0 %v4690
  %7504 = vmatpush.bf16.msra.mxu0 %v4686
  %7505 = vmatpush.bf16.msra.mxu0 %v4682
  %7506 = vmatmul.bf16.gmra.mxu0 %v1327
  %v7507 = vpop.f32.mrf.mxu0
  %v7508 = vadd.f32 %v7494, %v7507
  %v7509 = vpop.f32.mrf.mxu0
  %v7510 = vadd.f32 %v7496, %v7509
  %7511 = vdwg.mxu0
  %7512 = vmatpush.bf16.msra.mxu0 %v4742
  %7513 = vmatpush.bf16.msra.mxu0 %v4738
  %7514 = vmatpush.bf16.msra.mxu0 %v4734
  %7515 = vmatpush.bf16.msra.mxu0 %v4730
  %7516 = vmatpush.bf16.msra.mxu0 %v4726
  %7517 = vmatpush.bf16.msra.mxu0 %v4722
  %7518 = vmatpush.bf16.msra.mxu0 %v4718
  %7519 = vmatpush.bf16.msra.mxu0 %v4714
  %7520 = vmatmul.bf16.gmra.mxu0 %v1328
  %v7521 = vpop.f32.mrf.mxu0
  %v7522 = vadd.f32 %v7508, %v7521
  %v7523 = vpop.f32.mrf.mxu0
  %v7524 = vadd.f32 %v7510, %v7523
  %7525 = vdwg.mxu0
  %7526 = vmatpush.bf16.msra.mxu0 %v4774
  %7527 = vmatpush.bf16.msra.mxu0 %v4770
  %7528 = vmatpush.bf16.msra.mxu0 %v4766
  %7529 = vmatpush.bf16.msra.mxu0 %v4762
  %7530 = vmatpush.bf16.msra.mxu0 %v4758
  %7531 = vmatpush.bf16.msra.mxu0 %v4754
  %7532 = vmatpush.bf16.msra.mxu0 %v4750
  %7533 = vmatpush.bf16.msra.mxu0 %v4746
  %7534 = vmatmul.bf16.gmra.mxu0 %v1329
  %v7535 = vpop.f32.mrf.mxu0
  %v7536 = vadd.f32 %v7522, %v7535
  %v7537 = vpop.f32.mrf.mxu0
  %v7538 = vadd.f32 %v7524, %v7537
  %7539 = vdwg.mxu0
  %7540 = vmatpush.bf16.msra.mxu0 %v4806
  %7541 = vmatpush.bf16.msra.mxu0 %v4802
  %7542 = vmatpush.bf16.msra.mxu0 %v4798
  %7543 = vmatpush.bf16.msra.mxu0 %v4794
  %7544 = vmatpush.bf16.msra.mxu0 %v4790
  %7545 = vmatpush.bf16.msra.mxu0 %v4786
  %7546 = vmatpush.bf16.msra.mxu0 %v4782
  %7547 = vmatpush.bf16.msra.mxu0 %v4778
  %7548 = vmatmul.bf16.gmra.mxu0 %v1330
  %v7549 = vpop.f32.mrf.mxu0
  %v7550 = vadd.f32 %v7536, %v7549
  %v7551 = vpop.f32.mrf.mxu0
  %v7552 = vadd.f32 %v7538, %v7551
  %7553 = vdwg.mxu0
  %7554 = vmatpush.bf16.msra.mxu0 %v4838
  %7555 = vmatpush.bf16.msra.mxu0 %v4834
  %7556 = vmatpush.bf16.msra.mxu0 %v4830
  %7557 = vmatpush.bf16.msra.mxu0 %v4826
  %7558 = vmatpush.bf16.msra.mxu0 %v4822
  %7559 = vmatpush.bf16.msra.mxu0 %v4818
  %7560 = vmatpush.bf16.msra.mxu0 %v4814
  %7561 = vmatpush.bf16.msra.mxu0 %v4810
  %7562 = vmatmul.bf16.gmra.mxu0 %v1331
  %v7563 = vpop.f32.mrf.mxu0
  %v7564 = vadd.f32 %v7550, %v7563
  %v7565 = vpop.f32.mrf.mxu0
  %v7566 = vadd.f32 %v7552, %v7565
  %7567 = vdwg.mxu0
  %7568 = vmatpush.bf16.msra.mxu0 %v4870
  %7569 = vmatpush.bf16.msra.mxu0 %v4866
  %7570 = vmatpush.bf16.msra.mxu0 %v4862
  %7571 = vmatpush.bf16.msra.mxu0 %v4858
  %7572 = vmatpush.bf16.msra.mxu0 %v4854
  %7573 = vmatpush.bf16.msra.mxu0 %v4850
  %7574 = vmatpush.bf16.msra.mxu0 %v4846
  %7575 = vmatpush.bf16.msra.mxu0 %v4842
  %7576 = vmatmul.bf16.gmra.mxu0 %v1332
  %v7577 = vpop.f32.mrf.mxu0
  %v7578 = vadd.f32 %v7564, %v7577
  %v7579 = vpop.f32.mrf.mxu0
  %v7580 = vadd.f32 %v7566, %v7579
  %7581 = vdwg.mxu0
  %7582 = vmatpush.bf16.msra.mxu0 %v4902
  %7583 = vmatpush.bf16.msra.mxu0 %v4898
  %7584 = vmatpush.bf16.msra.mxu0 %v4894
  %7585 = vmatpush.bf16.msra.mxu0 %v4890
  %7586 = vmatpush.bf16.msra.mxu0 %v4886
  %7587 = vmatpush.bf16.msra.mxu0 %v4882
  %7588 = vmatpush.bf16.msra.mxu0 %v4878
  %7589 = vmatpush.bf16.msra.mxu0 %v4874
  %7590 = vmatmul.bf16.gmra.mxu0 %v1333
  %v7591 = vpop.f32.mrf.mxu0
  %v7592 = vadd.f32 %v7578, %v7591
  %v7593 = vpop.f32.mrf.mxu0
  %v7594 = vadd.f32 %v7580, %v7593
  %7595 = vdwg.mxu0
  %7596 = vmatpush.bf16.msra.mxu0 %v4934
  %7597 = vmatpush.bf16.msra.mxu0 %v4930
  %7598 = vmatpush.bf16.msra.mxu0 %v4926
  %7599 = vmatpush.bf16.msra.mxu0 %v4922
  %7600 = vmatpush.bf16.msra.mxu0 %v4918
  %7601 = vmatpush.bf16.msra.mxu0 %v4914
  %7602 = vmatpush.bf16.msra.mxu0 %v4910
  %7603 = vmatpush.bf16.msra.mxu0 %v4906
  %7604 = vmatmul.bf16.gmra.mxu0 %v1334
  %v7605 = vpop.f32.mrf.mxu0
  %v7606 = vadd.f32 %v7592, %v7605
  %v7607 = vpop.f32.mrf.mxu0
  %v7608 = vadd.f32 %v7594, %v7607
  %7609 = vdwg.mxu0
  %7610 = vmatpush.bf16.msra.mxu0 %v4966
  %7611 = vmatpush.bf16.msra.mxu0 %v4962
  %7612 = vmatpush.bf16.msra.mxu0 %v4958
  %7613 = vmatpush.bf16.msra.mxu0 %v4954
  %7614 = vmatpush.bf16.msra.mxu0 %v4950
  %7615 = vmatpush.bf16.msra.mxu0 %v4946
  %7616 = vmatpush.bf16.msra.mxu0 %v4942
  %7617 = vmatpush.bf16.msra.mxu0 %v4938
  %7618 = vmatmul.bf16.gmra.mxu0 %v1335
  %v7619 = vpop.f32.mrf.mxu0
  %v7620 = vadd.f32 %v7606, %v7619
  %v7621 = vpop.f32.mrf.mxu0
  %v7622 = vadd.f32 %v7608, %v7621
  %7623 = vdwg.mxu0
  %7624 = vmatpush.bf16.msra.mxu0 %v4998
  %7625 = vmatpush.bf16.msra.mxu0 %v4994
  %7626 = vmatpush.bf16.msra.mxu0 %v4990
  %7627 = vmatpush.bf16.msra.mxu0 %v4986
  %7628 = vmatpush.bf16.msra.mxu0 %v4982
  %7629 = vmatpush.bf16.msra.mxu0 %v4978
  %7630 = vmatpush.bf16.msra.mxu0 %v4974
  %7631 = vmatpush.bf16.msra.mxu0 %v4970
  %7632 = vmatmul.bf16.gmra.mxu0 %v1336
  %v7633 = vpop.f32.mrf.mxu0
  %v7634 = vadd.f32 %v7620, %v7633
  %v7635 = vpop.f32.mrf.mxu0
  %v7636 = vadd.f32 %v7622, %v7635
  %7637 = vdwg.mxu0
  %7638 = vmatpush.bf16.msra.mxu0 %v5030
  %7639 = vmatpush.bf16.msra.mxu0 %v5026
  %7640 = vmatpush.bf16.msra.mxu0 %v5022
  %7641 = vmatpush.bf16.msra.mxu0 %v5018
  %7642 = vmatpush.bf16.msra.mxu0 %v5014
  %7643 = vmatpush.bf16.msra.mxu0 %v5010
  %7644 = vmatpush.bf16.msra.mxu0 %v5006
  %7645 = vmatpush.bf16.msra.mxu0 %v5002
  %7646 = vmatmul.bf16.gmra.mxu0 %v1337
  %v7647 = vpop.f32.mrf.mxu0
  %v7648 = vadd.f32 %v7634, %v7647
  %v7649 = vpop.f32.mrf.mxu0
  %v7650 = vadd.f32 %v7636, %v7649
  %7651 = vdwg.mxu0
  %7652 = vmatpush.bf16.msra.mxu0 %v5062
  %7653 = vmatpush.bf16.msra.mxu0 %v5058
  %7654 = vmatpush.bf16.msra.mxu0 %v5054
  %7655 = vmatpush.bf16.msra.mxu0 %v5050
  %7656 = vmatpush.bf16.msra.mxu0 %v5046
  %7657 = vmatpush.bf16.msra.mxu0 %v5042
  %7658 = vmatpush.bf16.msra.mxu0 %v5038
  %7659 = vmatpush.bf16.msra.mxu0 %v5034
  %7660 = vmatmul.bf16.gmra.mxu0 %v1338
  %v7661 = vpop.f32.mrf.mxu0
  %v7662 = vadd.f32 %v7648, %v7661
  %v7663 = vpop.f32.mrf.mxu0
  %v7664 = vadd.f32 %v7650, %v7663
  %7665 = vdwg.mxu0
  %7666 = vmatpush.bf16.msra.mxu0 %v5094
  %7667 = vmatpush.bf16.msra.mxu0 %v5090
  %7668 = vmatpush.bf16.msra.mxu0 %v5086
  %7669 = vmatpush.bf16.msra.mxu0 %v5082
  %7670 = vmatpush.bf16.msra.mxu0 %v5078
  %7671 = vmatpush.bf16.msra.mxu0 %v5074
  %7672 = vmatpush.bf16.msra.mxu0 %v5070
  %7673 = vmatpush.bf16.msra.mxu0 %v5066
  %7674 = vmatmul.bf16.gmra.mxu0 %v1339
  %v7675 = vpop.f32.mrf.mxu0
  %v7676 = vadd.f32 %v7662, %v7675
  %v7677 = vpop.f32.mrf.mxu0
  %v7678 = vadd.f32 %v7664, %v7677
  %7679 = vdwg.mxu0
  %7680 = vmatpush.bf16.msra.mxu0 %v5126
  %7681 = vmatpush.bf16.msra.mxu0 %v5122
  %7682 = vmatpush.bf16.msra.mxu0 %v5118
  %7683 = vmatpush.bf16.msra.mxu0 %v5114
  %7684 = vmatpush.bf16.msra.mxu0 %v5110
  %7685 = vmatpush.bf16.msra.mxu0 %v5106
  %7686 = vmatpush.bf16.msra.mxu0 %v5102
  %7687 = vmatpush.bf16.msra.mxu0 %v5098
  %7688 = vmatmul.bf16.gmra.mxu0 %v1340
  %v7689 = vpop.f32.mrf.mxu0
  %v7690 = vadd.f32 %v7676, %v7689
  %v7691 = vpop.f32.mrf.mxu0
  %v7692 = vadd.f32 %v7678, %v7691
  %7693 = vdwg.mxu0
  %7694 = vmatpush.bf16.msra.mxu0 %v5158
  %7695 = vmatpush.bf16.msra.mxu0 %v5154
  %7696 = vmatpush.bf16.msra.mxu0 %v5150
  %7697 = vmatpush.bf16.msra.mxu0 %v5146
  %7698 = vmatpush.bf16.msra.mxu0 %v5142
  %7699 = vmatpush.bf16.msra.mxu0 %v5138
  %7700 = vmatpush.bf16.msra.mxu0 %v5134
  %7701 = vmatpush.bf16.msra.mxu0 %v5130
  %7702 = vmatmul.bf16.gmra.mxu0 %v1341
  %v7703 = vpop.f32.mrf.mxu0
  %v7704 = vadd.f32 %v7690, %v7703
  %v7705 = vpop.f32.mrf.mxu0
  %v7706 = vadd.f32 %v7692, %v7705
  %7707 = vdwg.mxu0
  %7708 = vmatpush.bf16.msra.mxu0 %v5190
  %7709 = vmatpush.bf16.msra.mxu0 %v5186
  %7710 = vmatpush.bf16.msra.mxu0 %v5182
  %7711 = vmatpush.bf16.msra.mxu0 %v5178
  %7712 = vmatpush.bf16.msra.mxu0 %v5174
  %7713 = vmatpush.bf16.msra.mxu0 %v5170
  %7714 = vmatpush.bf16.msra.mxu0 %v5166
  %7715 = vmatpush.bf16.msra.mxu0 %v5162
  %7716 = vmatmul.bf16.gmra.mxu0 %v1342
  %v7717 = vpop.f32.mrf.mxu0
  %v7718 = vadd.f32 %v7704, %v7717
  %v7719 = vpop.f32.mrf.mxu0
  %v7720 = vadd.f32 %v7706, %v7719
  %7721 = vdwg.mxu0
  %7722 = vmatpush.bf16.msra.mxu0 %v5222
  %7723 = vmatpush.bf16.msra.mxu0 %v5218
  %7724 = vmatpush.bf16.msra.mxu0 %v5214
  %7725 = vmatpush.bf16.msra.mxu0 %v5210
  %7726 = vmatpush.bf16.msra.mxu0 %v5206
  %7727 = vmatpush.bf16.msra.mxu0 %v5202
  %7728 = vmatpush.bf16.msra.mxu0 %v5198
  %7729 = vmatpush.bf16.msra.mxu0 %v5194
  %7730 = vmatmul.bf16.gmra.mxu0 %v1343
  %v7731 = vpop.f32.mrf.mxu0
  %v7732 = vadd.f32 %v7718, %v7731
  %v7733 = vpop.f32.mrf.mxu0
  %v7734 = vadd.f32 %v7720, %v7733
  %7735 = vdwg.mxu0
  %7736 = vmatpush.bf16.msra.mxu0 %v5254
  %7737 = vmatpush.bf16.msra.mxu0 %v5250
  %7738 = vmatpush.bf16.msra.mxu0 %v5246
  %7739 = vmatpush.bf16.msra.mxu0 %v5242
  %7740 = vmatpush.bf16.msra.mxu0 %v5238
  %7741 = vmatpush.bf16.msra.mxu0 %v5234
  %7742 = vmatpush.bf16.msra.mxu0 %v5230
  %7743 = vmatpush.bf16.msra.mxu0 %v5226
  %7744 = vmatmul.bf16.gmra.mxu0 %v1344
  %v7745 = vpop.f32.mrf.mxu0
  %v7746 = vadd.f32 %v7732, %v7745
  %v7747 = vpop.f32.mrf.mxu0
  %v7748 = vadd.f32 %v7734, %v7747
  %7749 = vdwg.mxu0
  %7750 = vmatpush.bf16.msra.mxu0 %v5286
  %7751 = vmatpush.bf16.msra.mxu0 %v5282
  %7752 = vmatpush.bf16.msra.mxu0 %v5278
  %7753 = vmatpush.bf16.msra.mxu0 %v5274
  %7754 = vmatpush.bf16.msra.mxu0 %v5270
  %7755 = vmatpush.bf16.msra.mxu0 %v5266
  %7756 = vmatpush.bf16.msra.mxu0 %v5262
  %7757 = vmatpush.bf16.msra.mxu0 %v5258
  %7758 = vmatmul.bf16.gmra.mxu0 %v1345
  %v7759 = vpop.f32.mrf.mxu0
  %v7760 = vadd.f32 %v7746, %v7759
  %v7761 = vpop.f32.mrf.mxu0
  %v7762 = vadd.f32 %v7748, %v7761
  %7763 = vdwg.mxu0
  %7764 = vmatpush.bf16.msra.mxu0 %v5318
  %7765 = vmatpush.bf16.msra.mxu0 %v5314
  %7766 = vmatpush.bf16.msra.mxu0 %v5310
  %7767 = vmatpush.bf16.msra.mxu0 %v5306
  %7768 = vmatpush.bf16.msra.mxu0 %v5302
  %7769 = vmatpush.bf16.msra.mxu0 %v5298
  %7770 = vmatpush.bf16.msra.mxu0 %v5294
  %7771 = vmatpush.bf16.msra.mxu0 %v5290
  %7772 = vmatmul.bf16.gmra.mxu0 %v1346
  %v7773 = vpop.f32.mrf.mxu0
  %v7774 = vadd.f32 %v7760, %v7773
  %v7775 = vpop.f32.mrf.mxu0
  %v7776 = vadd.f32 %v7762, %v7775
  %7777 = vdwg.mxu0
  %7778 = vmatpush.bf16.msra.mxu0 %v5350
  %7779 = vmatpush.bf16.msra.mxu0 %v5346
  %7780 = vmatpush.bf16.msra.mxu0 %v5342
  %7781 = vmatpush.bf16.msra.mxu0 %v5338
  %7782 = vmatpush.bf16.msra.mxu0 %v5334
  %7783 = vmatpush.bf16.msra.mxu0 %v5330
  %7784 = vmatpush.bf16.msra.mxu0 %v5326
  %7785 = vmatpush.bf16.msra.mxu0 %v5322
  %7786 = vmatmul.bf16.gmra.mxu0 %v1347
  %v7787 = vpop.f32.mrf.mxu0
  %v7788 = vadd.f32 %v7774, %v7787
  %v7789 = vpop.f32.mrf.mxu0
  %v7790 = vadd.f32 %v7776, %v7789
  %7791 = vdwg.mxu0
  %7792 = vmatpush.bf16.msra.mxu0 %v5382
  %7793 = vmatpush.bf16.msra.mxu0 %v5378
  %7794 = vmatpush.bf16.msra.mxu0 %v5374
  %7795 = vmatpush.bf16.msra.mxu0 %v5370
  %7796 = vmatpush.bf16.msra.mxu0 %v5366
  %7797 = vmatpush.bf16.msra.mxu0 %v5362
  %7798 = vmatpush.bf16.msra.mxu0 %v5358
  %7799 = vmatpush.bf16.msra.mxu0 %v5354
  %7800 = vmatmul.bf16.gmra.mxu0 %v1348
  %v7801 = vpop.f32.mrf.mxu0
  %v7802 = vadd.f32 %v7788, %v7801
  %v7803 = vpop.f32.mrf.mxu0
  %v7804 = vadd.f32 %v7790, %v7803
  %7805 = vdwg.mxu0
  %7806 = vmatpush.bf16.msra.mxu0 %v5414
  %7807 = vmatpush.bf16.msra.mxu0 %v5410
  %7808 = vmatpush.bf16.msra.mxu0 %v5406
  %7809 = vmatpush.bf16.msra.mxu0 %v5402
  %7810 = vmatpush.bf16.msra.mxu0 %v5398
  %7811 = vmatpush.bf16.msra.mxu0 %v5394
  %7812 = vmatpush.bf16.msra.mxu0 %v5390
  %7813 = vmatpush.bf16.msra.mxu0 %v5386
  %7814 = vmatmul.bf16.gmra.mxu0 %v1349
  %v7815 = vpop.f32.mrf.mxu0
  %v7816 = vadd.f32 %v7802, %v7815
  %v7817 = vpop.f32.mrf.mxu0
  %v7818 = vadd.f32 %v7804, %v7817
  %7819 = vdwg.mxu0
  %7820 = vmatpush.bf16.msra.mxu0 %v5446
  %7821 = vmatpush.bf16.msra.mxu0 %v5442
  %7822 = vmatpush.bf16.msra.mxu0 %v5438
  %7823 = vmatpush.bf16.msra.mxu0 %v5434
  %7824 = vmatpush.bf16.msra.mxu0 %v5430
  %7825 = vmatpush.bf16.msra.mxu0 %v5426
  %7826 = vmatpush.bf16.msra.mxu0 %v5422
  %7827 = vmatpush.bf16.msra.mxu0 %v5418
  %7828 = vmatmul.bf16.gmra.mxu0 %v1350
  %v7829 = vpop.f32.mrf.mxu0
  %v7830 = vadd.f32 %v7816, %v7829
  %v7831 = vpop.f32.mrf.mxu0
  %v7832 = vadd.f32 %v7818, %v7831
  %7833 = vdwg.mxu0
  %7834 = vmatpush.bf16.msra.mxu0 %v5478
  %7835 = vmatpush.bf16.msra.mxu0 %v5474
  %7836 = vmatpush.bf16.msra.mxu0 %v5470
  %7837 = vmatpush.bf16.msra.mxu0 %v5466
  %7838 = vmatpush.bf16.msra.mxu0 %v5462
  %7839 = vmatpush.bf16.msra.mxu0 %v5458
  %7840 = vmatpush.bf16.msra.mxu0 %v5454
  %7841 = vmatpush.bf16.msra.mxu0 %v5450
  %7842 = vmatmul.bf16.gmra.mxu0 %v1351
  %v7843 = vpop.f32.mrf.mxu0
  %v7844 = vadd.f32 %v7830, %v7843
  %v7845 = vpop.f32.mrf.mxu0
  %v7846 = vadd.f32 %v7832, %v7845
  %7847 = vdwg.mxu0
  %7848 = vmatpush.bf16.msra.mxu0 %v4487
  %7849 = vmatpush.bf16.msra.mxu0 %v4483
  %7850 = vmatpush.bf16.msra.mxu0 %v4479
  %7851 = vmatpush.bf16.msra.mxu0 %v4475
  %7852 = vmatpush.bf16.msra.mxu0 %v4471
  %7853 = vmatpush.bf16.msra.mxu0 %v4467
  %7854 = vmatpush.bf16.msra.mxu0 %v4463
  %7855 = vmatpush.bf16.msra.mxu0 %v4459
  %7856 = vmatmul.bf16.gmra.mxu0 %v1320
  %v7857 = vpop.f32.mrf.mxu0
  %v7858 = vadd.f32 %v1220, %v7857
  %v7859 = vpop.f32.mrf.mxu0
  %v7860 = vadd.f32 %v1222, %v7859
  %7861 = vdwg.mxu0
  %7862 = vmatpush.bf16.msra.mxu0 %v4519
  %7863 = vmatpush.bf16.msra.mxu0 %v4515
  %7864 = vmatpush.bf16.msra.mxu0 %v4511
  %7865 = vmatpush.bf16.msra.mxu0 %v4507
  %7866 = vmatpush.bf16.msra.mxu0 %v4503
  %7867 = vmatpush.bf16.msra.mxu0 %v4499
  %7868 = vmatpush.bf16.msra.mxu0 %v4495
  %7869 = vmatpush.bf16.msra.mxu0 %v4491
  %7870 = vmatmul.bf16.gmra.mxu0 %v1321
  %v7871 = vpop.f32.mrf.mxu0
  %v7872 = vadd.f32 %v7858, %v7871
  %v7873 = vpop.f32.mrf.mxu0
  %v7874 = vadd.f32 %v7860, %v7873
  %7875 = vdwg.mxu0
  %7876 = vmatpush.bf16.msra.mxu0 %v4551
  %7877 = vmatpush.bf16.msra.mxu0 %v4547
  %7878 = vmatpush.bf16.msra.mxu0 %v4543
  %7879 = vmatpush.bf16.msra.mxu0 %v4539
  %7880 = vmatpush.bf16.msra.mxu0 %v4535
  %7881 = vmatpush.bf16.msra.mxu0 %v4531
  %7882 = vmatpush.bf16.msra.mxu0 %v4527
  %7883 = vmatpush.bf16.msra.mxu0 %v4523
  %7884 = vmatmul.bf16.gmra.mxu0 %v1322
  %v7885 = vpop.f32.mrf.mxu0
  %v7886 = vadd.f32 %v7872, %v7885
  %v7887 = vpop.f32.mrf.mxu0
  %v7888 = vadd.f32 %v7874, %v7887
  %7889 = vdwg.mxu0
  %7890 = vmatpush.bf16.msra.mxu0 %v4583
  %7891 = vmatpush.bf16.msra.mxu0 %v4579
  %7892 = vmatpush.bf16.msra.mxu0 %v4575
  %7893 = vmatpush.bf16.msra.mxu0 %v4571
  %7894 = vmatpush.bf16.msra.mxu0 %v4567
  %7895 = vmatpush.bf16.msra.mxu0 %v4563
  %7896 = vmatpush.bf16.msra.mxu0 %v4559
  %7897 = vmatpush.bf16.msra.mxu0 %v4555
  %7898 = vmatmul.bf16.gmra.mxu0 %v1323
  %v7899 = vpop.f32.mrf.mxu0
  %v7900 = vadd.f32 %v7886, %v7899
  %v7901 = vpop.f32.mrf.mxu0
  %v7902 = vadd.f32 %v7888, %v7901
  %7903 = vdwg.mxu0
  %7904 = vmatpush.bf16.msra.mxu0 %v4615
  %7905 = vmatpush.bf16.msra.mxu0 %v4611
  %7906 = vmatpush.bf16.msra.mxu0 %v4607
  %7907 = vmatpush.bf16.msra.mxu0 %v4603
  %7908 = vmatpush.bf16.msra.mxu0 %v4599
  %7909 = vmatpush.bf16.msra.mxu0 %v4595
  %7910 = vmatpush.bf16.msra.mxu0 %v4591
  %7911 = vmatpush.bf16.msra.mxu0 %v4587
  %7912 = vmatmul.bf16.gmra.mxu0 %v1324
  %v7913 = vpop.f32.mrf.mxu0
  %v7914 = vadd.f32 %v7900, %v7913
  %v7915 = vpop.f32.mrf.mxu0
  %v7916 = vadd.f32 %v7902, %v7915
  %7917 = vdwg.mxu0
  %7918 = vmatpush.bf16.msra.mxu0 %v4647
  %7919 = vmatpush.bf16.msra.mxu0 %v4643
  %7920 = vmatpush.bf16.msra.mxu0 %v4639
  %7921 = vmatpush.bf16.msra.mxu0 %v4635
  %7922 = vmatpush.bf16.msra.mxu0 %v4631
  %7923 = vmatpush.bf16.msra.mxu0 %v4627
  %7924 = vmatpush.bf16.msra.mxu0 %v4623
  %7925 = vmatpush.bf16.msra.mxu0 %v4619
  %7926 = vmatmul.bf16.gmra.mxu0 %v1325
  %v7927 = vpop.f32.mrf.mxu0
  %v7928 = vadd.f32 %v7914, %v7927
  %v7929 = vpop.f32.mrf.mxu0
  %v7930 = vadd.f32 %v7916, %v7929
  %7931 = vdwg.mxu0
  %7932 = vmatpush.bf16.msra.mxu0 %v4679
  %7933 = vmatpush.bf16.msra.mxu0 %v4675
  %7934 = vmatpush.bf16.msra.mxu0 %v4671
  %7935 = vmatpush.bf16.msra.mxu0 %v4667
  %7936 = vmatpush.bf16.msra.mxu0 %v4663
  %7937 = vmatpush.bf16.msra.mxu0 %v4659
  %7938 = vmatpush.bf16.msra.mxu0 %v4655
  %7939 = vmatpush.bf16.msra.mxu0 %v4651
  %7940 = vmatmul.bf16.gmra.mxu0 %v1326
  %v7941 = vpop.f32.mrf.mxu0
  %v7942 = vadd.f32 %v7928, %v7941
  %v7943 = vpop.f32.mrf.mxu0
  %v7944 = vadd.f32 %v7930, %v7943
  %7945 = vdwg.mxu0
  %7946 = vmatpush.bf16.msra.mxu0 %v4711
  %7947 = vmatpush.bf16.msra.mxu0 %v4707
  %7948 = vmatpush.bf16.msra.mxu0 %v4703
  %7949 = vmatpush.bf16.msra.mxu0 %v4699
  %7950 = vmatpush.bf16.msra.mxu0 %v4695
  %7951 = vmatpush.bf16.msra.mxu0 %v4691
  %7952 = vmatpush.bf16.msra.mxu0 %v4687
  %7953 = vmatpush.bf16.msra.mxu0 %v4683
  %7954 = vmatmul.bf16.gmra.mxu0 %v1327
  %v7955 = vpop.f32.mrf.mxu0
  %v7956 = vadd.f32 %v7942, %v7955
  %v7957 = vpop.f32.mrf.mxu0
  %v7958 = vadd.f32 %v7944, %v7957
  %7959 = vdwg.mxu0
  %7960 = vmatpush.bf16.msra.mxu0 %v4743
  %7961 = vmatpush.bf16.msra.mxu0 %v4739
  %7962 = vmatpush.bf16.msra.mxu0 %v4735
  %7963 = vmatpush.bf16.msra.mxu0 %v4731
  %7964 = vmatpush.bf16.msra.mxu0 %v4727
  %7965 = vmatpush.bf16.msra.mxu0 %v4723
  %7966 = vmatpush.bf16.msra.mxu0 %v4719
  %7967 = vmatpush.bf16.msra.mxu0 %v4715
  %7968 = vmatmul.bf16.gmra.mxu0 %v1328
  %v7969 = vpop.f32.mrf.mxu0
  %v7970 = vadd.f32 %v7956, %v7969
  %v7971 = vpop.f32.mrf.mxu0
  %v7972 = vadd.f32 %v7958, %v7971
  %7973 = vdwg.mxu0
  %7974 = vmatpush.bf16.msra.mxu0 %v4775
  %7975 = vmatpush.bf16.msra.mxu0 %v4771
  %7976 = vmatpush.bf16.msra.mxu0 %v4767
  %7977 = vmatpush.bf16.msra.mxu0 %v4763
  %7978 = vmatpush.bf16.msra.mxu0 %v4759
  %7979 = vmatpush.bf16.msra.mxu0 %v4755
  %7980 = vmatpush.bf16.msra.mxu0 %v4751
  %7981 = vmatpush.bf16.msra.mxu0 %v4747
  %7982 = vmatmul.bf16.gmra.mxu0 %v1329
  %v7983 = vpop.f32.mrf.mxu0
  %v7984 = vadd.f32 %v7970, %v7983
  %v7985 = vpop.f32.mrf.mxu0
  %v7986 = vadd.f32 %v7972, %v7985
  %7987 = vdwg.mxu0
  %7988 = vmatpush.bf16.msra.mxu0 %v4807
  %7989 = vmatpush.bf16.msra.mxu0 %v4803
  %7990 = vmatpush.bf16.msra.mxu0 %v4799
  %7991 = vmatpush.bf16.msra.mxu0 %v4795
  %7992 = vmatpush.bf16.msra.mxu0 %v4791
  %7993 = vmatpush.bf16.msra.mxu0 %v4787
  %7994 = vmatpush.bf16.msra.mxu0 %v4783
  %7995 = vmatpush.bf16.msra.mxu0 %v4779
  %7996 = vmatmul.bf16.gmra.mxu0 %v1330
  %v7997 = vpop.f32.mrf.mxu0
  %v7998 = vadd.f32 %v7984, %v7997
  %v7999 = vpop.f32.mrf.mxu0
  %v8000 = vadd.f32 %v7986, %v7999
  %8001 = vdwg.mxu0
  %8002 = vmatpush.bf16.msra.mxu0 %v4839
  %8003 = vmatpush.bf16.msra.mxu0 %v4835
  %8004 = vmatpush.bf16.msra.mxu0 %v4831
  %8005 = vmatpush.bf16.msra.mxu0 %v4827
  %8006 = vmatpush.bf16.msra.mxu0 %v4823
  %8007 = vmatpush.bf16.msra.mxu0 %v4819
  %8008 = vmatpush.bf16.msra.mxu0 %v4815
  %8009 = vmatpush.bf16.msra.mxu0 %v4811
  %8010 = vmatmul.bf16.gmra.mxu0 %v1331
  %v8011 = vpop.f32.mrf.mxu0
  %v8012 = vadd.f32 %v7998, %v8011
  %v8013 = vpop.f32.mrf.mxu0
  %v8014 = vadd.f32 %v8000, %v8013
  %8015 = vdwg.mxu0
  %8016 = vmatpush.bf16.msra.mxu0 %v4871
  %8017 = vmatpush.bf16.msra.mxu0 %v4867
  %8018 = vmatpush.bf16.msra.mxu0 %v4863
  %8019 = vmatpush.bf16.msra.mxu0 %v4859
  %8020 = vmatpush.bf16.msra.mxu0 %v4855
  %8021 = vmatpush.bf16.msra.mxu0 %v4851
  %8022 = vmatpush.bf16.msra.mxu0 %v4847
  %8023 = vmatpush.bf16.msra.mxu0 %v4843
  %8024 = vmatmul.bf16.gmra.mxu0 %v1332
  %v8025 = vpop.f32.mrf.mxu0
  %v8026 = vadd.f32 %v8012, %v8025
  %v8027 = vpop.f32.mrf.mxu0
  %v8028 = vadd.f32 %v8014, %v8027
  %8029 = vdwg.mxu0
  %8030 = vmatpush.bf16.msra.mxu0 %v4903
  %8031 = vmatpush.bf16.msra.mxu0 %v4899
  %8032 = vmatpush.bf16.msra.mxu0 %v4895
  %8033 = vmatpush.bf16.msra.mxu0 %v4891
  %8034 = vmatpush.bf16.msra.mxu0 %v4887
  %8035 = vmatpush.bf16.msra.mxu0 %v4883
  %8036 = vmatpush.bf16.msra.mxu0 %v4879
  %8037 = vmatpush.bf16.msra.mxu0 %v4875
  %8038 = vmatmul.bf16.gmra.mxu0 %v1333
  %v8039 = vpop.f32.mrf.mxu0
  %v8040 = vadd.f32 %v8026, %v8039
  %v8041 = vpop.f32.mrf.mxu0
  %v8042 = vadd.f32 %v8028, %v8041
  %8043 = vdwg.mxu0
  %8044 = vmatpush.bf16.msra.mxu0 %v4935
  %8045 = vmatpush.bf16.msra.mxu0 %v4931
  %8046 = vmatpush.bf16.msra.mxu0 %v4927
  %8047 = vmatpush.bf16.msra.mxu0 %v4923
  %8048 = vmatpush.bf16.msra.mxu0 %v4919
  %8049 = vmatpush.bf16.msra.mxu0 %v4915
  %8050 = vmatpush.bf16.msra.mxu0 %v4911
  %8051 = vmatpush.bf16.msra.mxu0 %v4907
  %8052 = vmatmul.bf16.gmra.mxu0 %v1334
  %v8053 = vpop.f32.mrf.mxu0
  %v8054 = vadd.f32 %v8040, %v8053
  %v8055 = vpop.f32.mrf.mxu0
  %v8056 = vadd.f32 %v8042, %v8055
  %8057 = vdwg.mxu0
  %8058 = vmatpush.bf16.msra.mxu0 %v4967
  %8059 = vmatpush.bf16.msra.mxu0 %v4963
  %8060 = vmatpush.bf16.msra.mxu0 %v4959
  %8061 = vmatpush.bf16.msra.mxu0 %v4955
  %8062 = vmatpush.bf16.msra.mxu0 %v4951
  %8063 = vmatpush.bf16.msra.mxu0 %v4947
  %8064 = vmatpush.bf16.msra.mxu0 %v4943
  %8065 = vmatpush.bf16.msra.mxu0 %v4939
  %8066 = vmatmul.bf16.gmra.mxu0 %v1335
  %v8067 = vpop.f32.mrf.mxu0
  %v8068 = vadd.f32 %v8054, %v8067
  %v8069 = vpop.f32.mrf.mxu0
  %v8070 = vadd.f32 %v8056, %v8069
  %8071 = vdwg.mxu0
  %8072 = vmatpush.bf16.msra.mxu0 %v4999
  %8073 = vmatpush.bf16.msra.mxu0 %v4995
  %8074 = vmatpush.bf16.msra.mxu0 %v4991
  %8075 = vmatpush.bf16.msra.mxu0 %v4987
  %8076 = vmatpush.bf16.msra.mxu0 %v4983
  %8077 = vmatpush.bf16.msra.mxu0 %v4979
  %8078 = vmatpush.bf16.msra.mxu0 %v4975
  %8079 = vmatpush.bf16.msra.mxu0 %v4971
  %8080 = vmatmul.bf16.gmra.mxu0 %v1336
  %v8081 = vpop.f32.mrf.mxu0
  %v8082 = vadd.f32 %v8068, %v8081
  %v8083 = vpop.f32.mrf.mxu0
  %v8084 = vadd.f32 %v8070, %v8083
  %8085 = vdwg.mxu0
  %8086 = vmatpush.bf16.msra.mxu0 %v5031
  %8087 = vmatpush.bf16.msra.mxu0 %v5027
  %8088 = vmatpush.bf16.msra.mxu0 %v5023
  %8089 = vmatpush.bf16.msra.mxu0 %v5019
  %8090 = vmatpush.bf16.msra.mxu0 %v5015
  %8091 = vmatpush.bf16.msra.mxu0 %v5011
  %8092 = vmatpush.bf16.msra.mxu0 %v5007
  %8093 = vmatpush.bf16.msra.mxu0 %v5003
  %8094 = vmatmul.bf16.gmra.mxu0 %v1337
  %v8095 = vpop.f32.mrf.mxu0
  %v8096 = vadd.f32 %v8082, %v8095
  %v8097 = vpop.f32.mrf.mxu0
  %v8098 = vadd.f32 %v8084, %v8097
  %8099 = vdwg.mxu0
  %8100 = vmatpush.bf16.msra.mxu0 %v5063
  %8101 = vmatpush.bf16.msra.mxu0 %v5059
  %8102 = vmatpush.bf16.msra.mxu0 %v5055
  %8103 = vmatpush.bf16.msra.mxu0 %v5051
  %8104 = vmatpush.bf16.msra.mxu0 %v5047
  %8105 = vmatpush.bf16.msra.mxu0 %v5043
  %8106 = vmatpush.bf16.msra.mxu0 %v5039
  %8107 = vmatpush.bf16.msra.mxu0 %v5035
  %8108 = vmatmul.bf16.gmra.mxu0 %v1338
  %v8109 = vpop.f32.mrf.mxu0
  %v8110 = vadd.f32 %v8096, %v8109
  %v8111 = vpop.f32.mrf.mxu0
  %v8112 = vadd.f32 %v8098, %v8111
  %8113 = vdwg.mxu0
  %8114 = vmatpush.bf16.msra.mxu0 %v5095
  %8115 = vmatpush.bf16.msra.mxu0 %v5091
  %8116 = vmatpush.bf16.msra.mxu0 %v5087
  %8117 = vmatpush.bf16.msra.mxu0 %v5083
  %8118 = vmatpush.bf16.msra.mxu0 %v5079
  %8119 = vmatpush.bf16.msra.mxu0 %v5075
  %8120 = vmatpush.bf16.msra.mxu0 %v5071
  %8121 = vmatpush.bf16.msra.mxu0 %v5067
  %8122 = vmatmul.bf16.gmra.mxu0 %v1339
  %v8123 = vpop.f32.mrf.mxu0
  %v8124 = vadd.f32 %v8110, %v8123
  %v8125 = vpop.f32.mrf.mxu0
  %v8126 = vadd.f32 %v8112, %v8125
  %8127 = vdwg.mxu0
  %8128 = vmatpush.bf16.msra.mxu0 %v5127
  %8129 = vmatpush.bf16.msra.mxu0 %v5123
  %8130 = vmatpush.bf16.msra.mxu0 %v5119
  %8131 = vmatpush.bf16.msra.mxu0 %v5115
  %8132 = vmatpush.bf16.msra.mxu0 %v5111
  %8133 = vmatpush.bf16.msra.mxu0 %v5107
  %8134 = vmatpush.bf16.msra.mxu0 %v5103
  %8135 = vmatpush.bf16.msra.mxu0 %v5099
  %8136 = vmatmul.bf16.gmra.mxu0 %v1340
  %v8137 = vpop.f32.mrf.mxu0
  %v8138 = vadd.f32 %v8124, %v8137
  %v8139 = vpop.f32.mrf.mxu0
  %v8140 = vadd.f32 %v8126, %v8139
  %8141 = vdwg.mxu0
  %8142 = vmatpush.bf16.msra.mxu0 %v5159
  %8143 = vmatpush.bf16.msra.mxu0 %v5155
  %8144 = vmatpush.bf16.msra.mxu0 %v5151
  %8145 = vmatpush.bf16.msra.mxu0 %v5147
  %8146 = vmatpush.bf16.msra.mxu0 %v5143
  %8147 = vmatpush.bf16.msra.mxu0 %v5139
  %8148 = vmatpush.bf16.msra.mxu0 %v5135
  %8149 = vmatpush.bf16.msra.mxu0 %v5131
  %8150 = vmatmul.bf16.gmra.mxu0 %v1341
  %v8151 = vpop.f32.mrf.mxu0
  %v8152 = vadd.f32 %v8138, %v8151
  %v8153 = vpop.f32.mrf.mxu0
  %v8154 = vadd.f32 %v8140, %v8153
  %8155 = vdwg.mxu0
  %8156 = vmatpush.bf16.msra.mxu0 %v5191
  %8157 = vmatpush.bf16.msra.mxu0 %v5187
  %8158 = vmatpush.bf16.msra.mxu0 %v5183
  %8159 = vmatpush.bf16.msra.mxu0 %v5179
  %8160 = vmatpush.bf16.msra.mxu0 %v5175
  %8161 = vmatpush.bf16.msra.mxu0 %v5171
  %8162 = vmatpush.bf16.msra.mxu0 %v5167
  %8163 = vmatpush.bf16.msra.mxu0 %v5163
  %8164 = vmatmul.bf16.gmra.mxu0 %v1342
  %v8165 = vpop.f32.mrf.mxu0
  %v8166 = vadd.f32 %v8152, %v8165
  %v8167 = vpop.f32.mrf.mxu0
  %v8168 = vadd.f32 %v8154, %v8167
  %8169 = vdwg.mxu0
  %8170 = vmatpush.bf16.msra.mxu0 %v5223
  %8171 = vmatpush.bf16.msra.mxu0 %v5219
  %8172 = vmatpush.bf16.msra.mxu0 %v5215
  %8173 = vmatpush.bf16.msra.mxu0 %v5211
  %8174 = vmatpush.bf16.msra.mxu0 %v5207
  %8175 = vmatpush.bf16.msra.mxu0 %v5203
  %8176 = vmatpush.bf16.msra.mxu0 %v5199
  %8177 = vmatpush.bf16.msra.mxu0 %v5195
  %8178 = vmatmul.bf16.gmra.mxu0 %v1343
  %v8179 = vpop.f32.mrf.mxu0
  %v8180 = vadd.f32 %v8166, %v8179
  %v8181 = vpop.f32.mrf.mxu0
  %v8182 = vadd.f32 %v8168, %v8181
  %8183 = vdwg.mxu0
  %8184 = vmatpush.bf16.msra.mxu0 %v5255
  %8185 = vmatpush.bf16.msra.mxu0 %v5251
  %8186 = vmatpush.bf16.msra.mxu0 %v5247
  %8187 = vmatpush.bf16.msra.mxu0 %v5243
  %8188 = vmatpush.bf16.msra.mxu0 %v5239
  %8189 = vmatpush.bf16.msra.mxu0 %v5235
  %8190 = vmatpush.bf16.msra.mxu0 %v5231
  %8191 = vmatpush.bf16.msra.mxu0 %v5227
  %8192 = vmatmul.bf16.gmra.mxu0 %v1344
  %v8193 = vpop.f32.mrf.mxu0
  %v8194 = vadd.f32 %v8180, %v8193
  %v8195 = vpop.f32.mrf.mxu0
  %v8196 = vadd.f32 %v8182, %v8195
  %8197 = vdwg.mxu0
  %8198 = vmatpush.bf16.msra.mxu0 %v5287
  %8199 = vmatpush.bf16.msra.mxu0 %v5283
  %8200 = vmatpush.bf16.msra.mxu0 %v5279
  %8201 = vmatpush.bf16.msra.mxu0 %v5275
  %8202 = vmatpush.bf16.msra.mxu0 %v5271
  %8203 = vmatpush.bf16.msra.mxu0 %v5267
  %8204 = vmatpush.bf16.msra.mxu0 %v5263
  %8205 = vmatpush.bf16.msra.mxu0 %v5259
  %8206 = vmatmul.bf16.gmra.mxu0 %v1345
  %v8207 = vpop.f32.mrf.mxu0
  %v8208 = vadd.f32 %v8194, %v8207
  %v8209 = vpop.f32.mrf.mxu0
  %v8210 = vadd.f32 %v8196, %v8209
  %8211 = vdwg.mxu0
  %8212 = vmatpush.bf16.msra.mxu0 %v5319
  %8213 = vmatpush.bf16.msra.mxu0 %v5315
  %8214 = vmatpush.bf16.msra.mxu0 %v5311
  %8215 = vmatpush.bf16.msra.mxu0 %v5307
  %8216 = vmatpush.bf16.msra.mxu0 %v5303
  %8217 = vmatpush.bf16.msra.mxu0 %v5299
  %8218 = vmatpush.bf16.msra.mxu0 %v5295
  %8219 = vmatpush.bf16.msra.mxu0 %v5291
  %8220 = vmatmul.bf16.gmra.mxu0 %v1346
  %v8221 = vpop.f32.mrf.mxu0
  %v8222 = vadd.f32 %v8208, %v8221
  %v8223 = vpop.f32.mrf.mxu0
  %v8224 = vadd.f32 %v8210, %v8223
  %8225 = vdwg.mxu0
  %8226 = vmatpush.bf16.msra.mxu0 %v5351
  %8227 = vmatpush.bf16.msra.mxu0 %v5347
  %8228 = vmatpush.bf16.msra.mxu0 %v5343
  %8229 = vmatpush.bf16.msra.mxu0 %v5339
  %8230 = vmatpush.bf16.msra.mxu0 %v5335
  %8231 = vmatpush.bf16.msra.mxu0 %v5331
  %8232 = vmatpush.bf16.msra.mxu0 %v5327
  %8233 = vmatpush.bf16.msra.mxu0 %v5323
  %8234 = vmatmul.bf16.gmra.mxu0 %v1347
  %v8235 = vpop.f32.mrf.mxu0
  %v8236 = vadd.f32 %v8222, %v8235
  %v8237 = vpop.f32.mrf.mxu0
  %v8238 = vadd.f32 %v8224, %v8237
  %8239 = vdwg.mxu0
  %8240 = vmatpush.bf16.msra.mxu0 %v5383
  %8241 = vmatpush.bf16.msra.mxu0 %v5379
  %8242 = vmatpush.bf16.msra.mxu0 %v5375
  %8243 = vmatpush.bf16.msra.mxu0 %v5371
  %8244 = vmatpush.bf16.msra.mxu0 %v5367
  %8245 = vmatpush.bf16.msra.mxu0 %v5363
  %8246 = vmatpush.bf16.msra.mxu0 %v5359
  %8247 = vmatpush.bf16.msra.mxu0 %v5355
  %8248 = vmatmul.bf16.gmra.mxu0 %v1348
  %v8249 = vpop.f32.mrf.mxu0
  %v8250 = vadd.f32 %v8236, %v8249
  %v8251 = vpop.f32.mrf.mxu0
  %v8252 = vadd.f32 %v8238, %v8251
  %8253 = vdwg.mxu0
  %8254 = vmatpush.bf16.msra.mxu0 %v5415
  %8255 = vmatpush.bf16.msra.mxu0 %v5411
  %8256 = vmatpush.bf16.msra.mxu0 %v5407
  %8257 = vmatpush.bf16.msra.mxu0 %v5403
  %8258 = vmatpush.bf16.msra.mxu0 %v5399
  %8259 = vmatpush.bf16.msra.mxu0 %v5395
  %8260 = vmatpush.bf16.msra.mxu0 %v5391
  %8261 = vmatpush.bf16.msra.mxu0 %v5387
  %8262 = vmatmul.bf16.gmra.mxu0 %v1349
  %v8263 = vpop.f32.mrf.mxu0
  %v8264 = vadd.f32 %v8250, %v8263
  %v8265 = vpop.f32.mrf.mxu0
  %v8266 = vadd.f32 %v8252, %v8265
  %8267 = vdwg.mxu0
  %8268 = vmatpush.bf16.msra.mxu0 %v5447
  %8269 = vmatpush.bf16.msra.mxu0 %v5443
  %8270 = vmatpush.bf16.msra.mxu0 %v5439
  %8271 = vmatpush.bf16.msra.mxu0 %v5435
  %8272 = vmatpush.bf16.msra.mxu0 %v5431
  %8273 = vmatpush.bf16.msra.mxu0 %v5427
  %8274 = vmatpush.bf16.msra.mxu0 %v5423
  %8275 = vmatpush.bf16.msra.mxu0 %v5419
  %8276 = vmatmul.bf16.gmra.mxu0 %v1350
  %v8277 = vpop.f32.mrf.mxu0
  %v8278 = vadd.f32 %v8264, %v8277
  %v8279 = vpop.f32.mrf.mxu0
  %v8280 = vadd.f32 %v8266, %v8279
  %8281 = vdwg.mxu0
  %8282 = vmatpush.bf16.msra.mxu0 %v5479
  %8283 = vmatpush.bf16.msra.mxu0 %v5475
  %8284 = vmatpush.bf16.msra.mxu0 %v5471
  %8285 = vmatpush.bf16.msra.mxu0 %v5467
  %8286 = vmatpush.bf16.msra.mxu0 %v5463
  %8287 = vmatpush.bf16.msra.mxu0 %v5459
  %8288 = vmatpush.bf16.msra.mxu0 %v5455
  %8289 = vmatpush.bf16.msra.mxu0 %v5451
  %8290 = vmatmul.bf16.gmra.mxu0 %v1351
  %v8291 = vpop.f32.mrf.mxu0
  %v8292 = vadd.f32 %v8278, %v8291
  %v8293 = vpop.f32.mrf.mxu0
  %v8294 = vadd.f32 %v8280, %v8293
  %8295 = vdwg.mxu0
  %v8296 = vld [vmem:[%s6] sm:$0xf]
  %v8298 = vperm.slane %v8296, 0
  %v8299 = vperm.slane %v8296, 1
  %v8300 = vperm.slane %v8296, 2
  %v8301 = vperm.slane %v8296, 3
  %v8306 = vadd.f32 %v6948, %v8298
  %v8307 = vadd.f32 %v7396, %v8299
  %v8308 = vadd.f32 %v7844, %v8300
  %v8309 = vadd.f32 %v8292, %v8301
  %v8310 = vadd.f32 %v6950, %v8298
  %v8311 = vadd.f32 %v7398, %v8299
  %v8312 = vadd.f32 %v7846, %v8300
  %v8313 = vadd.f32 %v8294, %v8301
  %v8314 = vmax.f32 %v8306, 0.0
  %v8315 = vmax.f32 %v8307, 0.0
  %v8316 = vmax.f32 %v8308, 0.0
  %v8317 = vmax.f32 %v8309, 0.0
  %v8318 = vmax.f32 %v8310, 0.0
  %v8319 = vmax.f32 %v8311, 0.0
  %v8320 = vmax.f32 %v8312, 0.0
  %v8321 = vmax.f32 %v8313, 0.0
  %v8322 = vpack.c.bf16 %v8318, %v8314
  %v8323 = vpack.c.bf16 %v8319, %v8315
  %v8324 = vpack.c.bf16 %v8320, %v8316
  %v8325 = vpack.c.bf16 %v8321, %v8317
  %v8326 = vld [vmem:[%s7] sm:$0xf]
  %v8327 = vld [vmem:[%s7 + $0x4] sm:$0xf]
  %v8328 = vld [vmem:[%s7 + $0x8] sm:$0xf]
  %v8329 = vld [vmem:[%s7 + $0xc] sm:$0xf]
  %v8330 = vld [vmem:[%s7 + $0x10] sm:$0xf]
  %v8331 = vld [vmem:[%s7 + $0x14] sm:$0xf]
  %v8332 = vld [vmem:[%s7 + $0x18] sm:$0xf]
  %v8333 = vld [vmem:[%s7 + $0x1c] sm:$0xf]
  %v8334 = vld [vmem:[%s7 + $0x20] sm:$0xf]
  %v8335 = vld [vmem:[%s7 + $0x24] sm:$0xf]
  %v8336 = vld [vmem:[%s7 + $0x28] sm:$0xf]
  %v8337 = vld [vmem:[%s7 + $0x2c] sm:$0xf]
  %v8338 = vld [vmem:[%s7 + $0x30] sm:$0xf]
  %v8339 = vld [vmem:[%s7 + $0x34] sm:$0xf]
  %v8340 = vld [vmem:[%s7 + $0x38] sm:$0xf]
  %v8341 = vld [vmem:[%s7 + $0x3c] sm:$0xf]
  %v8342 = vld [vmem:[%s7 + $0x40] sm:$0xf]
  %v8343 = vld [vmem:[%s7 + $0x44] sm:$0xf]
  %v8344 = vld [vmem:[%s7 + $0x48] sm:$0xf]
  %v8345 = vld [vmem:[%s7 + $0x4c] sm:$0xf]
  %v8346 = vld [vmem:[%s7 + $0x50] sm:$0xf]
  %v8347 = vld [vmem:[%s7 + $0x54] sm:$0xf]
  %v8348 = vld [vmem:[%s7 + $0x58] sm:$0xf]
  %v8349 = vld [vmem:[%s7 + $0x5c] sm:$0xf]
  %v8350 = vld [vmem:[%s7 + $0x60] sm:$0xf]
  %v8351 = vld [vmem:[%s7 + $0x64] sm:$0xf]
  %v8352 = vld [vmem:[%s7 + $0x68] sm:$0xf]
  %v8353 = vld [vmem:[%s7 + $0x6c] sm:$0xf]
  %v8354 = vld [vmem:[%s7 + $0x70] sm:$0xf]
  %v8355 = vld [vmem:[%s7 + $0x74] sm:$0xf]
  %v8356 = vld [vmem:[%s7 + $0x78] sm:$0xf]
  %v8357 = vld [vmem:[%s7 + $0x7c] sm:$0xf]
  %v8358 = vld [vmem:[%s7 + $0x80] sm:$0xf]
  %v8359 = vld [vmem:[%s7 + $0x84] sm:$0xf]
  %v8360 = vld [vmem:[%s7 + $0x88] sm:$0xf]
  %v8361 = vld [vmem:[%s7 + $0x8c] sm:$0xf]
  %v8362 = vld [vmem:[%s7 + $0x90] sm:$0xf]
  %v8363 = vld [vmem:[%s7 + $0x94] sm:$0xf]
  %v8364 = vld [vmem:[%s7 + $0x98] sm:$0xf]
  %v8365 = vld [vmem:[%s7 + $0x9c] sm:$0xf]
  %v8366 = vld [vmem:[%s7 + $0xa0] sm:$0xf]
  %v8367 = vld [vmem:[%s7 + $0xa4] sm:$0xf]
  %v8368 = vld [vmem:[%s7 + $0xa8] sm:$0xf]
  %v8369 = vld [vmem:[%s7 + $0xac] sm:$0xf]
  %v8370 = vld [vmem:[%s7 + $0xb0] sm:$0xf]
  %v8371 = vld [vmem:[%s7 + $0xb4] sm:$0xf]
  %v8372 = vld [vmem:[%s7 + $0xb8] sm:$0xf]
  %v8373 = vld [vmem:[%s7 + $0xbc] sm:$0xf]
  %v8374 = vld [vmem:[%s7 + $0xc0] sm:$0xf]
  %v8375 = vld [vmem:[%s7 + $0xc4] sm:$0xf]
  %v8376 = vld [vmem:[%s7 + $0xc8] sm:$0xf]
  %v8377 = vld [vmem:[%s7 + $0xcc] sm:$0xf]
  %v8378 = vld [vmem:[%s7 + $0xd0] sm:$0xf]
  %v8379 = vld [vmem:[%s7 + $0xd4] sm:$0xf]
  %v8380 = vld [vmem:[%s7 + $0xd8] sm:$0xf]
  %v8381 = vld [vmem:[%s7 + $0xdc] sm:$0xf]
  %v8382 = vld [vmem:[%s7 + $0xe0] sm:$0xf]
  %v8383 = vld [vmem:[%s7 + $0xe4] sm:$0xf]
  %v8384 = vld [vmem:[%s7 + $0xe8] sm:$0xf]
  %v8385 = vld [vmem:[%s7 + $0xec] sm:$0xf]
  %v8386 = vld [vmem:[%s7 + $0xf0] sm:$0xf]
  %v8387 = vld [vmem:[%s7 + $0xf4] sm:$0xf]
  %v8388 = vld [vmem:[%s7 + $0xf8] sm:$0xf]
  %v8389 = vld [vmem:[%s7 + $0xfc] sm:$0xf]
  %v8390 = vld [vmem:[%s8] sm:$0x1]
  %v8392 = vperm.slane %v8390, 0
  %v8458 = vunpack.c.l.b16 %v8326
  %v8459 = vunpack.c.l.b16 %v8327
  %v8460 = vunpack.c.l.b16 %v8328
  %v8461 = vunpack.c.l.b16 %v8329
  %v8462 = vunpack.c.l.b16 %v8330
  %v8463 = vunpack.c.l.b16 %v8331
  %v8464 = vunpack.c.l.b16 %v8332
  %v8465 = vunpack.c.l.b16 %v8333
  %v8466 = vunpack.c.l.b16 %v8334
  %v8467 = vunpack.c.l.b16 %v8335
  %v8468 = vunpack.c.l.b16 %v8336
  %v8469 = vunpack.c.l.b16 %v8337
  %v8470 = vunpack.c.l.b16 %v8338
  %v8471 = vunpack.c.l.b16 %v8339
  %v8472 = vunpack.c.l.b16 %v8340
  %v8473 = vunpack.c.l.b16 %v8341
  %v8474 = vunpack.c.l.b16 %v8342
  %v8475 = vunpack.c.l.b16 %v8343
  %v8476 = vunpack.c.l.b16 %v8344
  %v8477 = vunpack.c.l.b16 %v8345
  %v8478 = vunpack.c.l.b16 %v8346
  %v8479 = vunpack.c.l.b16 %v8347
  %v8480 = vunpack.c.l.b16 %v8348
  %v8481 = vunpack.c.l.b16 %v8349
  %v8482 = vunpack.c.l.b16 %v8350
  %v8483 = vunpack.c.l.b16 %v8351
  %v8484 = vunpack.c.l.b16 %v8352
  %v8485 = vunpack.c.l.b16 %v8353
  %v8486 = vunpack.c.l.b16 %v8354
  %v8487 = vunpack.c.l.b16 %v8355
  %v8488 = vunpack.c.l.b16 %v8356
  %v8489 = vunpack.c.l.b16 %v8357
  %v8490 = vunpack.c.l.b16 %v8358
  %v8491 = vunpack.c.l.b16 %v8359
  %v8492 = vunpack.c.l.b16 %v8360
  %v8493 = vunpack.c.l.b16 %v8361
  %v8494 = vunpack.c.l.b16 %v8362
  %v8495 = vunpack.c.l.b16 %v8363
  %v8496 = vunpack.c.l.b16 %v8364
  %v8497 = vunpack.c.l.b16 %v8365
  %v8498 = vunpack.c.l.b16 %v8366
  %v8499 = vunpack.c.l.b16 %v8367
  %v8500 = vunpack.c.l.b16 %v8368
  %v8501 = vunpack.c.l.b16 %v8369
  %v8502 = vunpack.c.l.b16 %v8370
  %v8503 = vunpack.c.l.b16 %v8371
  %v8504 = vunpack.c.l.b16 %v8372
  %v8505 = vunpack.c.l.b16 %v8373
  %v8506 = vunpack.c.l.b16 %v8374
  %v8507 = vunpack.c.l.b16 %v8375
  %v8508 = vunpack.c.l.b16 %v8376
  %v8509 = vunpack.c.l.b16 %v8377
  %v8510 = vunpack.c.l.b16 %v8378
  %v8511 = vunpack.c.l.b16 %v8379
  %v8512 = vunpack.c.l.b16 %v8380
  %v8513 = vunpack.c.l.b16 %v8381
  %v8514 = vunpack.c.l.b16 %v8382
  %v8515 = vunpack.c.l.b16 %v8383
  %v8516 = vunpack.c.l.b16 %v8384
  %v8517 = vunpack.c.l.b16 %v8385
  %v8518 = vunpack.c.l.b16 %v8386
  %v8519 = vunpack.c.l.b16 %v8387
  %v8520 = vunpack.c.l.b16 %v8388
  %v8521 = vunpack.c.l.b16 %v8389
  %v8522 = vpack.c.b16 %v8459, %v8458
  %v8523 = vpack.c.b16 %v8461, %v8460
  %v8524 = vpack.c.b16 %v8463, %v8462
  %v8525 = vpack.c.b16 %v8465, %v8464
  %v8526 = vpack.c.b16 %v8467, %v8466
  %v8527 = vpack.c.b16 %v8469, %v8468
  %v8528 = vpack.c.b16 %v8471, %v8470
  %v8529 = vpack.c.b16 %v8473, %v8472
  %v8530 = vpack.c.b16 %v8475, %v8474
  %v8531 = vpack.c.b16 %v8477, %v8476
  %v8532 = vpack.c.b16 %v8479, %v8478
  %v8533 = vpack.c.b16 %v8481, %v8480
  %v8534 = vpack.c.b16 %v8483, %v8482
  %v8535 = vpack.c.b16 %v8485, %v8484
  %v8536 = vpack.c.b16 %v8487, %v8486
  %v8537 = vpack.c.b16 %v8489, %v8488
  %v8538 = vpack.c.b16 %v8491, %v8490
  %v8539 = vpack.c.b16 %v8493, %v8492
  %v8540 = vpack.c.b16 %v8495, %v8494
  %v8541 = vpack.c.b16 %v8497, %v8496
  %v8542 = vpack.c.b16 %v8499, %v8498
  %v8543 = vpack.c.b16 %v8501, %v8500
  %v8544 = vpack.c.b16 %v8503, %v8502
  %v8545 = vpack.c.b16 %v8505, %v8504
  %v8546 = vpack.c.b16 %v8507, %v8506
  %v8547 = vpack.c.b16 %v8509, %v8508
  %v8548 = vpack.c.b16 %v8511, %v8510
  %v8549 = vpack.c.b16 %v8513, %v8512
  %v8550 = vpack.c.b16 %v8515, %v8514
  %v8551 = vpack.c.b16 %v8517, %v8516
  %v8552 = vpack.c.b16 %v8519, %v8518
  %v8553 = vpack.c.b16 %v8521, %v8520
  %8586 = vmatpush.bf16.msra.mxu0 %v8529
  %8587 = vmatpush.bf16.msra.mxu0 %v8528
  %8588 = vmatpush.bf16.msra.mxu0 %v8527
  %8589 = vmatpush.bf16.msra.mxu0 %v8526
  %8590 = vmatpush.bf16.msra.mxu0 %v8525
  %8591 = vmatpush.bf16.msra.mxu0 %v8524
  %8592 = vmatpush.bf16.msra.mxu0 %v8523
  %8593 = vmatpush.bf16.msra.mxu0 %v8522
  %8594 = vmatmul.bf16.gmra.mxu0 %v8322
  %v8595 = vpop.f32.mrf.mxu0
  %v8596 = vadd.f32 %v8392, %v8595
  %v8597 = vpop.f32.mrf.mxu0
  %v8598 = vadd.f32 %v8392, %v8597
  %8599 = vdwg.mxu0
  %8600 = vmatpush.bf16.msra.mxu0 %v8537
  %8601 = vmatpush.bf16.msra.mxu0 %v8536
  %8602 = vmatpush.bf16.msra.mxu0 %v8535
  %8603 = vmatpush.bf16.msra.mxu0 %v8534
  %8604 = vmatpush.bf16.msra.mxu0 %v8533
  %8605 = vmatpush.bf16.msra.mxu0 %v8532
  %8606 = vmatpush.bf16.msra.mxu0 %v8531
  %8607 = vmatpush.bf16.msra.mxu0 %v8530
  %8608 = vmatmul.bf16.gmra.mxu0 %v8323
  %v8609 = vpop.f32.mrf.mxu0
  %v8610 = vadd.f32 %v8596, %v8609
  %v8611 = vpop.f32.mrf.mxu0
  %v8612 = vadd.f32 %v8598, %v8611
  %8613 = vdwg.mxu0
  %8614 = vmatpush.bf16.msra.mxu0 %v8545
  %8615 = vmatpush.bf16.msra.mxu0 %v8544
  %8616 = vmatpush.bf16.msra.mxu0 %v8543
  %8617 = vmatpush.bf16.msra.mxu0 %v8542
  %8618 = vmatpush.bf16.msra.mxu0 %v8541
  %8619 = vmatpush.bf16.msra.mxu0 %v8540
  %8620 = vmatpush.bf16.msra.mxu0 %v8539
  %8621 = vmatpush.bf16.msra.mxu0 %v8538
  %8622 = vmatmul.bf16.gmra.mxu0 %v8324
  %v8623 = vpop.f32.mrf.mxu0
  %v8624 = vadd.f32 %v8610, %v8623
  %v8625 = vpop.f32.mrf.mxu0
  %v8626 = vadd.f32 %v8612, %v8625
  %8627 = vdwg.mxu0
  %8628 = vmatpush.bf16.msra.mxu0 %v8553
  %8629 = vmatpush.bf16.msra.mxu0 %v8552
  %8630 = vmatpush.bf16.msra.mxu0 %v8551
  %8631 = vmatpush.bf16.msra.mxu0 %v8550
  %8632 = vmatpush.bf16.msra.mxu0 %v8549
  %8633 = vmatpush.bf16.msra.mxu0 %v8548
  %8634 = vmatpush.bf16.msra.mxu0 %v8547
  %8635 = vmatpush.bf16.msra.mxu0 %v8546
  %8636 = vmatmul.bf16.gmra.mxu0 %v8325
  %v8637 = vpop.f32.mrf.mxu0
  %v8638 = vadd.f32 %v8624, %v8637
  %v8639 = vpop.f32.mrf.mxu0
  %v8640 = vadd.f32 %v8626, %v8639
  %8641 = vdwg.mxu0
  %8642 = vst [vmem:[%s9] sm:$0xff] %v8638
  %8643 = vst [vmem:[%s9 + $0x8] sm:$0xff] %v8640
  // Predicated region
  $region38: #{_lambda_.9} parent=0 // pred_check
    _
  $region39: #{_lambda_.9} parent=0 // pred_check_branch
    %8645 = sbr.rel (0) target = $region41
  $region40: #{_lambda_.9} parent=0 // pred_region
    _
  $region41: #{_lambda_.9} parent=0 // pred_fallthru
    _
  // Predicated region
  $region42: #{_lambda_.9} parent=0 // pred_check
    _
  $region43: #{_lambda_.9} parent=0 // pred_check_branch
    %8647 = sbr.rel (0) target = $region45
  $region44: #{_lambda_.9} parent=0 // pred_region
    _
  $region45: #{_lambda_.9} parent=0 // pred_fallthru
    _

</llo_original>
